<compile_context>
chip_gen: v5e
topology: v5e:2x2
jax: 0.10.0
libtpu: 0.0.40
codegen_flags: <defaults>
</compile_context>

<pallas_src>
import math
import functools

import jax
import jax.numpy as jnp
from jax import lax
from jax.experimental import pallas as pl
from jax.experimental.pallas import tpu as pltpu

_K = 16  # Conv1d kernel_size in the reference module


# --------------------------------------------------------------------------
# helpers
# --------------------------------------------------------------------------

def _win4max(y):
    """max over the length-4 window starting at each column (circular; the
    3 wrapped columns at the end are never selected downstream)."""
    n = y.shape[-1]
    m = y
    for k in (1, 2, 3):
        m = jnp.maximum(m, pltpu.roll(y, shift=n - k, axis=1))
    return m


def positional_encoding(seq_len, d_model):
    position = jnp.arange(seq_len, dtype=jnp.float32)[:, None]
    div_term = jnp.exp(jnp.arange(0, d_model, 2, dtype=jnp.float32)
                       * (-math.log(10000.0) / d_model))
    pe = jnp.zeros((seq_len, d_model), jnp.float32)
    pe = pe.at[:, 0::2].set(jnp.sin(position * div_term))
    pe = pe.at[:, 1::2].set(jnp.cos(position * div_term))
    return pe


# --------------------------------------------------------------------------
# the fused kernel (one batch element per grid step)
# --------------------------------------------------------------------------

def _fused_psmc_kernel(
        xcol1_ref,                                   # (1, K, nc*cs)  conv1 im2col
        w1_ref, b1_ref, s1_ref, t1_ref,              # conv1 + folded BN1
        w2_ref, b2_ref, s2_ref, t2_ref,              # conv2 + folded BN2
        sel1_ref, mask2_ref, sel2a_ref,              # pooling / im2col constants
        wemb_ref, bemb_ref,                          # embedding Linear(64 -> D)
        cls_ref, pe_ref,                             # cls token, positional enc.
        win_ref, bin_ref, wout_ref, bout_ref,        # attention (stacked layers)
        ln1g_ref, ln1b_ref, ln2g_ref, ln2b_ref,      # layer norms
        wff1_ref, bff1_ref, wff2_ref, bff2_ref,      # feed-forward
        wc1_ref, bc1_ref, wc2_ref, bc2_ref,          # classifier head
        o_ref,                                       # (1, 1, O)
        *, nc, cs, nhead, num_layers, ln_eps):
    K = w1_ref.shape[1]
    Nl1 = nc * cs
    Nl2 = Nl1 // 4
    L2 = cs // 4
    D = cls_ref.shape[-1]
    dh = D // nhead
    pad_l = (K - 1) // 2

    # ---------------- chunk encoder (all nc chunks batched in lanes) -------
    xcol1 = xcol1_ref[0]                                          # (K, Nl1)
    y1 = jnp.dot(w1_ref[...], xcol1, preferred_element_type=jnp.float32)
    y1 = jnp.maximum(y1 + b1_ref[...], 0.0) * s1_ref[...] + t1_ref[...]
    # MaxPool1d(4): 4-way shifted max + subsample-by-4 selection matmul
    p1 = jnp.dot(_win4max(y1), sel1_ref[...],
                 preferred_element_type=jnp.float32)              # (C1, Nl2)

    # conv2 im2col: 16 masked lane rolls realise per-chunk 'same' padding
    mask2 = mask2_ref[...]                                        # (K, Nl2)
    pieces = []
    for j in range(K):
        d = j - pad_l
        rolled = p1 if d == 0 else pltpu.roll(p1, shift=(-d) % Nl2, axis=1)
        pieces.append(mask2[j:j + 1, :] * rolled)
    xcol2 = jnp.concatenate(pieces, axis=0)                       # (K*C1, Nl2)

    y2 = jnp.dot(w2_ref[...], xcol2, preferred_element_type=jnp.float32)
    y2 = jnp.maximum(y2 + b2_ref[...], 0.0) * s2_ref[...] + t2_ref[...]

    # MaxPool1d(4) + AdaptiveAvgPool1d(1) folded into a single matmul
    feats = jnp.dot(_win4max(y2), sel2a_ref[...],
                    preferred_element_type=jnp.float32)           # (C2, nc)

    # embedding Linear(64 -> D): contract the channel axis directly
    emb = lax.dot_general(feats, wemb_ref[...], (((0,), (0,)), ((), ())),
                          preferred_element_type=jnp.float32) + bemb_ref[...]
    # emb: (nc, D)

    # ---------------- cls token + positional encoding ----------------------
    x = jnp.concatenate([cls_ref[...], emb], axis=0) + pe_ref[...]   # (S, D)

    def layer_norm(z, gamma, beta):
        mu = jnp.mean(z, axis=-1, keepdims=True)
        zc = z - mu
        var = jnp.mean(zc * zc, axis=-1, keepdims=True)
        return zc * lax.rsqrt(var + ln_eps) * gamma + beta

    # ---------------- post-LN TransformerEncoder (eval) --------------------
    for l in range(num_layers):                                   # static unroll
        qkv = jnp.dot(x, win_ref[l],
                      preferred_element_type=jnp.float32) + bin_ref[l]
        heads = []
        for h in range(nhead):                                    # static unroll
            lo, hi = h * dh, (h + 1) * dh
            q = qkv[:, lo:hi]             # 1/sqrt(dh) pre-folded into W_in/b_in
            k = qkv[:, D + lo:D + hi]
            v = qkv[:, 2 * D + lo:2 * D + hi]
            s = lax.dot_general(q, k, (((1,), (1,)), ((), ())),
                                preferred_element_type=jnp.float32)   # (S, S)
            s = s - jnp.max(s, axis=-1, keepdims=True)
            p = jnp.exp(s)
            p = p / jnp.sum(p, axis=-1, keepdims=True)                # exact
            heads.append(jnp.dot(p, v, preferred_element_type=jnp.float32))
        # one output projection for all heads (single (S,D)@(D,D) matmul)
        attn = jnp.dot(jnp.concatenate(heads, axis=1), wout_ref[l],
                       preferred_element_type=jnp.float32) + bout_ref[l]
        x = layer_norm(x + attn, ln1g_ref[l], ln1b_ref[l])
        h1 = jnp.maximum(
            jnp.dot(x, wff1_ref[l], preferred_element_type=jnp.float32)
            + bff1_ref[l], 0.0)
        h2 = jnp.dot(h1, wff2_ref[l],
                     preferred_element_type=jnp.float32) + bff2_ref[l]
        x = layer_norm(x + h2, ln2g_ref[l], ln2b_ref[l])

    # ---------------- classifier head (cls row) + LogSoftmax ---------------
    cls_out = x[0:1, :]                                           # (1, D)
    hc = jnp.maximum(
        jnp.dot(cls_out, wc1_ref[...], preferred_element_type=jnp.float32)
        + bc1_ref[...], 0.0)
    logits = jnp.dot(hc, wc2_ref[...],
                     preferred_element_type=jnp.float32) + bc2_ref[...]
    m = jnp.max(logits, axis=-1, keepdims=True)
    lse = m + jnp.log(jnp.sum(jnp.exp(logits - m), axis=-1, keepdims=True))
    o_ref[0] = logits - lse


# --------------------------------------------------------------------------
# parameter init / host-side preparation
# --------------------------------------------------------------------------

def init_params(key, cfg):
    D, F, O = cfg["embedding_dim"], cfg["dim_feedforward"], cfg["output_size"]
    keys = jax.random.split(key, 128)
    idx = [0]

    def nk():
        k = keys[idx[0]]
        idx[0] += 1
        return k

    def w(shape, scale=0.05):
        return (scale * jax.random.normal(nk(), shape)).astype(jnp.float32)

    params = {
        "conv1_w": w((32, 1, 16)), "conv1_b": w((32,)),
        "bn1_g": 1.0 + w((32,)), "bn1_b": w((32,)),
        "bn1_m": w((32,)), "bn1_v": 1.0 + 0.1 * jnp.abs(w((32,))),
        "conv2_w": w((64, 32, 16)), "conv2_b": w((64,)),
        "bn2_g": 1.0 + w((64,)), "bn2_b": w((64,)),
        "bn2_m": w((64,)), "bn2_v": 1.0 + 0.1 * jnp.abs(w((64,))),
        "emb_w": w((64, D)), "emb_b": w((D,)),
        "cls_token": jnp.zeros((1, 1, D), jnp.float32),   # torch inits to zeros
        "cls_w1": w((D, D // 2)), "cls_b1": w((D // 2,)),
        "cls_w2": w((D // 2, O)), "cls_b2": w((O,)),
    }
    layers = []
    for _ in range(cfg["num_encoder_layers"]):
        layers.append({
            # stored (in, out) i.e. already transposed vs torch's (out, in)
            "w_in": w((D, 3 * D)), "b_in": w((3 * D,)),
            "w_out": w((D, D)), "b_out": w((D,)),
            "ln1_g": 1.0 + w((D,)), "ln1_b": w((D,)),
            "ln2_g": 1.0 + w((D,)), "ln2_b": w((D,)),
            "w1": w((D, F)), "b1": w((F,)),
            "w2": w((F, D)), "b2": w((D,)),
        })
    params["layers"] = layers
    return params


def prepare_params(params, cfg, bn_eps=1e-5):
    """Host-side re-layout: fold BN into scale/shift, fold 1/sqrt(d_head)
    into W_in's Q columns, reshape conv weights for im2col, stack layers."""
    D = cfg["embedding_dim"]
    dh = D // cfg["nhead"]
    scale = 1.0 / math.sqrt(dh)
    K = params["conv1_w"].shape[-1]
    C1 = params["conv1_w"].shape[0]
    C2 = params["conv2_w"].shape[0]

    col = lambda v: v.reshape(-1, 1).astype(jnp.float32)
    row = lambda v: v.reshape(1, -1).astype(jnp.float32)

    def bn_fold(g, b, m, v):
        s = g * lax.rsqrt(v + bn_eps)
        return s, b - m * s

    s1, t1 = bn_fold(params["bn1_g"], params["bn1_b"],
                     params["bn1_m"], params["bn1_v"])
    s2, t2 = bn_fold(params["bn2_g"], params["bn2_b"],
                     params["bn2_m"], params["bn2_v"])

    prep = {
        "w1": params["conv1_w"].reshape(C1, K).astype(jnp.float32),
        "b1": col(params["conv1_b"]), "s1": col(s1), "t1": col(t1),
        # im2col row/column order = (tap j major, input channel minor)
        "w2": jnp.transpose(params["conv2_w"], (0, 2, 1)).reshape(C2, K * C1),
        "b2": col(params["conv2_b"]), "s2": col(s2), "t2": col(t2),
        "wemb": params["emb_w"].astype(jnp.float32),          # (64, D)
        "bemb": row(params["emb_b"]),
        "cls": params["cls_token"].reshape(1, D),
        "wc1": params["cls_w1"], "bc1": row(params["cls_b1"]),
        "wc2": params["cls_w2"], "bc2": row(params["cls_b2"]),
    }

    def q_fold_w(wi):      # fold attention scale into Q projection weight
        return jnp.concatenate([wi[:, :D] * scale, wi[:, D:]], axis=1)

    def q_fold_b(bi):
        return jnp.concatenate([bi[:D] * scale, bi[D:]])

    L = params["layers"]
    prep["win"] = jnp.stack([q_fold_w(l["w_in"]) for l in L])          # (nl,D,3D)
    prep["bin"] = jnp.stack([q_fold_b(l["b_in"]).reshape(1, -1) for l in L])
    prep["wout"] = jnp.stack([l["w_out"] for l in L])                  # (nl,D,D)
    prep["bout"] = jnp.stack([l["b_out"].reshape(1, -1) for l in L])
    prep["ln1g"] = jnp.stack([l["ln1_g"].reshape(1, -1) for l in L])
    prep["ln1b"] = jnp.stack([l["ln1_b"].reshape(1, -1) for l in L])
    prep["ln2g"] = jnp.stack([l["ln2_g"].reshape(1, -1) for l in L])
    prep["ln2b"] = jnp.stack([l["ln2_b"].reshape(1, -1) for l in L])
    prep["wff1"] = jnp.stack([l["w1"] for l in L])                     # (nl,D,F)
    prep["bff1"] = jnp.stack([l["b1"].reshape(1, -1) for l in L])
    prep["wff2"] = jnp.stack([l["w2"] for l in L])                     # (nl,F,D)
    prep["bff2"] = jnp.stack([l["b2"].reshape(1, -1) for l in L])
    return prep


# --------------------------------------------------------------------------
# forward (one pallas_call)
# --------------------------------------------------------------------------

def transformer_psmc_forward(x, prep, cfg):
    """x: (batch, seq_len) float32 -> log-probs (batch, output_size)."""
    B, T = x.shape
    cs = cfg["chunk_size"]
    D = cfg["embedding_dim"]
    O = cfg["output_size"]
    if T % cs != 0:
        raise ValueError(f"Sequence length {T} not divisible by chunk size {cs}")
    assert cs % 16 == 0
    nc = T // cs
    S = nc + 1
    Nl1 = nc * cs
    Nl2 = Nl1 // 4
    L2 = cs // 4

    # ---- host-side conv1 im2col (per-chunk PyTorch 'same' padding 7/8) ----
    pad_l = (_K - 1) // 2
    pad_r = (_K - 1) - pad_l
    xp = jnp.pad(x.reshape(B, nc, cs).astype(jnp.float32),
                 ((0, 0), (0, 0), (pad_l, pad_r)))
    xcol1 = jnp.stack([xp[:, :, j:j + cs] for j in range(_K)], axis=1)
    xcol1 = xcol1.reshape(B, _K, Nl1)                          # (B, K, nc*cs)

    # ---- trace-time constants (selection / mask matrices, pos. encoding) --
    sel1 = (jnp.arange(Nl1)[:, None] == 4 * jnp.arange(Nl2)[None, :]
            ).astype(jnp.float32)                              # (Nl1, Nl2)
    i2 = jnp.arange(Nl2)
    sel2a = (((i2[:, None] // L2) == jnp.arange(nc)[None, :])
             & (i2[:, None] % 4 == 0)).astype(jnp.float32) / float(L2 // 4)
    g = i2 % L2
    mrows = []
    for j in range(_K):
        d = j - pad_l
        lo, hi = max(0, -d), L2 - max(0, d)
        mrows.append(((g >= lo) & (g < hi)).astype(jnp.float32))
    mask2 = jnp.stack(mrows, axis=0)                           # (K, Nl2)
    pe = positional_encoding(S, D)                             # (S, D)

    weights = (prep["w1"], prep["b1"], prep["s1"], prep["t1"],
               prep["w2"], prep["b2"], prep["s2"], prep["t2"],
               sel1, mask2, sel2a,
               prep["wemb"], prep["bemb"],
               prep["cls"], pe,
               prep["win"], prep["bin"], prep["wout"], prep["bout"],
               prep["ln1g"], prep["ln1b"], prep["ln2g"], prep["ln2b"],
               prep["wff1"], prep["bff1"], prep["wff2"], prep["bff2"],
               prep["wc1"], prep["bc1"], prep["wc2"], prep["bc2"])

    def full(a):
        nd = a.ndim
        return pl.BlockSpec(a.shape, lambda b, _n=nd: (0,) * _n)

    out = pl.pallas_call(
        functools.partial(_fused_psmc_kernel, nc=nc, cs=cs,
                          nhead=cfg["nhead"],
                          num_layers=cfg["num_encoder_layers"],
                          ln_eps=1e-5),
        out_shape=jax.ShapeDtypeStruct((B, 1, O), jnp.float32),
        grid=(B,),
        in_specs=[pl.BlockSpec((1, _K, Nl1), lambda b: (b, 0, 0))]
                 + [full(a) for a in weights],
        out_specs=pl.BlockSpec((1, 1, O), lambda b: (b, 0, 0)),
        compiler_params=pltpu.CompilerParams(
            dimension_semantics=("parallel",),
            vmem_limit_bytes=32 * 1024 * 1024),
    )(xcol1, *weights)
    return out[:, 0, :]


# --------------------------------------------------------------------------

if __name__ == "__main__":
    cfg = dict(
        output_size=8,
        chunk_size=256,
        embedding_dim=128,
        nhead=4,
        num_encoder_layers=2,
        dim_feedforward=256,
    )
    batch, seq_len = 2, 1024                        # 4 chunks of 256 samples

    key = jax.random.PRNGKey(0)
    k_x, k_p = jax.random.split(key)
    x = jax.random.normal(k_x, (batch, seq_len), dtype=jnp.float32)
    params = init_params(k_p, cfg)
    prep = prepare_params(params, cfg)

    fwd = jax.jit(functools.partial(transformer_psmc_forward, cfg=cfg))
    out = jax.block_until_ready(fwd(x, prep))
    assert out.shape == (batch, cfg["output_size"])
    assert bool(jnp.all(jnp.isfinite(out)))
    print("KERNEL_OK")
</pallas_src>

<mosaic_0001>
module attributes {stable_mosaic.version = 11 : i64} {
  func.func @_fused_psmc_kernel(%arg0: i32, %arg1: memref<1x16x1024xf32, #tpu.memory_space<vmem>>, %arg2: memref<32x16xf32, #tpu.memory_space<vmem>>, %arg3: memref<32x1xf32, #tpu.memory_space<vmem>>, %arg4: memref<32x1xf32, #tpu.memory_space<vmem>>, %arg5: memref<32x1xf32, #tpu.memory_space<vmem>>, %arg6: memref<64x512xf32, #tpu.memory_space<vmem>>, %arg7: memref<64x1xf32, #tpu.memory_space<vmem>>, %arg8: memref<64x1xf32, #tpu.memory_space<vmem>>, %arg9: memref<64x1xf32, #tpu.memory_space<vmem>>, %arg10: memref<1024x256xf32, #tpu.memory_space<vmem>>, %arg11: memref<16x256xf32, #tpu.memory_space<vmem>>, %arg12: memref<256x4xf32, #tpu.memory_space<vmem>>, %arg13: memref<64x128xf32, #tpu.memory_space<vmem>>, %arg14: memref<1x128xf32, #tpu.memory_space<vmem>>, %arg15: memref<1x128xf32, #tpu.memory_space<vmem>>, %arg16: memref<5x128xf32, #tpu.memory_space<vmem>>, %arg17: memref<2x128x384xf32, #tpu.memory_space<vmem>>, %arg18: memref<2x1x384xf32, #tpu.memory_space<vmem>>, %arg19: memref<2x128x128xf32, #tpu.memory_space<vmem>>, %arg20: memref<2x1x128xf32, #tpu.memory_space<vmem>>, %arg21: memref<2x1x128xf32, #tpu.memory_space<vmem>>, %arg22: memref<2x1x128xf32, #tpu.memory_space<vmem>>, %arg23: memref<2x1x128xf32, #tpu.memory_space<vmem>>, %arg24: memref<2x1x128xf32, #tpu.memory_space<vmem>>, %arg25: memref<2x128x256xf32, #tpu.memory_space<vmem>>, %arg26: memref<2x1x256xf32, #tpu.memory_space<vmem>>, %arg27: memref<2x256x128xf32, #tpu.memory_space<vmem>>, %arg28: memref<2x1x128xf32, #tpu.memory_space<vmem>>, %arg29: memref<128x64xf32, #tpu.memory_space<vmem>>, %arg30: memref<1x64xf32, #tpu.memory_space<vmem>>, %arg31: memref<64x8xf32, #tpu.memory_space<vmem>>, %arg32: memref<1x8xf32, #tpu.memory_space<vmem>>, %arg33: memref<1x1x8xf32, #tpu.memory_space<vmem>>) attributes {dimension_semantics = [#tpu.dimension_semantics<parallel>], iteration_bounds = array<i64: 2>, scalar_prefetch = 0 : i64, scratch_operands = 0 : i64, tpu.core_type = #tpu.core_type<tc>, window_params = [{transform_indices = @transform_0, window_bounds = array<i64: 1, 16, 1024>}, {pipeline_mode = #tpu.pipeline_mode<synchronous>, transform_indices = @transform_1, window_bounds = array<i64: 32, 16>}, {pipeline_mode = #tpu.pipeline_mode<synchronous>, transform_indices = @transform_2, window_bounds = array<i64: 32, 1>}, {pipeline_mode = #tpu.pipeline_mode<synchronous>, transform_indices = @transform_3, window_bounds = array<i64: 32, 1>}, {pipeline_mode = #tpu.pipeline_mode<synchronous>, transform_indices = @transform_4, window_bounds = array<i64: 32, 1>}, {pipeline_mode = #tpu.pipeline_mode<synchronous>, transform_indices = @transform_5, window_bounds = array<i64: 64, 512>}, {pipeline_mode = #tpu.pipeline_mode<synchronous>, transform_indices = @transform_6, window_bounds = array<i64: 64, 1>}, {pipeline_mode = #tpu.pipeline_mode<synchronous>, transform_indices = @transform_7, window_bounds = array<i64: 64, 1>}, {pipeline_mode = #tpu.pipeline_mode<synchronous>, transform_indices = @transform_8, window_bounds = array<i64: 64, 1>}, {pipeline_mode = #tpu.pipeline_mode<synchronous>, transform_indices = @transform_9, window_bounds = array<i64: 1024, 256>}, {pipeline_mode = #tpu.pipeline_mode<synchronous>, transform_indices = @transform_10, window_bounds = array<i64: 16, 256>}, {pipeline_mode = #tpu.pipeline_mode<synchronous>, transform_indices = @transform_11, window_bounds = array<i64: 256, 4>}, {pipeline_mode = #tpu.pipeline_mode<synchronous>, transform_indices = @transform_12, window_bounds = array<i64: 64, 128>}, {pipeline_mode = #tpu.pipeline_mode<synchronous>, transform_indices = @transform_13, window_bounds = array<i64: 1, 128>}, {pipeline_mode = #tpu.pipeline_mode<synchronous>, transform_indices = @transform_14, window_bounds = array<i64: 1, 128>}, {pipeline_mode = #tpu.pipeline_mode<synchronous>, transform_indices = @transform_15, window_bounds = array<i64: 5, 128>}, {pipeline_mode = #tpu.pipeline_mode<synchronous>, transform_indices = @transform_16, window_bounds = array<i64: 2, 128, 384>}, {pipeline_mode = #tpu.pipeline_mode<synchronous>, transform_indices = @transform_17, window_bounds = array<i64: 2, 1, 384>}, {pipeline_mode = #tpu.pipeline_mode<synchronous>, transform_indices = @transform_18, window_bounds = array<i64: 2, 128, 128>}, {pipeline_mode = #tpu.pipeline_mode<synchronous>, transform_indices = @transform_19, window_bounds = array<i64: 2, 1, 128>}, {pipeline_mode = #tpu.pipeline_mode<synchronous>, transform_indices = @transform_20, window_bounds = array<i64: 2, 1, 128>}, {pipeline_mode = #tpu.pipeline_mode<synchronous>, transform_indices = @transform_21, window_bounds = array<i64: 2, 1, 128>}, {pipeline_mode = #tpu.pipeline_mode<synchronous>, transform_indices = @transform_22, window_bounds = array<i64: 2, 1, 128>}, {pipeline_mode = #tpu.pipeline_mode<synchronous>, transform_indices = @transform_23, window_bounds = array<i64: 2, 1, 128>}, {pipeline_mode = #tpu.pipeline_mode<synchronous>, transform_indices = @transform_24, window_bounds = array<i64: 2, 128, 256>}, {pipeline_mode = #tpu.pipeline_mode<synchronous>, transform_indices = @transform_25, window_bounds = array<i64: 2, 1, 256>}, {pipeline_mode = #tpu.pipeline_mode<synchronous>, transform_indices = @transform_26, window_bounds = array<i64: 2, 256, 128>}, {pipeline_mode = #tpu.pipeline_mode<synchronous>, transform_indices = @transform_27, window_bounds = array<i64: 2, 1, 128>}, {pipeline_mode = #tpu.pipeline_mode<synchronous>, transform_indices = @transform_28, window_bounds = array<i64: 128, 64>}, {pipeline_mode = #tpu.pipeline_mode<synchronous>, transform_indices = @transform_29, window_bounds = array<i64: 1, 64>}, {pipeline_mode = #tpu.pipeline_mode<synchronous>, transform_indices = @transform_30, window_bounds = array<i64: 64, 8>}, {pipeline_mode = #tpu.pipeline_mode<synchronous>, transform_indices = @transform_31, window_bounds = array<i64: 1, 8>}, {transform_indices = @transform_32, window_bounds = array<i64: 1, 1, 8>}]} {
    %c0 = arith.constant 0 : index
    %c0_0 = arith.constant 0 : index
    %c0_1 = arith.constant 0 : index
    %0 = vector.load %arg1[%c0, %c0_0, %c0_1] : memref<1x16x1024xf32, #tpu.memory_space<vmem>>, vector<1x16x1024xf32>
    %1 = vector.shape_cast %0 : vector<1x16x1024xf32> to vector<16x1024xf32>
    %c0_2 = arith.constant 0 : index
    %c0_3 = arith.constant 0 : index
    %2 = vector.load %arg2[%c0_2, %c0_3] : memref<32x16xf32, #tpu.memory_space<vmem>>, vector<32x16xf32>
    %cst = arith.constant dense<0.000000e+00> : vector<32x1024xf32>
    %3 = tpu.matmul %2, %1, %cst {dimension_numbers = #tpu.dot_dimension_numbers<[1], [0], [0], [1], [0, 0, 1, 1], [], []>} : vector<32x16xf32>, vector<16x1024xf32>, vector<32x1024xf32> -> vector<32x1024xf32>
    %c0_4 = arith.constant 0 : index
    %c0_5 = arith.constant 0 : index
    %4 = vector.load %arg3[%c0_4, %c0_5] : memref<32x1xf32, #tpu.memory_space<vmem>>, vector<32x1xf32>
    %5 = vector.broadcast %4 : vector<32x1xf32> to vector<32x1024xf32>
    %6 = arith.addf %3, %5 : vector<32x1024xf32>
    %cst_6 = arith.constant 0.000000e+00 : f32
    %7 = vector.broadcast %cst_6 : f32 to vector<32x1024xf32>
    %8 = arith.maximumf %6, %7 : vector<32x1024xf32>
    %c0_7 = arith.constant 0 : index
    %c0_8 = arith.constant 0 : index
    %9 = vector.load %arg4[%c0_7, %c0_8] : memref<32x1xf32, #tpu.memory_space<vmem>>, vector<32x1xf32>
    %10 = vector.broadcast %9 : vector<32x1xf32> to vector<32x1024xf32>
    %11 = arith.mulf %8, %10 : vector<32x1024xf32>
    %c0_9 = arith.constant 0 : index
    %c0_10 = arith.constant 0 : index
    %12 = vector.load %arg5[%c0_9, %c0_10] : memref<32x1xf32, #tpu.memory_space<vmem>>, vector<32x1xf32>
    %13 = vector.broadcast %12 : vector<32x1xf32> to vector<32x1024xf32>
    %14 = arith.addf %11, %13 : vector<32x1024xf32>
    %c1023_i32 = arith.constant 1023 : i32
    %15 = tpu.dynamic_rotate %14 by %c1023_i32 dim 1 : vector<32x1024xf32>, i32 -> vector<32x1024xf32>
    %16 = arith.maximumf %14, %15 : vector<32x1024xf32>
    %c1022_i32 = arith.constant 1022 : i32
    %17 = tpu.dynamic_rotate %14 by %c1022_i32 dim 1 : vector<32x1024xf32>, i32 -> vector<32x1024xf32>
    %18 = arith.maximumf %16, %17 : vector<32x1024xf32>
    %c1021_i32 = arith.constant 1021 : i32
    %19 = tpu.dynamic_rotate %14 by %c1021_i32 dim 1 : vector<32x1024xf32>, i32 -> vector<32x1024xf32>
    %20 = arith.maximumf %18, %19 : vector<32x1024xf32>
    %c0_11 = arith.constant 0 : index
    %c0_12 = arith.constant 0 : index
    %21 = vector.load %arg10[%c0_11, %c0_12] : memref<1024x256xf32, #tpu.memory_space<vmem>>, vector<1024x256xf32>
    %cst_13 = arith.constant dense<0.000000e+00> : vector<32x256xf32>
    %22 = tpu.matmul %20, %21, %cst_13 {dimension_numbers = #tpu.dot_dimension_numbers<[1], [0], [0], [1], [0, 0, 1, 1], [], []>} : vector<32x1024xf32>, vector<1024x256xf32>, vector<32x256xf32> -> vector<32x256xf32>
    %c0_14 = arith.constant 0 : index
    %c0_15 = arith.constant 0 : index
    %23 = vector.load %arg11[%c0_14, %c0_15] : memref<16x256xf32, #tpu.memory_space<vmem>>, vector<16x256xf32>
    %c7_i32 = arith.constant 7 : i32
    %24 = tpu.dynamic_rotate %22 by %c7_i32 dim 1 : vector<32x256xf32>, i32 -> vector<32x256xf32>
    %25 = vector.extract_strided_slice %23 {offsets = [0, 0], sizes = [1, 256], strides = [1, 1]} : vector<16x256xf32> to vector<1x256xf32>
    %26 = vector.broadcast %25 : vector<1x256xf32> to vector<32x256xf32>
    %27 = arith.mulf %26, %24 : vector<32x256xf32>
    %c6_i32 = arith.constant 6 : i32
    %28 = tpu.dynamic_rotate %22 by %c6_i32 dim 1 : vector<32x256xf32>, i32 -> vector<32x256xf32>
    %29 = vector.extract_strided_slice %23 {offsets = [1, 0], sizes = [1, 256], strides = [1, 1]} : vector<16x256xf32> to vector<1x256xf32>
    %30 = vector.broadcast %29 : vector<1x256xf32> to vector<32x256xf32>
    %31 = arith.mulf %30, %28 : vector<32x256xf32>
    %c5_i32 = arith.constant 5 : i32
    %32 = tpu.dynamic_rotate %22 by %c5_i32 dim 1 : vector<32x256xf32>, i32 -> vector<32x256xf32>
    %33 = vector.extract_strided_slice %23 {offsets = [2, 0], sizes = [1, 256], strides = [1, 1]} : vector<16x256xf32> to vector<1x256xf32>
    %34 = vector.broadcast %33 : vector<1x256xf32> to vector<32x256xf32>
    %35 = arith.mulf %34, %32 : vector<32x256xf32>
    %c4_i32 = arith.constant 4 : i32
    %36 = tpu.dynamic_rotate %22 by %c4_i32 dim 1 : vector<32x256xf32>, i32 -> vector<32x256xf32>
    %37 = vector.extract_strided_slice %23 {offsets = [3, 0], sizes = [1, 256], strides = [1, 1]} : vector<16x256xf32> to vector<1x256xf32>
    %38 = vector.broadcast %37 : vector<1x256xf32> to vector<32x256xf32>
    %39 = arith.mulf %38, %36 : vector<32x256xf32>
    %c3_i32 = arith.constant 3 : i32
    %40 = tpu.dynamic_rotate %22 by %c3_i32 dim 1 : vector<32x256xf32>, i32 -> vector<32x256xf32>
    %41 = vector.extract_strided_slice %23 {offsets = [4, 0], sizes = [1, 256], strides = [1, 1]} : vector<16x256xf32> to vector<1x256xf32>
    %42 = vector.broadcast %41 : vector<1x256xf32> to vector<32x256xf32>
    %43 = arith.mulf %42, %40 : vector<32x256xf32>
    %c2_i32 = arith.constant 2 : i32
    %44 = tpu.dynamic_rotate %22 by %c2_i32 dim 1 : vector<32x256xf32>, i32 -> vector<32x256xf32>
    %45 = vector.extract_strided_slice %23 {offsets = [5, 0], sizes = [1, 256], strides = [1, 1]} : vector<16x256xf32> to vector<1x256xf32>
    %46 = vector.broadcast %45 : vector<1x256xf32> to vector<32x256xf32>
    %47 = arith.mulf %46, %44 : vector<32x256xf32>
    %c1_i32 = arith.constant 1 : i32
    %48 = tpu.dynamic_rotate %22 by %c1_i32 dim 1 : vector<32x256xf32>, i32 -> vector<32x256xf32>
    %49 = vector.extract_strided_slice %23 {offsets = [6, 0], sizes = [1, 256], strides = [1, 1]} : vector<16x256xf32> to vector<1x256xf32>
    %50 = vector.broadcast %49 : vector<1x256xf32> to vector<32x256xf32>
    %51 = arith.mulf %50, %48 : vector<32x256xf32>
    %52 = vector.extract_strided_slice %23 {offsets = [7, 0], sizes = [1, 256], strides = [1, 1]} : vector<16x256xf32> to vector<1x256xf32>
    %53 = vector.broadcast %52 : vector<1x256xf32> to vector<32x256xf32>
    %54 = arith.mulf %53, %22 : vector<32x256xf32>
    %c255_i32 = arith.constant 255 : i32
    %55 = tpu.dynamic_rotate %22 by %c255_i32 dim 1 : vector<32x256xf32>, i32 -> vector<32x256xf32>
    %56 = vector.extract_strided_slice %23 {offsets = [8, 0], sizes = [1, 256], strides = [1, 1]} : vector<16x256xf32> to vector<1x256xf32>
    %57 = vector.broadcast %56 : vector<1x256xf32> to vector<32x256xf32>
    %58 = arith.mulf %57, %55 : vector<32x256xf32>
    %c254_i32 = arith.constant 254 : i32
    %59 = tpu.dynamic_rotate %22 by %c254_i32 dim 1 : vector<32x256xf32>, i32 -> vector<32x256xf32>
    %60 = vector.extract_strided_slice %23 {offsets = [9, 0], sizes = [1, 256], strides = [1, 1]} : vector<16x256xf32> to vector<1x256xf32>
    %61 = vector.broadcast %60 : vector<1x256xf32> to vector<32x256xf32>
    %62 = arith.mulf %61, %59 : vector<32x256xf32>
    %c253_i32 = arith.constant 253 : i32
    %63 = tpu.dynamic_rotate %22 by %c253_i32 dim 1 : vector<32x256xf32>, i32 -> vector<32x256xf32>
    %64 = vector.extract_strided_slice %23 {offsets = [10, 0], sizes = [1, 256], strides = [1, 1]} : vector<16x256xf32> to vector<1x256xf32>
    %65 = vector.broadcast %64 : vector<1x256xf32> to vector<32x256xf32>
    %66 = arith.mulf %65, %63 : vector<32x256xf32>
    %c252_i32 = arith.constant 252 : i32
    %67 = tpu.dynamic_rotate %22 by %c252_i32 dim 1 : vector<32x256xf32>, i32 -> vector<32x256xf32>
    %68 = vector.extract_strided_slice %23 {offsets = [11, 0], sizes = [1, 256], strides = [1, 1]} : vector<16x256xf32> to vector<1x256xf32>
    %69 = vector.broadcast %68 : vector<1x256xf32> to vector<32x256xf32>
    %70 = arith.mulf %69, %67 : vector<32x256xf32>
    %c251_i32 = arith.constant 251 : i32
    %71 = tpu.dynamic_rotate %22 by %c251_i32 dim 1 : vector<32x256xf32>, i32 -> vector<32x256xf32>
    %72 = vector.extract_strided_slice %23 {offsets = [12, 0], sizes = [1, 256], strides = [1, 1]} : vector<16x256xf32> to vector<1x256xf32>
    %73 = vector.broadcast %72 : vector<1x256xf32> to vector<32x256xf32>
    %74 = arith.mulf %73, %71 : vector<32x256xf32>
    %c250_i32 = arith.constant 250 : i32
    %75 = tpu.dynamic_rotate %22 by %c250_i32 dim 1 : vector<32x256xf32>, i32 -> vector<32x256xf32>
    %76 = vector.extract_strided_slice %23 {offsets = [13, 0], sizes = [1, 256], strides = [1, 1]} : vector<16x256xf32> to vector<1x256xf32>
    %77 = vector.broadcast %76 : vector<1x256xf32> to vector<32x256xf32>
    %78 = arith.mulf %77, %75 : vector<32x256xf32>
    %c249_i32 = arith.constant 249 : i32
    %79 = tpu.dynamic_rotate %22 by %c249_i32 dim 1 : vector<32x256xf32>, i32 -> vector<32x256xf32>
    %80 = vector.extract_strided_slice %23 {offsets = [14, 0], sizes = [1, 256], strides = [1, 1]} : vector<16x256xf32> to vector<1x256xf32>
    %81 = vector.broadcast %80 : vector<1x256xf32> to vector<32x256xf32>
    %82 = arith.mulf %81, %79 : vector<32x256xf32>
    %c248_i32 = arith.constant 248 : i32
    %83 = tpu.dynamic_rotate %22 by %c248_i32 dim 1 : vector<32x256xf32>, i32 -> vector<32x256xf32>
    %84 = vector.extract_strided_slice %23 {offsets = [15, 0], sizes = [1, 256], strides = [1, 1]} : vector<16x256xf32> to vector<1x256xf32>
    %85 = vector.broadcast %84 : vector<1x256xf32> to vector<32x256xf32>
    %86 = arith.mulf %85, %83 : vector<32x256xf32>
    %87 = tpu.concatenate %27, %31, %35, %39, %43, %47, %51, %54, %58, %62, %66, %70, %74, %78, %82, %86 in 0 : vector<32x256xf32>, vector<32x256xf32>, vector<32x256xf32>, vector<32x256xf32>, vector<32x256xf32>, vector<32x256xf32>, vector<32x256xf32>, vector<32x256xf32>, vector<32x256xf32>, vector<32x256xf32>, vector<32x256xf32>, vector<32x256xf32>, vector<32x256xf32>, vector<32x256xf32>, vector<32x256xf32>, vector<32x256xf32> -> vector<512x256xf32>
    %c0_16 = arith.constant 0 : index
    %c0_17 = arith.constant 0 : index
    %88 = vector.load %arg6[%c0_16, %c0_17] : memref<64x512xf32, #tpu.memory_space<vmem>>, vector<64x512xf32>
    %cst_18 = arith.constant dense<0.000000e+00> : vector<64x256xf32>
    %89 = tpu.matmul %88, %87, %cst_18 {dimension_numbers = #tpu.dot_dimension_numbers<[1], [0], [0], [1], [0, 0, 1, 1], [], []>} : vector<64x512xf32>, vector<512x256xf32>, vector<64x256xf32> -> vector<64x256xf32>
    %c0_19 = arith.constant 0 : index
    %c0_20 = arith.constant 0 : index
    %90 = vector.load %arg7[%c0_19, %c0_20] : memref<64x1xf32, #tpu.memory_space<vmem>>, vector<64x1xf32>
    %91 = vector.broadcast %90 : vector<64x1xf32> to vector<64x256xf32>
    %92 = arith.addf %89, %91 : vector<64x256xf32>
    %cst_21 = arith.constant 0.000000e+00 : f32
    %93 = vector.broadcast %cst_21 : f32 to vector<64x256xf32>
    %94 = arith.maximumf %92, %93 : vector<64x256xf32>
    %c0_22 = arith.constant 0 : index
    %c0_23 = arith.constant 0 : index
    %95 = vector.load %arg8[%c0_22, %c0_23] : memref<64x1xf32, #tpu.memory_space<vmem>>, vector<64x1xf32>
    %96 = vector.broadcast %95 : vector<64x1xf32> to vector<64x256xf32>
    %97 = arith.mulf %94, %96 : vector<64x256xf32>
    %c0_24 = arith.constant 0 : index
    %c0_25 = arith.constant 0 : index
    %98 = vector.load %arg9[%c0_24, %c0_25] : memref<64x1xf32, #tpu.memory_space<vmem>>, vector<64x1xf32>
    %99 = vector.broadcast %98 : vector<64x1xf32> to vector<64x256xf32>
    %100 = arith.addf %97, %99 : vector<64x256xf32>
    %c255_i32_26 = arith.constant 255 : i32
    %101 = tpu.dynamic_rotate %100 by %c255_i32_26 dim 1 : vector<64x256xf32>, i32 -> vector<64x256xf32>
    %102 = arith.maximumf %100, %101 : vector<64x256xf32>
    %c254_i32_27 = arith.constant 254 : i32
    %103 = tpu.dynamic_rotate %100 by %c254_i32_27 dim 1 : vector<64x256xf32>, i32 -> vector<64x256xf32>
    %104 = arith.maximumf %102, %103 : vector<64x256xf32>
    %c253_i32_28 = arith.constant 253 : i32
    %105 = tpu.dynamic_rotate %100 by %c253_i32_28 dim 1 : vector<64x256xf32>, i32 -> vector<64x256xf32>
    %106 = arith.maximumf %104, %105 : vector<64x256xf32>
    %c0_29 = arith.constant 0 : index
    %c0_30 = arith.constant 0 : index
    %107 = vector.load %arg12[%c0_29, %c0_30] : memref<256x4xf32, #tpu.memory_space<vmem>>, vector<256x4xf32>
    %cst_31 = arith.constant dense<0.000000e+00> : vector<64x4xf32>
    %108 = tpu.matmul %106, %107, %cst_31 {dimension_numbers = #tpu.dot_dimension_numbers<[1], [0], [0], [1], [0, 0, 1, 1], [], []>} : vector<64x256xf32>, vector<256x4xf32>, vector<64x4xf32> -> vector<64x4xf32>
    %c0_32 = arith.constant 0 : index
    %c0_33 = arith.constant 0 : index
    %109 = vector.load %arg13[%c0_32, %c0_33] : memref<64x128xf32, #tpu.memory_space<vmem>>, vector<64x128xf32>
    %cst_34 = arith.constant dense<0.000000e+00> : vector<4x128xf32>
    %110 = tpu.matmul %108, %109, %cst_34 {dimension_numbers = #tpu.dot_dimension_numbers<[0], [0], [1], [1], [0, 1, 1, 1], [], []>} : vector<64x4xf32>, vector<64x128xf32>, vector<4x128xf32> -> vector<4x128xf32>
    %c0_35 = arith.constant 0 : index
    %c0_36 = arith.constant 0 : index
    %111 = vector.load %arg14[%c0_35, %c0_36] : memref<1x128xf32, #tpu.memory_space<vmem>>, vector<1x128xf32>
    %112 = vector.broadcast %111 : vector<1x128xf32> to vector<4x128xf32>
    %113 = arith.addf %110, %112 : vector<4x128xf32>
    %c0_37 = arith.constant 0 : index
    %c0_38 = arith.constant 0 : index
    %114 = vector.load %arg15[%c0_37, %c0_38] : memref<1x128xf32, #tpu.memory_space<vmem>>, vector<1x128xf32>
    %115 = tpu.concatenate %114, %113 in 0 : vector<1x128xf32>, vector<4x128xf32> -> vector<5x128xf32>
    %c0_39 = arith.constant 0 : index
    %c0_40 = arith.constant 0 : index
    %116 = vector.load %arg16[%c0_39, %c0_40] : memref<5x128xf32, #tpu.memory_space<vmem>>, vector<5x128xf32>
    %117 = arith.addf %115, %116 : vector<5x128xf32>
    %c0_41 = arith.constant 0 : index
    %c0_42 = arith.constant 0 : index
    %c0_43 = arith.constant 0 : index
    %118 = vector.load %arg17[%c0_41, %c0_42, %c0_43] : memref<2x128x384xf32, #tpu.memory_space<vmem>>, vector<1x128x384xf32>
    %119 = vector.shape_cast %118 : vector<1x128x384xf32> to vector<128x384xf32>
    %cst_44 = arith.constant dense<0.000000e+00> : vector<5x384xf32>
    %120 = tpu.matmul %117, %119, %cst_44 {dimension_numbers = #tpu.dot_dimension_numbers<[1], [0], [0], [1], [0, 0, 1, 1], [], []>} : vector<5x128xf32>, vector<128x384xf32>, vector<5x384xf32> -> vector<5x384xf32>
    %c0_45 = arith.constant 0 : index
    %c0_46 = arith.constant 0 : index
    %c0_47 = arith.constant 0 : index
    %121 = vector.load %arg18[%c0_45, %c0_46, %c0_47] : memref<2x1x384xf32, #tpu.memory_space<vmem>>, vector<1x1x384xf32>
    %122 = vector.shape_cast %121 : vector<1x1x384xf32> to vector<1x384xf32>
    %123 = vector.broadcast %122 : vector<1x384xf32> to vector<5x384xf32>
    %124 = arith.addf %120, %123 : vector<5x384xf32>
    %125 = vector.extract_strided_slice %124 {offsets = [0, 0], sizes = [5, 32], strides = [1, 1]} : vector<5x384xf32> to vector<5x32xf32>
    %126 = vector.extract_strided_slice %124 {offsets = [0, 128], sizes = [5, 32], strides = [1, 1]} : vector<5x384xf32> to vector<5x32xf32>
    %127 = vector.extract_strided_slice %124 {offsets = [0, 256], sizes = [5, 32], strides = [1, 1]} : vector<5x384xf32> to vector<5x32xf32>
    %cst_48 = arith.constant dense<0.000000e+00> : vector<5x5xf32>
    %128 = tpu.matmul %125, %126, %cst_48 {dimension_numbers = #tpu.dot_dimension_numbers<[1], [1], [0], [0], [0, 0, 1, 0], [], []>} : vector<5x32xf32>, vector<5x32xf32>, vector<5x5xf32> -> vector<5x5xf32>
    %cst_49 = arith.constant dense<0xFF800000> : vector<5xf32>
    %129 = vector.multi_reduction <maximumf>, %128, %cst_49 [1] : vector<5x5xf32> to vector<5xf32>
    %130 = vector.shape_cast %129 : vector<5xf32> to vector<5x1xf32>
    %131 = vector.broadcast %130 : vector<5x1xf32> to vector<5x5xf32>
    %132 = arith.subf %128, %131 : vector<5x5xf32>
    %133 = math.exp %132 : vector<5x5xf32>
    %cst_50 = arith.constant dense<0.000000e+00> : vector<5xf32>
    %134 = vector.multi_reduction <add>, %133, %cst_50 [1] : vector<5x5xf32> to vector<5xf32>
    %135 = vector.shape_cast %134 : vector<5xf32> to vector<5x1xf32>
    %136 = vector.broadcast %135 : vector<5x1xf32> to vector<5x5xf32>
    %137 = arith.divf %133, %136 : vector<5x5xf32>
    %cst_51 = arith.constant dense<0.000000e+00> : vector<5x32xf32>
    %138 = tpu.matmul %137, %127, %cst_51 {dimension_numbers = #tpu.dot_dimension_numbers<[1], [0], [0], [1], [0, 0, 1, 1], [], []>} : vector<5x5xf32>, vector<5x32xf32>, vector<5x32xf32> -> vector<5x32xf32>
    %139 = vector.extract_strided_slice %124 {offsets = [0, 32], sizes = [5, 32], strides = [1, 1]} : vector<5x384xf32> to vector<5x32xf32>
    %140 = vector.extract_strided_slice %124 {offsets = [0, 160], sizes = [5, 32], strides = [1, 1]} : vector<5x384xf32> to vector<5x32xf32>
    %141 = vector.extract_strided_slice %124 {offsets = [0, 288], sizes = [5, 32], strides = [1, 1]} : vector<5x384xf32> to vector<5x32xf32>
    %cst_52 = arith.constant dense<0.000000e+00> : vector<5x5xf32>
    %142 = tpu.matmul %139, %140, %cst_52 {dimension_numbers = #tpu.dot_dimension_numbers<[1], [1], [0], [0], [0, 0, 1, 0], [], []>} : vector<5x32xf32>, vector<5x32xf32>, vector<5x5xf32> -> vector<5x5xf32>
    %cst_53 = arith.constant dense<0xFF800000> : vector<5xf32>
    %143 = vector.multi_reduction <maximumf>, %142, %cst_53 [1] : vector<5x5xf32> to vector<5xf32>
    %144 = vector.shape_cast %143 : vector<5xf32> to vector<5x1xf32>
    %145 = vector.broadcast %144 : vector<5x1xf32> to vector<5x5xf32>
    %146 = arith.subf %142, %145 : vector<5x5xf32>
    %147 = math.exp %146 : vector<5x5xf32>
    %cst_54 = arith.constant dense<0.000000e+00> : vector<5xf32>
    %148 = vector.multi_reduction <add>, %147, %cst_54 [1] : vector<5x5xf32> to vector<5xf32>
    %149 = vector.shape_cast %148 : vector<5xf32> to vector<5x1xf32>
    %150 = vector.broadcast %149 : vector<5x1xf32> to vector<5x5xf32>
    %151 = arith.divf %147, %150 : vector<5x5xf32>
    %cst_55 = arith.constant dense<0.000000e+00> : vector<5x32xf32>
    %152 = tpu.matmul %151, %141, %cst_55 {dimension_numbers = #tpu.dot_dimension_numbers<[1], [0], [0], [1], [0, 0, 1, 1], [], []>} : vector<5x5xf32>, vector<5x32xf32>, vector<5x32xf32> -> vector<5x32xf32>
    %153 = vector.extract_strided_slice %124 {offsets = [0, 64], sizes = [5, 32], strides = [1, 1]} : vector<5x384xf32> to vector<5x32xf32>
    %154 = vector.extract_strided_slice %124 {offsets = [0, 192], sizes = [5, 32], strides = [1, 1]} : vector<5x384xf32> to vector<5x32xf32>
    %155 = vector.extract_strided_slice %124 {offsets = [0, 320], sizes = [5, 32], strides = [1, 1]} : vector<5x384xf32> to vector<5x32xf32>
    %cst_56 = arith.constant dense<0.000000e+00> : vector<5x5xf32>
    %156 = tpu.matmul %153, %154, %cst_56 {dimension_numbers = #tpu.dot_dimension_numbers<[1], [1], [0], [0], [0, 0, 1, 0], [], []>} : vector<5x32xf32>, vector<5x32xf32>, vector<5x5xf32> -> vector<5x5xf32>
    %cst_57 = arith.constant dense<0xFF800000> : vector<5xf32>
    %157 = vector.multi_reduction <maximumf>, %156, %cst_57 [1] : vector<5x5xf32> to vector<5xf32>
    %158 = vector.shape_cast %157 : vector<5xf32> to vector<5x1xf32>
    %159 = vector.broadcast %158 : vector<5x1xf32> to vector<5x5xf32>
    %160 = arith.subf %156, %159 : vector<5x5xf32>
    %161 = math.exp %160 : vector<5x5xf32>
    %cst_58 = arith.constant dense<0.000000e+00> : vector<5xf32>
    %162 = vector.multi_reduction <add>, %161, %cst_58 [1] : vector<5x5xf32> to vector<5xf32>
    %163 = vector.shape_cast %162 : vector<5xf32> to vector<5x1xf32>
    %164 = vector.broadcast %163 : vector<5x1xf32> to vector<5x5xf32>
    %165 = arith.divf %161, %164 : vector<5x5xf32>
    %cst_59 = arith.constant dense<0.000000e+00> : vector<5x32xf32>
    %166 = tpu.matmul %165, %155, %cst_59 {dimension_numbers = #tpu.dot_dimension_numbers<[1], [0], [0], [1], [0, 0, 1, 1], [], []>} : vector<5x5xf32>, vector<5x32xf32>, vector<5x32xf32> -> vector<5x32xf32>
    %167 = vector.extract_strided_slice %124 {offsets = [0, 96], sizes = [5, 32], strides = [1, 1]} : vector<5x384xf32> to vector<5x32xf32>
    %168 = vector.extract_strided_slice %124 {offsets = [0, 224], sizes = [5, 32], strides = [1, 1]} : vector<5x384xf32> to vector<5x32xf32>
    %169 = vector.extract_strided_slice %124 {offsets = [0, 352], sizes = [5, 32], strides = [1, 1]} : vector<5x384xf32> to vector<5x32xf32>
    %cst_60 = arith.constant dense<0.000000e+00> : vector<5x5xf32>
    %170 = tpu.matmul %167, %168, %cst_60 {dimension_numbers = #tpu.dot_dimension_numbers<[1], [1], [0], [0], [0, 0, 1, 0], [], []>} : vector<5x32xf32>, vector<5x32xf32>, vector<5x5xf32> -> vector<5x5xf32>
    %cst_61 = arith.constant dense<0xFF800000> : vector<5xf32>
    %171 = vector.multi_reduction <maximumf>, %170, %cst_61 [1] : vector<5x5xf32> to vector<5xf32>
    %172 = vector.shape_cast %171 : vector<5xf32> to vector<5x1xf32>
    %173 = vector.broadcast %172 : vector<5x1xf32> to vector<5x5xf32>
    %174 = arith.subf %170, %173 : vector<5x5xf32>
    %175 = math.exp %174 : vector<5x5xf32>
    %cst_62 = arith.constant dense<0.000000e+00> : vector<5xf32>
    %176 = vector.multi_reduction <add>, %175, %cst_62 [1] : vector<5x5xf32> to vector<5xf32>
    %177 = vector.shape_cast %176 : vector<5xf32> to vector<5x1xf32>
    %178 = vector.broadcast %177 : vector<5x1xf32> to vector<5x5xf32>
    %179 = arith.divf %175, %178 : vector<5x5xf32>
    %cst_63 = arith.constant dense<0.000000e+00> : vector<5x32xf32>
    %180 = tpu.matmul %179, %169, %cst_63 {dimension_numbers = #tpu.dot_dimension_numbers<[1], [0], [0], [1], [0, 0, 1, 1], [], []>} : vector<5x5xf32>, vector<5x32xf32>, vector<5x32xf32> -> vector<5x32xf32>
    %181 = tpu.concatenate %138, %152, %166, %180 in 1 : vector<5x32xf32>, vector<5x32xf32>, vector<5x32xf32>, vector<5x32xf32> -> vector<5x128xf32>
    %c0_64 = arith.constant 0 : index
    %c0_65 = arith.constant 0 : index
    %c0_66 = arith.constant 0 : index
    %182 = vector.load %arg19[%c0_64, %c0_65, %c0_66] : memref<2x128x128xf32, #tpu.memory_space<vmem>>, vector<1x128x128xf32>
    %183 = vector.shape_cast %182 : vector<1x128x128xf32> to vector<128x128xf32>
    %cst_67 = arith.constant dense<0.000000e+00> : vector<5x128xf32>
    %184 = tpu.matmul %181, %183, %cst_67 {dimension_numbers = #tpu.dot_dimension_numbers<[1], [0], [0], [1], [0, 0, 1, 1], [], []>} : vector<5x128xf32>, vector<128x128xf32>, vector<5x128xf32> -> vector<5x128xf32>
    %c0_68 = arith.constant 0 : index
    %c0_69 = arith.constant 0 : index
    %c0_70 = arith.constant 0 : index
    %185 = vector.load %arg20[%c0_68, %c0_69, %c0_70] : memref<2x1x128xf32, #tpu.memory_space<vmem>>, vector<1x1x128xf32>
    %186 = vector.shape_cast %185 : vector<1x1x128xf32> to vector<1x128xf32>
    %187 = vector.broadcast %186 : vector<1x128xf32> to vector<5x128xf32>
    %188 = arith.addf %184, %187 : vector<5x128xf32>
    %189 = arith.addf %117, %188 : vector<5x128xf32>
    %c0_71 = arith.constant 0 : index
    %c0_72 = arith.constant 0 : index
    %c0_73 = arith.constant 0 : index
    %190 = vector.load %arg21[%c0_71, %c0_72, %c0_73] : memref<2x1x128xf32, #tpu.memory_space<vmem>>, vector<1x1x128xf32>
    %191 = vector.shape_cast %190 : vector<1x1x128xf32> to vector<1x128xf32>
    %c0_74 = arith.constant 0 : index
    %c0_75 = arith.constant 0 : index
    %c0_76 = arith.constant 0 : index
    %192 = vector.load %arg22[%c0_74, %c0_75, %c0_76] : memref<2x1x128xf32, #tpu.memory_space<vmem>>, vector<1x1x128xf32>
    %193 = vector.shape_cast %192 : vector<1x1x128xf32> to vector<1x128xf32>
    %cst_77 = arith.constant dense<0.000000e+00> : vector<5xf32>
    %194 = vector.multi_reduction <add>, %189, %cst_77 [1] : vector<5x128xf32> to vector<5xf32>
    %195 = vector.shape_cast %194 : vector<5xf32> to vector<5x1xf32>
    %cst_78 = arith.constant 1.280000e+02 : f32
    %196 = vector.broadcast %cst_78 : f32 to vector<5x1xf32>
    %197 = arith.divf %195, %196 : vector<5x1xf32>
    %198 = vector.broadcast %197 : vector<5x1xf32> to vector<5x128xf32>
    %199 = arith.subf %189, %198 : vector<5x128xf32>
    %200 = arith.mulf %199, %199 : vector<5x128xf32>
    %cst_79 = arith.constant dense<0.000000e+00> : vector<5xf32>
    %201 = vector.multi_reduction <add>, %200, %cst_79 [1] : vector<5x128xf32> to vector<5xf32>
    %202 = vector.shape_cast %201 : vector<5xf32> to vector<5x1xf32>
    %cst_80 = arith.constant 1.280000e+02 : f32
    %203 = vector.broadcast %cst_80 : f32 to vector<5x1xf32>
    %204 = arith.divf %202, %203 : vector<5x1xf32>
    %cst_81 = arith.constant 9.99999974E-6 : f32
    %205 = vector.broadcast %cst_81 : f32 to vector<5x1xf32>
    %206 = arith.addf %204, %205 : vector<5x1xf32>
    %207 = math.rsqrt %206 : vector<5x1xf32>
    %208 = vector.broadcast %207 : vector<5x1xf32> to vector<5x128xf32>
    %209 = arith.mulf %199, %208 : vector<5x128xf32>
    %210 = vector.broadcast %191 : vector<1x128xf32> to vector<5x128xf32>
    %211 = arith.mulf %209, %210 : vector<5x128xf32>
    %212 = vector.broadcast %193 : vector<1x128xf32> to vector<5x128xf32>
    %213 = arith.addf %211, %212 : vector<5x128xf32>
    %c0_82 = arith.constant 0 : index
    %c0_83 = arith.constant 0 : index
    %c0_84 = arith.constant 0 : index
    %214 = vector.load %arg25[%c0_82, %c0_83, %c0_84] : memref<2x128x256xf32, #tpu.memory_space<vmem>>, vector<1x128x256xf32>
    %215 = vector.shape_cast %214 : vector<1x128x256xf32> to vector<128x256xf32>
    %cst_85 = arith.constant dense<0.000000e+00> : vector<5x256xf32>
    %216 = tpu.matmul %213, %215, %cst_85 {dimension_numbers = #tpu.dot_dimension_numbers<[1], [0], [0], [1], [0, 0, 1, 1], [], []>} : vector<5x128xf32>, vector<128x256xf32>, vector<5x256xf32> -> vector<5x256xf32>
    %c0_86 = arith.constant 0 : index
    %c0_87 = arith.constant 0 : index
    %c0_88 = arith.constant 0 : index
    %217 = vector.load %arg26[%c0_86, %c0_87, %c0_88] : memref<2x1x256xf32, #tpu.memory_space<vmem>>, vector<1x1x256xf32>
    %218 = vector.shape_cast %217 : vector<1x1x256xf32> to vector<1x256xf32>
    %219 = vector.broadcast %218 : vector<1x256xf32> to vector<5x256xf32>
    %220 = arith.addf %216, %219 : vector<5x256xf32>
    %cst_89 = arith.constant 0.000000e+00 : f32
    %221 = vector.broadcast %cst_89 : f32 to vector<5x256xf32>
    %222 = arith.maximumf %220, %221 : vector<5x256xf32>
    %c0_90 = arith.constant 0 : index
    %c0_91 = arith.constant 0 : index
    %c0_92 = arith.constant 0 : index
    %223 = vector.load %arg27[%c0_90, %c0_91, %c0_92] : memref<2x256x128xf32, #tpu.memory_space<vmem>>, vector<1x256x128xf32>
    %224 = vector.shape_cast %223 : vector<1x256x128xf32> to vector<256x128xf32>
    %cst_93 = arith.constant dense<0.000000e+00> : vector<5x128xf32>
    %225 = tpu.matmul %222, %224, %cst_93 {dimension_numbers = #tpu.dot_dimension_numbers<[1], [0], [0], [1], [0, 0, 1, 1], [], []>} : vector<5x256xf32>, vector<256x128xf32>, vector<5x128xf32> -> vector<5x128xf32>
    %c0_94 = arith.constant 0 : index
    %c0_95 = arith.constant 0 : index
    %c0_96 = arith.constant 0 : index
    %226 = vector.load %arg28[%c0_94, %c0_95, %c0_96] : memref<2x1x128xf32, #tpu.memory_space<vmem>>, vector<1x1x128xf32>
    %227 = vector.shape_cast %226 : vector<1x1x128xf32> to vector<1x128xf32>
    %228 = vector.broadcast %227 : vector<1x128xf32> to vector<5x128xf32>
    %229 = arith.addf %225, %228 : vector<5x128xf32>
    %230 = arith.addf %213, %229 : vector<5x128xf32>
    %c0_97 = arith.constant 0 : index
    %c0_98 = arith.constant 0 : index
    %c0_99 = arith.constant 0 : index
    %231 = vector.load %arg23[%c0_97, %c0_98, %c0_99] : memref<2x1x128xf32, #tpu.memory_space<vmem>>, vector<1x1x128xf32>
    %232 = vector.shape_cast %231 : vector<1x1x128xf32> to vector<1x128xf32>
    %c0_100 = arith.constant 0 : index
    %c0_101 = arith.constant 0 : index
    %c0_102 = arith.constant 0 : index
    %233 = vector.load %arg24[%c0_100, %c0_101, %c0_102] : memref<2x1x128xf32, #tpu.memory_space<vmem>>, vector<1x1x128xf32>
    %234 = vector.shape_cast %233 : vector<1x1x128xf32> to vector<1x128xf32>
    %cst_103 = arith.constant dense<0.000000e+00> : vector<5xf32>
    %235 = vector.multi_reduction <add>, %230, %cst_103 [1] : vector<5x128xf32> to vector<5xf32>
    %236 = vector.shape_cast %235 : vector<5xf32> to vector<5x1xf32>
    %cst_104 = arith.constant 1.280000e+02 : f32
    %237 = vector.broadcast %cst_104 : f32 to vector<5x1xf32>
    %238 = arith.divf %236, %237 : vector<5x1xf32>
    %239 = vector.broadcast %238 : vector<5x1xf32> to vector<5x128xf32>
    %240 = arith.subf %230, %239 : vector<5x128xf32>
    %241 = arith.mulf %240, %240 : vector<5x128xf32>
    %cst_105 = arith.constant dense<0.000000e+00> : vector<5xf32>
    %242 = vector.multi_reduction <add>, %241, %cst_105 [1] : vector<5x128xf32> to vector<5xf32>
    %243 = vector.shape_cast %242 : vector<5xf32> to vector<5x1xf32>
    %cst_106 = arith.constant 1.280000e+02 : f32
    %244 = vector.broadcast %cst_106 : f32 to vector<5x1xf32>
    %245 = arith.divf %243, %244 : vector<5x1xf32>
    %cst_107 = arith.constant 9.99999974E-6 : f32
    %246 = vector.broadcast %cst_107 : f32 to vector<5x1xf32>
    %247 = arith.addf %245, %246 : vector<5x1xf32>
    %248 = math.rsqrt %247 : vector<5x1xf32>
    %249 = vector.broadcast %248 : vector<5x1xf32> to vector<5x128xf32>
    %250 = arith.mulf %240, %249 : vector<5x128xf32>
    %251 = vector.broadcast %232 : vector<1x128xf32> to vector<5x128xf32>
    %252 = arith.mulf %250, %251 : vector<5x128xf32>
    %253 = vector.broadcast %234 : vector<1x128xf32> to vector<5x128xf32>
    %254 = arith.addf %252, %253 : vector<5x128xf32>
    %c1 = arith.constant 1 : index
    %c0_108 = arith.constant 0 : index
    %c0_109 = arith.constant 0 : index
    %255 = vector.load %arg17[%c1, %c0_108, %c0_109] : memref<2x128x384xf32, #tpu.memory_space<vmem>>, vector<1x128x384xf32>
    %256 = vector.shape_cast %255 : vector<1x128x384xf32> to vector<128x384xf32>
    %cst_110 = arith.constant dense<0.000000e+00> : vector<5x384xf32>
    %257 = tpu.matmul %254, %256, %cst_110 {dimension_numbers = #tpu.dot_dimension_numbers<[1], [0], [0], [1], [0, 0, 1, 1], [], []>} : vector<5x128xf32>, vector<128x384xf32>, vector<5x384xf32> -> vector<5x384xf32>
    %c1_111 = arith.constant 1 : index
    %c0_112 = arith.constant 0 : index
    %c0_113 = arith.constant 0 : index
    %258 = vector.load %arg18[%c1_111, %c0_112, %c0_113] : memref<2x1x384xf32, #tpu.memory_space<vmem>>, vector<1x1x384xf32>
    %259 = vector.shape_cast %258 : vector<1x1x384xf32> to vector<1x384xf32>
    %260 = vector.broadcast %259 : vector<1x384xf32> to vector<5x384xf32>
    %261 = arith.addf %257, %260 : vector<5x384xf32>
    %262 = vector.extract_strided_slice %261 {offsets = [0, 0], sizes = [5, 32], strides = [1, 1]} : vector<5x384xf32> to vector<5x32xf32>
    %263 = vector.extract_strided_slice %261 {offsets = [0, 128], sizes = [5, 32], strides = [1, 1]} : vector<5x384xf32> to vector<5x32xf32>
    %264 = vector.extract_strided_slice %261 {offsets = [0, 256], sizes = [5, 32], strides = [1, 1]} : vector<5x384xf32> to vector<5x32xf32>
    %cst_114 = arith.constant dense<0.000000e+00> : vector<5x5xf32>
    %265 = tpu.matmul %262, %263, %cst_114 {dimension_numbers = #tpu.dot_dimension_numbers<[1], [1], [0], [0], [0, 0, 1, 0], [], []>} : vector<5x32xf32>, vector<5x32xf32>, vector<5x5xf32> -> vector<5x5xf32>
    %cst_115 = arith.constant dense<0xFF800000> : vector<5xf32>
    %266 = vector.multi_reduction <maximumf>, %265, %cst_115 [1] : vector<5x5xf32> to vector<5xf32>
    %267 = vector.shape_cast %266 : vector<5xf32> to vector<5x1xf32>
    %268 = vector.broadcast %267 : vector<5x1xf32> to vector<5x5xf32>
    %269 = arith.subf %265, %268 : vector<5x5xf32>
    %270 = math.exp %269 : vector<5x5xf32>
    %cst_116 = arith.constant dense<0.000000e+00> : vector<5xf32>
    %271 = vector.multi_reduction <add>, %270, %cst_116 [1] : vector<5x5xf32> to vector<5xf32>
    %272 = vector.shape_cast %271 : vector<5xf32> to vector<5x1xf32>
    %273 = vector.broadcast %272 : vector<5x1xf32> to vector<5x5xf32>
    %274 = arith.divf %270, %273 : vector<5x5xf32>
    %cst_117 = arith.constant dense<0.000000e+00> : vector<5x32xf32>
    %275 = tpu.matmul %274, %264, %cst_117 {dimension_numbers = #tpu.dot_dimension_numbers<[1], [0], [0], [1], [0, 0, 1, 1], [], []>} : vector<5x5xf32>, vector<5x32xf32>, vector<5x32xf32> -> vector<5x32xf32>
    %276 = vector.extract_strided_slice %261 {offsets = [0, 32], sizes = [5, 32], strides = [1, 1]} : vector<5x384xf32> to vector<5x32xf32>
    %277 = vector.extract_strided_slice %261 {offsets = [0, 160], sizes = [5, 32], strides = [1, 1]} : vector<5x384xf32> to vector<5x32xf32>
    %278 = vector.extract_strided_slice %261 {offsets = [0, 288], sizes = [5, 32], strides = [1, 1]} : vector<5x384xf32> to vector<5x32xf32>
    %cst_118 = arith.constant dense<0.000000e+00> : vector<5x5xf32>
    %279 = tpu.matmul %276, %277, %cst_118 {dimension_numbers = #tpu.dot_dimension_numbers<[1], [1], [0], [0], [0, 0, 1, 0], [], []>} : vector<5x32xf32>, vector<5x32xf32>, vector<5x5xf32> -> vector<5x5xf32>
    %cst_119 = arith.constant dense<0xFF800000> : vector<5xf32>
    %280 = vector.multi_reduction <maximumf>, %279, %cst_119 [1] : vector<5x5xf32> to vector<5xf32>
    %281 = vector.shape_cast %280 : vector<5xf32> to vector<5x1xf32>
    %282 = vector.broadcast %281 : vector<5x1xf32> to vector<5x5xf32>
    %283 = arith.subf %279, %282 : vector<5x5xf32>
    %284 = math.exp %283 : vector<5x5xf32>
    %cst_120 = arith.constant dense<0.000000e+00> : vector<5xf32>
    %285 = vector.multi_reduction <add>, %284, %cst_120 [1] : vector<5x5xf32> to vector<5xf32>
    %286 = vector.shape_cast %285 : vector<5xf32> to vector<5x1xf32>
    %287 = vector.broadcast %286 : vector<5x1xf32> to vector<5x5xf32>
    %288 = arith.divf %284, %287 : vector<5x5xf32>
    %cst_121 = arith.constant dense<0.000000e+00> : vector<5x32xf32>
    %289 = tpu.matmul %288, %278, %cst_121 {dimension_numbers = #tpu.dot_dimension_numbers<[1], [0], [0], [1], [0, 0, 1, 1], [], []>} : vector<5x5xf32>, vector<5x32xf32>, vector<5x32xf32> -> vector<5x32xf32>
    %290 = vector.extract_strided_slice %261 {offsets = [0, 64], sizes = [5, 32], strides = [1, 1]} : vector<5x384xf32> to vector<5x32xf32>
    %291 = vector.extract_strided_slice %261 {offsets = [0, 192], sizes = [5, 32], strides = [1, 1]} : vector<5x384xf32> to vector<5x32xf32>
    %292 = vector.extract_strided_slice %261 {offsets = [0, 320], sizes = [5, 32], strides = [1, 1]} : vector<5x384xf32> to vector<5x32xf32>
    %cst_122 = arith.constant dense<0.000000e+00> : vector<5x5xf32>
    %293 = tpu.matmul %290, %291, %cst_122 {dimension_numbers = #tpu.dot_dimension_numbers<[1], [1], [0], [0], [0, 0, 1, 0], [], []>} : vector<5x32xf32>, vector<5x32xf32>, vector<5x5xf32> -> vector<5x5xf32>
    %cst_123 = arith.constant dense<0xFF800000> : vector<5xf32>
    %294 = vector.multi_reduction <maximumf>, %293, %cst_123 [1] : vector<5x5xf32> to vector<5xf32>
    %295 = vector.shape_cast %294 : vector<5xf32> to vector<5x1xf32>
    %296 = vector.broadcast %295 : vector<5x1xf32> to vector<5x5xf32>
    %297 = arith.subf %293, %296 : vector<5x5xf32>
    %298 = math.exp %297 : vector<5x5xf32>
    %cst_124 = arith.constant dense<0.000000e+00> : vector<5xf32>
    %299 = vector.multi_reduction <add>, %298, %cst_124 [1] : vector<5x5xf32> to vector<5xf32>
    %300 = vector.shape_cast %299 : vector<5xf32> to vector<5x1xf32>
    %301 = vector.broadcast %300 : vector<5x1xf32> to vector<5x5xf32>
    %302 = arith.divf %298, %301 : vector<5x5xf32>
    %cst_125 = arith.constant dense<0.000000e+00> : vector<5x32xf32>
    %303 = tpu.matmul %302, %292, %cst_125 {dimension_numbers = #tpu.dot_dimension_numbers<[1], [0], [0], [1], [0, 0, 1, 1], [], []>} : vector<5x5xf32>, vector<5x32xf32>, vector<5x32xf32> -> vector<5x32xf32>
    %304 = vector.extract_strided_slice %261 {offsets = [0, 96], sizes = [5, 32], strides = [1, 1]} : vector<5x384xf32> to vector<5x32xf32>
    %305 = vector.extract_strided_slice %261 {offsets = [0, 224], sizes = [5, 32], strides = [1, 1]} : vector<5x384xf32> to vector<5x32xf32>
    %306 = vector.extract_strided_slice %261 {offsets = [0, 352], sizes = [5, 32], strides = [1, 1]} : vector<5x384xf32> to vector<5x32xf32>
    %cst_126 = arith.constant dense<0.000000e+00> : vector<5x5xf32>
    %307 = tpu.matmul %304, %305, %cst_126 {dimension_numbers = #tpu.dot_dimension_numbers<[1], [1], [0], [0], [0, 0, 1, 0], [], []>} : vector<5x32xf32>, vector<5x32xf32>, vector<5x5xf32> -> vector<5x5xf32>
    %cst_127 = arith.constant dense<0xFF800000> : vector<5xf32>
    %308 = vector.multi_reduction <maximumf>, %307, %cst_127 [1] : vector<5x5xf32> to vector<5xf32>
    %309 = vector.shape_cast %308 : vector<5xf32> to vector<5x1xf32>
    %310 = vector.broadcast %309 : vector<5x1xf32> to vector<5x5xf32>
    %311 = arith.subf %307, %310 : vector<5x5xf32>
    %312 = math.exp %311 : vector<5x5xf32>
    %cst_128 = arith.constant dense<0.000000e+00> : vector<5xf32>
    %313 = vector.multi_reduction <add>, %312, %cst_128 [1] : vector<5x5xf32> to vector<5xf32>
    %314 = vector.shape_cast %313 : vector<5xf32> to vector<5x1xf32>
    %315 = vector.broadcast %314 : vector<5x1xf32> to vector<5x5xf32>
    %316 = arith.divf %312, %315 : vector<5x5xf32>
    %cst_129 = arith.constant dense<0.000000e+00> : vector<5x32xf32>
    %317 = tpu.matmul %316, %306, %cst_129 {dimension_numbers = #tpu.dot_dimension_numbers<[1], [0], [0], [1], [0, 0, 1, 1], [], []>} : vector<5x5xf32>, vector<5x32xf32>, vector<5x32xf32> -> vector<5x32xf32>
    %318 = tpu.concatenate %275, %289, %303, %317 in 1 : vector<5x32xf32>, vector<5x32xf32>, vector<5x32xf32>, vector<5x32xf32> -> vector<5x128xf32>
    %c1_130 = arith.constant 1 : index
    %c0_131 = arith.constant 0 : index
    %c0_132 = arith.constant 0 : index
    %319 = vector.load %arg19[%c1_130, %c0_131, %c0_132] : memref<2x128x128xf32, #tpu.memory_space<vmem>>, vector<1x128x128xf32>
    %320 = vector.shape_cast %319 : vector<1x128x128xf32> to vector<128x128xf32>
    %cst_133 = arith.constant dense<0.000000e+00> : vector<5x128xf32>
    %321 = tpu.matmul %318, %320, %cst_133 {dimension_numbers = #tpu.dot_dimension_numbers<[1], [0], [0], [1], [0, 0, 1, 1], [], []>} : vector<5x128xf32>, vector<128x128xf32>, vector<5x128xf32> -> vector<5x128xf32>
    %c1_134 = arith.constant 1 : index
    %c0_135 = arith.constant 0 : index
    %c0_136 = arith.constant 0 : index
    %322 = vector.load %arg20[%c1_134, %c0_135, %c0_136] : memref<2x1x128xf32, #tpu.memory_space<vmem>>, vector<1x1x128xf32>
    %323 = vector.shape_cast %322 : vector<1x1x128xf32> to vector<1x128xf32>
    %324 = vector.broadcast %323 : vector<1x128xf32> to vector<5x128xf32>
    %325 = arith.addf %321, %324 : vector<5x128xf32>
    %326 = arith.addf %254, %325 : vector<5x128xf32>
    %c1_137 = arith.constant 1 : index
    %c0_138 = arith.constant 0 : index
    %c0_139 = arith.constant 0 : index
    %327 = vector.load %arg21[%c1_137, %c0_138, %c0_139] : memref<2x1x128xf32, #tpu.memory_space<vmem>>, vector<1x1x128xf32>
    %328 = vector.shape_cast %327 : vector<1x1x128xf32> to vector<1x128xf32>
    %c1_140 = arith.constant 1 : index
    %c0_141 = arith.constant 0 : index
    %c0_142 = arith.constant 0 : index
    %329 = vector.load %arg22[%c1_140, %c0_141, %c0_142] : memref<2x1x128xf32, #tpu.memory_space<vmem>>, vector<1x1x128xf32>
    %330 = vector.shape_cast %329 : vector<1x1x128xf32> to vector<1x128xf32>
    %cst_143 = arith.constant dense<0.000000e+00> : vector<5xf32>
    %331 = vector.multi_reduction <add>, %326, %cst_143 [1] : vector<5x128xf32> to vector<5xf32>
    %332 = vector.shape_cast %331 : vector<5xf32> to vector<5x1xf32>
    %cst_144 = arith.constant 1.280000e+02 : f32
    %333 = vector.broadcast %cst_144 : f32 to vector<5x1xf32>
    %334 = arith.divf %332, %333 : vector<5x1xf32>
    %335 = vector.broadcast %334 : vector<5x1xf32> to vector<5x128xf32>
    %336 = arith.subf %326, %335 : vector<5x128xf32>
    %337 = arith.mulf %336, %336 : vector<5x128xf32>
    %cst_145 = arith.constant dense<0.000000e+00> : vector<5xf32>
    %338 = vector.multi_reduction <add>, %337, %cst_145 [1] : vector<5x128xf32> to vector<5xf32>
    %339 = vector.shape_cast %338 : vector<5xf32> to vector<5x1xf32>
    %cst_146 = arith.constant 1.280000e+02 : f32
    %340 = vector.broadcast %cst_146 : f32 to vector<5x1xf32>
    %341 = arith.divf %339, %340 : vector<5x1xf32>
    %cst_147 = arith.constant 9.99999974E-6 : f32
    %342 = vector.broadcast %cst_147 : f32 to vector<5x1xf32>
    %343 = arith.addf %341, %342 : vector<5x1xf32>
    %344 = math.rsqrt %343 : vector<5x1xf32>
    %345 = vector.broadcast %344 : vector<5x1xf32> to vector<5x128xf32>
    %346 = arith.mulf %336, %345 : vector<5x128xf32>
    %347 = vector.broadcast %328 : vector<1x128xf32> to vector<5x128xf32>
    %348 = arith.mulf %346, %347 : vector<5x128xf32>
    %349 = vector.broadcast %330 : vector<1x128xf32> to vector<5x128xf32>
    %350 = arith.addf %348, %349 : vector<5x128xf32>
    %c1_148 = arith.constant 1 : index
    %c0_149 = arith.constant 0 : index
    %c0_150 = arith.constant 0 : index
    %351 = vector.load %arg25[%c1_148, %c0_149, %c0_150] : memref<2x128x256xf32, #tpu.memory_space<vmem>>, vector<1x128x256xf32>
    %352 = vector.shape_cast %351 : vector<1x128x256xf32> to vector<128x256xf32>
    %cst_151 = arith.constant dense<0.000000e+00> : vector<5x256xf32>
    %353 = tpu.matmul %350, %352, %cst_151 {dimension_numbers = #tpu.dot_dimension_numbers<[1], [0], [0], [1], [0, 0, 1, 1], [], []>} : vector<5x128xf32>, vector<128x256xf32>, vector<5x256xf32> -> vector<5x256xf32>
    %c1_152 = arith.constant 1 : index
    %c0_153 = arith.constant 0 : index
    %c0_154 = arith.constant 0 : index
    %354 = vector.load %arg26[%c1_152, %c0_153, %c0_154] : memref<2x1x256xf32, #tpu.memory_space<vmem>>, vector<1x1x256xf32>
    %355 = vector.shape_cast %354 : vector<1x1x256xf32> to vector<1x256xf32>
    %356 = vector.broadcast %355 : vector<1x256xf32> to vector<5x256xf32>
    %357 = arith.addf %353, %356 : vector<5x256xf32>
    %cst_155 = arith.constant 0.000000e+00 : f32
    %358 = vector.broadcast %cst_155 : f32 to vector<5x256xf32>
    %359 = arith.maximumf %357, %358 : vector<5x256xf32>
    %c1_156 = arith.constant 1 : index
    %c0_157 = arith.constant 0 : index
    %c0_158 = arith.constant 0 : index
    %360 = vector.load %arg27[%c1_156, %c0_157, %c0_158] : memref<2x256x128xf32, #tpu.memory_space<vmem>>, vector<1x256x128xf32>
    %361 = vector.shape_cast %360 : vector<1x256x128xf32> to vector<256x128xf32>
    %cst_159 = arith.constant dense<0.000000e+00> : vector<5x128xf32>
    %362 = tpu.matmul %359, %361, %cst_159 {dimension_numbers = #tpu.dot_dimension_numbers<[1], [0], [0], [1], [0, 0, 1, 1], [], []>} : vector<5x256xf32>, vector<256x128xf32>, vector<5x128xf32> -> vector<5x128xf32>
    %c1_160 = arith.constant 1 : index
    %c0_161 = arith.constant 0 : index
    %c0_162 = arith.constant 0 : index
    %363 = vector.load %arg28[%c1_160, %c0_161, %c0_162] : memref<2x1x128xf32, #tpu.memory_space<vmem>>, vector<1x1x128xf32>
    %364 = vector.shape_cast %363 : vector<1x1x128xf32> to vector<1x128xf32>
    %365 = vector.broadcast %364 : vector<1x128xf32> to vector<5x128xf32>
    %366 = arith.addf %362, %365 : vector<5x128xf32>
    %367 = arith.addf %350, %366 : vector<5x128xf32>
    %c1_163 = arith.constant 1 : index
    %c0_164 = arith.constant 0 : index
    %c0_165 = arith.constant 0 : index
    %368 = vector.load %arg23[%c1_163, %c0_164, %c0_165] : memref<2x1x128xf32, #tpu.memory_space<vmem>>, vector<1x1x128xf32>
    %369 = vector.shape_cast %368 : vector<1x1x128xf32> to vector<1x128xf32>
    %c1_166 = arith.constant 1 : index
    %c0_167 = arith.constant 0 : index
    %c0_168 = arith.constant 0 : index
    %370 = vector.load %arg24[%c1_166, %c0_167, %c0_168] : memref<2x1x128xf32, #tpu.memory_space<vmem>>, vector<1x1x128xf32>
    %371 = vector.shape_cast %370 : vector<1x1x128xf32> to vector<1x128xf32>
    %cst_169 = arith.constant dense<0.000000e+00> : vector<5xf32>
    %372 = vector.multi_reduction <add>, %367, %cst_169 [1] : vector<5x128xf32> to vector<5xf32>
    %373 = vector.shape_cast %372 : vector<5xf32> to vector<5x1xf32>
    %cst_170 = arith.constant 1.280000e+02 : f32
    %374 = vector.broadcast %cst_170 : f32 to vector<5x1xf32>
    %375 = arith.divf %373, %374 : vector<5x1xf32>
    %376 = vector.broadcast %375 : vector<5x1xf32> to vector<5x128xf32>
    %377 = arith.subf %367, %376 : vector<5x128xf32>
    %378 = arith.mulf %377, %377 : vector<5x128xf32>
    %cst_171 = arith.constant dense<0.000000e+00> : vector<5xf32>
    %379 = vector.multi_reduction <add>, %378, %cst_171 [1] : vector<5x128xf32> to vector<5xf32>
    %380 = vector.shape_cast %379 : vector<5xf32> to vector<5x1xf32>
    %cst_172 = arith.constant 1.280000e+02 : f32
    %381 = vector.broadcast %cst_172 : f32 to vector<5x1xf32>
    %382 = arith.divf %380, %381 : vector<5x1xf32>
    %cst_173 = arith.constant 9.99999974E-6 : f32
    %383 = vector.broadcast %cst_173 : f32 to vector<5x1xf32>
    %384 = arith.addf %382, %383 : vector<5x1xf32>
    %385 = math.rsqrt %384 : vector<5x1xf32>
    %386 = vector.broadcast %385 : vector<5x1xf32> to vector<5x128xf32>
    %387 = arith.mulf %377, %386 : vector<5x128xf32>
    %388 = vector.broadcast %369 : vector<1x128xf32> to vector<5x128xf32>
    %389 = arith.mulf %387, %388 : vector<5x128xf32>
    %390 = vector.broadcast %371 : vector<1x128xf32> to vector<5x128xf32>
    %391 = arith.addf %389, %390 : vector<5x128xf32>
    %392 = vector.extract_strided_slice %391 {offsets = [0, 0], sizes = [1, 128], strides = [1, 1]} : vector<5x128xf32> to vector<1x128xf32>
    %c0_174 = arith.constant 0 : index
    %c0_175 = arith.constant 0 : index
    %393 = vector.load %arg29[%c0_174, %c0_175] : memref<128x64xf32, #tpu.memory_space<vmem>>, vector<128x64xf32>
    %cst_176 = arith.constant dense<0.000000e+00> : vector<1x64xf32>
    %394 = tpu.matmul %392, %393, %cst_176 {dimension_numbers = #tpu.dot_dimension_numbers<[1], [0], [0], [1], [0, 0, 1, 1], [], []>} : vector<1x128xf32>, vector<128x64xf32>, vector<1x64xf32> -> vector<1x64xf32>
    %c0_177 = arith.constant 0 : index
    %c0_178 = arith.constant 0 : index
    %395 = vector.load %arg30[%c0_177, %c0_178] : memref<1x64xf32, #tpu.memory_space<vmem>>, vector<1x64xf32>
    %396 = arith.addf %394, %395 : vector<1x64xf32>
    %cst_179 = arith.constant 0.000000e+00 : f32
    %397 = vector.broadcast %cst_179 : f32 to vector<1x64xf32>
    %398 = arith.maximumf %396, %397 : vector<1x64xf32>
    %c0_180 = arith.constant 0 : index
    %c0_181 = arith.constant 0 : index
    %399 = vector.load %arg31[%c0_180, %c0_181] : memref<64x8xf32, #tpu.memory_space<vmem>>, vector<64x8xf32>
    %cst_182 = arith.constant dense<0.000000e+00> : vector<1x8xf32>
    %400 = tpu.matmul %398, %399, %cst_182 {dimension_numbers = #tpu.dot_dimension_numbers<[1], [0], [0], [1], [0, 0, 1, 1], [], []>} : vector<1x64xf32>, vector<64x8xf32>, vector<1x8xf32> -> vector<1x8xf32>
    %c0_183 = arith.constant 0 : index
    %c0_184 = arith.constant 0 : index
    %401 = vector.load %arg32[%c0_183, %c0_184] : memref<1x8xf32, #tpu.memory_space<vmem>>, vector<1x8xf32>
    %402 = arith.addf %400, %401 : vector<1x8xf32>
    %cst_185 = arith.constant dense<0xFF800000> : vector<1xf32>
    %403 = vector.multi_reduction <maximumf>, %402, %cst_185 [1] : vector<1x8xf32> to vector<1xf32>
    %404 = vector.shape_cast %403 : vector<1xf32> to vector<1x1xf32>
    %405 = vector.broadcast %404 : vector<1x1xf32> to vector<1x8xf32>
    %406 = arith.subf %402, %405 : vector<1x8xf32>
    %407 = math.exp %406 : vector<1x8xf32>
    %cst_186 = arith.constant dense<0.000000e+00> : vector<1xf32>
    %408 = vector.multi_reduction <add>, %407, %cst_186 [1] : vector<1x8xf32> to vector<1xf32>
    %409 = vector.shape_cast %408 : vector<1xf32> to vector<1x1xf32>
    %410 = math.log %409 : vector<1x1xf32>
    %411 = arith.addf %404, %410 : vector<1x1xf32>
    %412 = vector.broadcast %411 : vector<1x1xf32> to vector<1x8xf32>
    %413 = arith.subf %402, %412 : vector<1x8xf32>
    %c0_187 = arith.constant 0 : index
    %c0_188 = arith.constant 0 : index
    %c0_189 = arith.constant 0 : index
    %414 = vector.load %arg33[%c0_187, %c0_188, %c0_189] : memref<1x1x8xf32, #tpu.memory_space<vmem>>, vector<1x1x8xf32>
    %415 = vector.shape_cast %414 : vector<1x1x8xf32> to vector<1x8xf32>
    %416 = vector.shape_cast %413 : vector<1x8xf32> to vector<1x1x8xf32>
    tpu.vector_store %arg33[%c0_187, %c0_188, %c0_189], %416 {strides = array<i32>} : memref<1x1x8xf32, #tpu.memory_space<vmem>>, vector<1x1x8xf32>,
    return
  }
  func.func @transform_0(%arg0: i32) -> (i32, i32, i32) {
    %c0_i32 = arith.constant 0 : i32
    %c0_i32_0 = arith.constant 0 : i32
    %c0_i32_1 = arith.constant 0 : i32
    return %arg0, %c0_i32, %c0_i32_0 : i32, i32, i32
  }
  func.func @transform_1(%arg0: i32) -> (i32, i32) {
    %c0_i32 = arith.constant 0 : i32
    %c0_i32_0 = arith.constant 0 : i32
    %c0_i32_1 = arith.constant 0 : i32
    return %c0_i32, %c0_i32_0 : i32, i32
  }
  func.func @transform_2(%arg0: i32) -> (i32, i32) {
    %c0_i32 = arith.constant 0 : i32
    %c0_i32_0 = arith.constant 0 : i32
    %c0_i32_1 = arith.constant 0 : i32
    return %c0_i32, %c0_i32_0 : i32, i32
  }
  func.func @transform_3(%arg0: i32) -> (i32, i32) {
    %c0_i32 = arith.constant 0 : i32
    %c0_i32_0 = arith.constant 0 : i32
    %c0_i32_1 = arith.constant 0 : i32
    return %c0_i32, %c0_i32_0 : i32, i32
  }
  func.func @transform_4(%arg0: i32) -> (i32, i32) {
    %c0_i32 = arith.constant 0 : i32
    %c0_i32_0 = arith.constant 0 : i32
    %c0_i32_1 = arith.constant 0 : i32
    return %c0_i32, %c0_i32_0 : i32, i32
  }
  func.func @transform_5(%arg0: i32) -> (i32, i32) {
    %c0_i32 = arith.constant 0 : i32
    %c0_i32_0 = arith.constant 0 : i32
    %c0_i32_1 = arith.constant 0 : i32
    return %c0_i32, %c0_i32_0 : i32, i32
  }
  func.func @transform_6(%arg0: i32) -> (i32, i32) {
    %c0_i32 = arith.constant 0 : i32
    %c0_i32_0 = arith.constant 0 : i32
    %c0_i32_1 = arith.constant 0 : i32
    return %c0_i32, %c0_i32_0 : i32, i32
  }
  func.func @transform_7(%arg0: i32) -> (i32, i32) {
    %c0_i32 = arith.constant 0 : i32
    %c0_i32_0 = arith.constant 0 : i32
    %c0_i32_1 = arith.constant 0 : i32
    return %c0_i32, %c0_i32_0 : i32, i32
  }
  func.func @transform_8(%arg0: i32) -> (i32, i32) {
    %c0_i32 = arith.constant 0 : i32
    %c0_i32_0 = arith.constant 0 : i32
    %c0_i32_1 = arith.constant 0 : i32
    return %c0_i32, %c0_i32_0 : i32, i32
  }
  func.func @transform_9(%arg0: i32) -> (i32, i32) {
    %c0_i32 = arith.constant 0 : i32
    %c0_i32_0 = arith.constant 0 : i32
    %c0_i32_1 = arith.constant 0 : i32
    return %c0_i32, %c0_i32_0 : i32, i32
  }
  func.func @transform_10(%arg0: i32) -> (i32, i32) {
    %c0_i32 = arith.constant 0 : i32
    %c0_i32_0 = arith.constant 0 : i32
    %c0_i32_1 = arith.constant 0 : i32
    return %c0_i32, %c0_i32_0 : i32, i32
  }
  func.func @transform_11(%arg0: i32) -> (i32, i32) {
    %c0_i32 = arith.constant 0 : i32
    %c0_i32_0 = arith.constant 0 : i32
    %c0_i32_1 = arith.constant 0 : i32
    return %c0_i32, %c0_i32_0 : i32, i32
  }
  func.func @transform_12(%arg0: i32) -> (i32, i32) {
    %c0_i32 = arith.constant 0 : i32
    %c0_i32_0 = arith.constant 0 : i32
    %c0_i32_1 = arith.constant 0 : i32
    return %c0_i32, %c0_i32_0 : i32, i32
  }
  func.func @transform_13(%arg0: i32) -> (i32, i32) {
    %c0_i32 = arith.constant 0 : i32
    %c0_i32_0 = arith.constant 0 : i32
    %c0_i32_1 = arith.constant 0 : i32
    return %c0_i32, %c0_i32_0 : i32, i32
  }
  func.func @transform_14(%arg0: i32) -> (i32, i32) {
    %c0_i32 = arith.constant 0 : i32
    %c0_i32_0 = arith.constant 0 : i32
    %c0_i32_1 = arith.constant 0 : i32
    return %c0_i32, %c0_i32_0 : i32, i32
  }
  func.func @transform_15(%arg0: i32) -> (i32, i32) {
    %c0_i32 = arith.constant 0 : i32
    %c0_i32_0 = arith.constant 0 : i32
    %c0_i32_1 = arith.constant 0 : i32
    return %c0_i32, %c0_i32_0 : i32, i32
  }
  func.func @transform_16(%arg0: i32) -> (i32, i32, i32) {
    %c0_i32 = arith.constant 0 : i32
    %c0_i32_0 = arith.constant 0 : i32
    %c0_i32_1 = arith.constant 0 : i32
    %c0_i32_2 = arith.constant 0 : i32
    return %c0_i32, %c0_i32_0, %c0_i32_1 : i32, i32, i32
  }
  func.func @transform_17(%arg0: i32) -> (i32, i32, i32) {
    %c0_i32 = arith.constant 0 : i32
    %c0_i32_0 = arith.constant 0 : i32
    %c0_i32_1 = arith.constant 0 : i32
    %c0_i32_2 = arith.constant 0 : i32
    return %c0_i32, %c0_i32_0, %c0_i32_1 : i32, i32, i32
  }
  func.func @transform_18(%arg0: i32) -> (i32, i32, i32) {
    %c0_i32 = arith.constant 0 : i32
    %c0_i32_0 = arith.constant 0 : i32
    %c0_i32_1 = arith.constant 0 : i32
    %c0_i32_2 = arith.constant 0 : i32
    return %c0_i32, %c0_i32_0, %c0_i32_1 : i32, i32, i32
  }
  func.func @transform_19(%arg0: i32) -> (i32, i32, i32) {
    %c0_i32 = arith.constant 0 : i32
    %c0_i32_0 = arith.constant 0 : i32
    %c0_i32_1 = arith.constant 0 : i32
    %c0_i32_2 = arith.constant 0 : i32
    return %c0_i32, %c0_i32_0, %c0_i32_1 : i32, i32, i32
  }
  func.func @transform_20(%arg0: i32) -> (i32, i32, i32) {
    %c0_i32 = arith.constant 0 : i32
    %c0_i32_0 = arith.constant 0 : i32
    %c0_i32_1 = arith.constant 0 : i32
    %c0_i32_2 = arith.constant 0 : i32
    return %c0_i32, %c0_i32_0, %c0_i32_1 : i32, i32, i32
  }
  func.func @transform_21(%arg0: i32) -> (i32, i32, i32) {
    %c0_i32 = arith.constant 0 : i32
    %c0_i32_0 = arith.constant 0 : i32
    %c0_i32_1 = arith.constant 0 : i32
    %c0_i32_2 = arith.constant 0 : i32
    return %c0_i32, %c0_i32_0, %c0_i32_1 : i32, i32, i32
  }
  func.func @transform_22(%arg0: i32) -> (i32, i32, i32) {
    %c0_i32 = arith.constant 0 : i32
    %c0_i32_0 = arith.constant 0 : i32
    %c0_i32_1 = arith.constant 0 : i32
    %c0_i32_2 = arith.constant 0 : i32
    return %c0_i32, %c0_i32_0, %c0_i32_1 : i32, i32, i32
  }
  func.func @transform_23(%arg0: i32) -> (i32, i32, i32) {
    %c0_i32 = arith.constant 0 : i32
    %c0_i32_0 = arith.constant 0 : i32
    %c0_i32_1 = arith.constant 0 : i32
    %c0_i32_2 = arith.constant 0 : i32
    return %c0_i32, %c0_i32_0, %c0_i32_1 : i32, i32, i32
  }
  func.func @transform_24(%arg0: i32) -> (i32, i32, i32) {
    %c0_i32 = arith.constant 0 : i32
    %c0_i32_0 = arith.constant 0 : i32
    %c0_i32_1 = arith.constant 0 : i32
    %c0_i32_2 = arith.constant 0 : i32
    return %c0_i32, %c0_i32_0, %c0_i32_1 : i32, i32, i32
  }
  func.func @transform_25(%arg0: i32) -> (i32, i32, i32) {
    %c0_i32 = arith.constant 0 : i32
    %c0_i32_0 = arith.constant 0 : i32
    %c0_i32_1 = arith.constant 0 : i32
    %c0_i32_2 = arith.constant 0 : i32
    return %c0_i32, %c0_i32_0, %c0_i32_1 : i32, i32, i32
  }
  func.func @transform_26(%arg0: i32) -> (i32, i32, i32) {
    %c0_i32 = arith.constant 0 : i32
    %c0_i32_0 = arith.constant 0 : i32
    %c0_i32_1 = arith.constant 0 : i32
    %c0_i32_2 = arith.constant 0 : i32
    return %c0_i32, %c0_i32_0, %c0_i32_1 : i32, i32, i32
  }
  func.func @transform_27(%arg0: i32) -> (i32, i32, i32) {
    %c0_i32 = arith.constant 0 : i32
    %c0_i32_0 = arith.constant 0 : i32
    %c0_i32_1 = arith.constant 0 : i32
    %c0_i32_2 = arith.constant 0 : i32
    return %c0_i32, %c0_i32_0, %c0_i32_1 : i32, i32, i32
  }
  func.func @transform_28(%arg0: i32) -> (i32, i32) {
    %c0_i32 = arith.constant 0 : i32
    %c0_i32_0 = arith.constant 0 : i32
    %c0_i32_1 = arith.constant 0 : i32
    return %c0_i32, %c0_i32_0 : i32, i32
  }
  func.func @transform_29(%arg0: i32) -> (i32, i32) {
    %c0_i32 = arith.constant 0 : i32
    %c0_i32_0 = arith.constant 0 : i32
    %c0_i32_1 = arith.constant 0 : i32
    return %c0_i32, %c0_i32_0 : i32, i32
  }
  func.func @transform_30(%arg0: i32) -> (i32, i32) {
    %c0_i32 = arith.constant 0 : i32
    %c0_i32_0 = arith.constant 0 : i32
    %c0_i32_1 = arith.constant 0 : i32
    return %c0_i32, %c0_i32_0 : i32, i32
  }
  func.func @transform_31(%arg0: i32) -> (i32, i32) {
    %c0_i32 = arith.constant 0 : i32
    %c0_i32_0 = arith.constant 0 : i32
    %c0_i32_1 = arith.constant 0 : i32
    return %c0_i32, %c0_i32_0 : i32, i32
  }
  func.func @transform_32(%arg0: i32) -> (i32, i32, i32) {
    %c0_i32 = arith.constant 0 : i32
    %c0_i32_0 = arith.constant 0 : i32
    %c0_i32_1 = arith.constant 0 : i32
    return %arg0, %c0_i32, %c0_i32_0 : i32, i32, i32
  }
}

</mosaic_0001>

<llo_original>
// kernel: transformer_psmc_forward.1
$region0: #{transformer_psmc_forward.1}
  #allocation0 [shape = 'u32[]', space=smem, size = 0x4, offset = 0x4, fixed_abs, tag = 'smem constant byte address 0x4 - core index']
  #allocation1 [shape = 'u32[72,128]{1,0:T(1,128)}', space=vmem, size = 0x9000, scoped, tag = 'internal scratch']
  %s0 = inlined_call_operand.smem [shape: u32[33], index: -1, kind: input, shape index: {}]
  %s1 = sld [smem:[%s0]]
  %s2 = scalar_lea.smem %s0, 1
  %s3 = sld [smem:[%s2]]
  %s4 = scalar_lea.smem %s0, 2
  %s5 = sld [smem:[%s4]]
  %s6 = scalar_lea.smem %s0, 3
  %s7 = sld [smem:[%s6]]
  %s8 = scalar_lea.smem %s0, 4
  %s9 = sld [smem:[%s8]]
  %s10 = scalar_lea.smem %s0, 5
  %s11 = sld [smem:[%s10]]
  %s12 = scalar_lea.smem %s0, 6
  %s13 = sld [smem:[%s12]]
  %s14 = scalar_lea.smem %s0, 7
  %s15 = sld [smem:[%s14]]
  %s16 = scalar_lea.smem %s0, 8
  %s17 = sld [smem:[%s16]]
  %s18 = scalar_lea.smem %s0, 9
  %s19 = sld [smem:[%s18]]
  %s20 = scalar_lea.smem %s0, 10
  %s21 = sld [smem:[%s20]]
  %s22 = scalar_lea.smem %s0, 11
  %s23 = sld [smem:[%s22]]
  %s24 = scalar_lea.smem %s0, 12
  %s25 = sld [smem:[%s24]]
  %s26 = scalar_lea.smem %s0, 13
  %s27 = sld [smem:[%s26]]
  %s28 = scalar_lea.smem %s0, 14
  %s29 = sld [smem:[%s28]]
  %s30 = scalar_lea.smem %s0, 15
  %s31 = sld [smem:[%s30]]
  %s32 = scalar_lea.smem %s0, 16
  %s33 = sld [smem:[%s32]]
  %s34 = scalar_lea.smem %s0, 17
  %s35 = sld [smem:[%s34]]
  %s36 = scalar_lea.smem %s0, 18
  %s37 = sld [smem:[%s36]]
  %s38 = scalar_lea.smem %s0, 19
  %s39 = sld [smem:[%s38]]
  %s40 = scalar_lea.smem %s0, 20
  %s41 = sld [smem:[%s40]]
  %s42 = scalar_lea.smem %s0, 21
  %s43 = sld [smem:[%s42]]
  %s44 = scalar_lea.smem %s0, 22
  %s45 = sld [smem:[%s44]]
  %s46 = scalar_lea.smem %s0, 23
  %s47 = sld [smem:[%s46]]
  %s48 = scalar_lea.smem %s0, 24
  %s49 = sld [smem:[%s48]]
  %s50 = scalar_lea.smem %s0, 25
  %s51 = sld [smem:[%s50]]
  %s52 = scalar_lea.smem %s0, 26
  %s53 = sld [smem:[%s52]]
  %s54 = scalar_lea.smem %s0, 27
  %s55 = sld [smem:[%s54]]
  %s56 = scalar_lea.smem %s0, 28
  %s57 = sld [smem:[%s56]]
  %s58 = scalar_lea.smem %s0, 29
  %s59 = sld [smem:[%s58]]
  %s60 = scalar_lea.smem %s0, 30
  %s61 = sld [smem:[%s60]]
  %s62 = scalar_lea.smem %s0, 31
  %s63 = sld [smem:[%s62]]
  %s64 = scalar_lea.smem %s0, 32
  %s65 = sld [smem:[%s64]]
  %s66 = sld [smem:[#allocation0]]
  $region161: #{transformer_psmc_forward.1} parent=0
    _
  %s68 = ssub.s32 1, %s66
  %s69 = scalar_select 0, %s68, %s66
  $region1: #{transformer_psmc_forward.1} parent=0
    #allocation2 [shape = 'u8[1024]{0}', space=vmem, size = 0x400, scoped, tag = 'output window, operand 0']
    #allocation3 [shape = 's32[2]{0}', space=sflag, size = 0x8, scoped, tag = 'scoped memory for transformer_psmc_forward.1']
    %70 = vsyncpa [#allocation3], 0
    %s71 = scalar_lea.sflag [#allocation3], 1
    %72 = vsyncpa %s71, 0
    loop: start=0, step=1, limit=4
    $region2: #{transformer_psmc_forward.1} parent=1 // loop_pre_header
      _
    $region3: #{transformer_psmc_forward.1} parent=1 // loop_header
      %s74 = sphi 0, %s78
      %p75 = scmp.ge.s32.totalorder %s74, 4
      %s84 = sphi 0, %s86
      %s87 = sphi 0, %s84
      %s88 = sphi 0, %s87
      %s104 = sphi 0, %s88
      %s108 = sphi 0, %s108
      %s110 = sphi 0, %s108
      %s111 = sphi 0, %s110
      %s125 = sphi 0, %s111
      %s129 = sphi 0, %s129
      %s131 = sphi 0, %s129
      %s132 = sphi 0, %s131
      %s146 = sphi 0, %s132
      %s150 = sphi 0, %s150
      %s152 = sphi 0, %s150
      %s153 = sphi 0, %s152
      %s167 = sphi 0, %s153
      %s171 = sphi 0, %s171
      %s173 = sphi 0, %s171
      %s174 = sphi 0, %s173
      %s188 = sphi 0, %s174
      %s192 = sphi 0, %s192
      %s194 = sphi 0, %s192
      %s195 = sphi 0, %s194
      %s209 = sphi 0, %s195
      %s213 = sphi 0, %s213
      %s215 = sphi 0, %s213
      %s216 = sphi 0, %s215
      %s230 = sphi 0, %s216
      %s234 = sphi 0, %s234
      %s236 = sphi 0, %s234
      %s237 = sphi 0, %s236
      %s251 = sphi 0, %s237
      %s255 = sphi 0, %s255
      %s257 = sphi 0, %s255
      %s258 = sphi 0, %s257
      %s272 = sphi 0, %s258
      %s276 = sphi 0, %s276
      %s278 = sphi 0, %s276
      %s279 = sphi 0, %s278
      %s293 = sphi 0, %s279
      %s297 = sphi 0, %s297
      %s299 = sphi 0, %s297
      %s300 = sphi 0, %s299
      %s314 = sphi 0, %s300
      %s318 = sphi 0, %s318
      %s320 = sphi 0, %s318
      %s321 = sphi 0, %s320
      %s335 = sphi 0, %s321
      %s339 = sphi 0, %s339
      %s341 = sphi 0, %s339
      %s342 = sphi 0, %s341
      %s356 = sphi 0, %s342
      %s360 = sphi 0, %s360
      %s362 = sphi 0, %s360
      %s363 = sphi 0, %s362
      %s377 = sphi 0, %s363
      %s381 = sphi 0, %s381
      %s383 = sphi 0, %s381
      %s384 = sphi 0, %s383
      %s398 = sphi 0, %s384
      %s402 = sphi 0, %s402
      %s404 = sphi 0, %s402
      %s405 = sphi 0, %s404
      %s419 = sphi 0, %s405
      %s423 = sphi 0, %s423
      %s425 = sphi 0, %s423
      %s426 = sphi 0, %s425
      %s440 = sphi 0, %s426
      %s444 = sphi 0, %s444
      %s446 = sphi 0, %s444
      %s447 = sphi 0, %s446
      %s461 = sphi 0, %s447
      %s465 = sphi 0, %s465
      %s467 = sphi 0, %s465
      %s468 = sphi 0, %s467
      %s482 = sphi 0, %s468
      %s486 = sphi 0, %s486
      %s488 = sphi 0, %s486
      %s489 = sphi 0, %s488
      %s503 = sphi 0, %s489
      %s507 = sphi 0, %s507
      %s509 = sphi 0, %s507
      %s510 = sphi 0, %s509
      %s524 = sphi 0, %s510
      %s528 = sphi 0, %s528
      %s530 = sphi 0, %s528
      %s531 = sphi 0, %s530
      %s545 = sphi 0, %s531
      %s549 = sphi 0, %s549
      %s551 = sphi 0, %s549
      %s552 = sphi 0, %s551
      %s566 = sphi 0, %s552
      %s570 = sphi 0, %s570
      %s572 = sphi 0, %s570
      %s573 = sphi 0, %s572
      %s587 = sphi 0, %s573
      %s591 = sphi 0, %s591
      %s593 = sphi 0, %s591
      %s594 = sphi 0, %s593
      %s608 = sphi 0, %s594
      %s612 = sphi 0, %s612
      %s614 = sphi 0, %s612
      %s615 = sphi 0, %s614
      %s629 = sphi 0, %s615
      %s633 = sphi 0, %s633
      %s635 = sphi 0, %s633
      %s636 = sphi 0, %s635
      %s650 = sphi 0, %s636
      %s654 = sphi 0, %s654
      %s656 = sphi 0, %s654
      %s657 = sphi 0, %s656
      %s671 = sphi 0, %s657
      %s675 = sphi 0, %s675
      %s677 = sphi 0, %s675
      %s678 = sphi 0, %s677
      %s692 = sphi 0, %s678
      %s696 = sphi 0, %s696
      %s698 = sphi 0, %s696
      %s699 = sphi 0, %s698
      %s713 = sphi 0, %s699
      %s717 = sphi 0, %s717
      %s719 = sphi 0, %s717
      %s720 = sphi 0, %s719
      %s734 = sphi 0, %s720
      %s738 = sphi 0, %s738
      %s740 = sphi 0, %s738
      %s741 = sphi 0, %s740
      %s755 = sphi 0, %s741
      %s761 = sphi 0, %s763
      %s764 = sphi 0, %s761
      %s765 = sphi 0, %s764
      %s781 = sphi 0, %s765
    $region4: #{transformer_psmc_forward.1} parent=1 // loop_header_branch
      %77 = sbr.rel (%p75) target = $region8
    $region5: #{transformer_psmc_forward.1} parent=1 // loop_body
      %s79 = ssub.s32 %s74, 1
      %s80 = ssub.s32 %s74, 2
      %s81 = sadd.s32 %s74, 1
      %s82 = ssub.s32 %s74, %s81
      %p83 = scmp.eq.s32.totalorder %s82, 0
      %s85 = sadd.s32 %s84, 1
      %s86 = scalar_select %p83, %s84, %s85
      %p89 = pneg %p83
      %p90 = scmp.eq.s32.totalorder %s74, 1
      %p91 = por %p89, %p90
      %p92 = scmp.ne.s32.totalorder %s84, %s87
      %p93 = scmp.eq.s32.totalorder %s74, 0
      %p94 = por %p92, %p93
      %p95 = scmp.ne.s32.totalorder %s84, %s87
      %p96 = scmp.eq.s32.totalorder %s79, 1
      %p97 = por %p95, %p96
      %p98 = scmp.ne.s32.totalorder %s87, %s88
      %p99 = scmp.eq.s32.totalorder %s79, 0
      %p100 = por %p98, %p99
      %p101 = scmp.ne.s32.totalorder %s87, %s88
      %p102 = scmp.eq.s32.totalorder %s80, 1
      %p103 = por %p101, %p102
      %p105 = scmp.ne.s32.totalorder %s88, %s104
      %p106 = scmp.eq.s32.totalorder %s80, 0
      %p107 = por %p105, %p106
      %s109 = sadd.s32 %s108, 1
      %p112 = scmp.eq.s32.totalorder %s74, 1
      %p113 = scmp.ne.s32.totalorder %s108, %s110
      %p114 = scmp.eq.s32.totalorder %s74, 0
      %p115 = por %p113, %p114
      %p116 = scmp.ne.s32.totalorder %s108, %s110
      %p117 = scmp.eq.s32.totalorder %s79, 1
      %p118 = por %p116, %p117
      %p119 = scmp.ne.s32.totalorder %s110, %s111
      %p120 = scmp.eq.s32.totalorder %s79, 0
      %p121 = por %p119, %p120
      %p122 = scmp.ne.s32.totalorder %s110, %s111
      %p123 = scmp.eq.s32.totalorder %s80, 1
      %p124 = por %p122, %p123
      %p126 = scmp.ne.s32.totalorder %s111, %s125
      %p127 = scmp.eq.s32.totalorder %s80, 0
      %p128 = por %p126, %p127
      %s130 = sadd.s32 %s129, 1
      %p133 = scmp.eq.s32.totalorder %s74, 1
      %p134 = scmp.ne.s32.totalorder %s129, %s131
      %p135 = scmp.eq.s32.totalorder %s74, 0
      %p136 = por %p134, %p135
      %p137 = scmp.ne.s32.totalorder %s129, %s131
      %p138 = scmp.eq.s32.totalorder %s79, 1
      %p139 = por %p137, %p138
      %p140 = scmp.ne.s32.totalorder %s131, %s132
      %p141 = scmp.eq.s32.totalorder %s79, 0
      %p142 = por %p140, %p141
      %p143 = scmp.ne.s32.totalorder %s131, %s132
      %p144 = scmp.eq.s32.totalorder %s80, 1
      %p145 = por %p143, %p144
      %p147 = scmp.ne.s32.totalorder %s132, %s146
      %p148 = scmp.eq.s32.totalorder %s80, 0
      %p149 = por %p147, %p148
      %s151 = sadd.s32 %s150, 1
      %p154 = scmp.eq.s32.totalorder %s74, 1
      %p155 = scmp.ne.s32.totalorder %s150, %s152
      %p156 = scmp.eq.s32.totalorder %s74, 0
      %p157 = por %p155, %p156
      %p158 = scmp.ne.s32.totalorder %s150, %s152
      %p159 = scmp.eq.s32.totalorder %s79, 1
      %p160 = por %p158, %p159
      %p161 = scmp.ne.s32.totalorder %s152, %s153
      %p162 = scmp.eq.s32.totalorder %s79, 0
      %p163 = por %p161, %p162
      %p164 = scmp.ne.s32.totalorder %s152, %s153
      %p165 = scmp.eq.s32.totalorder %s80, 1
      %p166 = por %p164, %p165
      %p168 = scmp.ne.s32.totalorder %s153, %s167
      %p169 = scmp.eq.s32.totalorder %s80, 0
      %p170 = por %p168, %p169
      %s172 = sadd.s32 %s171, 1
      %p175 = scmp.eq.s32.totalorder %s74, 1
      %p176 = scmp.ne.s32.totalorder %s171, %s173
      %p177 = scmp.eq.s32.totalorder %s74, 0
      %p178 = por %p176, %p177
      %p179 = scmp.ne.s32.totalorder %s171, %s173
      %p180 = scmp.eq.s32.totalorder %s79, 1
      %p181 = por %p179, %p180
      %p182 = scmp.ne.s32.totalorder %s173, %s174
      %p183 = scmp.eq.s32.totalorder %s79, 0
      %p184 = por %p182, %p183
      %p185 = scmp.ne.s32.totalorder %s173, %s174
      %p186 = scmp.eq.s32.totalorder %s80, 1
      %p187 = por %p185, %p186
      %p189 = scmp.ne.s32.totalorder %s174, %s188
      %p190 = scmp.eq.s32.totalorder %s80, 0
      %p191 = por %p189, %p190
      %s193 = sadd.s32 %s192, 1
      %p196 = scmp.eq.s32.totalorder %s74, 1
      %p197 = scmp.ne.s32.totalorder %s192, %s194
      %p198 = scmp.eq.s32.totalorder %s74, 0
      %p199 = por %p197, %p198
      %p200 = scmp.ne.s32.totalorder %s192, %s194
      %p201 = scmp.eq.s32.totalorder %s79, 1
      %p202 = por %p200, %p201
      %p203 = scmp.ne.s32.totalorder %s194, %s195
      %p204 = scmp.eq.s32.totalorder %s79, 0
      %p205 = por %p203, %p204
      %p206 = scmp.ne.s32.totalorder %s194, %s195
      %p207 = scmp.eq.s32.totalorder %s80, 1
      %p208 = por %p206, %p207
      %p210 = scmp.ne.s32.totalorder %s195, %s209
      %p211 = scmp.eq.s32.totalorder %s80, 0
      %p212 = por %p210, %p211
      %s214 = sadd.s32 %s213, 1
      %p217 = scmp.eq.s32.totalorder %s74, 1
      %p218 = scmp.ne.s32.totalorder %s213, %s215
      %p219 = scmp.eq.s32.totalorder %s74, 0
      %p220 = por %p218, %p219
      %p221 = scmp.ne.s32.totalorder %s213, %s215
      %p222 = scmp.eq.s32.totalorder %s79, 1
      %p223 = por %p221, %p222
      %p224 = scmp.ne.s32.totalorder %s215, %s216
      %p225 = scmp.eq.s32.totalorder %s79, 0
      %p226 = por %p224, %p225
      %p227 = scmp.ne.s32.totalorder %s215, %s216
      %p228 = scmp.eq.s32.totalorder %s80, 1
      %p229 = por %p227, %p228
      %p231 = scmp.ne.s32.totalorder %s216, %s230
      %p232 = scmp.eq.s32.totalorder %s80, 0
      %p233 = por %p231, %p232
      %s235 = sadd.s32 %s234, 1
      %p238 = scmp.eq.s32.totalorder %s74, 1
      %p239 = scmp.ne.s32.totalorder %s234, %s236
      %p240 = scmp.eq.s32.totalorder %s74, 0
      %p241 = por %p239, %p240
      %p242 = scmp.ne.s32.totalorder %s234, %s236
      %p243 = scmp.eq.s32.totalorder %s79, 1
      %p244 = por %p242, %p243
      %p245 = scmp.ne.s32.totalorder %s236, %s237
      %p246 = scmp.eq.s32.totalorder %s79, 0
      %p247 = por %p245, %p246
      %p248 = scmp.ne.s32.totalorder %s236, %s237
      %p249 = scmp.eq.s32.totalorder %s80, 1
      %p250 = por %p248, %p249
      %p252 = scmp.ne.s32.totalorder %s237, %s251
      %p253 = scmp.eq.s32.totalorder %s80, 0
      %p254 = por %p252, %p253
      %s256 = sadd.s32 %s255, 1
      %p259 = scmp.eq.s32.totalorder %s74, 1
      %p260 = scmp.ne.s32.totalorder %s255, %s257
      %p261 = scmp.eq.s32.totalorder %s74, 0
      %p262 = por %p260, %p261
      %p263 = scmp.ne.s32.totalorder %s255, %s257
      %p264 = scmp.eq.s32.totalorder %s79, 1
      %p265 = por %p263, %p264
      %p266 = scmp.ne.s32.totalorder %s257, %s258
      %p267 = scmp.eq.s32.totalorder %s79, 0
      %p268 = por %p266, %p267
      %p269 = scmp.ne.s32.totalorder %s257, %s258
      %p270 = scmp.eq.s32.totalorder %s80, 1
      %p271 = por %p269, %p270
      %p273 = scmp.ne.s32.totalorder %s258, %s272
      %p274 = scmp.eq.s32.totalorder %s80, 0
      %p275 = por %p273, %p274
      %s277 = sadd.s32 %s276, 1
      %p280 = scmp.eq.s32.totalorder %s74, 1
      %p281 = scmp.ne.s32.totalorder %s276, %s278
      %p282 = scmp.eq.s32.totalorder %s74, 0
      %p283 = por %p281, %p282
      %p284 = scmp.ne.s32.totalorder %s276, %s278
      %p285 = scmp.eq.s32.totalorder %s79, 1
      %p286 = por %p284, %p285
      %p287 = scmp.ne.s32.totalorder %s278, %s279
      %p288 = scmp.eq.s32.totalorder %s79, 0
      %p289 = por %p287, %p288
      %p290 = scmp.ne.s32.totalorder %s278, %s279
      %p291 = scmp.eq.s32.totalorder %s80, 1
      %p292 = por %p290, %p291
      %p294 = scmp.ne.s32.totalorder %s279, %s293
      %p295 = scmp.eq.s32.totalorder %s80, 0
      %p296 = por %p294, %p295
      %s298 = sadd.s32 %s297, 1
      %p301 = scmp.eq.s32.totalorder %s74, 1
      %p302 = scmp.ne.s32.totalorder %s297, %s299
      %p303 = scmp.eq.s32.totalorder %s74, 0
      %p304 = por %p302, %p303
      %p305 = scmp.ne.s32.totalorder %s297, %s299
      %p306 = scmp.eq.s32.totalorder %s79, 1
      %p307 = por %p305, %p306
      %p308 = scmp.ne.s32.totalorder %s299, %s300
      %p309 = scmp.eq.s32.totalorder %s79, 0
      %p310 = por %p308, %p309
      %p311 = scmp.ne.s32.totalorder %s299, %s300
      %p312 = scmp.eq.s32.totalorder %s80, 1
      %p313 = por %p311, %p312
      %p315 = scmp.ne.s32.totalorder %s300, %s314
      %p316 = scmp.eq.s32.totalorder %s80, 0
      %p317 = por %p315, %p316
      %s319 = sadd.s32 %s318, 1
      %p322 = scmp.eq.s32.totalorder %s74, 1
      %p323 = scmp.ne.s32.totalorder %s318, %s320
      %p324 = scmp.eq.s32.totalorder %s74, 0
      %p325 = por %p323, %p324
      %p326 = scmp.ne.s32.totalorder %s318, %s320
      %p327 = scmp.eq.s32.totalorder %s79, 1
      %p328 = por %p326, %p327
      %p329 = scmp.ne.s32.totalorder %s320, %s321
      %p330 = scmp.eq.s32.totalorder %s79, 0
      %p331 = por %p329, %p330
      %p332 = scmp.ne.s32.totalorder %s320, %s321
      %p333 = scmp.eq.s32.totalorder %s80, 1
      %p334 = por %p332, %p333
      %p336 = scmp.ne.s32.totalorder %s321, %s335
      %p337 = scmp.eq.s32.totalorder %s80, 0
      %p338 = por %p336, %p337
      %s340 = sadd.s32 %s339, 1
      %p343 = scmp.eq.s32.totalorder %s74, 1
      %p344 = scmp.ne.s32.totalorder %s339, %s341
      %p345 = scmp.eq.s32.totalorder %s74, 0
      %p346 = por %p344, %p345
      %p347 = scmp.ne.s32.totalorder %s339, %s341
      %p348 = scmp.eq.s32.totalorder %s79, 1
      %p349 = por %p347, %p348
      %p350 = scmp.ne.s32.totalorder %s341, %s342
      %p351 = scmp.eq.s32.totalorder %s79, 0
      %p352 = por %p350, %p351
      %p353 = scmp.ne.s32.totalorder %s341, %s342
      %p354 = scmp.eq.s32.totalorder %s80, 1
      %p355 = por %p353, %p354
      %p357 = scmp.ne.s32.totalorder %s342, %s356
      %p358 = scmp.eq.s32.totalorder %s80, 0
      %p359 = por %p357, %p358
      %s361 = sadd.s32 %s360, 1
      %p364 = scmp.eq.s32.totalorder %s74, 1
      %p365 = scmp.ne.s32.totalorder %s360, %s362
      %p366 = scmp.eq.s32.totalorder %s74, 0
      %p367 = por %p365, %p366
      %p368 = scmp.ne.s32.totalorder %s360, %s362
      %p369 = scmp.eq.s32.totalorder %s79, 1
      %p370 = por %p368, %p369
      %p371 = scmp.ne.s32.totalorder %s362, %s363
      %p372 = scmp.eq.s32.totalorder %s79, 0
      %p373 = por %p371, %p372
      %p374 = scmp.ne.s32.totalorder %s362, %s363
      %p375 = scmp.eq.s32.totalorder %s80, 1
      %p376 = por %p374, %p375
      %p378 = scmp.ne.s32.totalorder %s363, %s377
      %p379 = scmp.eq.s32.totalorder %s80, 0
      %p380 = por %p378, %p379
      %s382 = sadd.s32 %s381, 1
      %p385 = scmp.eq.s32.totalorder %s74, 1
      %p386 = scmp.ne.s32.totalorder %s381, %s383
      %p387 = scmp.eq.s32.totalorder %s74, 0
      %p388 = por %p386, %p387
      %p389 = scmp.ne.s32.totalorder %s381, %s383
      %p390 = scmp.eq.s32.totalorder %s79, 1
      %p391 = por %p389, %p390
      %p392 = scmp.ne.s32.totalorder %s383, %s384
      %p393 = scmp.eq.s32.totalorder %s79, 0
      %p394 = por %p392, %p393
      %p395 = scmp.ne.s32.totalorder %s383, %s384
      %p396 = scmp.eq.s32.totalorder %s80, 1
      %p397 = por %p395, %p396
      %p399 = scmp.ne.s32.totalorder %s384, %s398
      %p400 = scmp.eq.s32.totalorder %s80, 0
      %p401 = por %p399, %p400
      %s403 = sadd.s32 %s402, 1
      %p406 = scmp.eq.s32.totalorder %s74, 1
      %p407 = scmp.ne.s32.totalorder %s402, %s404
      %p408 = scmp.eq.s32.totalorder %s74, 0
      %p409 = por %p407, %p408
      %p410 = scmp.ne.s32.totalorder %s402, %s404
      %p411 = scmp.eq.s32.totalorder %s79, 1
      %p412 = por %p410, %p411
      %p413 = scmp.ne.s32.totalorder %s404, %s405
      %p414 = scmp.eq.s32.totalorder %s79, 0
      %p415 = por %p413, %p414
      %p416 = scmp.ne.s32.totalorder %s404, %s405
      %p417 = scmp.eq.s32.totalorder %s80, 1
      %p418 = por %p416, %p417
      %p420 = scmp.ne.s32.totalorder %s405, %s419
      %p421 = scmp.eq.s32.totalorder %s80, 0
      %p422 = por %p420, %p421
      %s424 = sadd.s32 %s423, 1
      %p427 = scmp.eq.s32.totalorder %s74, 1
      %p428 = scmp.ne.s32.totalorder %s423, %s425
      %p429 = scmp.eq.s32.totalorder %s74, 0
      %p430 = por %p428, %p429
      %p431 = scmp.ne.s32.totalorder %s423, %s425
      %p432 = scmp.eq.s32.totalorder %s79, 1
      %p433 = por %p431, %p432
      %p434 = scmp.ne.s32.totalorder %s425, %s426
      %p435 = scmp.eq.s32.totalorder %s79, 0
      %p436 = por %p434, %p435
      %p437 = scmp.ne.s32.totalorder %s425, %s426
      %p438 = scmp.eq.s32.totalorder %s80, 1
      %p439 = por %p437, %p438
      %p441 = scmp.ne.s32.totalorder %s426, %s440
      %p442 = scmp.eq.s32.totalorder %s80, 0
      %p443 = por %p441, %p442
      %s445 = sadd.s32 %s444, 1
      %p448 = scmp.eq.s32.totalorder %s74, 1
      %p449 = scmp.ne.s32.totalorder %s444, %s446
      %p450 = scmp.eq.s32.totalorder %s74, 0
      %p451 = por %p449, %p450
      %p452 = scmp.ne.s32.totalorder %s444, %s446
      %p453 = scmp.eq.s32.totalorder %s79, 1
      %p454 = por %p452, %p453
      %p455 = scmp.ne.s32.totalorder %s446, %s447
      %p456 = scmp.eq.s32.totalorder %s79, 0
      %p457 = por %p455, %p456
      %p458 = scmp.ne.s32.totalorder %s446, %s447
      %p459 = scmp.eq.s32.totalorder %s80, 1
      %p460 = por %p458, %p459
      %p462 = scmp.ne.s32.totalorder %s447, %s461
      %p463 = scmp.eq.s32.totalorder %s80, 0
      %p464 = por %p462, %p463
      %s466 = sadd.s32 %s465, 1
      %p469 = scmp.eq.s32.totalorder %s74, 1
      %p470 = scmp.ne.s32.totalorder %s465, %s467
      %p471 = scmp.eq.s32.totalorder %s74, 0
      %p472 = por %p470, %p471
      %p473 = scmp.ne.s32.totalorder %s465, %s467
      %p474 = scmp.eq.s32.totalorder %s79, 1
      %p475 = por %p473, %p474
      %p476 = scmp.ne.s32.totalorder %s467, %s468
      %p477 = scmp.eq.s32.totalorder %s79, 0
      %p478 = por %p476, %p477
      %p479 = scmp.ne.s32.totalorder %s467, %s468
      %p480 = scmp.eq.s32.totalorder %s80, 1
      %p481 = por %p479, %p480
      %p483 = scmp.ne.s32.totalorder %s468, %s482
      %p484 = scmp.eq.s32.totalorder %s80, 0
      %p485 = por %p483, %p484
      %s487 = sadd.s32 %s486, 1
      %p490 = scmp.eq.s32.totalorder %s74, 1
      %p491 = scmp.ne.s32.totalorder %s486, %s488
      %p492 = scmp.eq.s32.totalorder %s74, 0
      %p493 = por %p491, %p492
      %p494 = scmp.ne.s32.totalorder %s486, %s488
      %p495 = scmp.eq.s32.totalorder %s79, 1
      %p496 = por %p494, %p495
      %p497 = scmp.ne.s32.totalorder %s488, %s489
      %p498 = scmp.eq.s32.totalorder %s79, 0
      %p499 = por %p497, %p498
      %p500 = scmp.ne.s32.totalorder %s488, %s489
      %p501 = scmp.eq.s32.totalorder %s80, 1
      %p502 = por %p500, %p501
      %p504 = scmp.ne.s32.totalorder %s489, %s503
      %p505 = scmp.eq.s32.totalorder %s80, 0
      %p506 = por %p504, %p505
      %s508 = sadd.s32 %s507, 1
      %p511 = scmp.eq.s32.totalorder %s74, 1
      %p512 = scmp.ne.s32.totalorder %s507, %s509
      %p513 = scmp.eq.s32.totalorder %s74, 0
      %p514 = por %p512, %p513
      %p515 = scmp.ne.s32.totalorder %s507, %s509
      %p516 = scmp.eq.s32.totalorder %s79, 1
      %p517 = por %p515, %p516
      %p518 = scmp.ne.s32.totalorder %s509, %s510
      %p519 = scmp.eq.s32.totalorder %s79, 0
      %p520 = por %p518, %p519
      %p521 = scmp.ne.s32.totalorder %s509, %s510
      %p522 = scmp.eq.s32.totalorder %s80, 1
      %p523 = por %p521, %p522
      %p525 = scmp.ne.s32.totalorder %s510, %s524
      %p526 = scmp.eq.s32.totalorder %s80, 0
      %p527 = por %p525, %p526
      %s529 = sadd.s32 %s528, 1
      %p532 = scmp.eq.s32.totalorder %s74, 1
      %p533 = scmp.ne.s32.totalorder %s528, %s530
      %p534 = scmp.eq.s32.totalorder %s74, 0
      %p535 = por %p533, %p534
      %p536 = scmp.ne.s32.totalorder %s528, %s530
      %p537 = scmp.eq.s32.totalorder %s79, 1
      %p538 = por %p536, %p537
      %p539 = scmp.ne.s32.totalorder %s530, %s531
      %p540 = scmp.eq.s32.totalorder %s79, 0
      %p541 = por %p539, %p540
      %p542 = scmp.ne.s32.totalorder %s530, %s531
      %p543 = scmp.eq.s32.totalorder %s80, 1
      %p544 = por %p542, %p543
      %p546 = scmp.ne.s32.totalorder %s531, %s545
      %p547 = scmp.eq.s32.totalorder %s80, 0
      %p548 = por %p546, %p547
      %s550 = sadd.s32 %s549, 1
      %p553 = scmp.eq.s32.totalorder %s74, 1
      %p554 = scmp.ne.s32.totalorder %s549, %s551
      %p555 = scmp.eq.s32.totalorder %s74, 0
      %p556 = por %p554, %p555
      %p557 = scmp.ne.s32.totalorder %s549, %s551
      %p558 = scmp.eq.s32.totalorder %s79, 1
      %p559 = por %p557, %p558
      %p560 = scmp.ne.s32.totalorder %s551, %s552
      %p561 = scmp.eq.s32.totalorder %s79, 0
      %p562 = por %p560, %p561
      %p563 = scmp.ne.s32.totalorder %s551, %s552
      %p564 = scmp.eq.s32.totalorder %s80, 1
      %p565 = por %p563, %p564
      %p567 = scmp.ne.s32.totalorder %s552, %s566
      %p568 = scmp.eq.s32.totalorder %s80, 0
      %p569 = por %p567, %p568
      %s571 = sadd.s32 %s570, 1
      %p574 = scmp.eq.s32.totalorder %s74, 1
      %p575 = scmp.ne.s32.totalorder %s570, %s572
      %p576 = scmp.eq.s32.totalorder %s74, 0
      %p577 = por %p575, %p576
      %p578 = scmp.ne.s32.totalorder %s570, %s572
      %p579 = scmp.eq.s32.totalorder %s79, 1
      %p580 = por %p578, %p579
      %p581 = scmp.ne.s32.totalorder %s572, %s573
      %p582 = scmp.eq.s32.totalorder %s79, 0
      %p583 = por %p581, %p582
      %p584 = scmp.ne.s32.totalorder %s572, %s573
      %p585 = scmp.eq.s32.totalorder %s80, 1
      %p586 = por %p584, %p585
      %p588 = scmp.ne.s32.totalorder %s573, %s587
      %p589 = scmp.eq.s32.totalorder %s80, 0
      %p590 = por %p588, %p589
      %s592 = sadd.s32 %s591, 1
      %p595 = scmp.eq.s32.totalorder %s74, 1
      %p596 = scmp.ne.s32.totalorder %s591, %s593
      %p597 = scmp.eq.s32.totalorder %s74, 0
      %p598 = por %p596, %p597
      %p599 = scmp.ne.s32.totalorder %s591, %s593
      %p600 = scmp.eq.s32.totalorder %s79, 1
      %p601 = por %p599, %p600
      %p602 = scmp.ne.s32.totalorder %s593, %s594
      %p603 = scmp.eq.s32.totalorder %s79, 0
      %p604 = por %p602, %p603
      %p605 = scmp.ne.s32.totalorder %s593, %s594
      %p606 = scmp.eq.s32.totalorder %s80, 1
      %p607 = por %p605, %p606
      %p609 = scmp.ne.s32.totalorder %s594, %s608
      %p610 = scmp.eq.s32.totalorder %s80, 0
      %p611 = por %p609, %p610
      %s613 = sadd.s32 %s612, 1
      %p616 = scmp.eq.s32.totalorder %s74, 1
      %p617 = scmp.ne.s32.totalorder %s612, %s614
      %p618 = scmp.eq.s32.totalorder %s74, 0
      %p619 = por %p617, %p618
      %p620 = scmp.ne.s32.totalorder %s612, %s614
      %p621 = scmp.eq.s32.totalorder %s79, 1
      %p622 = por %p620, %p621
      %p623 = scmp.ne.s32.totalorder %s614, %s615
      %p624 = scmp.eq.s32.totalorder %s79, 0
      %p625 = por %p623, %p624
      %p626 = scmp.ne.s32.totalorder %s614, %s615
      %p627 = scmp.eq.s32.totalorder %s80, 1
      %p628 = por %p626, %p627
      %p630 = scmp.ne.s32.totalorder %s615, %s629
      %p631 = scmp.eq.s32.totalorder %s80, 0
      %p632 = por %p630, %p631
      %s634 = sadd.s32 %s633, 1
      %p637 = scmp.eq.s32.totalorder %s74, 1
      %p638 = scmp.ne.s32.totalorder %s633, %s635
      %p639 = scmp.eq.s32.totalorder %s74, 0
      %p640 = por %p638, %p639
      %p641 = scmp.ne.s32.totalorder %s633, %s635
      %p642 = scmp.eq.s32.totalorder %s79, 1
      %p643 = por %p641, %p642
      %p644 = scmp.ne.s32.totalorder %s635, %s636
      %p645 = scmp.eq.s32.totalorder %s79, 0
      %p646 = por %p644, %p645
      %p647 = scmp.ne.s32.totalorder %s635, %s636
      %p648 = scmp.eq.s32.totalorder %s80, 1
      %p649 = por %p647, %p648
      %p651 = scmp.ne.s32.totalorder %s636, %s650
      %p652 = scmp.eq.s32.totalorder %s80, 0
      %p653 = por %p651, %p652
      %s655 = sadd.s32 %s654, 1
      %p658 = scmp.eq.s32.totalorder %s74, 1
      %p659 = scmp.ne.s32.totalorder %s654, %s656
      %p660 = scmp.eq.s32.totalorder %s74, 0
      %p661 = por %p659, %p660
      %p662 = scmp.ne.s32.totalorder %s654, %s656
      %p663 = scmp.eq.s32.totalorder %s79, 1
      %p664 = por %p662, %p663
      %p665 = scmp.ne.s32.totalorder %s656, %s657
      %p666 = scmp.eq.s32.totalorder %s79, 0
      %p667 = por %p665, %p666
      %p668 = scmp.ne.s32.totalorder %s656, %s657
      %p669 = scmp.eq.s32.totalorder %s80, 1
      %p670 = por %p668, %p669
      %p672 = scmp.ne.s32.totalorder %s657, %s671
      %p673 = scmp.eq.s32.totalorder %s80, 0
      %p674 = por %p672, %p673
      %s676 = sadd.s32 %s675, 1
      %p679 = scmp.eq.s32.totalorder %s74, 1
      %p680 = scmp.ne.s32.totalorder %s675, %s677
      %p681 = scmp.eq.s32.totalorder %s74, 0
      %p682 = por %p680, %p681
      %p683 = scmp.ne.s32.totalorder %s675, %s677
      %p684 = scmp.eq.s32.totalorder %s79, 1
      %p685 = por %p683, %p684
      %p686 = scmp.ne.s32.totalorder %s677, %s678
      %p687 = scmp.eq.s32.totalorder %s79, 0
      %p688 = por %p686, %p687
      %p689 = scmp.ne.s32.totalorder %s677, %s678
      %p690 = scmp.eq.s32.totalorder %s80, 1
      %p691 = por %p689, %p690
      %p693 = scmp.ne.s32.totalorder %s678, %s692
      %p694 = scmp.eq.s32.totalorder %s80, 0
      %p695 = por %p693, %p694
      %s697 = sadd.s32 %s696, 1
      %p700 = scmp.eq.s32.totalorder %s74, 1
      %p701 = scmp.ne.s32.totalorder %s696, %s698
      %p702 = scmp.eq.s32.totalorder %s74, 0
      %p703 = por %p701, %p702
      %p704 = scmp.ne.s32.totalorder %s696, %s698
      %p705 = scmp.eq.s32.totalorder %s79, 1
      %p706 = por %p704, %p705
      %p707 = scmp.ne.s32.totalorder %s698, %s699
      %p708 = scmp.eq.s32.totalorder %s79, 0
      %p709 = por %p707, %p708
      %p710 = scmp.ne.s32.totalorder %s698, %s699
      %p711 = scmp.eq.s32.totalorder %s80, 1
      %p712 = por %p710, %p711
      %p714 = scmp.ne.s32.totalorder %s699, %s713
      %p715 = scmp.eq.s32.totalorder %s80, 0
      %p716 = por %p714, %p715
      %s718 = sadd.s32 %s717, 1
      %p721 = scmp.eq.s32.totalorder %s74, 1
      %p722 = scmp.ne.s32.totalorder %s717, %s719
      %p723 = scmp.eq.s32.totalorder %s74, 0
      %p724 = por %p722, %p723
      %p725 = scmp.ne.s32.totalorder %s717, %s719
      %p726 = scmp.eq.s32.totalorder %s79, 1
      %p727 = por %p725, %p726
      %p728 = scmp.ne.s32.totalorder %s719, %s720
      %p729 = scmp.eq.s32.totalorder %s79, 0
      %p730 = por %p728, %p729
      %p731 = scmp.ne.s32.totalorder %s719, %s720
      %p732 = scmp.eq.s32.totalorder %s80, 1
      %p733 = por %p731, %p732
      %p735 = scmp.ne.s32.totalorder %s720, %s734
      %p736 = scmp.eq.s32.totalorder %s80, 0
      %p737 = por %p735, %p736
      %s739 = sadd.s32 %s738, 1
      %p742 = scmp.eq.s32.totalorder %s74, 1
      %p743 = scmp.ne.s32.totalorder %s738, %s740
      %p744 = scmp.eq.s32.totalorder %s74, 0
      %p745 = por %p743, %p744
      %p746 = scmp.ne.s32.totalorder %s738, %s740
      %p747 = scmp.eq.s32.totalorder %s79, 1
      %p748 = por %p746, %p747
      %p749 = scmp.ne.s32.totalorder %s740, %s741
      %p750 = scmp.eq.s32.totalorder %s79, 0
      %p751 = por %p749, %p750
      %p752 = scmp.ne.s32.totalorder %s740, %s741
      %p753 = scmp.eq.s32.totalorder %s80, 1
      %p754 = por %p752, %p753
      %p756 = scmp.ne.s32.totalorder %s741, %s755
      %p757 = scmp.eq.s32.totalorder %s80, 0
      %p758 = por %p756, %p757
      %s759 = ssub.s32 %s74, %s81
      %p760 = scmp.eq.s32.totalorder %s759, 0
      %s762 = sadd.s32 %s761, 1
      %s763 = scalar_select %p760, %s761, %s762
      %p766 = pneg %p760
      %p767 = scmp.eq.s32.totalorder %s74, 1
      %p768 = por %p766, %p767
      %p769 = scmp.ne.s32.totalorder %s761, %s764
      %p770 = scmp.eq.s32.totalorder %s74, 0
      %p771 = por %p769, %p770
      %p772 = scmp.ne.s32.totalorder %s761, %s764
      %p773 = scmp.eq.s32.totalorder %s79, 1
      %p774 = por %p772, %p773
      %p775 = scmp.ne.s32.totalorder %s764, %s765
      %p776 = scmp.eq.s32.totalorder %s79, 0
      %p777 = por %p775, %p776
      %p778 = scmp.ne.s32.totalorder %s764, %s765
      %p779 = scmp.eq.s32.totalorder %s80, 1
      %p780 = por %p778, %p779
      %p782 = scmp.ne.s32.totalorder %s765, %s781
      %p783 = scmp.eq.s32.totalorder %s80, 0
      %p784 = por %p782, %p783
      %p785 = scmp.le.s32.totalorder 1, %s74
      %p786 = scmp.lt.s32.totalorder %s74, 3
      %p787 = pnand %p785, %p786
      %p788 = pneg %p787
      // Predicated region
      $region9: #{transformer_psmc_forward.1} parent=5 // pred_check
        _
      $region10: #{transformer_psmc_forward.1} parent=5 // pred_check_branch
        %790 = sbr.rel (%p787) target = $region12
      $region11: #{transformer_psmc_forward.1} parent=5 // pred_region
        %s791 = ssub.s32 %s74, 1
        // Predicated region
        $region13: #{transformer_psmc_forward.1} parent=11 // pred_check
          %p792 = pneg %p121
        $region14: #{transformer_psmc_forward.1} parent=11 // pred_check_branch
          %794 = sbr.rel (%p792) target = $region16
        $region15: #{transformer_psmc_forward.1} parent=11 // pred_region
          _
        $region16: #{transformer_psmc_forward.1} parent=11 // pred_fallthru
          _
        // Predicated region
        $region17: #{transformer_psmc_forward.1} parent=11 // pred_check
          %p795 = pneg %p142
        $region18: #{transformer_psmc_forward.1} parent=11 // pred_check_branch
          %797 = sbr.rel (%p795) target = $region20
        $region19: #{transformer_psmc_forward.1} parent=11 // pred_region
          _
        $region20: #{transformer_psmc_forward.1} parent=11 // pred_fallthru
          _
        // Predicated region
        $region21: #{transformer_psmc_forward.1} parent=11 // pred_check
          %p798 = pneg %p163
        $region22: #{transformer_psmc_forward.1} parent=11 // pred_check_branch
          %800 = sbr.rel (%p798) target = $region24
        $region23: #{transformer_psmc_forward.1} parent=11 // pred_region
          _
        $region24: #{transformer_psmc_forward.1} parent=11 // pred_fallthru
          _
        // Predicated region
        $region25: #{transformer_psmc_forward.1} parent=11 // pred_check
          %p801 = pneg %p184
        $region26: #{transformer_psmc_forward.1} parent=11 // pred_check_branch
          %803 = sbr.rel (%p801) target = $region28
        $region27: #{transformer_psmc_forward.1} parent=11 // pred_region
          _
        $region28: #{transformer_psmc_forward.1} parent=11 // pred_fallthru
          _
        // Predicated region
        $region29: #{transformer_psmc_forward.1} parent=11 // pred_check
          %p804 = pneg %p205
        $region30: #{transformer_psmc_forward.1} parent=11 // pred_check_branch
          %806 = sbr.rel (%p804) target = $region32
        $region31: #{transformer_psmc_forward.1} parent=11 // pred_region
          _
        $region32: #{transformer_psmc_forward.1} parent=11 // pred_fallthru
          _
        // Predicated region
        $region33: #{transformer_psmc_forward.1} parent=11 // pred_check
          %p807 = pneg %p226
        $region34: #{transformer_psmc_forward.1} parent=11 // pred_check_branch
          %809 = sbr.rel (%p807) target = $region36
        $region35: #{transformer_psmc_forward.1} parent=11 // pred_region
          _
        $region36: #{transformer_psmc_forward.1} parent=11 // pred_fallthru
          _
        // Predicated region
        $region37: #{transformer_psmc_forward.1} parent=11 // pred_check
          %p810 = pneg %p247
        $region38: #{transformer_psmc_forward.1} parent=11 // pred_check_branch
          %812 = sbr.rel (%p810) target = $region40
        $region39: #{transformer_psmc_forward.1} parent=11 // pred_region
          _
        $region40: #{transformer_psmc_forward.1} parent=11 // pred_fallthru
          _
        // Predicated region
        $region41: #{transformer_psmc_forward.1} parent=11 // pred_check
          %p813 = pneg %p268
        $region42: #{transformer_psmc_forward.1} parent=11 // pred_check_branch
          %815 = sbr.rel (%p813) target = $region44
        $region43: #{transformer_psmc_forward.1} parent=11 // pred_region
          _
        $region44: #{transformer_psmc_forward.1} parent=11 // pred_fallthru
          _
        // Predicated region
        $region45: #{transformer_psmc_forward.1} parent=11 // pred_check
          %p816 = pneg %p289
        $region46: #{transformer_psmc_forward.1} parent=11 // pred_check_branch
          %818 = sbr.rel (%p816) target = $region48
        $region47: #{transformer_psmc_forward.1} parent=11 // pred_region
          _
        $region48: #{transformer_psmc_forward.1} parent=11 // pred_fallthru
          _
        // Predicated region
        $region49: #{transformer_psmc_forward.1} parent=11 // pred_check
          %p819 = pneg %p310
        $region50: #{transformer_psmc_forward.1} parent=11 // pred_check_branch
          %821 = sbr.rel (%p819) target = $region52
        $region51: #{transformer_psmc_forward.1} parent=11 // pred_region
          _
        $region52: #{transformer_psmc_forward.1} parent=11 // pred_fallthru
          _
        // Predicated region
        $region53: #{transformer_psmc_forward.1} parent=11 // pred_check
          %p822 = pneg %p331
        $region54: #{transformer_psmc_forward.1} parent=11 // pred_check_branch
          %824 = sbr.rel (%p822) target = $region56
        $region55: #{transformer_psmc_forward.1} parent=11 // pred_region
          _
        $region56: #{transformer_psmc_forward.1} parent=11 // pred_fallthru
          _
        // Predicated region
        $region57: #{transformer_psmc_forward.1} parent=11 // pred_check
          %p825 = pneg %p352
        $region58: #{transformer_psmc_forward.1} parent=11 // pred_check_branch
          %827 = sbr.rel (%p825) target = $region60
        $region59: #{transformer_psmc_forward.1} parent=11 // pred_region
          _
        $region60: #{transformer_psmc_forward.1} parent=11 // pred_fallthru
          _
        // Predicated region
        $region61: #{transformer_psmc_forward.1} parent=11 // pred_check
          %p828 = pneg %p373
        $region62: #{transformer_psmc_forward.1} parent=11 // pred_check_branch
          %830 = sbr.rel (%p828) target = $region64
        $region63: #{transformer_psmc_forward.1} parent=11 // pred_region
          _
        $region64: #{transformer_psmc_forward.1} parent=11 // pred_fallthru
          _
        // Predicated region
        $region65: #{transformer_psmc_forward.1} parent=11 // pred_check
          %p831 = pneg %p394
        $region66: #{transformer_psmc_forward.1} parent=11 // pred_check_branch
          %833 = sbr.rel (%p831) target = $region68
        $region67: #{transformer_psmc_forward.1} parent=11 // pred_region
          _
        $region68: #{transformer_psmc_forward.1} parent=11 // pred_fallthru
          _
        // Predicated region
        $region69: #{transformer_psmc_forward.1} parent=11 // pred_check
          %p834 = pneg %p415
        $region70: #{transformer_psmc_forward.1} parent=11 // pred_check_branch
          %836 = sbr.rel (%p834) target = $region72
        $region71: #{transformer_psmc_forward.1} parent=11 // pred_region
          _
        $region72: #{transformer_psmc_forward.1} parent=11 // pred_fallthru
          _
        // Predicated region
        $region73: #{transformer_psmc_forward.1} parent=11 // pred_check
          %p837 = pneg %p436
        $region74: #{transformer_psmc_forward.1} parent=11 // pred_check_branch
          %839 = sbr.rel (%p837) target = $region76
        $region75: #{transformer_psmc_forward.1} parent=11 // pred_region
          _
        $region76: #{transformer_psmc_forward.1} parent=11 // pred_fallthru
          _
        // Predicated region
        $region77: #{transformer_psmc_forward.1} parent=11 // pred_check
          %p840 = pneg %p457
        $region78: #{transformer_psmc_forward.1} parent=11 // pred_check_branch
          %842 = sbr.rel (%p840) target = $region80
        $region79: #{transformer_psmc_forward.1} parent=11 // pred_region
          _
        $region80: #{transformer_psmc_forward.1} parent=11 // pred_fallthru
          _
        // Predicated region
        $region81: #{transformer_psmc_forward.1} parent=11 // pred_check
          %p843 = pneg %p478
        $region82: #{transformer_psmc_forward.1} parent=11 // pred_check_branch
          %845 = sbr.rel (%p843) target = $region84
        $region83: #{transformer_psmc_forward.1} parent=11 // pred_region
          _
        $region84: #{transformer_psmc_forward.1} parent=11 // pred_fallthru
          _
        // Predicated region
        $region85: #{transformer_psmc_forward.1} parent=11 // pred_check
          %p846 = pneg %p499
        $region86: #{transformer_psmc_forward.1} parent=11 // pred_check_branch
          %848 = sbr.rel (%p846) target = $region88
        $region87: #{transformer_psmc_forward.1} parent=11 // pred_region
          _
        $region88: #{transformer_psmc_forward.1} parent=11 // pred_fallthru
          _
        // Predicated region
        $region89: #{transformer_psmc_forward.1} parent=11 // pred_check
          %p849 = pneg %p520
        $region90: #{transformer_psmc_forward.1} parent=11 // pred_check_branch
          %851 = sbr.rel (%p849) target = $region92
        $region91: #{transformer_psmc_forward.1} parent=11 // pred_region
          _
        $region92: #{transformer_psmc_forward.1} parent=11 // pred_fallthru
          _
        // Predicated region
        $region93: #{transformer_psmc_forward.1} parent=11 // pred_check
          %p852 = pneg %p541
        $region94: #{transformer_psmc_forward.1} parent=11 // pred_check_branch
          %854 = sbr.rel (%p852) target = $region96
        $region95: #{transformer_psmc_forward.1} parent=11 // pred_region
          _
        $region96: #{transformer_psmc_forward.1} parent=11 // pred_fallthru
          _
        // Predicated region
        $region97: #{transformer_psmc_forward.1} parent=11 // pred_check
          %p855 = pneg %p562
        $region98: #{transformer_psmc_forward.1} parent=11 // pred_check_branch
          %857 = sbr.rel (%p855) target = $region100
        $region99: #{transformer_psmc_forward.1} parent=11 // pred_region
          _
        $region100: #{transformer_psmc_forward.1} parent=11 // pred_fallthru
          _
        // Predicated region
        $region101: #{transformer_psmc_forward.1} parent=11 // pred_check
          %p858 = pneg %p583
        $region102: #{transformer_psmc_forward.1} parent=11 // pred_check_branch
          %860 = sbr.rel (%p858) target = $region104
        $region103: #{transformer_psmc_forward.1} parent=11 // pred_region
          _
        $region104: #{transformer_psmc_forward.1} parent=11 // pred_fallthru
          _
        // Predicated region
        $region105: #{transformer_psmc_forward.1} parent=11 // pred_check
          %p861 = pneg %p604
        $region106: #{transformer_psmc_forward.1} parent=11 // pred_check_branch
          %863 = sbr.rel (%p861) target = $region108
        $region107: #{transformer_psmc_forward.1} parent=11 // pred_region
          _
        $region108: #{transformer_psmc_forward.1} parent=11 // pred_fallthru
          _
        // Predicated region
        $region109: #{transformer_psmc_forward.1} parent=11 // pred_check
          %p864 = pneg %p625
        $region110: #{transformer_psmc_forward.1} parent=11 // pred_check_branch
          %866 = sbr.rel (%p864) target = $region112
        $region111: #{transformer_psmc_forward.1} parent=11 // pred_region
          _
        $region112: #{transformer_psmc_forward.1} parent=11 // pred_fallthru
          _
        // Predicated region
        $region113: #{transformer_psmc_forward.1} parent=11 // pred_check
          %p867 = pneg %p646
        $region114: #{transformer_psmc_forward.1} parent=11 // pred_check_branch
          %869 = sbr.rel (%p867) target = $region116
        $region115: #{transformer_psmc_forward.1} parent=11 // pred_region
          _
        $region116: #{transformer_psmc_forward.1} parent=11 // pred_fallthru
          _
        // Predicated region
        $region117: #{transformer_psmc_forward.1} parent=11 // pred_check
          %p870 = pneg %p667
        $region118: #{transformer_psmc_forward.1} parent=11 // pred_check_branch
          %872 = sbr.rel (%p870) target = $region120
        $region119: #{transformer_psmc_forward.1} parent=11 // pred_region
          _
        $region120: #{transformer_psmc_forward.1} parent=11 // pred_fallthru
          _
        // Predicated region
        $region121: #{transformer_psmc_forward.1} parent=11 // pred_check
          %p873 = pneg %p688
        $region122: #{transformer_psmc_forward.1} parent=11 // pred_check_branch
          %875 = sbr.rel (%p873) target = $region124
        $region123: #{transformer_psmc_forward.1} parent=11 // pred_region
          _
        $region124: #{transformer_psmc_forward.1} parent=11 // pred_fallthru
          _
        // Predicated region
        $region125: #{transformer_psmc_forward.1} parent=11 // pred_check
          %p876 = pneg %p709
        $region126: #{transformer_psmc_forward.1} parent=11 // pred_check_branch
          %878 = sbr.rel (%p876) target = $region128
        $region127: #{transformer_psmc_forward.1} parent=11 // pred_region
          _
        $region128: #{transformer_psmc_forward.1} parent=11 // pred_fallthru
          _
        // Predicated region
        $region129: #{transformer_psmc_forward.1} parent=11 // pred_check
          %p879 = pneg %p730
        $region130: #{transformer_psmc_forward.1} parent=11 // pred_check_branch
          %881 = sbr.rel (%p879) target = $region132
        $region131: #{transformer_psmc_forward.1} parent=11 // pred_region
          _
        $region132: #{transformer_psmc_forward.1} parent=11 // pred_fallthru
          _
        // Predicated region
        $region133: #{transformer_psmc_forward.1} parent=11 // pred_check
          %p882 = pneg %p751
        $region134: #{transformer_psmc_forward.1} parent=11 // pred_check_branch
          %884 = sbr.rel (%p882) target = $region136
        $region135: #{transformer_psmc_forward.1} parent=11 // pred_region
          _
        $region136: #{transformer_psmc_forward.1} parent=11 // pred_fallthru
          _
      $region12: #{transformer_psmc_forward.1} parent=5 // pred_fallthru
        _
      %p885 = scmp.lt.s32.totalorder %s74, 2
      // Predicated region
      $region137: #{transformer_psmc_forward.1} parent=5 // pred_check
        %p886 = pneg %p885
      $region138: #{transformer_psmc_forward.1} parent=5 // pred_check_branch
        %888 = sbr.rel (%p886) target = $region140
      $region139: #{transformer_psmc_forward.1} parent=5 // pred_region
        // Predicated region
        $region141: #{transformer_psmc_forward.1} parent=139 // pred_check
          %p889 = pneg %p94
        $region142: #{transformer_psmc_forward.1} parent=139 // pred_check_branch
          %891 = sbr.rel (%p889) target = $region144
        $region143: #{transformer_psmc_forward.1} parent=139 // pred_region
          %p892 = scmp.lt.s32.totalorder %s74, 1
          %s893 = scalar_select %p892, %s74, 1
          %s894 = smul.addr %s893, 16
          %s895 = smul.addr %s894, 8
          %s896 = scalar_lea.vmem %s1, %s895
        $region144: #{transformer_psmc_forward.1} parent=139 // pred_fallthru
          _
      $region140: #{transformer_psmc_forward.1} parent=5 // pred_fallthru
        _
      %p897 = scmp.le.s32.totalorder 1, %s74
      %p898 = scmp.lt.s32.totalorder %s74, 3
      %p899 = pnand %p897, %p898
      %p900 = pneg %p899
      // Predicated region
      $region145: #{transformer_psmc_forward.1} parent=5 // pred_check
        _
      $region146: #{transformer_psmc_forward.1} parent=5 // pred_check_branch
        %902 = sbr.rel (%p899) target = $region148
      $region147: #{transformer_psmc_forward.1} parent=5 // pred_region
        %s903 = ssub.s32 %s74, 1
        %p904 = scmp.lt.s32.totalorder %s79, 1
        %s905 = scalar_select %p904, %s79, 1
        %s906 = smul.addr %s905, 16
        %s907 = smul.addr %s906, 8
        %s908 = scalar_lea.vmem %s1, %s907
        %p909 = pneg %p100
        %p910 = pneg %p97
        %p911 = pneg %p121
        %p912 = pneg %p118
        %p913 = pneg %p142
        %p914 = pneg %p139
        %p915 = pneg %p163
        %p916 = pneg %p160
        %p917 = pneg %p184
        %p918 = pneg %p181
        %p919 = pneg %p205
        %p920 = pneg %p202
        %p921 = pneg %p226
        %p922 = pneg %p223
        %p923 = pneg %p247
        %p924 = pneg %p244
        %p925 = pneg %p268
        %p926 = pneg %p265
        %p927 = pneg %p289
        %p928 = pneg %p286
        %p929 = pneg %p310
        %p930 = pneg %p307
        %p931 = pneg %p331
        %p932 = pneg %p328
        %p933 = pneg %p352
        %p934 = pneg %p349
        %p935 = pneg %p373
        %p936 = pneg %p370
        %p937 = pneg %p394
        %p938 = pneg %p391
        %p939 = pneg %p415
        %p940 = pneg %p412
        %p941 = pneg %p436
        %p942 = pneg %p433
        %p943 = pneg %p457
        %p944 = pneg %p454
        %p945 = pneg %p478
        %p946 = pneg %p475
        %p947 = pneg %p499
        %p948 = pneg %p496
        %p949 = pneg %p520
        %p950 = pneg %p517
        %p951 = pneg %p541
        %p952 = pneg %p538
        %p953 = pneg %p562
        %p954 = pneg %p559
        %p955 = pneg %p583
        %p956 = pneg %p580
        %p957 = pneg %p604
        %p958 = pneg %p601
        %p959 = pneg %p625
        %p960 = pneg %p622
        %p961 = pneg %p646
        %p962 = pneg %p643
        %p963 = pneg %p667
        %p964 = pneg %p664
        %p965 = pneg %p688
        %p966 = pneg %p685
        %p967 = pneg %p709
        %p968 = pneg %p706
        %p969 = pneg %p730
        %p970 = pneg %p727
        %p971 = pneg %p751
        %p972 = pneg %p748
        %p973 = pneg %p777
        %p974 = pneg %p774
        %s975 = sand.u32 %s764, 1
        %s976 = scalar_lea.sflag [#allocation3], %s975
        %s977 = sand.u32 %s764, 1
        %s978 = scalar_lea.vmem [#allocation2], %s977
        %p979 = scmp.lt.s32.totalorder %s79, 1
        %s980 = scalar_select %p979, %s79, 1
        %s981 = smul.addr %s980, 16
        %s982 = smul.addr %s981, 8
        %s983 = scalar_lea.vmem %s1, %s982
        %v984 = vld [vmem:[%s983] sm:$0xff]
        %v985 = vld [vmem:[%s983 + $0x8] sm:$0xff]
        %v986 = vld [vmem:[%s983 + $0x10] sm:$0xff]
        %v987 = vld [vmem:[%s983 + $0x18] sm:$0xff]
        %v988 = vld [vmem:[%s983 + $0x20] sm:$0xff]
        %v989 = vld [vmem:[%s983 + $0x28] sm:$0xff]
        %v990 = vld [vmem:[%s983 + $0x30] sm:$0xff]
        %v991 = vld [vmem:[%s983 + $0x38] sm:$0xff]
        %v992 = vld [vmem:[%s983 + $0x40] sm:$0xff]
        %v993 = vld [vmem:[%s983 + $0x48] sm:$0xff]
        %v994 = vld [vmem:[%s983 + $0x50] sm:$0xff]
        %v995 = vld [vmem:[%s983 + $0x58] sm:$0xff]
        %v996 = vld [vmem:[%s983 + $0x60] sm:$0xff]
        %v997 = vld [vmem:[%s983 + $0x68] sm:$0xff]
        %v998 = vld [vmem:[%s983 + $0x70] sm:$0xff]
        %v999 = vld [vmem:[%s983 + $0x78] sm:$0xff]
        %v1000 = vld [vmem:[%s3] sm:$0xff]
        %v1001 = vld [vmem:[%s3 + $0x8] sm:$0xff]
        %v1002 = vld [vmem:[%s3 + $0x10] sm:$0xff]
        %v1003 = vld [vmem:[%s3 + $0x18] sm:$0xff]
        %v1004 = vld [vmem:[%s5] sm:$0xff]
        %v1005 = vld [vmem:[%s5 + $0x8] sm:$0xff]
        %v1006 = vld [vmem:[%s5 + $0x10] sm:$0xff]
        %v1007 = vld [vmem:[%s5 + $0x18] sm:$0xff]
        %1009 = vset.pattern.permute.xlu0 0
        %1010 = vperm.xlu0 %1009, %v1004
        %v1011 = vpop.permute.xlu0 %1010
        %1014 = vset.pattern.permute.xlu0 0
        %1015 = vperm.xlu0 %1014, %v1005
        %v1016 = vpop.permute.xlu0 %1015
        %1019 = vset.pattern.permute.xlu0 0
        %1020 = vperm.xlu0 %1019, %v1006
        %v1021 = vpop.permute.xlu0 %1020
        %1024 = vset.pattern.permute.xlu0 0
        %1025 = vperm.xlu0 %1024, %v1007
        %v1026 = vpop.permute.xlu0 %1025
        %vm1028 = vcmask 130048
        %v1030 = vsel %vm1028, %v1000, 0
        %v1033 = vsel %vm1028, %v1001, 0
        %v1036 = vsel %vm1028, %v1002, 0
        %v1039 = vsel %vm1028, %v1003, 0
        %1041 = vmatpush.msra.mxu0 0.0
        %1042 = vmatpush.msra.mxu0 0.0
        %1043 = vmatpush.msra.mxu0 0.0
        %1044 = vmatpush.msra.mxu0 0.0
        %1045 = vmatpush.msra.mxu0 0.0
        %1046 = vmatpush.msra.mxu0 0.0
        %1047 = vmatpush.msra.mxu0 0.0
        %1048 = vmatpush.msra.mxu0 0.0
        %1049 = vmatpush.msra.mxu0 0.0
        %1050 = vmatpush.msra.mxu0 0.0
        %1051 = vmatpush.msra.mxu0 0.0
        %1052 = vmatpush.msra.mxu0 0.0
        %1053 = vmatpush.msra.mxu0 0.0
        %1054 = vmatpush.msra.mxu0 0.0
        %1055 = vmatpush.msra.mxu0 %v992
        %1056 = vmatpush.msra.mxu0 %v984
        %1057 = vmatmul.f32.gmra.mxu0 %v1030
        %v1058 = vpop.f32.mrf.mxu0
        %v1059 = vadd.f32 %v1011, %v1058
        %1060 = vmatmul.f32.gmra.mxu0 %v1033
        %v1061 = vpop.f32.mrf.mxu0
        %v1062 = vadd.f32 %v1016, %v1061
        %1063 = vmatmul.f32.gmra.mxu0 %v1036
        %v1064 = vpop.f32.mrf.mxu0
        %v1065 = vadd.f32 %v1021, %v1064
        %1066 = vmatmul.f32.gmra.mxu0 %v1039
        %v1067 = vpop.f32.mrf.mxu0
        %v1068 = vadd.f32 %v1026, %v1067
        %1069 = vdwg.mxu0
        %1070 = vmatpush.msra.mxu0 0.0
        %1071 = vmatpush.msra.mxu0 0.0
        %1072 = vmatpush.msra.mxu0 0.0
        %1073 = vmatpush.msra.mxu0 0.0
        %1074 = vmatpush.msra.mxu0 0.0
        %1075 = vmatpush.msra.mxu0 0.0
        %1076 = vmatpush.msra.mxu0 0.0
        %1077 = vmatpush.msra.mxu0 0.0
        %1078 = vmatpush.msra.mxu0 0.0
        %1079 = vmatpush.msra.mxu0 0.0
        %1080 = vmatpush.msra.mxu0 0.0
        %1081 = vmatpush.msra.mxu0 0.0
        %1082 = vmatpush.msra.mxu0 0.0
        %1083 = vmatpush.msra.mxu0 0.0
        %1084 = vmatpush.msra.mxu0 %v993
        %1085 = vmatpush.msra.mxu0 %v985
        %1086 = vmatmul.f32.gmra.mxu0 %v1030
        %v1087 = vpop.f32.mrf.mxu0
        %v1088 = vadd.f32 %v1011, %v1087
        %1089 = vmatmul.f32.gmra.mxu0 %v1033
        %v1090 = vpop.f32.mrf.mxu0
        %v1091 = vadd.f32 %v1016, %v1090
        %1092 = vmatmul.f32.gmra.mxu0 %v1036
        %v1093 = vpop.f32.mrf.mxu0
        %v1094 = vadd.f32 %v1021, %v1093
        %1095 = vmatmul.f32.gmra.mxu0 %v1039
        %v1096 = vpop.f32.mrf.mxu0
        %v1097 = vadd.f32 %v1026, %v1096
        %1098 = vdwg.mxu0
        %1099 = vmatpush.msra.mxu0 0.0
        %1100 = vmatpush.msra.mxu0 0.0
        %1101 = vmatpush.msra.mxu0 0.0
        %1102 = vmatpush.msra.mxu0 0.0
        %1103 = vmatpush.msra.mxu0 0.0
        %1104 = vmatpush.msra.mxu0 0.0
        %1105 = vmatpush.msra.mxu0 0.0
        %1106 = vmatpush.msra.mxu0 0.0
        %1107 = vmatpush.msra.mxu0 0.0
        %1108 = vmatpush.msra.mxu0 0.0
        %1109 = vmatpush.msra.mxu0 0.0
        %1110 = vmatpush.msra.mxu0 0.0
        %1111 = vmatpush.msra.mxu0 0.0
        %1112 = vmatpush.msra.mxu0 0.0
        %1113 = vmatpush.msra.mxu0 %v994
        %1114 = vmatpush.msra.mxu0 %v986
        %1115 = vmatmul.f32.gmra.mxu0 %v1030
        %v1116 = vpop.f32.mrf.mxu0
        %v1117 = vadd.f32 %v1011, %v1116
        %1118 = vmatmul.f32.gmra.mxu0 %v1033
        %v1119 = vpop.f32.mrf.mxu0
        %v1120 = vadd.f32 %v1016, %v1119
        %1121 = vmatmul.f32.gmra.mxu0 %v1036
        %v1122 = vpop.f32.mrf.mxu0
        %v1123 = vadd.f32 %v1021, %v1122
        %1124 = vmatmul.f32.gmra.mxu0 %v1039
        %v1125 = vpop.f32.mrf.mxu0
        %v1126 = vadd.f32 %v1026, %v1125
        %1127 = vdwg.mxu0
        %1128 = vmatpush.msra.mxu0 0.0
        %1129 = vmatpush.msra.mxu0 0.0
        %1130 = vmatpush.msra.mxu0 0.0
        %1131 = vmatpush.msra.mxu0 0.0
        %1132 = vmatpush.msra.mxu0 0.0
        %1133 = vmatpush.msra.mxu0 0.0
        %1134 = vmatpush.msra.mxu0 0.0
        %1135 = vmatpush.msra.mxu0 0.0
        %1136 = vmatpush.msra.mxu0 0.0
        %1137 = vmatpush.msra.mxu0 0.0
        %1138 = vmatpush.msra.mxu0 0.0
        %1139 = vmatpush.msra.mxu0 0.0
        %1140 = vmatpush.msra.mxu0 0.0
        %1141 = vmatpush.msra.mxu0 0.0
        %1142 = vmatpush.msra.mxu0 %v995
        %1143 = vmatpush.msra.mxu0 %v987
        %1144 = vmatmul.f32.gmra.mxu0 %v1030
        %v1145 = vpop.f32.mrf.mxu0
        %v1146 = vadd.f32 %v1011, %v1145
        %1147 = vmatmul.f32.gmra.mxu0 %v1033
        %v1148 = vpop.f32.mrf.mxu0
        %v1149 = vadd.f32 %v1016, %v1148
        %1150 = vmatmul.f32.gmra.mxu0 %v1036
        %v1151 = vpop.f32.mrf.mxu0
        %v1152 = vadd.f32 %v1021, %v1151
        %1153 = vmatmul.f32.gmra.mxu0 %v1039
        %v1154 = vpop.f32.mrf.mxu0
        %v1155 = vadd.f32 %v1026, %v1154
        %1156 = vdwg.mxu0
        %1157 = vmatpush.msra.mxu0 0.0
        %1158 = vmatpush.msra.mxu0 0.0
        %1159 = vmatpush.msra.mxu0 0.0
        %1160 = vmatpush.msra.mxu0 0.0
        %1161 = vmatpush.msra.mxu0 0.0
        %1162 = vmatpush.msra.mxu0 0.0
        %1163 = vmatpush.msra.mxu0 0.0
        %1164 = vmatpush.msra.mxu0 0.0
        %1165 = vmatpush.msra.mxu0 0.0
        %1166 = vmatpush.msra.mxu0 0.0
        %1167 = vmatpush.msra.mxu0 0.0
        %1168 = vmatpush.msra.mxu0 0.0
        %1169 = vmatpush.msra.mxu0 0.0
        %1170 = vmatpush.msra.mxu0 0.0
        %1171 = vmatpush.msra.mxu0 %v996
        %1172 = vmatpush.msra.mxu0 %v988
        %1173 = vmatmul.f32.gmra.mxu0 %v1030
        %v1174 = vpop.f32.mrf.mxu0
        %v1175 = vadd.f32 %v1011, %v1174
        %1176 = vmatmul.f32.gmra.mxu0 %v1033
        %v1177 = vpop.f32.mrf.mxu0
        %v1178 = vadd.f32 %v1016, %v1177
        %1179 = vmatmul.f32.gmra.mxu0 %v1036
        %v1180 = vpop.f32.mrf.mxu0
        %v1181 = vadd.f32 %v1021, %v1180
        %1182 = vmatmul.f32.gmra.mxu0 %v1039
        %v1183 = vpop.f32.mrf.mxu0
        %v1184 = vadd.f32 %v1026, %v1183
        %1185 = vdwg.mxu0
        %1186 = vmatpush.msra.mxu0 0.0
        %1187 = vmatpush.msra.mxu0 0.0
        %1188 = vmatpush.msra.mxu0 0.0
        %1189 = vmatpush.msra.mxu0 0.0
        %1190 = vmatpush.msra.mxu0 0.0
        %1191 = vmatpush.msra.mxu0 0.0
        %1192 = vmatpush.msra.mxu0 0.0
        %1193 = vmatpush.msra.mxu0 0.0
        %1194 = vmatpush.msra.mxu0 0.0
        %1195 = vmatpush.msra.mxu0 0.0
        %1196 = vmatpush.msra.mxu0 0.0
        %1197 = vmatpush.msra.mxu0 0.0
        %1198 = vmatpush.msra.mxu0 0.0
        %1199 = vmatpush.msra.mxu0 0.0
        %1200 = vmatpush.msra.mxu0 %v997
        %1201 = vmatpush.msra.mxu0 %v989
        %1202 = vmatmul.f32.gmra.mxu0 %v1030
        %v1203 = vpop.f32.mrf.mxu0
        %v1204 = vadd.f32 %v1011, %v1203
        %1205 = vmatmul.f32.gmra.mxu0 %v1033
        %v1206 = vpop.f32.mrf.mxu0
        %v1207 = vadd.f32 %v1016, %v1206
        %1208 = vmatmul.f32.gmra.mxu0 %v1036
        %v1209 = vpop.f32.mrf.mxu0
        %v1210 = vadd.f32 %v1021, %v1209
        %1211 = vmatmul.f32.gmra.mxu0 %v1039
        %v1212 = vpop.f32.mrf.mxu0
        %v1213 = vadd.f32 %v1026, %v1212
        %1214 = vdwg.mxu0
        %1215 = vmatpush.msra.mxu0 0.0
        %1216 = vmatpush.msra.mxu0 0.0
        %1217 = vmatpush.msra.mxu0 0.0
        %1218 = vmatpush.msra.mxu0 0.0
        %1219 = vmatpush.msra.mxu0 0.0
        %1220 = vmatpush.msra.mxu0 0.0
        %1221 = vmatpush.msra.mxu0 0.0
        %1222 = vmatpush.msra.mxu0 0.0
        %1223 = vmatpush.msra.mxu0 0.0
        %1224 = vmatpush.msra.mxu0 0.0
        %1225 = vmatpush.msra.mxu0 0.0
        %1226 = vmatpush.msra.mxu0 0.0
        %1227 = vmatpush.msra.mxu0 0.0
        %1228 = vmatpush.msra.mxu0 0.0
        %1229 = vmatpush.msra.mxu0 %v998
        %1230 = vmatpush.msra.mxu0 %v990
        %1231 = vmatmul.f32.gmra.mxu0 %v1030
        %v1232 = vpop.f32.mrf.mxu0
        %v1233 = vadd.f32 %v1011, %v1232
        %1234 = vmatmul.f32.gmra.mxu0 %v1033
        %v1235 = vpop.f32.mrf.mxu0
        %v1236 = vadd.f32 %v1016, %v1235
        %1237 = vmatmul.f32.gmra.mxu0 %v1036
        %v1238 = vpop.f32.mrf.mxu0
        %v1239 = vadd.f32 %v1021, %v1238
        %1240 = vmatmul.f32.gmra.mxu0 %v1039
        %v1241 = vpop.f32.mrf.mxu0
        %v1242 = vadd.f32 %v1026, %v1241
        %1243 = vdwg.mxu0
        %1244 = vmatpush.msra.mxu0 0.0
        %1245 = vmatpush.msra.mxu0 0.0
        %1246 = vmatpush.msra.mxu0 0.0
        %1247 = vmatpush.msra.mxu0 0.0
        %1248 = vmatpush.msra.mxu0 0.0
        %1249 = vmatpush.msra.mxu0 0.0
        %1250 = vmatpush.msra.mxu0 0.0
        %1251 = vmatpush.msra.mxu0 0.0
        %1252 = vmatpush.msra.mxu0 0.0
        %1253 = vmatpush.msra.mxu0 0.0
        %1254 = vmatpush.msra.mxu0 0.0
        %1255 = vmatpush.msra.mxu0 0.0
        %1256 = vmatpush.msra.mxu0 0.0
        %1257 = vmatpush.msra.mxu0 0.0
        %1258 = vmatpush.msra.mxu0 %v999
        %1259 = vmatpush.msra.mxu0 %v991
        %1260 = vmatmul.f32.gmra.mxu0 %v1030
        %v1261 = vpop.f32.mrf.mxu0
        %v1262 = vadd.f32 %v1011, %v1261
        %1263 = vmatmul.f32.gmra.mxu0 %v1033
        %v1264 = vpop.f32.mrf.mxu0
        %v1265 = vadd.f32 %v1016, %v1264
        %1266 = vmatmul.f32.gmra.mxu0 %v1036
        %v1267 = vpop.f32.mrf.mxu0
        %v1268 = vadd.f32 %v1021, %v1267
        %1269 = vmatmul.f32.gmra.mxu0 %v1039
        %v1270 = vpop.f32.mrf.mxu0
        %v1271 = vadd.f32 %v1026, %v1270
        %1272 = vdwg.mxu0
        %v1273 = vmax.f32 %v1059, 0.0
        %v1274 = vmax.f32 %v1088, 0.0
        %v1275 = vmax.f32 %v1117, 0.0
        %v1276 = vmax.f32 %v1146, 0.0
        %v1277 = vmax.f32 %v1175, 0.0
        %v1278 = vmax.f32 %v1204, 0.0
        %v1279 = vmax.f32 %v1233, 0.0
        %v1280 = vmax.f32 %v1262, 0.0
        %v1281 = vmax.f32 %v1062, 0.0
        %v1282 = vmax.f32 %v1091, 0.0
        %v1283 = vmax.f32 %v1120, 0.0
        %v1284 = vmax.f32 %v1149, 0.0
        %v1285 = vmax.f32 %v1178, 0.0
        %v1286 = vmax.f32 %v1207, 0.0
        %v1287 = vmax.f32 %v1236, 0.0
        %v1288 = vmax.f32 %v1265, 0.0
        %v1289 = vmax.f32 %v1065, 0.0
        %v1290 = vmax.f32 %v1094, 0.0
        %v1291 = vmax.f32 %v1123, 0.0
        %v1292 = vmax.f32 %v1152, 0.0
        %v1293 = vmax.f32 %v1181, 0.0
        %v1294 = vmax.f32 %v1210, 0.0
        %v1295 = vmax.f32 %v1239, 0.0
        %v1296 = vmax.f32 %v1268, 0.0
        %v1297 = vmax.f32 %v1068, 0.0
        %v1298 = vmax.f32 %v1097, 0.0
        %v1299 = vmax.f32 %v1126, 0.0
        %v1300 = vmax.f32 %v1155, 0.0
        %v1301 = vmax.f32 %v1184, 0.0
        %v1302 = vmax.f32 %v1213, 0.0
        %v1303 = vmax.f32 %v1242, 0.0
        %v1304 = vmax.f32 %v1271, 0.0
        %v1305 = vld [vmem:[%s7] sm:$0xff]
        %v1306 = vld [vmem:[%s7 + $0x8] sm:$0xff]
        %v1307 = vld [vmem:[%s7 + $0x10] sm:$0xff]
        %v1308 = vld [vmem:[%s7 + $0x18] sm:$0xff]
        %1310 = vset.pattern.permute.xlu0 0
        %1311 = vperm.xlu0 %1310, %v1305
        %v1312 = vpop.permute.xlu0 %1311
        %1315 = vset.pattern.permute.xlu0 0
        %1316 = vperm.xlu0 %1315, %v1306
        %v1317 = vpop.permute.xlu0 %1316
        %1320 = vset.pattern.permute.xlu0 0
        %1321 = vperm.xlu0 %1320, %v1307
        %v1322 = vpop.permute.xlu0 %1321
        %1325 = vset.pattern.permute.xlu0 0
        %1326 = vperm.xlu0 %1325, %v1308
        %v1327 = vpop.permute.xlu0 %1326
        %v1329 = vmul.f32 %v1273, %v1312
        %v1330 = vmul.f32 %v1274, %v1312
        %v1331 = vmul.f32 %v1275, %v1312
        %v1332 = vmul.f32 %v1276, %v1312
        %v1333 = vmul.f32 %v1277, %v1312
        %v1334 = vmul.f32 %v1278, %v1312
        %v1335 = vmul.f32 %v1279, %v1312
        %v1336 = vmul.f32 %v1280, %v1312
        %v1337 = vmul.f32 %v1281, %v1317
        %v1338 = vmul.f32 %v1282, %v1317
        %v1339 = vmul.f32 %v1283, %v1317
        %v1340 = vmul.f32 %v1284, %v1317
        %v1341 = vmul.f32 %v1285, %v1317
        %v1342 = vmul.f32 %v1286, %v1317
        %v1343 = vmul.f32 %v1287, %v1317
        %v1344 = vmul.f32 %v1288, %v1317
        %v1345 = vmul.f32 %v1289, %v1322
        %v1346 = vmul.f32 %v1290, %v1322
        %v1347 = vmul.f32 %v1291, %v1322
        %v1348 = vmul.f32 %v1292, %v1322
        %v1349 = vmul.f32 %v1293, %v1322
        %v1350 = vmul.f32 %v1294, %v1322
        %v1351 = vmul.f32 %v1295, %v1322
        %v1352 = vmul.f32 %v1296, %v1322
        %v1353 = vmul.f32 %v1297, %v1327
        %v1354 = vmul.f32 %v1298, %v1327
        %v1355 = vmul.f32 %v1299, %v1327
        %v1356 = vmul.f32 %v1300, %v1327
        %v1357 = vmul.f32 %v1301, %v1327
        %v1358 = vmul.f32 %v1302, %v1327
        %v1359 = vmul.f32 %v1303, %v1327
        %v1360 = vmul.f32 %v1304, %v1327
        %v1361 = vld [vmem:[%s9] sm:$0xff]
        %v1362 = vld [vmem:[%s9 + $0x8] sm:$0xff]
        %v1363 = vld [vmem:[%s9 + $0x10] sm:$0xff]
        %v1364 = vld [vmem:[%s9 + $0x18] sm:$0xff]
        %1366 = vset.pattern.permute.xlu0 0
        %1367 = vperm.xlu0 %1366, %v1361
        %v1368 = vpop.permute.xlu0 %1367
        %1371 = vset.pattern.permute.xlu0 0
        %1372 = vperm.xlu0 %1371, %v1362
        %v1373 = vpop.permute.xlu0 %1372
        %1376 = vset.pattern.permute.xlu0 0
        %1377 = vperm.xlu0 %1376, %v1363
        %v1378 = vpop.permute.xlu0 %1377
        %1381 = vset.pattern.permute.xlu0 0
        %1382 = vperm.xlu0 %1381, %v1364
        %v1383 = vpop.permute.xlu0 %1382
        %v1385 = vadd.f32 %v1329, %v1368
        %v1386 = vadd.f32 %v1330, %v1368
        %v1387 = vadd.f32 %v1331, %v1368
        %v1388 = vadd.f32 %v1332, %v1368
        %v1389 = vadd.f32 %v1333, %v1368
        %v1390 = vadd.f32 %v1334, %v1368
        %v1391 = vadd.f32 %v1335, %v1368
        %v1392 = vadd.f32 %v1336, %v1368
        %v1393 = vadd.f32 %v1337, %v1373
        %v1394 = vadd.f32 %v1338, %v1373
        %v1395 = vadd.f32 %v1339, %v1373
        %v1396 = vadd.f32 %v1340, %v1373
        %v1397 = vadd.f32 %v1341, %v1373
        %v1398 = vadd.f32 %v1342, %v1373
        %v1399 = vadd.f32 %v1343, %v1373
        %v1400 = vadd.f32 %v1344, %v1373
        %v1401 = vadd.f32 %v1345, %v1378
        %v1402 = vadd.f32 %v1346, %v1378
        %v1403 = vadd.f32 %v1347, %v1378
        %v1404 = vadd.f32 %v1348, %v1378
        %v1405 = vadd.f32 %v1349, %v1378
        %v1406 = vadd.f32 %v1350, %v1378
        %v1407 = vadd.f32 %v1351, %v1378
        %v1408 = vadd.f32 %v1352, %v1378
        %v1409 = vadd.f32 %v1353, %v1383
        %v1410 = vadd.f32 %v1354, %v1383
        %v1411 = vadd.f32 %v1355, %v1383
        %v1412 = vadd.f32 %v1356, %v1383
        %v1413 = vadd.f32 %v1357, %v1383
        %v1414 = vadd.f32 %v1358, %v1383
        %v1415 = vadd.f32 %v1359, %v1383
        %v1416 = vadd.f32 %v1360, %v1383
        %1417 = vrot.lane.b32.xlu0 %v1385, 127
        %v1418 = vpop.permute.xlu0 %1417
        %1419 = vrot.lane.b32.xlu0 %v1393, 127
        %v1420 = vpop.permute.xlu0 %1419
        %1421 = vrot.lane.b32.xlu0 %v1401, 127
        %v1422 = vpop.permute.xlu0 %1421
        %1423 = vrot.lane.b32.xlu0 %v1409, 127
        %v1424 = vpop.permute.xlu0 %1423
        %1425 = vrot.lane.b32.xlu0 %v1386, 127
        %v1426 = vpop.permute.xlu0 %1425
        %1427 = vrot.lane.b32.xlu0 %v1394, 127
        %v1428 = vpop.permute.xlu0 %1427
        %1429 = vrot.lane.b32.xlu0 %v1402, 127
        %v1430 = vpop.permute.xlu0 %1429
        %1431 = vrot.lane.b32.xlu0 %v1410, 127
        %v1432 = vpop.permute.xlu0 %1431
        %1433 = vrot.lane.b32.xlu0 %v1387, 127
        %v1434 = vpop.permute.xlu0 %1433
        %1435 = vrot.lane.b32.xlu0 %v1395, 127
        %v1436 = vpop.permute.xlu0 %1435
        %1437 = vrot.lane.b32.xlu0 %v1403, 127
        %v1438 = vpop.permute.xlu0 %1437
        %1439 = vrot.lane.b32.xlu0 %v1411, 127
        %v1440 = vpop.permute.xlu0 %1439
        %1441 = vrot.lane.b32.xlu0 %v1388, 127
        %v1442 = vpop.permute.xlu0 %1441
        %1443 = vrot.lane.b32.xlu0 %v1396, 127
        %v1444 = vpop.permute.xlu0 %1443
        %1445 = vrot.lane.b32.xlu0 %v1404, 127
        %v1446 = vpop.permute.xlu0 %1445
        %1447 = vrot.lane.b32.xlu0 %v1412, 127
        %v1448 = vpop.permute.xlu0 %1447
        %1449 = vrot.lane.b32.xlu0 %v1389, 127
        %v1450 = vpop.permute.xlu0 %1449
        %1451 = vrot.lane.b32.xlu0 %v1397, 127
        %v1452 = vpop.permute.xlu0 %1451
        %1453 = vrot.lane.b32.xlu0 %v1405, 127
        %v1454 = vpop.permute.xlu0 %1453
        %1455 = vrot.lane.b32.xlu0 %v1413, 127
        %v1456 = vpop.permute.xlu0 %1455
        %1457 = vrot.lane.b32.xlu0 %v1390, 127
        %v1458 = vpop.permute.xlu0 %1457
        %1459 = vrot.lane.b32.xlu0 %v1398, 127
        %v1460 = vpop.permute.xlu0 %1459
        %1461 = vrot.lane.b32.xlu0 %v1406, 127
        %v1462 = vpop.permute.xlu0 %1461
        %1463 = vrot.lane.b32.xlu0 %v1414, 127
        %v1464 = vpop.permute.xlu0 %1463
        %1465 = vrot.lane.b32.xlu0 %v1391, 127
        %v1466 = vpop.permute.xlu0 %1465
        %1467 = vrot.lane.b32.xlu0 %v1399, 127
        %v1468 = vpop.permute.xlu0 %1467
        %1469 = vrot.lane.b32.xlu0 %v1407, 127
        %v1470 = vpop.permute.xlu0 %1469
        %1471 = vrot.lane.b32.xlu0 %v1415, 127
        %v1472 = vpop.permute.xlu0 %1471
        %1473 = vrot.lane.b32.xlu0 %v1392, 127
        %v1474 = vpop.permute.xlu0 %1473
        %1475 = vrot.lane.b32.xlu0 %v1400, 127
        %v1476 = vpop.permute.xlu0 %1475
        %1477 = vrot.lane.b32.xlu0 %v1408, 127
        %v1478 = vpop.permute.xlu0 %1477
        %1479 = vrot.lane.b32.xlu0 %v1416, 127
        %v1480 = vpop.permute.xlu0 %1479
        %v1481 = vlaneseq
        %v1482 = vand.u32 %v1481, 127
        %vm1483 = vcmp.lt.s32.totalorder %v1482, 127
        %v1484 = vsel %vm1483, %v1466, %v1474
        %v1485 = vsel %vm1483, %v1468, %v1476
        %v1486 = vsel %vm1483, %v1470, %v1478
        %v1487 = vsel %vm1483, %v1472, %v1480
        %v1488 = vsel %vm1483, %v1458, %v1466
        %v1489 = vsel %vm1483, %v1460, %v1468
        %v1490 = vsel %vm1483, %v1462, %v1470
        %v1491 = vsel %vm1483, %v1464, %v1472
        %v1492 = vsel %vm1483, %v1450, %v1458
        %v1493 = vsel %vm1483, %v1452, %v1460
        %v1494 = vsel %vm1483, %v1454, %v1462
        %v1495 = vsel %vm1483, %v1456, %v1464
        %v1496 = vsel %vm1483, %v1442, %v1450
        %v1497 = vsel %vm1483, %v1444, %v1452
        %v1498 = vsel %vm1483, %v1446, %v1454
        %v1499 = vsel %vm1483, %v1448, %v1456
        %v1500 = vsel %vm1483, %v1434, %v1442
        %v1501 = vsel %vm1483, %v1436, %v1444
        %v1502 = vsel %vm1483, %v1438, %v1446
        %v1503 = vsel %vm1483, %v1440, %v1448
        %v1504 = vsel %vm1483, %v1426, %v1434
        %v1505 = vsel %vm1483, %v1428, %v1436
        %v1506 = vsel %vm1483, %v1430, %v1438
        %v1507 = vsel %vm1483, %v1432, %v1440
        %v1508 = vsel %vm1483, %v1418, %v1426
        %v1509 = vsel %vm1483, %v1420, %v1428
        %v1510 = vsel %vm1483, %v1422, %v1430
        %v1511 = vsel %vm1483, %v1424, %v1432
        %v1512 = vsel %vm1483, %v1474, %v1418
        %v1513 = vsel %vm1483, %v1476, %v1420
        %v1514 = vsel %vm1483, %v1478, %v1422
        %v1515 = vsel %vm1483, %v1480, %v1424
        %v1516 = vmax.f32 %v1385, %v1508
        %v1517 = vmax.f32 %v1386, %v1504
        %v1518 = vmax.f32 %v1387, %v1500
        %v1519 = vmax.f32 %v1388, %v1496
        %v1520 = vmax.f32 %v1389, %v1492
        %v1521 = vmax.f32 %v1390, %v1488
        %v1522 = vmax.f32 %v1391, %v1484
        %v1523 = vmax.f32 %v1392, %v1512
        %v1524 = vmax.f32 %v1393, %v1509
        %v1525 = vmax.f32 %v1394, %v1505
        %v1526 = vmax.f32 %v1395, %v1501
        %v1527 = vmax.f32 %v1396, %v1497
        %v1528 = vmax.f32 %v1397, %v1493
        %v1529 = vmax.f32 %v1398, %v1489
        %v1530 = vmax.f32 %v1399, %v1485
        %v1531 = vmax.f32 %v1400, %v1513
        %v1532 = vmax.f32 %v1401, %v1510
        %v1533 = vmax.f32 %v1402, %v1506
        %v1534 = vmax.f32 %v1403, %v1502
        %v1535 = vmax.f32 %v1404, %v1498
        %v1536 = vmax.f32 %v1405, %v1494
        %v1537 = vmax.f32 %v1406, %v1490
        %v1538 = vmax.f32 %v1407, %v1486
        %v1539 = vmax.f32 %v1408, %v1514
        %v1540 = vmax.f32 %v1409, %v1511
        %v1541 = vmax.f32 %v1410, %v1507
        %v1542 = vmax.f32 %v1411, %v1503
        %v1543 = vmax.f32 %v1412, %v1499
        %v1544 = vmax.f32 %v1413, %v1495
        %v1545 = vmax.f32 %v1414, %v1491
        %v1546 = vmax.f32 %v1415, %v1487
        %v1547 = vmax.f32 %v1416, %v1515
        %1548 = vrot.lane.b32.xlu0 %v1385, 126
        %v1549 = vpop.permute.xlu0 %1548
        %1550 = vrot.lane.b32.xlu0 %v1393, 126
        %v1551 = vpop.permute.xlu0 %1550
        %1552 = vrot.lane.b32.xlu0 %v1401, 126
        %v1553 = vpop.permute.xlu0 %1552
        %1554 = vrot.lane.b32.xlu0 %v1409, 126
        %v1555 = vpop.permute.xlu0 %1554
        %1556 = vrot.lane.b32.xlu0 %v1386, 126
        %v1557 = vpop.permute.xlu0 %1556
        %1558 = vrot.lane.b32.xlu0 %v1394, 126
        %v1559 = vpop.permute.xlu0 %1558
        %1560 = vrot.lane.b32.xlu0 %v1402, 126
        %v1561 = vpop.permute.xlu0 %1560
        %1562 = vrot.lane.b32.xlu0 %v1410, 126
        %v1563 = vpop.permute.xlu0 %1562
        %1564 = vrot.lane.b32.xlu0 %v1387, 126
        %v1565 = vpop.permute.xlu0 %1564
        %1566 = vrot.lane.b32.xlu0 %v1395, 126
        %v1567 = vpop.permute.xlu0 %1566
        %1568 = vrot.lane.b32.xlu0 %v1403, 126
        %v1569 = vpop.permute.xlu0 %1568
        %1570 = vrot.lane.b32.xlu0 %v1411, 126
        %v1571 = vpop.permute.xlu0 %1570
        %1572 = vrot.lane.b32.xlu0 %v1388, 126
        %v1573 = vpop.permute.xlu0 %1572
        %1574 = vrot.lane.b32.xlu0 %v1396, 126
        %v1575 = vpop.permute.xlu0 %1574
        %1576 = vrot.lane.b32.xlu0 %v1404, 126
        %v1577 = vpop.permute.xlu0 %1576
        %1578 = vrot.lane.b32.xlu0 %v1412, 126
        %v1579 = vpop.permute.xlu0 %1578
        %1580 = vrot.lane.b32.xlu0 %v1389, 126
        %v1581 = vpop.permute.xlu0 %1580
        %1582 = vrot.lane.b32.xlu0 %v1397, 126
        %v1583 = vpop.permute.xlu0 %1582
        %1584 = vrot.lane.b32.xlu0 %v1405, 126
        %v1585 = vpop.permute.xlu0 %1584
        %1586 = vrot.lane.b32.xlu0 %v1413, 126
        %v1587 = vpop.permute.xlu0 %1586
        %1588 = vrot.lane.b32.xlu0 %v1390, 126
        %v1589 = vpop.permute.xlu0 %1588
        %1590 = vrot.lane.b32.xlu0 %v1398, 126
        %v1591 = vpop.permute.xlu0 %1590
        %1592 = vrot.lane.b32.xlu0 %v1406, 126
        %v1593 = vpop.permute.xlu0 %1592
        %1594 = vrot.lane.b32.xlu0 %v1414, 126
        %v1595 = vpop.permute.xlu0 %1594
        %1596 = vrot.lane.b32.xlu0 %v1391, 126
        %v1597 = vpop.permute.xlu0 %1596
        %1598 = vrot.lane.b32.xlu0 %v1399, 126
        %v1599 = vpop.permute.xlu0 %1598
        %1600 = vrot.lane.b32.xlu0 %v1407, 126
        %v1601 = vpop.permute.xlu0 %1600
        %1602 = vrot.lane.b32.xlu0 %v1415, 126
        %v1603 = vpop.permute.xlu0 %1602
        %1604 = vrot.lane.b32.xlu0 %v1392, 126
        %v1605 = vpop.permute.xlu0 %1604
        %1606 = vrot.lane.b32.xlu0 %v1400, 126
        %v1607 = vpop.permute.xlu0 %1606
        %1608 = vrot.lane.b32.xlu0 %v1408, 126
        %v1609 = vpop.permute.xlu0 %1608
        %1610 = vrot.lane.b32.xlu0 %v1416, 126
        %v1611 = vpop.permute.xlu0 %1610
        %vm1612 = vcmp.lt.s32.totalorder %v1482, 126
        %v1613 = vsel %vm1612, %v1597, %v1605
        %v1614 = vsel %vm1612, %v1599, %v1607
        %v1615 = vsel %vm1612, %v1601, %v1609
        %v1616 = vsel %vm1612, %v1603, %v1611
        %v1617 = vsel %vm1612, %v1589, %v1597
        %v1618 = vsel %vm1612, %v1591, %v1599
        %v1619 = vsel %vm1612, %v1593, %v1601
        %v1620 = vsel %vm1612, %v1595, %v1603
        %v1621 = vsel %vm1612, %v1581, %v1589
        %v1622 = vsel %vm1612, %v1583, %v1591
        %v1623 = vsel %vm1612, %v1585, %v1593
        %v1624 = vsel %vm1612, %v1587, %v1595
        %v1625 = vsel %vm1612, %v1573, %v1581
        %v1626 = vsel %vm1612, %v1575, %v1583
        %v1627 = vsel %vm1612, %v1577, %v1585
        %v1628 = vsel %vm1612, %v1579, %v1587
        %v1629 = vsel %vm1612, %v1565, %v1573
        %v1630 = vsel %vm1612, %v1567, %v1575
        %v1631 = vsel %vm1612, %v1569, %v1577
        %v1632 = vsel %vm1612, %v1571, %v1579
        %v1633 = vsel %vm1612, %v1557, %v1565
        %v1634 = vsel %vm1612, %v1559, %v1567
        %v1635 = vsel %vm1612, %v1561, %v1569
        %v1636 = vsel %vm1612, %v1563, %v1571
        %v1637 = vsel %vm1612, %v1549, %v1557
        %v1638 = vsel %vm1612, %v1551, %v1559
        %v1639 = vsel %vm1612, %v1553, %v1561
        %v1640 = vsel %vm1612, %v1555, %v1563
        %v1641 = vsel %vm1612, %v1605, %v1549
        %v1642 = vsel %vm1612, %v1607, %v1551
        %v1643 = vsel %vm1612, %v1609, %v1553
        %v1644 = vsel %vm1612, %v1611, %v1555
        %v1645 = vmax.f32 %v1516, %v1637
        %v1646 = vmax.f32 %v1517, %v1633
        %v1647 = vmax.f32 %v1518, %v1629
        %v1648 = vmax.f32 %v1519, %v1625
        %v1649 = vmax.f32 %v1520, %v1621
        %v1650 = vmax.f32 %v1521, %v1617
        %v1651 = vmax.f32 %v1522, %v1613
        %v1652 = vmax.f32 %v1523, %v1641
        %v1653 = vmax.f32 %v1524, %v1638
        %v1654 = vmax.f32 %v1525, %v1634
        %v1655 = vmax.f32 %v1526, %v1630
        %v1656 = vmax.f32 %v1527, %v1626
        %v1657 = vmax.f32 %v1528, %v1622
        %v1658 = vmax.f32 %v1529, %v1618
        %v1659 = vmax.f32 %v1530, %v1614
        %v1660 = vmax.f32 %v1531, %v1642
        %v1661 = vmax.f32 %v1532, %v1639
        %v1662 = vmax.f32 %v1533, %v1635
        %v1663 = vmax.f32 %v1534, %v1631
        %v1664 = vmax.f32 %v1535, %v1627
        %v1665 = vmax.f32 %v1536, %v1623
        %v1666 = vmax.f32 %v1537, %v1619
        %v1667 = vmax.f32 %v1538, %v1615
        %v1668 = vmax.f32 %v1539, %v1643
        %v1669 = vmax.f32 %v1540, %v1640
        %v1670 = vmax.f32 %v1541, %v1636
        %v1671 = vmax.f32 %v1542, %v1632
        %v1672 = vmax.f32 %v1543, %v1628
        %v1673 = vmax.f32 %v1544, %v1624
        %v1674 = vmax.f32 %v1545, %v1620
        %v1675 = vmax.f32 %v1546, %v1616
        %v1676 = vmax.f32 %v1547, %v1644
        %1677 = vrot.lane.b32.xlu0 %v1385, 125
        %v1678 = vpop.permute.xlu0 %1677
        %1679 = vrot.lane.b32.xlu0 %v1393, 125
        %v1680 = vpop.permute.xlu0 %1679
        %1681 = vrot.lane.b32.xlu0 %v1401, 125
        %v1682 = vpop.permute.xlu0 %1681
        %1683 = vrot.lane.b32.xlu0 %v1409, 125
        %v1684 = vpop.permute.xlu0 %1683
        %1685 = vrot.lane.b32.xlu0 %v1386, 125
        %v1686 = vpop.permute.xlu0 %1685
        %1687 = vrot.lane.b32.xlu0 %v1394, 125
        %v1688 = vpop.permute.xlu0 %1687
        %1689 = vrot.lane.b32.xlu0 %v1402, 125
        %v1690 = vpop.permute.xlu0 %1689
        %1691 = vrot.lane.b32.xlu0 %v1410, 125
        %v1692 = vpop.permute.xlu0 %1691
        %1693 = vrot.lane.b32.xlu0 %v1387, 125
        %v1694 = vpop.permute.xlu0 %1693
        %1695 = vrot.lane.b32.xlu0 %v1395, 125
        %v1696 = vpop.permute.xlu0 %1695
        %1697 = vrot.lane.b32.xlu0 %v1403, 125
        %v1698 = vpop.permute.xlu0 %1697
        %1699 = vrot.lane.b32.xlu0 %v1411, 125
        %v1700 = vpop.permute.xlu0 %1699
        %1701 = vrot.lane.b32.xlu0 %v1388, 125
        %v1702 = vpop.permute.xlu0 %1701
        %1703 = vrot.lane.b32.xlu0 %v1396, 125
        %v1704 = vpop.permute.xlu0 %1703
        %1705 = vrot.lane.b32.xlu0 %v1404, 125
        %v1706 = vpop.permute.xlu0 %1705
        %1707 = vrot.lane.b32.xlu0 %v1412, 125
        %v1708 = vpop.permute.xlu0 %1707
        %1709 = vrot.lane.b32.xlu0 %v1389, 125
        %v1710 = vpop.permute.xlu0 %1709
        %1711 = vrot.lane.b32.xlu0 %v1397, 125
        %v1712 = vpop.permute.xlu0 %1711
        %1713 = vrot.lane.b32.xlu0 %v1405, 125
        %v1714 = vpop.permute.xlu0 %1713
        %1715 = vrot.lane.b32.xlu0 %v1413, 125
        %v1716 = vpop.permute.xlu0 %1715
        %1717 = vrot.lane.b32.xlu0 %v1390, 125
        %v1718 = vpop.permute.xlu0 %1717
        %1719 = vrot.lane.b32.xlu0 %v1398, 125
        %v1720 = vpop.permute.xlu0 %1719
        %1721 = vrot.lane.b32.xlu0 %v1406, 125
        %v1722 = vpop.permute.xlu0 %1721
        %1723 = vrot.lane.b32.xlu0 %v1414, 125
        %v1724 = vpop.permute.xlu0 %1723
        %1725 = vrot.lane.b32.xlu0 %v1391, 125
        %v1726 = vpop.permute.xlu0 %1725
        %1727 = vrot.lane.b32.xlu0 %v1399, 125
        %v1728 = vpop.permute.xlu0 %1727
        %1729 = vrot.lane.b32.xlu0 %v1407, 125
        %v1730 = vpop.permute.xlu0 %1729
        %1731 = vrot.lane.b32.xlu0 %v1415, 125
        %v1732 = vpop.permute.xlu0 %1731
        %1733 = vrot.lane.b32.xlu0 %v1392, 125
        %v1734 = vpop.permute.xlu0 %1733
        %1735 = vrot.lane.b32.xlu0 %v1400, 125
        %v1736 = vpop.permute.xlu0 %1735
        %1737 = vrot.lane.b32.xlu0 %v1408, 125
        %v1738 = vpop.permute.xlu0 %1737
        %1739 = vrot.lane.b32.xlu0 %v1416, 125
        %v1740 = vpop.permute.xlu0 %1739
        %vm1741 = vcmp.lt.s32.totalorder %v1482, 125
        %v1742 = vsel %vm1741, %v1726, %v1734
        %v1743 = vsel %vm1741, %v1728, %v1736
        %v1744 = vsel %vm1741, %v1730, %v1738
        %v1745 = vsel %vm1741, %v1732, %v1740
        %v1746 = vsel %vm1741, %v1718, %v1726
        %v1747 = vsel %vm1741, %v1720, %v1728
        %v1748 = vsel %vm1741, %v1722, %v1730
        %v1749 = vsel %vm1741, %v1724, %v1732
        %v1750 = vsel %vm1741, %v1710, %v1718
        %v1751 = vsel %vm1741, %v1712, %v1720
        %v1752 = vsel %vm1741, %v1714, %v1722
        %v1753 = vsel %vm1741, %v1716, %v1724
        %v1754 = vsel %vm1741, %v1702, %v1710
        %v1755 = vsel %vm1741, %v1704, %v1712
        %v1756 = vsel %vm1741, %v1706, %v1714
        %v1757 = vsel %vm1741, %v1708, %v1716
        %v1758 = vsel %vm1741, %v1694, %v1702
        %v1759 = vsel %vm1741, %v1696, %v1704
        %v1760 = vsel %vm1741, %v1698, %v1706
        %v1761 = vsel %vm1741, %v1700, %v1708
        %v1762 = vsel %vm1741, %v1686, %v1694
        %v1763 = vsel %vm1741, %v1688, %v1696
        %v1764 = vsel %vm1741, %v1690, %v1698
        %v1765 = vsel %vm1741, %v1692, %v1700
        %v1766 = vsel %vm1741, %v1678, %v1686
        %v1767 = vsel %vm1741, %v1680, %v1688
        %v1768 = vsel %vm1741, %v1682, %v1690
        %v1769 = vsel %vm1741, %v1684, %v1692
        %v1770 = vsel %vm1741, %v1734, %v1678
        %v1771 = vsel %vm1741, %v1736, %v1680
        %v1772 = vsel %vm1741, %v1738, %v1682
        %v1773 = vsel %vm1741, %v1740, %v1684
        %v1774 = vmax.f32 %v1645, %v1766
        %v1775 = vmax.f32 %v1646, %v1762
        %v1776 = vmax.f32 %v1647, %v1758
        %v1777 = vmax.f32 %v1648, %v1754
        %v1778 = vmax.f32 %v1649, %v1750
        %v1779 = vmax.f32 %v1650, %v1746
        %v1780 = vmax.f32 %v1651, %v1742
        %v1781 = vmax.f32 %v1652, %v1770
        %v1782 = vmax.f32 %v1653, %v1767
        %v1783 = vmax.f32 %v1654, %v1763
        %v1784 = vmax.f32 %v1655, %v1759
        %v1785 = vmax.f32 %v1656, %v1755
        %v1786 = vmax.f32 %v1657, %v1751
        %v1787 = vmax.f32 %v1658, %v1747
        %v1788 = vmax.f32 %v1659, %v1743
        %v1789 = vmax.f32 %v1660, %v1771
        %v1790 = vmax.f32 %v1661, %v1768
        %v1791 = vmax.f32 %v1662, %v1764
        %v1792 = vmax.f32 %v1663, %v1760
        %v1793 = vmax.f32 %v1664, %v1756
        %v1794 = vmax.f32 %v1665, %v1752
        %v1795 = vmax.f32 %v1666, %v1748
        %v1796 = vmax.f32 %v1667, %v1744
        %v1797 = vmax.f32 %v1668, %v1772
        %v1798 = vmax.f32 %v1669, %v1769
        %v1799 = vmax.f32 %v1670, %v1765
        %v1800 = vmax.f32 %v1671, %v1761
        %v1801 = vmax.f32 %v1672, %v1757
        %v1802 = vmax.f32 %v1673, %v1753
        %v1803 = vmax.f32 %v1674, %v1749
        %v1804 = vmax.f32 %v1675, %v1745
        %v1805 = vmax.f32 %v1676, %v1773
        %v1806 = vld [vmem:[%s19] sm:$0xff]
        %v1807 = vld [vmem:[%s19 + $0x8] sm:$0xff]
        %v1808 = vld [vmem:[%s19 + $0x10] sm:$0xff]
        %v1809 = vld [vmem:[%s19 + $0x18] sm:$0xff]
        %v1810 = vld [vmem:[%s19 + $0x20] sm:$0xff]
        %v1811 = vld [vmem:[%s19 + $0x28] sm:$0xff]
        %v1812 = vld [vmem:[%s19 + $0x30] sm:$0xff]
        %v1813 = vld [vmem:[%s19 + $0x38] sm:$0xff]
        %v1814 = vld [vmem:[%s19 + $0x40] sm:$0xff]
        %v1815 = vld [vmem:[%s19 + $0x48] sm:$0xff]
        %v1816 = vld [vmem:[%s19 + $0x50] sm:$0xff]
        %v1817 = vld [vmem:[%s19 + $0x58] sm:$0xff]
        %v1818 = vld [vmem:[%s19 + $0x60] sm:$0xff]
        %v1819 = vld [vmem:[%s19 + $0x68] sm:$0xff]
        %v1820 = vld [vmem:[%s19 + $0x70] sm:$0xff]
        %v1821 = vld [vmem:[%s19 + $0x78] sm:$0xff]
        %v1822 = vld [vmem:[%s19 + $0x80] sm:$0xff]
        %v1823 = vld [vmem:[%s19 + $0x88] sm:$0xff]
        %v1824 = vld [vmem:[%s19 + $0x90] sm:$0xff]
        %v1825 = vld [vmem:[%s19 + $0x98] sm:$0xff]
        %v1826 = vld [vmem:[%s19 + $0xa0] sm:$0xff]
        %v1827 = vld [vmem:[%s19 + $0xa8] sm:$0xff]
        %v1828 = vld [vmem:[%s19 + $0xb0] sm:$0xff]
        %v1829 = vld [vmem:[%s19 + $0xb8] sm:$0xff]
        %v1830 = vld [vmem:[%s19 + $0xc0] sm:$0xff]
        %v1831 = vld [vmem:[%s19 + $0xc8] sm:$0xff]
        %v1832 = vld [vmem:[%s19 + $0xd0] sm:$0xff]
        %v1833 = vld [vmem:[%s19 + $0xd8] sm:$0xff]
        %v1834 = vld [vmem:[%s19 + $0xe0] sm:$0xff]
        %v1835 = vld [vmem:[%s19 + $0xe8] sm:$0xff]
        %v1836 = vld [vmem:[%s19 + $0xf0] sm:$0xff]
        %v1837 = vld [vmem:[%s19 + $0xf8] sm:$0xff]
        %v1838 = vld [vmem:[%s19 + $0x100] sm:$0xff]
        %v1839 = vld [vmem:[%s19 + $0x108] sm:$0xff]
        %v1840 = vld [vmem:[%s19 + $0x110] sm:$0xff]
        %v1841 = vld [vmem:[%s19 + $0x118] sm:$0xff]
        %v1842 = vld [vmem:[%s19 + $0x120] sm:$0xff]
        %v1843 = vld [vmem:[%s19 + $0x128] sm:$0xff]
        %v1844 = vld [vmem:[%s19 + $0x130] sm:$0xff]
        %v1845 = vld [vmem:[%s19 + $0x138] sm:$0xff]
        %v1846 = vld [vmem:[%s19 + $0x140] sm:$0xff]
        %v1847 = vld [vmem:[%s19 + $0x148] sm:$0xff]
        %v1848 = vld [vmem:[%s19 + $0x150] sm:$0xff]
        %v1849 = vld [vmem:[%s19 + $0x158] sm:$0xff]
        %v1850 = vld [vmem:[%s19 + $0x160] sm:$0xff]
        %v1851 = vld [vmem:[%s19 + $0x168] sm:$0xff]
        %v1852 = vld [vmem:[%s19 + $0x170] sm:$0xff]
        %v1853 = vld [vmem:[%s19 + $0x178] sm:$0xff]
        %v1854 = vld [vmem:[%s19 + $0x180] sm:$0xff]
        %v1855 = vld [vmem:[%s19 + $0x188] sm:$0xff]
        %v1856 = vld [vmem:[%s19 + $0x190] sm:$0xff]
        %v1857 = vld [vmem:[%s19 + $0x198] sm:$0xff]
        %v1858 = vld [vmem:[%s19 + $0x1a0] sm:$0xff]
        %v1859 = vld [vmem:[%s19 + $0x1a8] sm:$0xff]
        %v1860 = vld [vmem:[%s19 + $0x1b0] sm:$0xff]
        %v1861 = vld [vmem:[%s19 + $0x1b8] sm:$0xff]
        %v1862 = vld [vmem:[%s19 + $0x1c0] sm:$0xff]
        %v1863 = vld [vmem:[%s19 + $0x1c8] sm:$0xff]
        %v1864 = vld [vmem:[%s19 + $0x1d0] sm:$0xff]
        %v1865 = vld [vmem:[%s19 + $0x1d8] sm:$0xff]
        %v1866 = vld [vmem:[%s19 + $0x1e0] sm:$0xff]
        %v1867 = vld [vmem:[%s19 + $0x1e8] sm:$0xff]
        %v1868 = vld [vmem:[%s19 + $0x1f0] sm:$0xff]
        %v1869 = vld [vmem:[%s19 + $0x1f8] sm:$0xff]
        %v1870 = vld [vmem:[%s19 + $0x200] sm:$0xff]
        %v1871 = vld [vmem:[%s19 + $0x208] sm:$0xff]
        %v1872 = vld [vmem:[%s19 + $0x210] sm:$0xff]
        %v1873 = vld [vmem:[%s19 + $0x218] sm:$0xff]
        %v1874 = vld [vmem:[%s19 + $0x220] sm:$0xff]
        %v1875 = vld [vmem:[%s19 + $0x228] sm:$0xff]
        %v1876 = vld [vmem:[%s19 + $0x230] sm:$0xff]
        %v1877 = vld [vmem:[%s19 + $0x238] sm:$0xff]
        %v1878 = vld [vmem:[%s19 + $0x240] sm:$0xff]
        %v1879 = vld [vmem:[%s19 + $0x248] sm:$0xff]
        %v1880 = vld [vmem:[%s19 + $0x250] sm:$0xff]
        %v1881 = vld [vmem:[%s19 + $0x258] sm:$0xff]
        %v1882 = vld [vmem:[%s19 + $0x260] sm:$0xff]
        %v1883 = vld [vmem:[%s19 + $0x268] sm:$0xff]
        %v1884 = vld [vmem:[%s19 + $0x270] sm:$0xff]
        %v1885 = vld [vmem:[%s19 + $0x278] sm:$0xff]
        %v1886 = vld [vmem:[%s19 + $0x280] sm:$0xff]
        %v1887 = vld [vmem:[%s19 + $0x288] sm:$0xff]
        %v1888 = vld [vmem:[%s19 + $0x290] sm:$0xff]
        %v1889 = vld [vmem:[%s19 + $0x298] sm:$0xff]
        %v1890 = vld [vmem:[%s19 + $0x2a0] sm:$0xff]
        %v1891 = vld [vmem:[%s19 + $0x2a8] sm:$0xff]
        %v1892 = vld [vmem:[%s19 + $0x2b0] sm:$0xff]
        %v1893 = vld [vmem:[%s19 + $0x2b8] sm:$0xff]
        %v1894 = vld [vmem:[%s19 + $0x2c0] sm:$0xff]
        %v1895 = vld [vmem:[%s19 + $0x2c8] sm:$0xff]
        %v1896 = vld [vmem:[%s19 + $0x2d0] sm:$0xff]
        %v1897 = vld [vmem:[%s19 + $0x2d8] sm:$0xff]
        %v1898 = vld [vmem:[%s19 + $0x2e0] sm:$0xff]
        %v1899 = vld [vmem:[%s19 + $0x2e8] sm:$0xff]
        %v1900 = vld [vmem:[%s19 + $0x2f0] sm:$0xff]
        %v1901 = vld [vmem:[%s19 + $0x2f8] sm:$0xff]
        %v1902 = vld [vmem:[%s19 + $0x300] sm:$0xff]
        %v1903 = vld [vmem:[%s19 + $0x308] sm:$0xff]
        %v1904 = vld [vmem:[%s19 + $0x310] sm:$0xff]
        %v1905 = vld [vmem:[%s19 + $0x318] sm:$0xff]
        %v1906 = vld [vmem:[%s19 + $0x320] sm:$0xff]
        %v1907 = vld [vmem:[%s19 + $0x328] sm:$0xff]
        %v1908 = vld [vmem:[%s19 + $0x330] sm:$0xff]
        %v1909 = vld [vmem:[%s19 + $0x338] sm:$0xff]
        %v1910 = vld [vmem:[%s19 + $0x340] sm:$0xff]
        %v1911 = vld [vmem:[%s19 + $0x348] sm:$0xff]
        %v1912 = vld [vmem:[%s19 + $0x350] sm:$0xff]
        %v1913 = vld [vmem:[%s19 + $0x358] sm:$0xff]
        %v1914 = vld [vmem:[%s19 + $0x360] sm:$0xff]
        %v1915 = vld [vmem:[%s19 + $0x368] sm:$0xff]
        %v1916 = vld [vmem:[%s19 + $0x370] sm:$0xff]
        %v1917 = vld [vmem:[%s19 + $0x378] sm:$0xff]
        %v1918 = vld [vmem:[%s19 + $0x380] sm:$0xff]
        %v1919 = vld [vmem:[%s19 + $0x388] sm:$0xff]
        %v1920 = vld [vmem:[%s19 + $0x390] sm:$0xff]
        %v1921 = vld [vmem:[%s19 + $0x398] sm:$0xff]
        %v1922 = vld [vmem:[%s19 + $0x3a0] sm:$0xff]
        %v1923 = vld [vmem:[%s19 + $0x3a8] sm:$0xff]
        %v1924 = vld [vmem:[%s19 + $0x3b0] sm:$0xff]
        %v1925 = vld [vmem:[%s19 + $0x3b8] sm:$0xff]
        %v1926 = vld [vmem:[%s19 + $0x3c0] sm:$0xff]
        %v1927 = vld [vmem:[%s19 + $0x3c8] sm:$0xff]
        %v1928 = vld [vmem:[%s19 + $0x3d0] sm:$0xff]
        %v1929 = vld [vmem:[%s19 + $0x3d8] sm:$0xff]
        %v1930 = vld [vmem:[%s19 + $0x3e0] sm:$0xff]
        %v1931 = vld [vmem:[%s19 + $0x3e8] sm:$0xff]
        %v1932 = vld [vmem:[%s19 + $0x3f0] sm:$0xff]
        %v1933 = vld [vmem:[%s19 + $0x3f8] sm:$0xff]
        %v1934 = vld [vmem:[%s19 + $0x400] sm:$0xff]
        %v1935 = vld [vmem:[%s19 + $0x408] sm:$0xff]
        %v1936 = vld [vmem:[%s19 + $0x410] sm:$0xff]
        %v1937 = vld [vmem:[%s19 + $0x418] sm:$0xff]
        %v1938 = vld [vmem:[%s19 + $0x420] sm:$0xff]
        %v1939 = vld [vmem:[%s19 + $0x428] sm:$0xff]
        %v1940 = vld [vmem:[%s19 + $0x430] sm:$0xff]
        %v1941 = vld [vmem:[%s19 + $0x438] sm:$0xff]
        %v1942 = vld [vmem:[%s19 + $0x440] sm:$0xff]
        %v1943 = vld [vmem:[%s19 + $0x448] sm:$0xff]
        %v1944 = vld [vmem:[%s19 + $0x450] sm:$0xff]
        %v1945 = vld [vmem:[%s19 + $0x458] sm:$0xff]
        %v1946 = vld [vmem:[%s19 + $0x460] sm:$0xff]
        %v1947 = vld [vmem:[%s19 + $0x468] sm:$0xff]
        %v1948 = vld [vmem:[%s19 + $0x470] sm:$0xff]
        %v1949 = vld [vmem:[%s19 + $0x478] sm:$0xff]
        %v1950 = vld [vmem:[%s19 + $0x480] sm:$0xff]
        %v1951 = vld [vmem:[%s19 + $0x488] sm:$0xff]
        %v1952 = vld [vmem:[%s19 + $0x490] sm:$0xff]
        %v1953 = vld [vmem:[%s19 + $0x498] sm:$0xff]
        %v1954 = vld [vmem:[%s19 + $0x4a0] sm:$0xff]
        %v1955 = vld [vmem:[%s19 + $0x4a8] sm:$0xff]
        %v1956 = vld [vmem:[%s19 + $0x4b0] sm:$0xff]
        %v1957 = vld [vmem:[%s19 + $0x4b8] sm:$0xff]
        %v1958 = vld [vmem:[%s19 + $0x4c0] sm:$0xff]
        %v1959 = vld [vmem:[%s19 + $0x4c8] sm:$0xff]
        %v1960 = vld [vmem:[%s19 + $0x4d0] sm:$0xff]
        %v1961 = vld [vmem:[%s19 + $0x4d8] sm:$0xff]
        %v1962 = vld [vmem:[%s19 + $0x4e0] sm:$0xff]
        %v1963 = vld [vmem:[%s19 + $0x4e8] sm:$0xff]
        %v1964 = vld [vmem:[%s19 + $0x4f0] sm:$0xff]
        %v1965 = vld [vmem:[%s19 + $0x4f8] sm:$0xff]
        %v1966 = vld [vmem:[%s19 + $0x500] sm:$0xff]
        %v1967 = vld [vmem:[%s19 + $0x508] sm:$0xff]
        %v1968 = vld [vmem:[%s19 + $0x510] sm:$0xff]
        %v1969 = vld [vmem:[%s19 + $0x518] sm:$0xff]
        %v1970 = vld [vmem:[%s19 + $0x520] sm:$0xff]
        %v1971 = vld [vmem:[%s19 + $0x528] sm:$0xff]
        %v1972 = vld [vmem:[%s19 + $0x530] sm:$0xff]
        %v1973 = vld [vmem:[%s19 + $0x538] sm:$0xff]
        %v1974 = vld [vmem:[%s19 + $0x540] sm:$0xff]
        %v1975 = vld [vmem:[%s19 + $0x548] sm:$0xff]
        %v1976 = vld [vmem:[%s19 + $0x550] sm:$0xff]
        %v1977 = vld [vmem:[%s19 + $0x558] sm:$0xff]
        %v1978 = vld [vmem:[%s19 + $0x560] sm:$0xff]
        %v1979 = vld [vmem:[%s19 + $0x568] sm:$0xff]
        %v1980 = vld [vmem:[%s19 + $0x570] sm:$0xff]
        %v1981 = vld [vmem:[%s19 + $0x578] sm:$0xff]
        %v1982 = vld [vmem:[%s19 + $0x580] sm:$0xff]
        %v1983 = vld [vmem:[%s19 + $0x588] sm:$0xff]
        %v1984 = vld [vmem:[%s19 + $0x590] sm:$0xff]
        %v1985 = vld [vmem:[%s19 + $0x598] sm:$0xff]
        %v1986 = vld [vmem:[%s19 + $0x5a0] sm:$0xff]
        %v1987 = vld [vmem:[%s19 + $0x5a8] sm:$0xff]
        %v1988 = vld [vmem:[%s19 + $0x5b0] sm:$0xff]
        %v1989 = vld [vmem:[%s19 + $0x5b8] sm:$0xff]
        %v1990 = vld [vmem:[%s19 + $0x5c0] sm:$0xff]
        %v1991 = vld [vmem:[%s19 + $0x5c8] sm:$0xff]
        %v1992 = vld [vmem:[%s19 + $0x5d0] sm:$0xff]
        %v1993 = vld [vmem:[%s19 + $0x5d8] sm:$0xff]
        %v1994 = vld [vmem:[%s19 + $0x5e0] sm:$0xff]
        %v1995 = vld [vmem:[%s19 + $0x5e8] sm:$0xff]
        %v1996 = vld [vmem:[%s19 + $0x5f0] sm:$0xff]
        %v1997 = vld [vmem:[%s19 + $0x5f8] sm:$0xff]
        %v1998 = vld [vmem:[%s19 + $0x600] sm:$0xff]
        %v1999 = vld [vmem:[%s19 + $0x608] sm:$0xff]
        %v2000 = vld [vmem:[%s19 + $0x610] sm:$0xff]
        %v2001 = vld [vmem:[%s19 + $0x618] sm:$0xff]
        %v2002 = vld [vmem:[%s19 + $0x620] sm:$0xff]
        %v2003 = vld [vmem:[%s19 + $0x628] sm:$0xff]
        %v2004 = vld [vmem:[%s19 + $0x630] sm:$0xff]
        %v2005 = vld [vmem:[%s19 + $0x638] sm:$0xff]
        %v2006 = vld [vmem:[%s19 + $0x640] sm:$0xff]
        %v2007 = vld [vmem:[%s19 + $0x648] sm:$0xff]
        %v2008 = vld [vmem:[%s19 + $0x650] sm:$0xff]
        %v2009 = vld [vmem:[%s19 + $0x658] sm:$0xff]
        %v2010 = vld [vmem:[%s19 + $0x660] sm:$0xff]
        %v2011 = vld [vmem:[%s19 + $0x668] sm:$0xff]
        %v2012 = vld [vmem:[%s19 + $0x670] sm:$0xff]
        %v2013 = vld [vmem:[%s19 + $0x678] sm:$0xff]
        %v2014 = vld [vmem:[%s19 + $0x680] sm:$0xff]
        %v2015 = vld [vmem:[%s19 + $0x688] sm:$0xff]
        %v2016 = vld [vmem:[%s19 + $0x690] sm:$0xff]
        %v2017 = vld [vmem:[%s19 + $0x698] sm:$0xff]
        %v2018 = vld [vmem:[%s19 + $0x6a0] sm:$0xff]
        %v2019 = vld [vmem:[%s19 + $0x6a8] sm:$0xff]
        %v2020 = vld [vmem:[%s19 + $0x6b0] sm:$0xff]
        %v2021 = vld [vmem:[%s19 + $0x6b8] sm:$0xff]
        %v2022 = vld [vmem:[%s19 + $0x6c0] sm:$0xff]
        %v2023 = vld [vmem:[%s19 + $0x6c8] sm:$0xff]
        %v2024 = vld [vmem:[%s19 + $0x6d0] sm:$0xff]
        %v2025 = vld [vmem:[%s19 + $0x6d8] sm:$0xff]
        %v2026 = vld [vmem:[%s19 + $0x6e0] sm:$0xff]
        %v2027 = vld [vmem:[%s19 + $0x6e8] sm:$0xff]
        %v2028 = vld [vmem:[%s19 + $0x6f0] sm:$0xff]
        %v2029 = vld [vmem:[%s19 + $0x6f8] sm:$0xff]
        %v2030 = vld [vmem:[%s19 + $0x700] sm:$0xff]
        %v2031 = vld [vmem:[%s19 + $0x708] sm:$0xff]
        %v2032 = vld [vmem:[%s19 + $0x710] sm:$0xff]
        %v2033 = vld [vmem:[%s19 + $0x718] sm:$0xff]
        %v2034 = vld [vmem:[%s19 + $0x720] sm:$0xff]
        %v2035 = vld [vmem:[%s19 + $0x728] sm:$0xff]
        %v2036 = vld [vmem:[%s19 + $0x730] sm:$0xff]
        %v2037 = vld [vmem:[%s19 + $0x738] sm:$0xff]
        %v2038 = vld [vmem:[%s19 + $0x740] sm:$0xff]
        %v2039 = vld [vmem:[%s19 + $0x748] sm:$0xff]
        %v2040 = vld [vmem:[%s19 + $0x750] sm:$0xff]
        %v2041 = vld [vmem:[%s19 + $0x758] sm:$0xff]
        %v2042 = vld [vmem:[%s19 + $0x760] sm:$0xff]
        %v2043 = vld [vmem:[%s19 + $0x768] sm:$0xff]
        %v2044 = vld [vmem:[%s19 + $0x770] sm:$0xff]
        %v2045 = vld [vmem:[%s19 + $0x778] sm:$0xff]
        %v2046 = vld [vmem:[%s19 + $0x780] sm:$0xff]
        %v2047 = vld [vmem:[%s19 + $0x788] sm:$0xff]
        %v2048 = vld [vmem:[%s19 + $0x790] sm:$0xff]
        %v2049 = vld [vmem:[%s19 + $0x798] sm:$0xff]
        %v2050 = vld [vmem:[%s19 + $0x7a0] sm:$0xff]
        %v2051 = vld [vmem:[%s19 + $0x7a8] sm:$0xff]
        %v2052 = vld [vmem:[%s19 + $0x7b0] sm:$0xff]
        %v2053 = vld [vmem:[%s19 + $0x7b8] sm:$0xff]
        %v2054 = vld [vmem:[%s19 + $0x7c0] sm:$0xff]
        %v2055 = vld [vmem:[%s19 + $0x7c8] sm:$0xff]
        %v2056 = vld [vmem:[%s19 + $0x7d0] sm:$0xff]
        %v2057 = vld [vmem:[%s19 + $0x7d8] sm:$0xff]
        %v2058 = vld [vmem:[%s19 + $0x7e0] sm:$0xff]
        %v2059 = vld [vmem:[%s19 + $0x7e8] sm:$0xff]
        %v2060 = vld [vmem:[%s19 + $0x7f0] sm:$0xff]
        %v2061 = vld [vmem:[%s19 + $0x7f8] sm:$0xff]
        %2062 = vmatpush.msra.mxu0 %v1836
        %2063 = vmatpush.msra.mxu0 %v1834
        %2064 = vmatpush.msra.mxu0 %v1832
        %2065 = vmatpush.msra.mxu0 %v1830
        %2066 = vmatpush.msra.mxu0 %v1828
        %2067 = vmatpush.msra.mxu0 %v1826
        %2068 = vmatpush.msra.mxu0 %v1824
        %2069 = vmatpush.msra.mxu0 %v1822
        %2070 = vmatpush.msra.mxu0 %v1820
        %2071 = vmatpush.msra.mxu0 %v1818
        %2072 = vmatpush.msra.mxu0 %v1816
        %2073 = vmatpush.msra.mxu0 %v1814
        %2074 = vmatpush.msra.mxu0 %v1812
        %2075 = vmatpush.msra.mxu0 %v1810
        %2076 = vmatpush.msra.mxu0 %v1808
        %2077 = vmatpush.msra.mxu0 %v1806
        %2078 = vmatmul.f32.gmra.mxu0 %v1774
        %v2079 = vpop.f32.mrf.mxu0
        %v2080 = vadd.f32 0.0, %v2079
        %2081 = vmatmul.f32.gmra.mxu0 %v1782
        %v2082 = vpop.f32.mrf.mxu0
        %v2083 = vadd.f32 0.0, %v2082
        %2084 = vmatmul.f32.gmra.mxu0 %v1790
        %v2085 = vpop.f32.mrf.mxu0
        %v2086 = vadd.f32 0.0, %v2085
        %2087 = vmatmul.f32.gmra.mxu0 %v1798
        %v2088 = vpop.f32.mrf.mxu0
        %v2089 = vadd.f32 0.0, %v2088
        %2090 = vdwg.mxu0
        %2091 = vmatpush.msra.mxu0 %v1868
        %2092 = vmatpush.msra.mxu0 %v1866
        %2093 = vmatpush.msra.mxu0 %v1864
        %2094 = vmatpush.msra.mxu0 %v1862
        %2095 = vmatpush.msra.mxu0 %v1860
        %2096 = vmatpush.msra.mxu0 %v1858
        %2097 = vmatpush.msra.mxu0 %v1856
        %2098 = vmatpush.msra.mxu0 %v1854
        %2099 = vmatpush.msra.mxu0 %v1852
        %2100 = vmatpush.msra.mxu0 %v1850
        %2101 = vmatpush.msra.mxu0 %v1848
        %2102 = vmatpush.msra.mxu0 %v1846
        %2103 = vmatpush.msra.mxu0 %v1844
        %2104 = vmatpush.msra.mxu0 %v1842
        %2105 = vmatpush.msra.mxu0 %v1840
        %2106 = vmatpush.msra.mxu0 %v1838
        %2107 = vmatmul.f32.gmra.mxu0 %v1775
        %v2108 = vpop.f32.mrf.mxu0
        %v2109 = vadd.f32 %v2080, %v2108
        %2110 = vmatmul.f32.gmra.mxu0 %v1783
        %v2111 = vpop.f32.mrf.mxu0
        %v2112 = vadd.f32 %v2083, %v2111
        %2113 = vmatmul.f32.gmra.mxu0 %v1791
        %v2114 = vpop.f32.mrf.mxu0
        %v2115 = vadd.f32 %v2086, %v2114
        %2116 = vmatmul.f32.gmra.mxu0 %v1799
        %v2117 = vpop.f32.mrf.mxu0
        %v2118 = vadd.f32 %v2089, %v2117
        %2119 = vdwg.mxu0
        %2120 = vmatpush.msra.mxu0 %v1900
        %2121 = vmatpush.msra.mxu0 %v1898
        %2122 = vmatpush.msra.mxu0 %v1896
        %2123 = vmatpush.msra.mxu0 %v1894
        %2124 = vmatpush.msra.mxu0 %v1892
        %2125 = vmatpush.msra.mxu0 %v1890
        %2126 = vmatpush.msra.mxu0 %v1888
        %2127 = vmatpush.msra.mxu0 %v1886
        %2128 = vmatpush.msra.mxu0 %v1884
        %2129 = vmatpush.msra.mxu0 %v1882
        %2130 = vmatpush.msra.mxu0 %v1880
        %2131 = vmatpush.msra.mxu0 %v1878
        %2132 = vmatpush.msra.mxu0 %v1876
        %2133 = vmatpush.msra.mxu0 %v1874
        %2134 = vmatpush.msra.mxu0 %v1872
        %2135 = vmatpush.msra.mxu0 %v1870
        %2136 = vmatmul.f32.gmra.mxu0 %v1776
        %v2137 = vpop.f32.mrf.mxu0
        %v2138 = vadd.f32 %v2109, %v2137
        %2139 = vmatmul.f32.gmra.mxu0 %v1784
        %v2140 = vpop.f32.mrf.mxu0
        %v2141 = vadd.f32 %v2112, %v2140
        %2142 = vmatmul.f32.gmra.mxu0 %v1792
        %v2143 = vpop.f32.mrf.mxu0
        %v2144 = vadd.f32 %v2115, %v2143
        %2145 = vmatmul.f32.gmra.mxu0 %v1800
        %v2146 = vpop.f32.mrf.mxu0
        %v2147 = vadd.f32 %v2118, %v2146
        %2148 = vdwg.mxu0
        %2149 = vmatpush.msra.mxu0 %v1932
        %2150 = vmatpush.msra.mxu0 %v1930
        %2151 = vmatpush.msra.mxu0 %v1928
        %2152 = vmatpush.msra.mxu0 %v1926
        %2153 = vmatpush.msra.mxu0 %v1924
        %2154 = vmatpush.msra.mxu0 %v1922
        %2155 = vmatpush.msra.mxu0 %v1920
        %2156 = vmatpush.msra.mxu0 %v1918
        %2157 = vmatpush.msra.mxu0 %v1916
        %2158 = vmatpush.msra.mxu0 %v1914
        %2159 = vmatpush.msra.mxu0 %v1912
        %2160 = vmatpush.msra.mxu0 %v1910
        %2161 = vmatpush.msra.mxu0 %v1908
        %2162 = vmatpush.msra.mxu0 %v1906
        %2163 = vmatpush.msra.mxu0 %v1904
        %2164 = vmatpush.msra.mxu0 %v1902
        %2165 = vmatmul.f32.gmra.mxu0 %v1777
        %v2166 = vpop.f32.mrf.mxu0
        %v2167 = vadd.f32 %v2138, %v2166
        %2168 = vmatmul.f32.gmra.mxu0 %v1785
        %v2169 = vpop.f32.mrf.mxu0
        %v2170 = vadd.f32 %v2141, %v2169
        %2171 = vmatmul.f32.gmra.mxu0 %v1793
        %v2172 = vpop.f32.mrf.mxu0
        %v2173 = vadd.f32 %v2144, %v2172
        %2174 = vmatmul.f32.gmra.mxu0 %v1801
        %v2175 = vpop.f32.mrf.mxu0
        %v2176 = vadd.f32 %v2147, %v2175
        %2177 = vdwg.mxu0
        %2178 = vmatpush.msra.mxu0 %v1964
        %2179 = vmatpush.msra.mxu0 %v1962
        %2180 = vmatpush.msra.mxu0 %v1960
        %2181 = vmatpush.msra.mxu0 %v1958
        %2182 = vmatpush.msra.mxu0 %v1956
        %2183 = vmatpush.msra.mxu0 %v1954
        %2184 = vmatpush.msra.mxu0 %v1952
        %2185 = vmatpush.msra.mxu0 %v1950
        %2186 = vmatpush.msra.mxu0 %v1948
        %2187 = vmatpush.msra.mxu0 %v1946
        %2188 = vmatpush.msra.mxu0 %v1944
        %2189 = vmatpush.msra.mxu0 %v1942
        %2190 = vmatpush.msra.mxu0 %v1940
        %2191 = vmatpush.msra.mxu0 %v1938
        %2192 = vmatpush.msra.mxu0 %v1936
        %2193 = vmatpush.msra.mxu0 %v1934
        %2194 = vmatmul.f32.gmra.mxu0 %v1778
        %v2195 = vpop.f32.mrf.mxu0
        %v2196 = vadd.f32 %v2167, %v2195
        %2197 = vmatmul.f32.gmra.mxu0 %v1786
        %v2198 = vpop.f32.mrf.mxu0
        %v2199 = vadd.f32 %v2170, %v2198
        %2200 = vmatmul.f32.gmra.mxu0 %v1794
        %v2201 = vpop.f32.mrf.mxu0
        %v2202 = vadd.f32 %v2173, %v2201
        %2203 = vmatmul.f32.gmra.mxu0 %v1802
        %v2204 = vpop.f32.mrf.mxu0
        %v2205 = vadd.f32 %v2176, %v2204
        %2206 = vdwg.mxu0
        %2207 = vmatpush.msra.mxu0 %v1996
        %2208 = vmatpush.msra.mxu0 %v1994
        %2209 = vmatpush.msra.mxu0 %v1992
        %2210 = vmatpush.msra.mxu0 %v1990
        %2211 = vmatpush.msra.mxu0 %v1988
        %2212 = vmatpush.msra.mxu0 %v1986
        %2213 = vmatpush.msra.mxu0 %v1984
        %2214 = vmatpush.msra.mxu0 %v1982
        %2215 = vmatpush.msra.mxu0 %v1980
        %2216 = vmatpush.msra.mxu0 %v1978
        %2217 = vmatpush.msra.mxu0 %v1976
        %2218 = vmatpush.msra.mxu0 %v1974
        %2219 = vmatpush.msra.mxu0 %v1972
        %2220 = vmatpush.msra.mxu0 %v1970
        %2221 = vmatpush.msra.mxu0 %v1968
        %2222 = vmatpush.msra.mxu0 %v1966
        %2223 = vmatmul.f32.gmra.mxu0 %v1779
        %v2224 = vpop.f32.mrf.mxu0
        %v2225 = vadd.f32 %v2196, %v2224
        %2226 = vmatmul.f32.gmra.mxu0 %v1787
        %v2227 = vpop.f32.mrf.mxu0
        %v2228 = vadd.f32 %v2199, %v2227
        %2229 = vmatmul.f32.gmra.mxu0 %v1795
        %v2230 = vpop.f32.mrf.mxu0
        %v2231 = vadd.f32 %v2202, %v2230
        %2232 = vmatmul.f32.gmra.mxu0 %v1803
        %v2233 = vpop.f32.mrf.mxu0
        %v2234 = vadd.f32 %v2205, %v2233
        %2235 = vdwg.mxu0
        %2236 = vmatpush.msra.mxu0 %v2028
        %2237 = vmatpush.msra.mxu0 %v2026
        %2238 = vmatpush.msra.mxu0 %v2024
        %2239 = vmatpush.msra.mxu0 %v2022
        %2240 = vmatpush.msra.mxu0 %v2020
        %2241 = vmatpush.msra.mxu0 %v2018
        %2242 = vmatpush.msra.mxu0 %v2016
        %2243 = vmatpush.msra.mxu0 %v2014
        %2244 = vmatpush.msra.mxu0 %v2012
        %2245 = vmatpush.msra.mxu0 %v2010
        %2246 = vmatpush.msra.mxu0 %v2008
        %2247 = vmatpush.msra.mxu0 %v2006
        %2248 = vmatpush.msra.mxu0 %v2004
        %2249 = vmatpush.msra.mxu0 %v2002
        %2250 = vmatpush.msra.mxu0 %v2000
        %2251 = vmatpush.msra.mxu0 %v1998
        %2252 = vmatmul.f32.gmra.mxu0 %v1780
        %v2253 = vpop.f32.mrf.mxu0
        %v2254 = vadd.f32 %v2225, %v2253
        %2255 = vmatmul.f32.gmra.mxu0 %v1788
        %v2256 = vpop.f32.mrf.mxu0
        %v2257 = vadd.f32 %v2228, %v2256
        %2258 = vmatmul.f32.gmra.mxu0 %v1796
        %v2259 = vpop.f32.mrf.mxu0
        %v2260 = vadd.f32 %v2231, %v2259
        %2261 = vmatmul.f32.gmra.mxu0 %v1804
        %v2262 = vpop.f32.mrf.mxu0
        %v2263 = vadd.f32 %v2234, %v2262
        %2264 = vdwg.mxu0
        %2265 = vmatpush.msra.mxu0 %v2060
        %2266 = vmatpush.msra.mxu0 %v2058
        %2267 = vmatpush.msra.mxu0 %v2056
        %2268 = vmatpush.msra.mxu0 %v2054
        %2269 = vmatpush.msra.mxu0 %v2052
        %2270 = vmatpush.msra.mxu0 %v2050
        %2271 = vmatpush.msra.mxu0 %v2048
        %2272 = vmatpush.msra.mxu0 %v2046
        %2273 = vmatpush.msra.mxu0 %v2044
        %2274 = vmatpush.msra.mxu0 %v2042
        %2275 = vmatpush.msra.mxu0 %v2040
        %2276 = vmatpush.msra.mxu0 %v2038
        %2277 = vmatpush.msra.mxu0 %v2036
        %2278 = vmatpush.msra.mxu0 %v2034
        %2279 = vmatpush.msra.mxu0 %v2032
        %2280 = vmatpush.msra.mxu0 %v2030
        %2281 = vmatmul.f32.gmra.mxu0 %v1781
        %v2282 = vpop.f32.mrf.mxu0
        %v2283 = vadd.f32 %v2254, %v2282
        %2284 = vmatmul.f32.gmra.mxu0 %v1789
        %v2285 = vpop.f32.mrf.mxu0
        %v2286 = vadd.f32 %v2257, %v2285
        %2287 = vmatmul.f32.gmra.mxu0 %v1797
        %v2288 = vpop.f32.mrf.mxu0
        %v2289 = vadd.f32 %v2260, %v2288
        %2290 = vmatmul.f32.gmra.mxu0 %v1805
        %v2291 = vpop.f32.mrf.mxu0
        %v2292 = vadd.f32 %v2263, %v2291
        %2293 = vdwg.mxu0
        %2294 = vmatpush.msra.mxu0 %v1837
        %2295 = vmatpush.msra.mxu0 %v1835
        %2296 = vmatpush.msra.mxu0 %v1833
        %2297 = vmatpush.msra.mxu0 %v1831
        %2298 = vmatpush.msra.mxu0 %v1829
        %2299 = vmatpush.msra.mxu0 %v1827
        %2300 = vmatpush.msra.mxu0 %v1825
        %2301 = vmatpush.msra.mxu0 %v1823
        %2302 = vmatpush.msra.mxu0 %v1821
        %2303 = vmatpush.msra.mxu0 %v1819
        %2304 = vmatpush.msra.mxu0 %v1817
        %2305 = vmatpush.msra.mxu0 %v1815
        %2306 = vmatpush.msra.mxu0 %v1813
        %2307 = vmatpush.msra.mxu0 %v1811
        %2308 = vmatpush.msra.mxu0 %v1809
        %2309 = vmatpush.msra.mxu0 %v1807
        %2310 = vmatmul.f32.gmra.mxu0 %v1774
        %v2311 = vpop.f32.mrf.mxu0
        %v2312 = vadd.f32 0.0, %v2311
        %2313 = vmatmul.f32.gmra.mxu0 %v1782
        %v2314 = vpop.f32.mrf.mxu0
        %v2315 = vadd.f32 0.0, %v2314
        %2316 = vmatmul.f32.gmra.mxu0 %v1790
        %v2317 = vpop.f32.mrf.mxu0
        %v2318 = vadd.f32 0.0, %v2317
        %2319 = vmatmul.f32.gmra.mxu0 %v1798
        %v2320 = vpop.f32.mrf.mxu0
        %v2321 = vadd.f32 0.0, %v2320
        %2322 = vdwg.mxu0
        %2323 = vmatpush.msra.mxu0 %v1869
        %2324 = vmatpush.msra.mxu0 %v1867
        %2325 = vmatpush.msra.mxu0 %v1865
        %2326 = vmatpush.msra.mxu0 %v1863
        %2327 = vmatpush.msra.mxu0 %v1861
        %2328 = vmatpush.msra.mxu0 %v1859
        %2329 = vmatpush.msra.mxu0 %v1857
        %2330 = vmatpush.msra.mxu0 %v1855
        %2331 = vmatpush.msra.mxu0 %v1853
        %2332 = vmatpush.msra.mxu0 %v1851
        %2333 = vmatpush.msra.mxu0 %v1849
        %2334 = vmatpush.msra.mxu0 %v1847
        %2335 = vmatpush.msra.mxu0 %v1845
        %2336 = vmatpush.msra.mxu0 %v1843
        %2337 = vmatpush.msra.mxu0 %v1841
        %2338 = vmatpush.msra.mxu0 %v1839
        %2339 = vmatmul.f32.gmra.mxu0 %v1775
        %v2340 = vpop.f32.mrf.mxu0
        %v2341 = vadd.f32 %v2312, %v2340
        %2342 = vmatmul.f32.gmra.mxu0 %v1783
        %v2343 = vpop.f32.mrf.mxu0
        %v2344 = vadd.f32 %v2315, %v2343
        %2345 = vmatmul.f32.gmra.mxu0 %v1791
        %v2346 = vpop.f32.mrf.mxu0
        %v2347 = vadd.f32 %v2318, %v2346
        %2348 = vmatmul.f32.gmra.mxu0 %v1799
        %v2349 = vpop.f32.mrf.mxu0
        %v2350 = vadd.f32 %v2321, %v2349
        %2351 = vdwg.mxu0
        %2352 = vmatpush.msra.mxu0 %v1901
        %2353 = vmatpush.msra.mxu0 %v1899
        %2354 = vmatpush.msra.mxu0 %v1897
        %2355 = vmatpush.msra.mxu0 %v1895
        %2356 = vmatpush.msra.mxu0 %v1893
        %2357 = vmatpush.msra.mxu0 %v1891
        %2358 = vmatpush.msra.mxu0 %v1889
        %2359 = vmatpush.msra.mxu0 %v1887
        %2360 = vmatpush.msra.mxu0 %v1885
        %2361 = vmatpush.msra.mxu0 %v1883
        %2362 = vmatpush.msra.mxu0 %v1881
        %2363 = vmatpush.msra.mxu0 %v1879
        %2364 = vmatpush.msra.mxu0 %v1877
        %2365 = vmatpush.msra.mxu0 %v1875
        %2366 = vmatpush.msra.mxu0 %v1873
        %2367 = vmatpush.msra.mxu0 %v1871
        %2368 = vmatmul.f32.gmra.mxu0 %v1776
        %v2369 = vpop.f32.mrf.mxu0
        %v2370 = vadd.f32 %v2341, %v2369
        %2371 = vmatmul.f32.gmra.mxu0 %v1784
        %v2372 = vpop.f32.mrf.mxu0
        %v2373 = vadd.f32 %v2344, %v2372
        %2374 = vmatmul.f32.gmra.mxu0 %v1792
        %v2375 = vpop.f32.mrf.mxu0
        %v2376 = vadd.f32 %v2347, %v2375
        %2377 = vmatmul.f32.gmra.mxu0 %v1800
        %v2378 = vpop.f32.mrf.mxu0
        %v2379 = vadd.f32 %v2350, %v2378
        %2380 = vdwg.mxu0
        %2381 = vmatpush.msra.mxu0 %v1933
        %2382 = vmatpush.msra.mxu0 %v1931
        %2383 = vmatpush.msra.mxu0 %v1929
        %2384 = vmatpush.msra.mxu0 %v1927
        %2385 = vmatpush.msra.mxu0 %v1925
        %2386 = vmatpush.msra.mxu0 %v1923
        %2387 = vmatpush.msra.mxu0 %v1921
        %2388 = vmatpush.msra.mxu0 %v1919
        %2389 = vmatpush.msra.mxu0 %v1917
        %2390 = vmatpush.msra.mxu0 %v1915
        %2391 = vmatpush.msra.mxu0 %v1913
        %2392 = vmatpush.msra.mxu0 %v1911
        %2393 = vmatpush.msra.mxu0 %v1909
        %2394 = vmatpush.msra.mxu0 %v1907
        %2395 = vmatpush.msra.mxu0 %v1905
        %2396 = vmatpush.msra.mxu0 %v1903
        %2397 = vmatmul.f32.gmra.mxu0 %v1777
        %v2398 = vpop.f32.mrf.mxu0
        %v2399 = vadd.f32 %v2370, %v2398
        %2400 = vmatmul.f32.gmra.mxu0 %v1785
        %v2401 = vpop.f32.mrf.mxu0
        %v2402 = vadd.f32 %v2373, %v2401
        %2403 = vmatmul.f32.gmra.mxu0 %v1793
        %v2404 = vpop.f32.mrf.mxu0
        %v2405 = vadd.f32 %v2376, %v2404
        %2406 = vmatmul.f32.gmra.mxu0 %v1801
        %v2407 = vpop.f32.mrf.mxu0
        %v2408 = vadd.f32 %v2379, %v2407
        %2409 = vdwg.mxu0
        %2410 = vmatpush.msra.mxu0 %v1965
        %2411 = vmatpush.msra.mxu0 %v1963
        %2412 = vmatpush.msra.mxu0 %v1961
        %2413 = vmatpush.msra.mxu0 %v1959
        %2414 = vmatpush.msra.mxu0 %v1957
        %2415 = vmatpush.msra.mxu0 %v1955
        %2416 = vmatpush.msra.mxu0 %v1953
        %2417 = vmatpush.msra.mxu0 %v1951
        %2418 = vmatpush.msra.mxu0 %v1949
        %2419 = vmatpush.msra.mxu0 %v1947
        %2420 = vmatpush.msra.mxu0 %v1945
        %2421 = vmatpush.msra.mxu0 %v1943
        %2422 = vmatpush.msra.mxu0 %v1941
        %2423 = vmatpush.msra.mxu0 %v1939
        %2424 = vmatpush.msra.mxu0 %v1937
        %2425 = vmatpush.msra.mxu0 %v1935
        %2426 = vmatmul.f32.gmra.mxu0 %v1778
        %v2427 = vpop.f32.mrf.mxu0
        %v2428 = vadd.f32 %v2399, %v2427
        %2429 = vmatmul.f32.gmra.mxu0 %v1786
        %v2430 = vpop.f32.mrf.mxu0
        %v2431 = vadd.f32 %v2402, %v2430
        %2432 = vmatmul.f32.gmra.mxu0 %v1794
        %v2433 = vpop.f32.mrf.mxu0
        %v2434 = vadd.f32 %v2405, %v2433
        %2435 = vmatmul.f32.gmra.mxu0 %v1802
        %v2436 = vpop.f32.mrf.mxu0
        %v2437 = vadd.f32 %v2408, %v2436
        %2438 = vdwg.mxu0
        %2439 = vmatpush.msra.mxu0 %v1997
        %2440 = vmatpush.msra.mxu0 %v1995
        %2441 = vmatpush.msra.mxu0 %v1993
        %2442 = vmatpush.msra.mxu0 %v1991
        %2443 = vmatpush.msra.mxu0 %v1989
        %2444 = vmatpush.msra.mxu0 %v1987
        %2445 = vmatpush.msra.mxu0 %v1985
        %2446 = vmatpush.msra.mxu0 %v1983
        %2447 = vmatpush.msra.mxu0 %v1981
        %2448 = vmatpush.msra.mxu0 %v1979
        %2449 = vmatpush.msra.mxu0 %v1977
        %2450 = vmatpush.msra.mxu0 %v1975
        %2451 = vmatpush.msra.mxu0 %v1973
        %2452 = vmatpush.msra.mxu0 %v1971
        %2453 = vmatpush.msra.mxu0 %v1969
        %2454 = vmatpush.msra.mxu0 %v1967
        %2455 = vmatmul.f32.gmra.mxu0 %v1779
        %v2456 = vpop.f32.mrf.mxu0
        %v2457 = vadd.f32 %v2428, %v2456
        %2458 = vmatmul.f32.gmra.mxu0 %v1787
        %v2459 = vpop.f32.mrf.mxu0
        %v2460 = vadd.f32 %v2431, %v2459
        %2461 = vmatmul.f32.gmra.mxu0 %v1795
        %v2462 = vpop.f32.mrf.mxu0
        %v2463 = vadd.f32 %v2434, %v2462
        %2464 = vmatmul.f32.gmra.mxu0 %v1803
        %v2465 = vpop.f32.mrf.mxu0
        %v2466 = vadd.f32 %v2437, %v2465
        %2467 = vdwg.mxu0
        %2468 = vmatpush.msra.mxu0 %v2029
        %2469 = vmatpush.msra.mxu0 %v2027
        %2470 = vmatpush.msra.mxu0 %v2025
        %2471 = vmatpush.msra.mxu0 %v2023
        %2472 = vmatpush.msra.mxu0 %v2021
        %2473 = vmatpush.msra.mxu0 %v2019
        %2474 = vmatpush.msra.mxu0 %v2017
        %2475 = vmatpush.msra.mxu0 %v2015
        %2476 = vmatpush.msra.mxu0 %v2013
        %2477 = vmatpush.msra.mxu0 %v2011
        %2478 = vmatpush.msra.mxu0 %v2009
        %2479 = vmatpush.msra.mxu0 %v2007
        %2480 = vmatpush.msra.mxu0 %v2005
        %2481 = vmatpush.msra.mxu0 %v2003
        %2482 = vmatpush.msra.mxu0 %v2001
        %2483 = vmatpush.msra.mxu0 %v1999
        %2484 = vmatmul.f32.gmra.mxu0 %v1780
        %v2485 = vpop.f32.mrf.mxu0
        %v2486 = vadd.f32 %v2457, %v2485
        %2487 = vmatmul.f32.gmra.mxu0 %v1788
        %v2488 = vpop.f32.mrf.mxu0
        %v2489 = vadd.f32 %v2460, %v2488
        %2490 = vmatmul.f32.gmra.mxu0 %v1796
        %v2491 = vpop.f32.mrf.mxu0
        %v2492 = vadd.f32 %v2463, %v2491
        %2493 = vmatmul.f32.gmra.mxu0 %v1804
        %v2494 = vpop.f32.mrf.mxu0
        %v2495 = vadd.f32 %v2466, %v2494
        %2496 = vdwg.mxu0
        %2497 = vmatpush.msra.mxu0 %v2061
        %2498 = vmatpush.msra.mxu0 %v2059
        %2499 = vmatpush.msra.mxu0 %v2057
        %2500 = vmatpush.msra.mxu0 %v2055
        %2501 = vmatpush.msra.mxu0 %v2053
        %2502 = vmatpush.msra.mxu0 %v2051
        %2503 = vmatpush.msra.mxu0 %v2049
        %2504 = vmatpush.msra.mxu0 %v2047
        %2505 = vmatpush.msra.mxu0 %v2045
        %2506 = vmatpush.msra.mxu0 %v2043
        %2507 = vmatpush.msra.mxu0 %v2041
        %2508 = vmatpush.msra.mxu0 %v2039
        %2509 = vmatpush.msra.mxu0 %v2037
        %2510 = vmatpush.msra.mxu0 %v2035
        %2511 = vmatpush.msra.mxu0 %v2033
        %2512 = vmatpush.msra.mxu0 %v2031
        %2513 = vmatmul.f32.gmra.mxu0 %v1781
        %v2514 = vpop.f32.mrf.mxu0
        %v2515 = vadd.f32 %v2486, %v2514
        %2516 = vmatmul.f32.gmra.mxu0 %v1789
        %v2517 = vpop.f32.mrf.mxu0
        %v2518 = vadd.f32 %v2489, %v2517
        %2519 = vmatmul.f32.gmra.mxu0 %v1797
        %v2520 = vpop.f32.mrf.mxu0
        %v2521 = vadd.f32 %v2492, %v2520
        %2522 = vmatmul.f32.gmra.mxu0 %v1805
        %v2523 = vpop.f32.mrf.mxu0
        %v2524 = vadd.f32 %v2495, %v2523
        %2525 = vdwg.mxu0
        %v2526 = vld [vmem:[%s21] sm:$0xff]
        %v2527 = vld [vmem:[%s21 + $0x8] sm:$0xff]
        %v2528 = vld [vmem:[%s21 + $0x10] sm:$0xff]
        %v2529 = vld [vmem:[%s21 + $0x18] sm:$0xff]
        %2530 = vrot.lane.b32.xlu0 %v2283, 7
        %v2531 = vpop.permute.xlu0 %2530
        %2532 = vrot.lane.b32.xlu0 %v2286, 7
        %v2533 = vpop.permute.xlu0 %2532
        %2534 = vrot.lane.b32.xlu0 %v2289, 7
        %v2535 = vpop.permute.xlu0 %2534
        %2536 = vrot.lane.b32.xlu0 %v2292, 7
        %v2537 = vpop.permute.xlu0 %2536
        %2538 = vrot.lane.b32.xlu0 %v2515, 7
        %v2539 = vpop.permute.xlu0 %2538
        %2540 = vrot.lane.b32.xlu0 %v2518, 7
        %v2541 = vpop.permute.xlu0 %2540
        %2542 = vrot.lane.b32.xlu0 %v2521, 7
        %v2543 = vpop.permute.xlu0 %2542
        %2544 = vrot.lane.b32.xlu0 %v2524, 7
        %v2545 = vpop.permute.xlu0 %2544
        %vm2546 = vcmp.lt.s32.totalorder %v1482, 7
        %v2547 = vsel %vm2546, %v2531, %v2539
        %v2548 = vsel %vm2546, %v2533, %v2541
        %v2549 = vsel %vm2546, %v2535, %v2543
        %v2550 = vsel %vm2546, %v2537, %v2545
        %v2551 = vsel %vm2546, %v2539, %v2531
        %v2552 = vsel %vm2546, %v2541, %v2533
        %v2553 = vsel %vm2546, %v2543, %v2535
        %v2554 = vsel %vm2546, %v2545, %v2537
        %v2555 = vperm.slane %v2526, 0
        %v2556 = vperm.slane %v2527, 0
        %v2557 = vmul.f32 %v2555, %v2551
        %v2558 = vmul.f32 %v2556, %v2547
        %v2559 = vmul.f32 %v2555, %v2552
        %v2560 = vmul.f32 %v2556, %v2548
        %v2561 = vmul.f32 %v2555, %v2553
        %v2562 = vmul.f32 %v2556, %v2549
        %v2563 = vmul.f32 %v2555, %v2554
        %v2564 = vmul.f32 %v2556, %v2550
        %2565 = vrot.lane.b32.xlu0 %v2283, 6
        %v2566 = vpop.permute.xlu0 %2565
        %2567 = vrot.lane.b32.xlu0 %v2286, 6
        %v2568 = vpop.permute.xlu0 %2567
        %2569 = vrot.lane.b32.xlu0 %v2289, 6
        %v2570 = vpop.permute.xlu0 %2569
        %2571 = vrot.lane.b32.xlu0 %v2292, 6
        %v2572 = vpop.permute.xlu0 %2571
        %2573 = vrot.lane.b32.xlu0 %v2515, 6
        %v2574 = vpop.permute.xlu0 %2573
        %2575 = vrot.lane.b32.xlu0 %v2518, 6
        %v2576 = vpop.permute.xlu0 %2575
        %2577 = vrot.lane.b32.xlu0 %v2521, 6
        %v2578 = vpop.permute.xlu0 %2577
        %2579 = vrot.lane.b32.xlu0 %v2524, 6
        %v2580 = vpop.permute.xlu0 %2579
        %vm2581 = vcmp.lt.s32.totalorder %v1482, 6
        %v2582 = vsel %vm2581, %v2566, %v2574
        %v2583 = vsel %vm2581, %v2568, %v2576
        %v2584 = vsel %vm2581, %v2570, %v2578
        %v2585 = vsel %vm2581, %v2572, %v2580
        %v2586 = vsel %vm2581, %v2574, %v2566
        %v2587 = vsel %vm2581, %v2576, %v2568
        %v2588 = vsel %vm2581, %v2578, %v2570
        %v2589 = vsel %vm2581, %v2580, %v2572
        %v2590 = vperm.slane %v2526, 1
        %v2591 = vperm.slane %v2527, 1
        %v2592 = vmul.f32 %v2590, %v2586
        %v2593 = vmul.f32 %v2591, %v2582
        %v2594 = vmul.f32 %v2590, %v2587
        %v2595 = vmul.f32 %v2591, %v2583
        %v2596 = vmul.f32 %v2590, %v2588
        %v2597 = vmul.f32 %v2591, %v2584
        %v2598 = vmul.f32 %v2590, %v2589
        %v2599 = vmul.f32 %v2591, %v2585
        %2600 = vrot.lane.b32.xlu0 %v2283, 5
        %v2601 = vpop.permute.xlu0 %2600
        %2602 = vrot.lane.b32.xlu0 %v2286, 5
        %v2603 = vpop.permute.xlu0 %2602
        %2604 = vrot.lane.b32.xlu0 %v2289, 5
        %v2605 = vpop.permute.xlu0 %2604
        %2606 = vrot.lane.b32.xlu0 %v2292, 5
        %v2607 = vpop.permute.xlu0 %2606
        %2608 = vrot.lane.b32.xlu0 %v2515, 5
        %v2609 = vpop.permute.xlu0 %2608
        %2610 = vrot.lane.b32.xlu0 %v2518, 5
        %v2611 = vpop.permute.xlu0 %2610
        %2612 = vrot.lane.b32.xlu0 %v2521, 5
        %v2613 = vpop.permute.xlu0 %2612
        %2614 = vrot.lane.b32.xlu0 %v2524, 5
        %v2615 = vpop.permute.xlu0 %2614
        %vm2616 = vcmp.lt.s32.totalorder %v1482, 5
        %v2617 = vsel %vm2616, %v2601, %v2609
        %v2618 = vsel %vm2616, %v2603, %v2611
        %v2619 = vsel %vm2616, %v2605, %v2613
        %v2620 = vsel %vm2616, %v2607, %v2615
        %v2621 = vsel %vm2616, %v2609, %v2601
        %v2622 = vsel %vm2616, %v2611, %v2603
        %v2623 = vsel %vm2616, %v2613, %v2605
        %v2624 = vsel %vm2616, %v2615, %v2607
        %v2625 = vperm.slane %v2526, 2
        %v2626 = vperm.slane %v2527, 2
        %v2627 = vmul.f32 %v2625, %v2621
        %v2628 = vmul.f32 %v2626, %v2617
        %v2629 = vmul.f32 %v2625, %v2622
        %v2630 = vmul.f32 %v2626, %v2618
        %v2631 = vmul.f32 %v2625, %v2623
        %v2632 = vmul.f32 %v2626, %v2619
        %v2633 = vmul.f32 %v2625, %v2624
        %v2634 = vmul.f32 %v2626, %v2620
        %2635 = vrot.lane.b32.xlu0 %v2283, 4
        %v2636 = vpop.permute.xlu0 %2635
        %2637 = vrot.lane.b32.xlu0 %v2286, 4
        %v2638 = vpop.permute.xlu0 %2637
        %2639 = vrot.lane.b32.xlu0 %v2289, 4
        %v2640 = vpop.permute.xlu0 %2639
        %2641 = vrot.lane.b32.xlu0 %v2292, 4
        %v2642 = vpop.permute.xlu0 %2641
        %2643 = vrot.lane.b32.xlu0 %v2515, 4
        %v2644 = vpop.permute.xlu0 %2643
        %2645 = vrot.lane.b32.xlu0 %v2518, 4
        %v2646 = vpop.permute.xlu0 %2645
        %2647 = vrot.lane.b32.xlu0 %v2521, 4
        %v2648 = vpop.permute.xlu0 %2647
        %2649 = vrot.lane.b32.xlu0 %v2524, 4
        %v2650 = vpop.permute.xlu0 %2649
        %vm2651 = vcmp.lt.s32.totalorder %v1482, 4
        %v2652 = vsel %vm2651, %v2636, %v2644
        %v2653 = vsel %vm2651, %v2638, %v2646
        %v2654 = vsel %vm2651, %v2640, %v2648
        %v2655 = vsel %vm2651, %v2642, %v2650
        %v2656 = vsel %vm2651, %v2644, %v2636
        %v2657 = vsel %vm2651, %v2646, %v2638
        %v2658 = vsel %vm2651, %v2648, %v2640
        %v2659 = vsel %vm2651, %v2650, %v2642
        %v2660 = vperm.slane %v2526, 3
        %v2661 = vperm.slane %v2527, 3
        %v2662 = vmul.f32 %v2660, %v2656
        %v2663 = vmul.f32 %v2661, %v2652
        %v2664 = vmul.f32 %v2660, %v2657
        %v2665 = vmul.f32 %v2661, %v2653
        %v2666 = vmul.f32 %v2660, %v2658
        %v2667 = vmul.f32 %v2661, %v2654
        %v2668 = vmul.f32 %v2660, %v2659
        %v2669 = vmul.f32 %v2661, %v2655
        %2670 = vrot.lane.b32.xlu0 %v2283, 3
        %v2671 = vpop.permute.xlu0 %2670
        %2672 = vrot.lane.b32.xlu0 %v2286, 3
        %v2673 = vpop.permute.xlu0 %2672
        %2674 = vrot.lane.b32.xlu0 %v2289, 3
        %v2675 = vpop.permute.xlu0 %2674
        %2676 = vrot.lane.b32.xlu0 %v2292, 3
        %v2677 = vpop.permute.xlu0 %2676
        %2678 = vrot.lane.b32.xlu0 %v2515, 3
        %v2679 = vpop.permute.xlu0 %2678
        %2680 = vrot.lane.b32.xlu0 %v2518, 3
        %v2681 = vpop.permute.xlu0 %2680
        %2682 = vrot.lane.b32.xlu0 %v2521, 3
        %v2683 = vpop.permute.xlu0 %2682
        %2684 = vrot.lane.b32.xlu0 %v2524, 3
        %v2685 = vpop.permute.xlu0 %2684
        %vm2686 = vcmp.lt.s32.totalorder %v1482, 3
        %v2687 = vsel %vm2686, %v2671, %v2679
        %v2688 = vsel %vm2686, %v2673, %v2681
        %v2689 = vsel %vm2686, %v2675, %v2683
        %v2690 = vsel %vm2686, %v2677, %v2685
        %v2691 = vsel %vm2686, %v2679, %v2671
        %v2692 = vsel %vm2686, %v2681, %v2673
        %v2693 = vsel %vm2686, %v2683, %v2675
        %v2694 = vsel %vm2686, %v2685, %v2677
        %v2695 = vperm.slane %v2526, 4
        %v2696 = vperm.slane %v2527, 4
        %v2697 = vmul.f32 %v2695, %v2691
        %v2698 = vmul.f32 %v2696, %v2687
        %v2699 = vmul.f32 %v2695, %v2692
        %v2700 = vmul.f32 %v2696, %v2688
        %v2701 = vmul.f32 %v2695, %v2693
        %v2702 = vmul.f32 %v2696, %v2689
        %v2703 = vmul.f32 %v2695, %v2694
        %v2704 = vmul.f32 %v2696, %v2690
        %2705 = vrot.lane.b32.xlu0 %v2283, 2
        %v2706 = vpop.permute.xlu0 %2705
        %2707 = vrot.lane.b32.xlu0 %v2286, 2
        %v2708 = vpop.permute.xlu0 %2707
        %2709 = vrot.lane.b32.xlu0 %v2289, 2
        %v2710 = vpop.permute.xlu0 %2709
        %2711 = vrot.lane.b32.xlu0 %v2292, 2
        %v2712 = vpop.permute.xlu0 %2711
        %2713 = vrot.lane.b32.xlu0 %v2515, 2
        %v2714 = vpop.permute.xlu0 %2713
        %2715 = vrot.lane.b32.xlu0 %v2518, 2
        %v2716 = vpop.permute.xlu0 %2715
        %2717 = vrot.lane.b32.xlu0 %v2521, 2
        %v2718 = vpop.permute.xlu0 %2717
        %2719 = vrot.lane.b32.xlu0 %v2524, 2
        %v2720 = vpop.permute.xlu0 %2719
        %vm2721 = vcmp.lt.s32.totalorder %v1482, 2
        %v2722 = vsel %vm2721, %v2706, %v2714
        %v2723 = vsel %vm2721, %v2708, %v2716
        %v2724 = vsel %vm2721, %v2710, %v2718
        %v2725 = vsel %vm2721, %v2712, %v2720
        %v2726 = vsel %vm2721, %v2714, %v2706
        %v2727 = vsel %vm2721, %v2716, %v2708
        %v2728 = vsel %vm2721, %v2718, %v2710
        %v2729 = vsel %vm2721, %v2720, %v2712
        %v2730 = vperm.slane %v2526, 5
        %v2731 = vperm.slane %v2527, 5
        %v2732 = vmul.f32 %v2730, %v2726
        %v2733 = vmul.f32 %v2731, %v2722
        %v2734 = vmul.f32 %v2730, %v2727
        %v2735 = vmul.f32 %v2731, %v2723
        %v2736 = vmul.f32 %v2730, %v2728
        %v2737 = vmul.f32 %v2731, %v2724
        %v2738 = vmul.f32 %v2730, %v2729
        %v2739 = vmul.f32 %v2731, %v2725
        %2740 = vrot.lane.b32.xlu0 %v2283, 1
        %v2741 = vpop.permute.xlu0 %2740
        %2742 = vrot.lane.b32.xlu0 %v2286, 1
        %v2743 = vpop.permute.xlu0 %2742
        %2744 = vrot.lane.b32.xlu0 %v2289, 1
        %v2745 = vpop.permute.xlu0 %2744
        %2746 = vrot.lane.b32.xlu0 %v2292, 1
        %v2747 = vpop.permute.xlu0 %2746
        %2748 = vrot.lane.b32.xlu0 %v2515, 1
        %v2749 = vpop.permute.xlu0 %2748
        %2750 = vrot.lane.b32.xlu0 %v2518, 1
        %v2751 = vpop.permute.xlu0 %2750
        %2752 = vrot.lane.b32.xlu0 %v2521, 1
        %v2753 = vpop.permute.xlu0 %2752
        %2754 = vrot.lane.b32.xlu0 %v2524, 1
        %v2755 = vpop.permute.xlu0 %2754
        %vm2756 = vcmp.lt.s32.totalorder %v1482, 1
        %v2757 = vsel %vm2756, %v2741, %v2749
        %v2758 = vsel %vm2756, %v2743, %v2751
        %v2759 = vsel %vm2756, %v2745, %v2753
        %v2760 = vsel %vm2756, %v2747, %v2755
        %v2761 = vsel %vm2756, %v2749, %v2741
        %v2762 = vsel %vm2756, %v2751, %v2743
        %v2763 = vsel %vm2756, %v2753, %v2745
        %v2764 = vsel %vm2756, %v2755, %v2747
        %v2765 = vperm.slane %v2526, 6
        %v2766 = vperm.slane %v2527, 6
        %v2767 = vmul.f32 %v2765, %v2761
        %v2768 = vmul.f32 %v2766, %v2757
        %v2769 = vmul.f32 %v2765, %v2762
        %v2770 = vmul.f32 %v2766, %v2758
        %v2771 = vmul.f32 %v2765, %v2763
        %v2772 = vmul.f32 %v2766, %v2759
        %v2773 = vmul.f32 %v2765, %v2764
        %v2774 = vmul.f32 %v2766, %v2760
        %v2775 = vperm.slane %v2526, 7
        %v2776 = vperm.slane %v2527, 7
        %v2777 = vmul.f32 %v2775, %v2283
        %v2778 = vmul.f32 %v2776, %v2515
        %v2779 = vmul.f32 %v2775, %v2286
        %v2780 = vmul.f32 %v2776, %v2518
        %v2781 = vmul.f32 %v2775, %v2289
        %v2782 = vmul.f32 %v2776, %v2521
        %v2783 = vmul.f32 %v2775, %v2292
        %v2784 = vmul.f32 %v2776, %v2524
        %2785 = vrot.lane.b32.xlu0 %v2283, 127
        %v2786 = vpop.permute.xlu0 %2785
        %2787 = vrot.lane.b32.xlu0 %v2286, 127
        %v2788 = vpop.permute.xlu0 %2787
        %2789 = vrot.lane.b32.xlu0 %v2289, 127
        %v2790 = vpop.permute.xlu0 %2789
        %2791 = vrot.lane.b32.xlu0 %v2292, 127
        %v2792 = vpop.permute.xlu0 %2791
        %2793 = vrot.lane.b32.xlu0 %v2515, 127
        %v2794 = vpop.permute.xlu0 %2793
        %2795 = vrot.lane.b32.xlu0 %v2518, 127
        %v2796 = vpop.permute.xlu0 %2795
        %2797 = vrot.lane.b32.xlu0 %v2521, 127
        %v2798 = vpop.permute.xlu0 %2797
        %2799 = vrot.lane.b32.xlu0 %v2524, 127
        %v2800 = vpop.permute.xlu0 %2799
        %v2801 = vsel %vm1483, %v2786, %v2794
        %v2802 = vsel %vm1483, %v2788, %v2796
        %v2803 = vsel %vm1483, %v2790, %v2798
        %v2804 = vsel %vm1483, %v2792, %v2800
        %v2805 = vsel %vm1483, %v2794, %v2786
        %v2806 = vsel %vm1483, %v2796, %v2788
        %v2807 = vsel %vm1483, %v2798, %v2790
        %v2808 = vsel %vm1483, %v2800, %v2792
        %v2809 = vperm.slane %v2528, 0
        %v2810 = vperm.slane %v2529, 0
        %v2811 = vmul.f32 %v2809, %v2801
        %v2812 = vmul.f32 %v2810, %v2805
        %v2813 = vmul.f32 %v2809, %v2802
        %v2814 = vmul.f32 %v2810, %v2806
        %v2815 = vmul.f32 %v2809, %v2803
        %v2816 = vmul.f32 %v2810, %v2807
        %v2817 = vmul.f32 %v2809, %v2804
        %v2818 = vmul.f32 %v2810, %v2808
        %2819 = vrot.lane.b32.xlu0 %v2283, 126
        %v2820 = vpop.permute.xlu0 %2819
        %2821 = vrot.lane.b32.xlu0 %v2286, 126
        %v2822 = vpop.permute.xlu0 %2821
        %2823 = vrot.lane.b32.xlu0 %v2289, 126
        %v2824 = vpop.permute.xlu0 %2823
        %2825 = vrot.lane.b32.xlu0 %v2292, 126
        %v2826 = vpop.permute.xlu0 %2825
        %2827 = vrot.lane.b32.xlu0 %v2515, 126
        %v2828 = vpop.permute.xlu0 %2827
        %2829 = vrot.lane.b32.xlu0 %v2518, 126
        %v2830 = vpop.permute.xlu0 %2829
        %2831 = vrot.lane.b32.xlu0 %v2521, 126
        %v2832 = vpop.permute.xlu0 %2831
        %2833 = vrot.lane.b32.xlu0 %v2524, 126
        %v2834 = vpop.permute.xlu0 %2833
        %v2835 = vsel %vm1612, %v2820, %v2828
        %v2836 = vsel %vm1612, %v2822, %v2830
        %v2837 = vsel %vm1612, %v2824, %v2832
        %v2838 = vsel %vm1612, %v2826, %v2834
        %v2839 = vsel %vm1612, %v2828, %v2820
        %v2840 = vsel %vm1612, %v2830, %v2822
        %v2841 = vsel %vm1612, %v2832, %v2824
        %v2842 = vsel %vm1612, %v2834, %v2826
        %v2843 = vperm.slane %v2528, 1
        %v2844 = vperm.slane %v2529, 1
        %v2845 = vmul.f32 %v2843, %v2835
        %v2846 = vmul.f32 %v2844, %v2839
        %v2847 = vmul.f32 %v2843, %v2836
        %v2848 = vmul.f32 %v2844, %v2840
        %v2849 = vmul.f32 %v2843, %v2837
        %v2850 = vmul.f32 %v2844, %v2841
        %v2851 = vmul.f32 %v2843, %v2838
        %v2852 = vmul.f32 %v2844, %v2842
        %2853 = vrot.lane.b32.xlu0 %v2283, 125
        %v2854 = vpop.permute.xlu0 %2853
        %2855 = vrot.lane.b32.xlu0 %v2286, 125
        %v2856 = vpop.permute.xlu0 %2855
        %2857 = vrot.lane.b32.xlu0 %v2289, 125
        %v2858 = vpop.permute.xlu0 %2857
        %2859 = vrot.lane.b32.xlu0 %v2292, 125
        %v2860 = vpop.permute.xlu0 %2859
        %2861 = vrot.lane.b32.xlu0 %v2515, 125
        %v2862 = vpop.permute.xlu0 %2861
        %2863 = vrot.lane.b32.xlu0 %v2518, 125
        %v2864 = vpop.permute.xlu0 %2863
        %2865 = vrot.lane.b32.xlu0 %v2521, 125
        %v2866 = vpop.permute.xlu0 %2865
        %2867 = vrot.lane.b32.xlu0 %v2524, 125
        %v2868 = vpop.permute.xlu0 %2867
        %v2869 = vsel %vm1741, %v2854, %v2862
        %v2870 = vsel %vm1741, %v2856, %v2864
        %v2871 = vsel %vm1741, %v2858, %v2866
        %v2872 = vsel %vm1741, %v2860, %v2868
        %v2873 = vsel %vm1741, %v2862, %v2854
        %v2874 = vsel %vm1741, %v2864, %v2856
        %v2875 = vsel %vm1741, %v2866, %v2858
        %v2876 = vsel %vm1741, %v2868, %v2860
        %v2877 = vperm.slane %v2528, 2
        %v2878 = vperm.slane %v2529, 2
        %v2879 = vmul.f32 %v2877, %v2869
        %v2880 = vmul.f32 %v2878, %v2873
        %v2881 = vmul.f32 %v2877, %v2870
        %v2882 = vmul.f32 %v2878, %v2874
        %v2883 = vmul.f32 %v2877, %v2871
        %v2884 = vmul.f32 %v2878, %v2875
        %v2885 = vmul.f32 %v2877, %v2872
        %v2886 = vmul.f32 %v2878, %v2876
        %2887 = vrot.lane.b32.xlu0 %v2283, 124
        %v2888 = vpop.permute.xlu0 %2887
        %2889 = vrot.lane.b32.xlu0 %v2286, 124
        %v2890 = vpop.permute.xlu0 %2889
        %2891 = vrot.lane.b32.xlu0 %v2289, 124
        %v2892 = vpop.permute.xlu0 %2891
        %2893 = vrot.lane.b32.xlu0 %v2292, 124
        %v2894 = vpop.permute.xlu0 %2893
        %2895 = vrot.lane.b32.xlu0 %v2515, 124
        %v2896 = vpop.permute.xlu0 %2895
        %2897 = vrot.lane.b32.xlu0 %v2518, 124
        %v2898 = vpop.permute.xlu0 %2897
        %2899 = vrot.lane.b32.xlu0 %v2521, 124
        %v2900 = vpop.permute.xlu0 %2899
        %2901 = vrot.lane.b32.xlu0 %v2524, 124
        %v2902 = vpop.permute.xlu0 %2901
        %vm2903 = vcmp.lt.s32.totalorder %v1482, 124
        %v2904 = vsel %vm2903, %v2888, %v2896
        %v2905 = vsel %vm2903, %v2890, %v2898
        %v2906 = vsel %vm2903, %v2892, %v2900
        %v2907 = vsel %vm2903, %v2894, %v2902
        %v2908 = vsel %vm2903, %v2896, %v2888
        %v2909 = vsel %vm2903, %v2898, %v2890
        %v2910 = vsel %vm2903, %v2900, %v2892
        %v2911 = vsel %vm2903, %v2902, %v2894
        %v2912 = vperm.slane %v2528, 3
        %v2913 = vperm.slane %v2529, 3
        %v2914 = vmul.f32 %v2912, %v2904
        %v2915 = vmul.f32 %v2913, %v2908
        %v2916 = vmul.f32 %v2912, %v2905
        %v2917 = vmul.f32 %v2913, %v2909
        %v2918 = vmul.f32 %v2912, %v2906
        %v2919 = vmul.f32 %v2913, %v2910
        %v2920 = vmul.f32 %v2912, %v2907
        %v2921 = vmul.f32 %v2913, %v2911
        %2922 = vrot.lane.b32.xlu0 %v2283, 123
        %v2923 = vpop.permute.xlu0 %2922
        %2924 = vrot.lane.b32.xlu0 %v2286, 123
        %v2925 = vpop.permute.xlu0 %2924
        %2926 = vrot.lane.b32.xlu0 %v2289, 123
        %v2927 = vpop.permute.xlu0 %2926
        %2928 = vrot.lane.b32.xlu0 %v2292, 123
        %v2929 = vpop.permute.xlu0 %2928
        %2930 = vrot.lane.b32.xlu0 %v2515, 123
        %v2931 = vpop.permute.xlu0 %2930
        %2932 = vrot.lane.b32.xlu0 %v2518, 123
        %v2933 = vpop.permute.xlu0 %2932
        %2934 = vrot.lane.b32.xlu0 %v2521, 123
        %v2935 = vpop.permute.xlu0 %2934
        %2936 = vrot.lane.b32.xlu0 %v2524, 123
        %v2937 = vpop.permute.xlu0 %2936
        %vm2938 = vcmp.lt.s32.totalorder %v1482, 123
        %v2939 = vsel %vm2938, %v2923, %v2931
        %v2940 = vsel %vm2938, %v2925, %v2933
        %v2941 = vsel %vm2938, %v2927, %v2935
        %v2942 = vsel %vm2938, %v2929, %v2937
        %v2943 = vsel %vm2938, %v2931, %v2923
        %v2944 = vsel %vm2938, %v2933, %v2925
        %v2945 = vsel %vm2938, %v2935, %v2927
        %v2946 = vsel %vm2938, %v2937, %v2929
        %v2947 = vperm.slane %v2528, 4
        %v2948 = vperm.slane %v2529, 4
        %v2949 = vmul.f32 %v2947, %v2939
        %v2950 = vmul.f32 %v2948, %v2943
        %v2951 = vmul.f32 %v2947, %v2940
        %v2952 = vmul.f32 %v2948, %v2944
        %v2953 = vmul.f32 %v2947, %v2941
        %v2954 = vmul.f32 %v2948, %v2945
        %v2955 = vmul.f32 %v2947, %v2942
        %v2956 = vmul.f32 %v2948, %v2946
        %2957 = vrot.lane.b32.xlu0 %v2283, 122
        %v2958 = vpop.permute.xlu0 %2957
        %2959 = vrot.lane.b32.xlu0 %v2286, 122
        %v2960 = vpop.permute.xlu0 %2959
        %2961 = vrot.lane.b32.xlu0 %v2289, 122
        %v2962 = vpop.permute.xlu0 %2961
        %2963 = vrot.lane.b32.xlu0 %v2292, 122
        %v2964 = vpop.permute.xlu0 %2963
        %2965 = vrot.lane.b32.xlu0 %v2515, 122
        %v2966 = vpop.permute.xlu0 %2965
        %2967 = vrot.lane.b32.xlu0 %v2518, 122
        %v2968 = vpop.permute.xlu0 %2967
        %2969 = vrot.lane.b32.xlu0 %v2521, 122
        %v2970 = vpop.permute.xlu0 %2969
        %2971 = vrot.lane.b32.xlu0 %v2524, 122
        %v2972 = vpop.permute.xlu0 %2971
        %vm2973 = vcmp.lt.s32.totalorder %v1482, 122
        %v2974 = vsel %vm2973, %v2958, %v2966
        %v2975 = vsel %vm2973, %v2960, %v2968
        %v2976 = vsel %vm2973, %v2962, %v2970
        %v2977 = vsel %vm2973, %v2964, %v2972
        %v2978 = vsel %vm2973, %v2966, %v2958
        %v2979 = vsel %vm2973, %v2968, %v2960
        %v2980 = vsel %vm2973, %v2970, %v2962
        %v2981 = vsel %vm2973, %v2972, %v2964
        %v2982 = vperm.slane %v2528, 5
        %v2983 = vperm.slane %v2529, 5
        %v2984 = vmul.f32 %v2982, %v2974
        %v2985 = vmul.f32 %v2983, %v2978
        %v2986 = vmul.f32 %v2982, %v2975
        %v2987 = vmul.f32 %v2983, %v2979
        %v2988 = vmul.f32 %v2982, %v2976
        %v2989 = vmul.f32 %v2983, %v2980
        %v2990 = vmul.f32 %v2982, %v2977
        %v2991 = vmul.f32 %v2983, %v2981
        %2992 = vrot.lane.b32.xlu0 %v2283, 121
        %v2993 = vpop.permute.xlu0 %2992
        %2994 = vrot.lane.b32.xlu0 %v2286, 121
        %v2995 = vpop.permute.xlu0 %2994
        %2996 = vrot.lane.b32.xlu0 %v2289, 121
        %v2997 = vpop.permute.xlu0 %2996
        %2998 = vrot.lane.b32.xlu0 %v2292, 121
        %v2999 = vpop.permute.xlu0 %2998
        %3000 = vrot.lane.b32.xlu0 %v2515, 121
        %v3001 = vpop.permute.xlu0 %3000
        %3002 = vrot.lane.b32.xlu0 %v2518, 121
        %v3003 = vpop.permute.xlu0 %3002
        %3004 = vrot.lane.b32.xlu0 %v2521, 121
        %v3005 = vpop.permute.xlu0 %3004
        %3006 = vrot.lane.b32.xlu0 %v2524, 121
        %v3007 = vpop.permute.xlu0 %3006
        %vm3008 = vcmp.lt.s32.totalorder %v1482, 121
        %v3009 = vsel %vm3008, %v2993, %v3001
        %v3010 = vsel %vm3008, %v2995, %v3003
        %v3011 = vsel %vm3008, %v2997, %v3005
        %v3012 = vsel %vm3008, %v2999, %v3007
        %v3013 = vsel %vm3008, %v3001, %v2993
        %v3014 = vsel %vm3008, %v3003, %v2995
        %v3015 = vsel %vm3008, %v3005, %v2997
        %v3016 = vsel %vm3008, %v3007, %v2999
        %v3017 = vperm.slane %v2528, 6
        %v3018 = vperm.slane %v2529, 6
        %v3019 = vmul.f32 %v3017, %v3009
        %v3020 = vmul.f32 %v3018, %v3013
        %v3021 = vmul.f32 %v3017, %v3010
        %v3022 = vmul.f32 %v3018, %v3014
        %v3023 = vmul.f32 %v3017, %v3011
        %v3024 = vmul.f32 %v3018, %v3015
        %v3025 = vmul.f32 %v3017, %v3012
        %v3026 = vmul.f32 %v3018, %v3016
        %3027 = vrot.lane.b32.xlu0 %v2283, 120
        %v3028 = vpop.permute.xlu0 %3027
        %3029 = vrot.lane.b32.xlu0 %v2286, 120
        %v3030 = vpop.permute.xlu0 %3029
        %3031 = vrot.lane.b32.xlu0 %v2289, 120
        %v3032 = vpop.permute.xlu0 %3031
        %3033 = vrot.lane.b32.xlu0 %v2292, 120
        %v3034 = vpop.permute.xlu0 %3033
        %3035 = vrot.lane.b32.xlu0 %v2515, 120
        %v3036 = vpop.permute.xlu0 %3035
        %3037 = vrot.lane.b32.xlu0 %v2518, 120
        %v3038 = vpop.permute.xlu0 %3037
        %3039 = vrot.lane.b32.xlu0 %v2521, 120
        %v3040 = vpop.permute.xlu0 %3039
        %3041 = vrot.lane.b32.xlu0 %v2524, 120
        %v3042 = vpop.permute.xlu0 %3041
        %vm3043 = vcmp.lt.s32.totalorder %v1482, 120
        %v3044 = vsel %vm3043, %v3028, %v3036
        %v3045 = vsel %vm3043, %v3030, %v3038
        %v3046 = vsel %vm3043, %v3032, %v3040
        %v3047 = vsel %vm3043, %v3034, %v3042
        %v3048 = vsel %vm3043, %v3036, %v3028
        %v3049 = vsel %vm3043, %v3038, %v3030
        %v3050 = vsel %vm3043, %v3040, %v3032
        %v3051 = vsel %vm3043, %v3042, %v3034
        %v3052 = vperm.slane %v2528, 7
        %v3053 = vperm.slane %v2529, 7
        %v3054 = vmul.f32 %v3052, %v3044
        %v3055 = vmul.f32 %v3053, %v3048
        %v3056 = vmul.f32 %v3052, %v3045
        %v3057 = vmul.f32 %v3053, %v3049
        %v3058 = vmul.f32 %v3052, %v3046
        %v3059 = vmul.f32 %v3053, %v3050
        %v3060 = vmul.f32 %v3052, %v3047
        %v3061 = vmul.f32 %v3053, %v3051
        %v3062 = vld [vmem:[%s11] sm:$0xff]
        %v3063 = vld [vmem:[%s11 + $0x8] sm:$0xff]
        %v3064 = vld [vmem:[%s11 + $0x10] sm:$0xff]
        %v3065 = vld [vmem:[%s11 + $0x18] sm:$0xff]
        %v3066 = vld [vmem:[%s11 + $0x20] sm:$0xff]
        %v3067 = vld [vmem:[%s11 + $0x28] sm:$0xff]
        %v3068 = vld [vmem:[%s11 + $0x30] sm:$0xff]
        %v3069 = vld [vmem:[%s11 + $0x38] sm:$0xff]
        %v3070 = vld [vmem:[%s11 + $0x40] sm:$0xff]
        %v3071 = vld [vmem:[%s11 + $0x48] sm:$0xff]
        %v3072 = vld [vmem:[%s11 + $0x50] sm:$0xff]
        %v3073 = vld [vmem:[%s11 + $0x58] sm:$0xff]
        %v3074 = vld [vmem:[%s11 + $0x60] sm:$0xff]
        %v3075 = vld [vmem:[%s11 + $0x68] sm:$0xff]
        %v3076 = vld [vmem:[%s11 + $0x70] sm:$0xff]
        %v3077 = vld [vmem:[%s11 + $0x78] sm:$0xff]
        %v3078 = vld [vmem:[%s11 + $0x80] sm:$0xff]
        %v3079 = vld [vmem:[%s11 + $0x88] sm:$0xff]
        %v3080 = vld [vmem:[%s11 + $0x90] sm:$0xff]
        %v3081 = vld [vmem:[%s11 + $0x98] sm:$0xff]
        %v3082 = vld [vmem:[%s11 + $0xa0] sm:$0xff]
        %v3083 = vld [vmem:[%s11 + $0xa8] sm:$0xff]
        %v3084 = vld [vmem:[%s11 + $0xb0] sm:$0xff]
        %v3085 = vld [vmem:[%s11 + $0xb8] sm:$0xff]
        %v3086 = vld [vmem:[%s11 + $0xc0] sm:$0xff]
        %v3087 = vld [vmem:[%s11 + $0xc8] sm:$0xff]
        %v3088 = vld [vmem:[%s11 + $0xd0] sm:$0xff]
        %v3089 = vld [vmem:[%s11 + $0xd8] sm:$0xff]
        %v3090 = vld [vmem:[%s11 + $0xe0] sm:$0xff]
        %v3091 = vld [vmem:[%s11 + $0xe8] sm:$0xff]
        %v3092 = vld [vmem:[%s11 + $0xf0] sm:$0xff]
        %v3093 = vld [vmem:[%s11 + $0xf8] sm:$0xff]
        %v3094 = vld [vmem:[%s13] sm:$0xff]
        %v3095 = vld [vmem:[%s13 + $0x8] sm:$0xff]
        %v3096 = vld [vmem:[%s13 + $0x10] sm:$0xff]
        %v3097 = vld [vmem:[%s13 + $0x18] sm:$0xff]
        %v3098 = vld [vmem:[%s13 + $0x20] sm:$0xff]
        %v3099 = vld [vmem:[%s13 + $0x28] sm:$0xff]
        %v3100 = vld [vmem:[%s13 + $0x30] sm:$0xff]
        %v3101 = vld [vmem:[%s13 + $0x38] sm:$0xff]
        %3103 = vset.pattern.permute.xlu0 0
        %3104 = vperm.xlu0 %3103, %v3094
        %v3105 = vpop.permute.xlu0 %3104
        %3108 = vset.pattern.permute.xlu0 0
        %3109 = vperm.xlu0 %3108, %v3095
        %v3110 = vpop.permute.xlu0 %3109
        %3113 = vset.pattern.permute.xlu0 0
        %3114 = vperm.xlu0 %3113, %v3096
        %v3115 = vpop.permute.xlu0 %3114
        %3118 = vset.pattern.permute.xlu0 0
        %3119 = vperm.xlu0 %3118, %v3097
        %v3120 = vpop.permute.xlu0 %3119
        %3123 = vset.pattern.permute.xlu0 0
        %3124 = vperm.xlu0 %3123, %v3098
        %v3125 = vpop.permute.xlu0 %3124
        %3128 = vset.pattern.permute.xlu0 0
        %3129 = vperm.xlu0 %3128, %v3099
        %v3130 = vpop.permute.xlu0 %3129
        %3133 = vset.pattern.permute.xlu0 0
        %3134 = vperm.xlu0 %3133, %v3100
        %v3135 = vpop.permute.xlu0 %3134
        %3138 = vset.pattern.permute.xlu0 0
        %3139 = vperm.xlu0 %3138, %v3101
        %v3140 = vpop.permute.xlu0 %3139
        %3142 = vmatpush.msra.mxu0 %v2668
        %3143 = vmatpush.msra.mxu0 %v2666
        %3144 = vmatpush.msra.mxu0 %v2664
        %3145 = vmatpush.msra.mxu0 %v2662
        %3146 = vmatpush.msra.mxu0 %v2633
        %3147 = vmatpush.msra.mxu0 %v2631
        %3148 = vmatpush.msra.mxu0 %v2629
        %3149 = vmatpush.msra.mxu0 %v2627
        %3150 = vmatpush.msra.mxu0 %v2598
        %3151 = vmatpush.msra.mxu0 %v2596
        %3152 = vmatpush.msra.mxu0 %v2594
        %3153 = vmatpush.msra.mxu0 %v2592
        %3154 = vmatpush.msra.mxu0 %v2563
        %3155 = vmatpush.msra.mxu0 %v2561
        %3156 = vmatpush.msra.mxu0 %v2559
        %3157 = vmatpush.msra.mxu0 %v2557
        %3158 = vmatmul.f32.gmra.mxu0 %v3062
        %v3159 = vpop.f32.mrf.mxu0
        %v3160 = vadd.f32 %v3105, %v3159
        %3161 = vmatmul.f32.gmra.mxu0 %v3066
        %v3162 = vpop.f32.mrf.mxu0
        %v3163 = vadd.f32 %v3110, %v3162
        %3164 = vmatmul.f32.gmra.mxu0 %v3070
        %v3165 = vpop.f32.mrf.mxu0
        %v3166 = vadd.f32 %v3115, %v3165
        %3167 = vmatmul.f32.gmra.mxu0 %v3074
        %v3168 = vpop.f32.mrf.mxu0
        %v3169 = vadd.f32 %v3120, %v3168
        %3170 = vmatmul.f32.gmra.mxu0 %v3078
        %v3171 = vpop.f32.mrf.mxu0
        %v3172 = vadd.f32 %v3125, %v3171
        %3173 = vmatmul.f32.gmra.mxu0 %v3082
        %v3174 = vpop.f32.mrf.mxu0
        %v3175 = vadd.f32 %v3130, %v3174
        %3176 = vmatmul.f32.gmra.mxu0 %v3086
        %v3177 = vpop.f32.mrf.mxu0
        %v3178 = vadd.f32 %v3135, %v3177
        %3179 = vmatmul.f32.gmra.mxu0 %v3090
        %v3180 = vpop.f32.mrf.mxu0
        %v3181 = vadd.f32 %v3140, %v3180
        %3182 = vdwg.mxu0
        %3183 = vmatpush.msra.mxu0 %v2783
        %3184 = vmatpush.msra.mxu0 %v2781
        %3185 = vmatpush.msra.mxu0 %v2779
        %3186 = vmatpush.msra.mxu0 %v2777
        %3187 = vmatpush.msra.mxu0 %v2773
        %3188 = vmatpush.msra.mxu0 %v2771
        %3189 = vmatpush.msra.mxu0 %v2769
        %3190 = vmatpush.msra.mxu0 %v2767
        %3191 = vmatpush.msra.mxu0 %v2738
        %3192 = vmatpush.msra.mxu0 %v2736
        %3193 = vmatpush.msra.mxu0 %v2734
        %3194 = vmatpush.msra.mxu0 %v2732
        %3195 = vmatpush.msra.mxu0 %v2703
        %3196 = vmatpush.msra.mxu0 %v2701
        %3197 = vmatpush.msra.mxu0 %v2699
        %3198 = vmatpush.msra.mxu0 %v2697
        %3199 = vmatmul.f32.gmra.mxu0 %v3063
        %v3200 = vpop.f32.mrf.mxu0
        %v3201 = vadd.f32 %v3160, %v3200
        %3202 = vmatmul.f32.gmra.mxu0 %v3067
        %v3203 = vpop.f32.mrf.mxu0
        %v3204 = vadd.f32 %v3163, %v3203
        %3205 = vmatmul.f32.gmra.mxu0 %v3071
        %v3206 = vpop.f32.mrf.mxu0
        %v3207 = vadd.f32 %v3166, %v3206
        %3208 = vmatmul.f32.gmra.mxu0 %v3075
        %v3209 = vpop.f32.mrf.mxu0
        %v3210 = vadd.f32 %v3169, %v3209
        %3211 = vmatmul.f32.gmra.mxu0 %v3079
        %v3212 = vpop.f32.mrf.mxu0
        %v3213 = vadd.f32 %v3172, %v3212
        %3214 = vmatmul.f32.gmra.mxu0 %v3083
        %v3215 = vpop.f32.mrf.mxu0
        %v3216 = vadd.f32 %v3175, %v3215
        %3217 = vmatmul.f32.gmra.mxu0 %v3087
        %v3218 = vpop.f32.mrf.mxu0
        %v3219 = vadd.f32 %v3178, %v3218
        %3220 = vmatmul.f32.gmra.mxu0 %v3091
        %v3221 = vpop.f32.mrf.mxu0
        %v3222 = vadd.f32 %v3181, %v3221
        %3223 = vdwg.mxu0
        %3224 = vmatpush.msra.mxu0 %v2920
        %3225 = vmatpush.msra.mxu0 %v2918
        %3226 = vmatpush.msra.mxu0 %v2916
        %3227 = vmatpush.msra.mxu0 %v2914
        %3228 = vmatpush.msra.mxu0 %v2885
        %3229 = vmatpush.msra.mxu0 %v2883
        %3230 = vmatpush.msra.mxu0 %v2881
        %3231 = vmatpush.msra.mxu0 %v2879
        %3232 = vmatpush.msra.mxu0 %v2851
        %3233 = vmatpush.msra.mxu0 %v2849
        %3234 = vmatpush.msra.mxu0 %v2847
        %3235 = vmatpush.msra.mxu0 %v2845
        %3236 = vmatpush.msra.mxu0 %v2817
        %3237 = vmatpush.msra.mxu0 %v2815
        %3238 = vmatpush.msra.mxu0 %v2813
        %3239 = vmatpush.msra.mxu0 %v2811
        %3240 = vmatmul.f32.gmra.mxu0 %v3064
        %v3241 = vpop.f32.mrf.mxu0
        %v3242 = vadd.f32 %v3201, %v3241
        %3243 = vmatmul.f32.gmra.mxu0 %v3068
        %v3244 = vpop.f32.mrf.mxu0
        %v3245 = vadd.f32 %v3204, %v3244
        %3246 = vmatmul.f32.gmra.mxu0 %v3072
        %v3247 = vpop.f32.mrf.mxu0
        %v3248 = vadd.f32 %v3207, %v3247
        %3249 = vmatmul.f32.gmra.mxu0 %v3076
        %v3250 = vpop.f32.mrf.mxu0
        %v3251 = vadd.f32 %v3210, %v3250
        %3252 = vmatmul.f32.gmra.mxu0 %v3080
        %v3253 = vpop.f32.mrf.mxu0
        %v3254 = vadd.f32 %v3213, %v3253
        %3255 = vmatmul.f32.gmra.mxu0 %v3084
        %v3256 = vpop.f32.mrf.mxu0
        %v3257 = vadd.f32 %v3216, %v3256
        %3258 = vmatmul.f32.gmra.mxu0 %v3088
        %v3259 = vpop.f32.mrf.mxu0
        %v3260 = vadd.f32 %v3219, %v3259
        %3261 = vmatmul.f32.gmra.mxu0 %v3092
        %v3262 = vpop.f32.mrf.mxu0
        %v3263 = vadd.f32 %v3222, %v3262
        %3264 = vdwg.mxu0
        %3265 = vmatpush.msra.mxu0 %v3060
        %3266 = vmatpush.msra.mxu0 %v3058
        %3267 = vmatpush.msra.mxu0 %v3056
        %3268 = vmatpush.msra.mxu0 %v3054
        %3269 = vmatpush.msra.mxu0 %v3025
        %3270 = vmatpush.msra.mxu0 %v3023
        %3271 = vmatpush.msra.mxu0 %v3021
        %3272 = vmatpush.msra.mxu0 %v3019
        %3273 = vmatpush.msra.mxu0 %v2990
        %3274 = vmatpush.msra.mxu0 %v2988
        %3275 = vmatpush.msra.mxu0 %v2986
        %3276 = vmatpush.msra.mxu0 %v2984
        %3277 = vmatpush.msra.mxu0 %v2955
        %3278 = vmatpush.msra.mxu0 %v2953
        %3279 = vmatpush.msra.mxu0 %v2951
        %3280 = vmatpush.msra.mxu0 %v2949
        %3281 = vmatmul.f32.gmra.mxu0 %v3065
        %v3282 = vpop.f32.mrf.mxu0
        %v3283 = vadd.f32 %v3242, %v3282
        %3284 = vmatmul.f32.gmra.mxu0 %v3069
        %v3285 = vpop.f32.mrf.mxu0
        %v3286 = vadd.f32 %v3245, %v3285
        %3287 = vmatmul.f32.gmra.mxu0 %v3073
        %v3288 = vpop.f32.mrf.mxu0
        %v3289 = vadd.f32 %v3248, %v3288
        %3290 = vmatmul.f32.gmra.mxu0 %v3077
        %v3291 = vpop.f32.mrf.mxu0
        %v3292 = vadd.f32 %v3251, %v3291
        %3293 = vmatmul.f32.gmra.mxu0 %v3081
        %v3294 = vpop.f32.mrf.mxu0
        %v3295 = vadd.f32 %v3254, %v3294
        %3296 = vmatmul.f32.gmra.mxu0 %v3085
        %v3297 = vpop.f32.mrf.mxu0
        %v3298 = vadd.f32 %v3257, %v3297
        %3299 = vmatmul.f32.gmra.mxu0 %v3089
        %v3300 = vpop.f32.mrf.mxu0
        %v3301 = vadd.f32 %v3260, %v3300
        %3302 = vmatmul.f32.gmra.mxu0 %v3093
        %v3303 = vpop.f32.mrf.mxu0
        %v3304 = vadd.f32 %v3263, %v3303
        %3305 = vdwg.mxu0
        %3306 = vmatpush.msra.mxu0 %v2669
        %3307 = vmatpush.msra.mxu0 %v2667
        %3308 = vmatpush.msra.mxu0 %v2665
        %3309 = vmatpush.msra.mxu0 %v2663
        %3310 = vmatpush.msra.mxu0 %v2634
        %3311 = vmatpush.msra.mxu0 %v2632
        %3312 = vmatpush.msra.mxu0 %v2630
        %3313 = vmatpush.msra.mxu0 %v2628
        %3314 = vmatpush.msra.mxu0 %v2599
        %3315 = vmatpush.msra.mxu0 %v2597
        %3316 = vmatpush.msra.mxu0 %v2595
        %3317 = vmatpush.msra.mxu0 %v2593
        %3318 = vmatpush.msra.mxu0 %v2564
        %3319 = vmatpush.msra.mxu0 %v2562
        %3320 = vmatpush.msra.mxu0 %v2560
        %3321 = vmatpush.msra.mxu0 %v2558
        %3322 = vmatmul.f32.gmra.mxu0 %v3062
        %v3323 = vpop.f32.mrf.mxu0
        %v3324 = vadd.f32 %v3105, %v3323
        %3325 = vmatmul.f32.gmra.mxu0 %v3066
        %v3326 = vpop.f32.mrf.mxu0
        %v3327 = vadd.f32 %v3110, %v3326
        %3328 = vmatmul.f32.gmra.mxu0 %v3070
        %v3329 = vpop.f32.mrf.mxu0
        %v3330 = vadd.f32 %v3115, %v3329
        %3331 = vmatmul.f32.gmra.mxu0 %v3074
        %v3332 = vpop.f32.mrf.mxu0
        %v3333 = vadd.f32 %v3120, %v3332
        %3334 = vmatmul.f32.gmra.mxu0 %v3078
        %v3335 = vpop.f32.mrf.mxu0
        %v3336 = vadd.f32 %v3125, %v3335
        %3337 = vmatmul.f32.gmra.mxu0 %v3082
        %v3338 = vpop.f32.mrf.mxu0
        %v3339 = vadd.f32 %v3130, %v3338
        %3340 = vmatmul.f32.gmra.mxu0 %v3086
        %v3341 = vpop.f32.mrf.mxu0
        %v3342 = vadd.f32 %v3135, %v3341
        %3343 = vmatmul.f32.gmra.mxu0 %v3090
        %v3344 = vpop.f32.mrf.mxu0
        %v3345 = vadd.f32 %v3140, %v3344
        %3346 = vdwg.mxu0
        %3347 = vmatpush.msra.mxu0 %v2784
        %3348 = vmatpush.msra.mxu0 %v2782
        %3349 = vmatpush.msra.mxu0 %v2780
        %3350 = vmatpush.msra.mxu0 %v2778
        %3351 = vmatpush.msra.mxu0 %v2774
        %3352 = vmatpush.msra.mxu0 %v2772
        %3353 = vmatpush.msra.mxu0 %v2770
        %3354 = vmatpush.msra.mxu0 %v2768
        %3355 = vmatpush.msra.mxu0 %v2739
        %3356 = vmatpush.msra.mxu0 %v2737
        %3357 = vmatpush.msra.mxu0 %v2735
        %3358 = vmatpush.msra.mxu0 %v2733
        %3359 = vmatpush.msra.mxu0 %v2704
        %3360 = vmatpush.msra.mxu0 %v2702
        %3361 = vmatpush.msra.mxu0 %v2700
        %3362 = vmatpush.msra.mxu0 %v2698
        %3363 = vmatmul.f32.gmra.mxu0 %v3063
        %v3364 = vpop.f32.mrf.mxu0
        %v3365 = vadd.f32 %v3324, %v3364
        %3366 = vmatmul.f32.gmra.mxu0 %v3067
        %v3367 = vpop.f32.mrf.mxu0
        %v3368 = vadd.f32 %v3327, %v3367
        %3369 = vmatmul.f32.gmra.mxu0 %v3071
        %v3370 = vpop.f32.mrf.mxu0
        %v3371 = vadd.f32 %v3330, %v3370
        %3372 = vmatmul.f32.gmra.mxu0 %v3075
        %v3373 = vpop.f32.mrf.mxu0
        %v3374 = vadd.f32 %v3333, %v3373
        %3375 = vmatmul.f32.gmra.mxu0 %v3079
        %v3376 = vpop.f32.mrf.mxu0
        %v3377 = vadd.f32 %v3336, %v3376
        %3378 = vmatmul.f32.gmra.mxu0 %v3083
        %v3379 = vpop.f32.mrf.mxu0
        %v3380 = vadd.f32 %v3339, %v3379
        %3381 = vmatmul.f32.gmra.mxu0 %v3087
        %v3382 = vpop.f32.mrf.mxu0
        %v3383 = vadd.f32 %v3342, %v3382
        %3384 = vmatmul.f32.gmra.mxu0 %v3091
        %v3385 = vpop.f32.mrf.mxu0
        %v3386 = vadd.f32 %v3345, %v3385
        %3387 = vdwg.mxu0
        %3388 = vmatpush.msra.mxu0 %v2921
        %3389 = vmatpush.msra.mxu0 %v2919
        %3390 = vmatpush.msra.mxu0 %v2917
        %3391 = vmatpush.msra.mxu0 %v2915
        %3392 = vmatpush.msra.mxu0 %v2886
        %3393 = vmatpush.msra.mxu0 %v2884
        %3394 = vmatpush.msra.mxu0 %v2882
        %3395 = vmatpush.msra.mxu0 %v2880
        %3396 = vmatpush.msra.mxu0 %v2852
        %3397 = vmatpush.msra.mxu0 %v2850
        %3398 = vmatpush.msra.mxu0 %v2848
        %3399 = vmatpush.msra.mxu0 %v2846
        %3400 = vmatpush.msra.mxu0 %v2818
        %3401 = vmatpush.msra.mxu0 %v2816
        %3402 = vmatpush.msra.mxu0 %v2814
        %3403 = vmatpush.msra.mxu0 %v2812
        %3404 = vmatmul.f32.gmra.mxu0 %v3064
        %v3405 = vpop.f32.mrf.mxu0
        %v3406 = vadd.f32 %v3365, %v3405
        %3407 = vmatmul.f32.gmra.mxu0 %v3068
        %v3408 = vpop.f32.mrf.mxu0
        %v3409 = vadd.f32 %v3368, %v3408
        %3410 = vmatmul.f32.gmra.mxu0 %v3072
        %v3411 = vpop.f32.mrf.mxu0
        %v3412 = vadd.f32 %v3371, %v3411
        %3413 = vmatmul.f32.gmra.mxu0 %v3076
        %v3414 = vpop.f32.mrf.mxu0
        %v3415 = vadd.f32 %v3374, %v3414
        %3416 = vmatmul.f32.gmra.mxu0 %v3080
        %v3417 = vpop.f32.mrf.mxu0
        %v3418 = vadd.f32 %v3377, %v3417
        %3419 = vmatmul.f32.gmra.mxu0 %v3084
        %v3420 = vpop.f32.mrf.mxu0
        %v3421 = vadd.f32 %v3380, %v3420
        %3422 = vmatmul.f32.gmra.mxu0 %v3088
        %v3423 = vpop.f32.mrf.mxu0
        %v3424 = vadd.f32 %v3383, %v3423
        %3425 = vmatmul.f32.gmra.mxu0 %v3092
        %v3426 = vpop.f32.mrf.mxu0
        %v3427 = vadd.f32 %v3386, %v3426
        %3428 = vdwg.mxu0
        %3429 = vmatpush.msra.mxu0 %v3061
        %3430 = vmatpush.msra.mxu0 %v3059
        %3431 = vmatpush.msra.mxu0 %v3057
        %3432 = vmatpush.msra.mxu0 %v3055
        %3433 = vmatpush.msra.mxu0 %v3026
        %3434 = vmatpush.msra.mxu0 %v3024
        %3435 = vmatpush.msra.mxu0 %v3022
        %3436 = vmatpush.msra.mxu0 %v3020
        %3437 = vmatpush.msra.mxu0 %v2991
        %3438 = vmatpush.msra.mxu0 %v2989
        %3439 = vmatpush.msra.mxu0 %v2987
        %3440 = vmatpush.msra.mxu0 %v2985
        %3441 = vmatpush.msra.mxu0 %v2956
        %3442 = vmatpush.msra.mxu0 %v2954
        %3443 = vmatpush.msra.mxu0 %v2952
        %3444 = vmatpush.msra.mxu0 %v2950
        %3445 = vmatmul.f32.gmra.mxu0 %v3065
        %v3446 = vpop.f32.mrf.mxu0
        %v3447 = vadd.f32 %v3406, %v3446
        %3448 = vmatmul.f32.gmra.mxu0 %v3069
        %v3449 = vpop.f32.mrf.mxu0
        %v3450 = vadd.f32 %v3409, %v3449
        %3451 = vmatmul.f32.gmra.mxu0 %v3073
        %v3452 = vpop.f32.mrf.mxu0
        %v3453 = vadd.f32 %v3412, %v3452
        %3454 = vmatmul.f32.gmra.mxu0 %v3077
        %v3455 = vpop.f32.mrf.mxu0
        %v3456 = vadd.f32 %v3415, %v3455
        %3457 = vmatmul.f32.gmra.mxu0 %v3081
        %v3458 = vpop.f32.mrf.mxu0
        %v3459 = vadd.f32 %v3418, %v3458
        %3460 = vmatmul.f32.gmra.mxu0 %v3085
        %v3461 = vpop.f32.mrf.mxu0
        %v3462 = vadd.f32 %v3421, %v3461
        %3463 = vmatmul.f32.gmra.mxu0 %v3089
        %v3464 = vpop.f32.mrf.mxu0
        %v3465 = vadd.f32 %v3424, %v3464
        %3466 = vmatmul.f32.gmra.mxu0 %v3093
        %v3467 = vpop.f32.mrf.mxu0
        %v3468 = vadd.f32 %v3427, %v3467
        %3469 = vdwg.mxu0
        %v3470 = vmax.f32 %v3283, 0.0
        %v3471 = vmax.f32 %v3447, 0.0
        %v3472 = vmax.f32 %v3286, 0.0
        %v3473 = vmax.f32 %v3450, 0.0
        %v3474 = vmax.f32 %v3289, 0.0
        %v3475 = vmax.f32 %v3453, 0.0
        %v3476 = vmax.f32 %v3292, 0.0
        %v3477 = vmax.f32 %v3456, 0.0
        %v3478 = vmax.f32 %v3295, 0.0
        %v3479 = vmax.f32 %v3459, 0.0
        %v3480 = vmax.f32 %v3298, 0.0
        %v3481 = vmax.f32 %v3462, 0.0
        %v3482 = vmax.f32 %v3301, 0.0
        %v3483 = vmax.f32 %v3465, 0.0
        %v3484 = vmax.f32 %v3304, 0.0
        %v3485 = vmax.f32 %v3468, 0.0
        %v3486 = vld [vmem:[%s15] sm:$0xff]
        %v3487 = vld [vmem:[%s15 + $0x8] sm:$0xff]
        %v3488 = vld [vmem:[%s15 + $0x10] sm:$0xff]
        %v3489 = vld [vmem:[%s15 + $0x18] sm:$0xff]
        %v3490 = vld [vmem:[%s15 + $0x20] sm:$0xff]
        %v3491 = vld [vmem:[%s15 + $0x28] sm:$0xff]
        %v3492 = vld [vmem:[%s15 + $0x30] sm:$0xff]
        %v3493 = vld [vmem:[%s15 + $0x38] sm:$0xff]
        %3495 = vset.pattern.permute.xlu0 0
        %3496 = vperm.xlu0 %3495, %v3486
        %v3497 = vpop.permute.xlu0 %3496
        %3500 = vset.pattern.permute.xlu0 0
        %3501 = vperm.xlu0 %3500, %v3487
        %v3502 = vpop.permute.xlu0 %3501
        %3505 = vset.pattern.permute.xlu0 0
        %3506 = vperm.xlu0 %3505, %v3488
        %v3507 = vpop.permute.xlu0 %3506
        %3510 = vset.pattern.permute.xlu0 0
        %3511 = vperm.xlu0 %3510, %v3489
        %v3512 = vpop.permute.xlu0 %3511
        %3515 = vset.pattern.permute.xlu0 0
        %3516 = vperm.xlu0 %3515, %v3490
        %v3517 = vpop.permute.xlu0 %3516
        %3520 = vset.pattern.permute.xlu0 0
        %3521 = vperm.xlu0 %3520, %v3491
        %v3522 = vpop.permute.xlu0 %3521
        %3525 = vset.pattern.permute.xlu0 0
        %3526 = vperm.xlu0 %3525, %v3492
        %v3527 = vpop.permute.xlu0 %3526
        %3530 = vset.pattern.permute.xlu0 0
        %3531 = vperm.xlu0 %3530, %v3493
        %v3532 = vpop.permute.xlu0 %3531
        %v3534 = vmul.f32 %v3470, %v3497
        %v3535 = vmul.f32 %v3471, %v3497
        %v3536 = vmul.f32 %v3472, %v3502
        %v3537 = vmul.f32 %v3473, %v3502
        %v3538 = vmul.f32 %v3474, %v3507
        %v3539 = vmul.f32 %v3475, %v3507
        %v3540 = vmul.f32 %v3476, %v3512
        %v3541 = vmul.f32 %v3477, %v3512
        %v3542 = vmul.f32 %v3478, %v3517
        %v3543 = vmul.f32 %v3479, %v3517
        %v3544 = vmul.f32 %v3480, %v3522
        %v3545 = vmul.f32 %v3481, %v3522
        %v3546 = vmul.f32 %v3482, %v3527
        %v3547 = vmul.f32 %v3483, %v3527
        %v3548 = vmul.f32 %v3484, %v3532
        %v3549 = vmul.f32 %v3485, %v3532
        %v3550 = vld [vmem:[%s17] sm:$0xff]
        %v3551 = vld [vmem:[%s17 + $0x8] sm:$0xff]
        %v3552 = vld [vmem:[%s17 + $0x10] sm:$0xff]
        %v3553 = vld [vmem:[%s17 + $0x18] sm:$0xff]
        %v3554 = vld [vmem:[%s17 + $0x20] sm:$0xff]
        %v3555 = vld [vmem:[%s17 + $0x28] sm:$0xff]
        %v3556 = vld [vmem:[%s17 + $0x30] sm:$0xff]
        %v3557 = vld [vmem:[%s17 + $0x38] sm:$0xff]
        %3559 = vset.pattern.permute.xlu0 0
        %3560 = vperm.xlu0 %3559, %v3550
        %v3561 = vpop.permute.xlu0 %3560
        %3564 = vset.pattern.permute.xlu0 0
        %3565 = vperm.xlu0 %3564, %v3551
        %v3566 = vpop.permute.xlu0 %3565
        %3569 = vset.pattern.permute.xlu0 0
        %3570 = vperm.xlu0 %3569, %v3552
        %v3571 = vpop.permute.xlu0 %3570
        %3574 = vset.pattern.permute.xlu0 0
        %3575 = vperm.xlu0 %3574, %v3553
        %v3576 = vpop.permute.xlu0 %3575
        %3579 = vset.pattern.permute.xlu0 0
        %3580 = vperm.xlu0 %3579, %v3554
        %v3581 = vpop.permute.xlu0 %3580
        %3584 = vset.pattern.permute.xlu0 0
        %3585 = vperm.xlu0 %3584, %v3555
        %v3586 = vpop.permute.xlu0 %3585
        %3589 = vset.pattern.permute.xlu0 0
        %3590 = vperm.xlu0 %3589, %v3556
        %v3591 = vpop.permute.xlu0 %3590
        %3594 = vset.pattern.permute.xlu0 0
        %3595 = vperm.xlu0 %3594, %v3557
        %v3596 = vpop.permute.xlu0 %3595
        %v3598 = vadd.f32 %v3534, %v3561
        %v3599 = vadd.f32 %v3535, %v3561
        %v3600 = vadd.f32 %v3536, %v3566
        %v3601 = vadd.f32 %v3537, %v3566
        %v3602 = vadd.f32 %v3538, %v3571
        %v3603 = vadd.f32 %v3539, %v3571
        %v3604 = vadd.f32 %v3540, %v3576
        %v3605 = vadd.f32 %v3541, %v3576
        %v3606 = vadd.f32 %v3542, %v3581
        %v3607 = vadd.f32 %v3543, %v3581
        %v3608 = vadd.f32 %v3544, %v3586
        %v3609 = vadd.f32 %v3545, %v3586
        %v3610 = vadd.f32 %v3546, %v3591
        %v3611 = vadd.f32 %v3547, %v3591
        %v3612 = vadd.f32 %v3548, %v3596
        %v3613 = vadd.f32 %v3549, %v3596
        %3614 = vrot.lane.b32.xlu0 %v3598, 127
        %v3615 = vpop.permute.xlu0 %3614
        %3616 = vrot.lane.b32.xlu0 %v3600, 127
        %v3617 = vpop.permute.xlu0 %3616
        %3618 = vrot.lane.b32.xlu0 %v3602, 127
        %v3619 = vpop.permute.xlu0 %3618
        %3620 = vrot.lane.b32.xlu0 %v3604, 127
        %v3621 = vpop.permute.xlu0 %3620
        %3622 = vrot.lane.b32.xlu0 %v3606, 127
        %v3623 = vpop.permute.xlu0 %3622
        %3624 = vrot.lane.b32.xlu0 %v3608, 127
        %v3625 = vpop.permute.xlu0 %3624
        %3626 = vrot.lane.b32.xlu0 %v3610, 127
        %v3627 = vpop.permute.xlu0 %3626
        %3628 = vrot.lane.b32.xlu0 %v3612, 127
        %v3629 = vpop.permute.xlu0 %3628
        %3630 = vrot.lane.b32.xlu0 %v3599, 127
        %v3631 = vpop.permute.xlu0 %3630
        %3632 = vrot.lane.b32.xlu0 %v3601, 127
        %v3633 = vpop.permute.xlu0 %3632
        %3634 = vrot.lane.b32.xlu0 %v3603, 127
        %v3635 = vpop.permute.xlu0 %3634
        %3636 = vrot.lane.b32.xlu0 %v3605, 127
        %v3637 = vpop.permute.xlu0 %3636
        %3638 = vrot.lane.b32.xlu0 %v3607, 127
        %v3639 = vpop.permute.xlu0 %3638
        %3640 = vrot.lane.b32.xlu0 %v3609, 127
        %v3641 = vpop.permute.xlu0 %3640
        %3642 = vrot.lane.b32.xlu0 %v3611, 127
        %v3643 = vpop.permute.xlu0 %3642
        %3644 = vrot.lane.b32.xlu0 %v3613, 127
        %v3645 = vpop.permute.xlu0 %3644
        %v3646 = vsel %vm1483, %v3615, %v3631
        %v3647 = vsel %vm1483, %v3617, %v3633
        %v3648 = vsel %vm1483, %v3619, %v3635
        %v3649 = vsel %vm1483, %v3621, %v3637
        %v3650 = vsel %vm1483, %v3623, %v3639
        %v3651 = vsel %vm1483, %v3625, %v3641
        %v3652 = vsel %vm1483, %v3627, %v3643
        %v3653 = vsel %vm1483, %v3629, %v3645
        %v3654 = vsel %vm1483, %v3631, %v3615
        %v3655 = vsel %vm1483, %v3633, %v3617
        %v3656 = vsel %vm1483, %v3635, %v3619
        %v3657 = vsel %vm1483, %v3637, %v3621
        %v3658 = vsel %vm1483, %v3639, %v3623
        %v3659 = vsel %vm1483, %v3641, %v3625
        %v3660 = vsel %vm1483, %v3643, %v3627
        %v3661 = vsel %vm1483, %v3645, %v3629
        %v3662 = vmax.f32 %v3598, %v3646
        %v3663 = vmax.f32 %v3599, %v3654
        %v3664 = vmax.f32 %v3600, %v3647
        %v3665 = vmax.f32 %v3601, %v3655
        %v3666 = vmax.f32 %v3602, %v3648
        %v3667 = vmax.f32 %v3603, %v3656
        %v3668 = vmax.f32 %v3604, %v3649
        %v3669 = vmax.f32 %v3605, %v3657
        %v3670 = vmax.f32 %v3606, %v3650
        %v3671 = vmax.f32 %v3607, %v3658
        %v3672 = vmax.f32 %v3608, %v3651
        %v3673 = vmax.f32 %v3609, %v3659
        %v3674 = vmax.f32 %v3610, %v3652
        %v3675 = vmax.f32 %v3611, %v3660
        %v3676 = vmax.f32 %v3612, %v3653
        %v3677 = vmax.f32 %v3613, %v3661
        %3678 = vrot.lane.b32.xlu0 %v3598, 126
        %v3679 = vpop.permute.xlu0 %3678
        %3680 = vrot.lane.b32.xlu0 %v3600, 126
        %v3681 = vpop.permute.xlu0 %3680
        %3682 = vrot.lane.b32.xlu0 %v3602, 126
        %v3683 = vpop.permute.xlu0 %3682
        %3684 = vrot.lane.b32.xlu0 %v3604, 126
        %v3685 = vpop.permute.xlu0 %3684
        %3686 = vrot.lane.b32.xlu0 %v3606, 126
        %v3687 = vpop.permute.xlu0 %3686
        %3688 = vrot.lane.b32.xlu0 %v3608, 126
        %v3689 = vpop.permute.xlu0 %3688
        %3690 = vrot.lane.b32.xlu0 %v3610, 126
        %v3691 = vpop.permute.xlu0 %3690
        %3692 = vrot.lane.b32.xlu0 %v3612, 126
        %v3693 = vpop.permute.xlu0 %3692
        %3694 = vrot.lane.b32.xlu0 %v3599, 126
        %v3695 = vpop.permute.xlu0 %3694
        %3696 = vrot.lane.b32.xlu0 %v3601, 126
        %v3697 = vpop.permute.xlu0 %3696
        %3698 = vrot.lane.b32.xlu0 %v3603, 126
        %v3699 = vpop.permute.xlu0 %3698
        %3700 = vrot.lane.b32.xlu0 %v3605, 126
        %v3701 = vpop.permute.xlu0 %3700
        %3702 = vrot.lane.b32.xlu0 %v3607, 126
        %v3703 = vpop.permute.xlu0 %3702
        %3704 = vrot.lane.b32.xlu0 %v3609, 126
        %v3705 = vpop.permute.xlu0 %3704
        %3706 = vrot.lane.b32.xlu0 %v3611, 126
        %v3707 = vpop.permute.xlu0 %3706
        %3708 = vrot.lane.b32.xlu0 %v3613, 126
        %v3709 = vpop.permute.xlu0 %3708
        %v3710 = vsel %vm1612, %v3679, %v3695
        %v3711 = vsel %vm1612, %v3681, %v3697
        %v3712 = vsel %vm1612, %v3683, %v3699
        %v3713 = vsel %vm1612, %v3685, %v3701
        %v3714 = vsel %vm1612, %v3687, %v3703
        %v3715 = vsel %vm1612, %v3689, %v3705
        %v3716 = vsel %vm1612, %v3691, %v3707
        %v3717 = vsel %vm1612, %v3693, %v3709
        %v3718 = vsel %vm1612, %v3695, %v3679
        %v3719 = vsel %vm1612, %v3697, %v3681
        %v3720 = vsel %vm1612, %v3699, %v3683
        %v3721 = vsel %vm1612, %v3701, %v3685
        %v3722 = vsel %vm1612, %v3703, %v3687
        %v3723 = vsel %vm1612, %v3705, %v3689
        %v3724 = vsel %vm1612, %v3707, %v3691
        %v3725 = vsel %vm1612, %v3709, %v3693
        %v3726 = vmax.f32 %v3662, %v3710
        %v3727 = vmax.f32 %v3663, %v3718
        %v3728 = vmax.f32 %v3664, %v3711
        %v3729 = vmax.f32 %v3665, %v3719
        %v3730 = vmax.f32 %v3666, %v3712
        %v3731 = vmax.f32 %v3667, %v3720
        %v3732 = vmax.f32 %v3668, %v3713
        %v3733 = vmax.f32 %v3669, %v3721
        %v3734 = vmax.f32 %v3670, %v3714
        %v3735 = vmax.f32 %v3671, %v3722
        %v3736 = vmax.f32 %v3672, %v3715
        %v3737 = vmax.f32 %v3673, %v3723
        %v3738 = vmax.f32 %v3674, %v3716
        %v3739 = vmax.f32 %v3675, %v3724
        %v3740 = vmax.f32 %v3676, %v3717
        %v3741 = vmax.f32 %v3677, %v3725
        %3742 = vrot.lane.b32.xlu0 %v3598, 125
        %v3743 = vpop.permute.xlu0 %3742
        %3744 = vrot.lane.b32.xlu0 %v3600, 125
        %v3745 = vpop.permute.xlu0 %3744
        %3746 = vrot.lane.b32.xlu0 %v3602, 125
        %v3747 = vpop.permute.xlu0 %3746
        %3748 = vrot.lane.b32.xlu0 %v3604, 125
        %v3749 = vpop.permute.xlu0 %3748
        %3750 = vrot.lane.b32.xlu0 %v3606, 125
        %v3751 = vpop.permute.xlu0 %3750
        %3752 = vrot.lane.b32.xlu0 %v3608, 125
        %v3753 = vpop.permute.xlu0 %3752
        %3754 = vrot.lane.b32.xlu0 %v3610, 125
        %v3755 = vpop.permute.xlu0 %3754
        %3756 = vrot.lane.b32.xlu0 %v3612, 125
        %v3757 = vpop.permute.xlu0 %3756
        %3758 = vrot.lane.b32.xlu0 %v3599, 125
        %v3759 = vpop.permute.xlu0 %3758
        %3760 = vrot.lane.b32.xlu0 %v3601, 125
        %v3761 = vpop.permute.xlu0 %3760
        %3762 = vrot.lane.b32.xlu0 %v3603, 125
        %v3763 = vpop.permute.xlu0 %3762
        %3764 = vrot.lane.b32.xlu0 %v3605, 125
        %v3765 = vpop.permute.xlu0 %3764
        %3766 = vrot.lane.b32.xlu0 %v3607, 125
        %v3767 = vpop.permute.xlu0 %3766
        %3768 = vrot.lane.b32.xlu0 %v3609, 125
        %v3769 = vpop.permute.xlu0 %3768
        %3770 = vrot.lane.b32.xlu0 %v3611, 125
        %v3771 = vpop.permute.xlu0 %3770
        %3772 = vrot.lane.b32.xlu0 %v3613, 125
        %v3773 = vpop.permute.xlu0 %3772
        %v3774 = vsel %vm1741, %v3743, %v3759
        %v3775 = vsel %vm1741, %v3745, %v3761
        %v3776 = vsel %vm1741, %v3747, %v3763
        %v3777 = vsel %vm1741, %v3749, %v3765
        %v3778 = vsel %vm1741, %v3751, %v3767
        %v3779 = vsel %vm1741, %v3753, %v3769
        %v3780 = vsel %vm1741, %v3755, %v3771
        %v3781 = vsel %vm1741, %v3757, %v3773
        %v3782 = vsel %vm1741, %v3759, %v3743
        %v3783 = vsel %vm1741, %v3761, %v3745
        %v3784 = vsel %vm1741, %v3763, %v3747
        %v3785 = vsel %vm1741, %v3765, %v3749
        %v3786 = vsel %vm1741, %v3767, %v3751
        %v3787 = vsel %vm1741, %v3769, %v3753
        %v3788 = vsel %vm1741, %v3771, %v3755
        %v3789 = vsel %vm1741, %v3773, %v3757
        %v3790 = vmax.f32 %v3726, %v3774
        %v3791 = vmax.f32 %v3727, %v3782
        %v3792 = vmax.f32 %v3728, %v3775
        %v3793 = vmax.f32 %v3729, %v3783
        %v3794 = vmax.f32 %v3730, %v3776
        %v3795 = vmax.f32 %v3731, %v3784
        %v3796 = vmax.f32 %v3732, %v3777
        %v3797 = vmax.f32 %v3733, %v3785
        %v3798 = vmax.f32 %v3734, %v3778
        %v3799 = vmax.f32 %v3735, %v3786
        %v3800 = vmax.f32 %v3736, %v3779
        %v3801 = vmax.f32 %v3737, %v3787
        %v3802 = vmax.f32 %v3738, %v3780
        %v3803 = vmax.f32 %v3739, %v3788
        %v3804 = vmax.f32 %v3740, %v3781
        %v3805 = vmax.f32 %v3741, %v3789
        %v3806 = vld [vmem:[%s23] sm:$0xff]
        %v3807 = vld [vmem:[%s23 + $0x8] sm:$0xff]
        %v3808 = vld [vmem:[%s23 + $0x10] sm:$0xff]
        %v3809 = vld [vmem:[%s23 + $0x18] sm:$0xff]
        %v3810 = vld [vmem:[%s23 + $0x20] sm:$0xff]
        %v3811 = vld [vmem:[%s23 + $0x28] sm:$0xff]
        %v3812 = vld [vmem:[%s23 + $0x30] sm:$0xff]
        %v3813 = vld [vmem:[%s23 + $0x38] sm:$0xff]
        %v3814 = vld [vmem:[%s23 + $0x40] sm:$0xff]
        %v3815 = vld [vmem:[%s23 + $0x48] sm:$0xff]
        %v3816 = vld [vmem:[%s23 + $0x50] sm:$0xff]
        %v3817 = vld [vmem:[%s23 + $0x58] sm:$0xff]
        %v3818 = vld [vmem:[%s23 + $0x60] sm:$0xff]
        %v3819 = vld [vmem:[%s23 + $0x68] sm:$0xff]
        %v3820 = vld [vmem:[%s23 + $0x70] sm:$0xff]
        %v3821 = vld [vmem:[%s23 + $0x78] sm:$0xff]
        %v3822 = vld [vmem:[%s23 + $0x80] sm:$0xff]
        %v3823 = vld [vmem:[%s23 + $0x88] sm:$0xff]
        %v3824 = vld [vmem:[%s23 + $0x90] sm:$0xff]
        %v3825 = vld [vmem:[%s23 + $0x98] sm:$0xff]
        %v3826 = vld [vmem:[%s23 + $0xa0] sm:$0xff]
        %v3827 = vld [vmem:[%s23 + $0xa8] sm:$0xff]
        %v3828 = vld [vmem:[%s23 + $0xb0] sm:$0xff]
        %v3829 = vld [vmem:[%s23 + $0xb8] sm:$0xff]
        %v3830 = vld [vmem:[%s23 + $0xc0] sm:$0xff]
        %v3831 = vld [vmem:[%s23 + $0xc8] sm:$0xff]
        %v3832 = vld [vmem:[%s23 + $0xd0] sm:$0xff]
        %v3833 = vld [vmem:[%s23 + $0xd8] sm:$0xff]
        %v3834 = vld [vmem:[%s23 + $0xe0] sm:$0xff]
        %v3835 = vld [vmem:[%s23 + $0xe8] sm:$0xff]
        %v3836 = vld [vmem:[%s23 + $0xf0] sm:$0xff]
        %v3837 = vld [vmem:[%s23 + $0xf8] sm:$0xff]
        %3838 = vmatpush.msra.mxu0 %v3821
        %3839 = vmatpush.msra.mxu0 %v3820
        %3840 = vmatpush.msra.mxu0 %v3819
        %3841 = vmatpush.msra.mxu0 %v3818
        %3842 = vmatpush.msra.mxu0 %v3817
        %3843 = vmatpush.msra.mxu0 %v3816
        %3844 = vmatpush.msra.mxu0 %v3815
        %3845 = vmatpush.msra.mxu0 %v3814
        %3846 = vmatpush.msra.mxu0 %v3813
        %3847 = vmatpush.msra.mxu0 %v3812
        %3848 = vmatpush.msra.mxu0 %v3811
        %3849 = vmatpush.msra.mxu0 %v3810
        %3850 = vmatpush.msra.mxu0 %v3809
        %3851 = vmatpush.msra.mxu0 %v3808
        %3852 = vmatpush.msra.mxu0 %v3807
        %3853 = vmatpush.msra.mxu0 %v3806
        %3854 = vmatmul.f32.gmra.mxu0 %v3790
        %v3855 = vpop.f32.mrf.mxu0
        %v3856 = vadd.f32 0.0, %v3855
        %3857 = vmatmul.f32.gmra.mxu0 %v3792
        %v3858 = vpop.f32.mrf.mxu0
        %v3859 = vadd.f32 0.0, %v3858
        %3860 = vmatmul.f32.gmra.mxu0 %v3794
        %v3861 = vpop.f32.mrf.mxu0
        %v3862 = vadd.f32 0.0, %v3861
        %3863 = vmatmul.f32.gmra.mxu0 %v3796
        %v3864 = vpop.f32.mrf.mxu0
        %v3865 = vadd.f32 0.0, %v3864
        %3866 = vmatmul.f32.gmra.mxu0 %v3798
        %v3867 = vpop.f32.mrf.mxu0
        %v3868 = vadd.f32 0.0, %v3867
        %3869 = vmatmul.f32.gmra.mxu0 %v3800
        %v3870 = vpop.f32.mrf.mxu0
        %v3871 = vadd.f32 0.0, %v3870
        %3872 = vmatmul.f32.gmra.mxu0 %v3802
        %v3873 = vpop.f32.mrf.mxu0
        %v3874 = vadd.f32 0.0, %v3873
        %3875 = vmatmul.f32.gmra.mxu0 %v3804
        %v3876 = vpop.f32.mrf.mxu0
        %v3877 = vadd.f32 0.0, %v3876
        %3878 = vdwg.mxu0
        %3879 = vmatpush.msra.mxu0 %v3837
        %3880 = vmatpush.msra.mxu0 %v3836
        %3881 = vmatpush.msra.mxu0 %v3835
        %3882 = vmatpush.msra.mxu0 %v3834
        %3883 = vmatpush.msra.mxu0 %v3833
        %3884 = vmatpush.msra.mxu0 %v3832
        %3885 = vmatpush.msra.mxu0 %v3831
        %3886 = vmatpush.msra.mxu0 %v3830
        %3887 = vmatpush.msra.mxu0 %v3829
        %3888 = vmatpush.msra.mxu0 %v3828
        %3889 = vmatpush.msra.mxu0 %v3827
        %3890 = vmatpush.msra.mxu0 %v3826
        %3891 = vmatpush.msra.mxu0 %v3825
        %3892 = vmatpush.msra.mxu0 %v3824
        %3893 = vmatpush.msra.mxu0 %v3823
        %3894 = vmatpush.msra.mxu0 %v3822
        %3895 = vmatmul.f32.gmra.mxu0 %v3791
        %v3896 = vpop.f32.mrf.mxu0
        %v3897 = vadd.f32 %v3856, %v3896
        %3898 = vmatmul.f32.gmra.mxu0 %v3793
        %v3899 = vpop.f32.mrf.mxu0
        %v3900 = vadd.f32 %v3859, %v3899
        %3901 = vmatmul.f32.gmra.mxu0 %v3795
        %v3902 = vpop.f32.mrf.mxu0
        %v3903 = vadd.f32 %v3862, %v3902
        %3904 = vmatmul.f32.gmra.mxu0 %v3797
        %v3905 = vpop.f32.mrf.mxu0
        %v3906 = vadd.f32 %v3865, %v3905
        %3907 = vmatmul.f32.gmra.mxu0 %v3799
        %v3908 = vpop.f32.mrf.mxu0
        %v3909 = vadd.f32 %v3868, %v3908
        %3910 = vmatmul.f32.gmra.mxu0 %v3801
        %v3911 = vpop.f32.mrf.mxu0
        %v3912 = vadd.f32 %v3871, %v3911
        %3913 = vmatmul.f32.gmra.mxu0 %v3803
        %v3914 = vpop.f32.mrf.mxu0
        %v3915 = vadd.f32 %v3874, %v3914
        %3916 = vmatmul.f32.gmra.mxu0 %v3805
        %v3917 = vpop.f32.mrf.mxu0
        %v3918 = vadd.f32 %v3877, %v3917
        %3919 = vdwg.mxu0
        %v3920 = vld [vmem:[%s25] sm:$0xff]
        %v3921 = vld [vmem:[%s25 + $0x8] sm:$0xff]
        %v3922 = vld [vmem:[%s25 + $0x10] sm:$0xff]
        %v3923 = vld [vmem:[%s25 + $0x18] sm:$0xff]
        %v3924 = vld [vmem:[%s25 + $0x20] sm:$0xff]
        %v3925 = vld [vmem:[%s25 + $0x28] sm:$0xff]
        %v3926 = vld [vmem:[%s25 + $0x30] sm:$0xff]
        %v3927 = vld [vmem:[%s25 + $0x38] sm:$0xff]
        %v3928 = vld [vmem:[%s27] sm:$0x1]
        %v3930 = vperm.slane %v3928, 0
        %3932 = vxpose.xlu0.b32.start [1/16] %v3897, 128
        %3933 = vxpose.xlu0.b32.cont [2/16] %v3900, 128
        %3934 = vxpose.xlu0.b32.cont [3/16] %v3903, 128
        %3935 = vxpose.xlu0.b32.cont [4/16] %v3906, 128
        %3936 = vxpose.xlu0.b32.cont [5/16] %v3909, 128
        %3937 = vxpose.xlu0.b32.cont [6/16] %v3912, 128
        %3938 = vxpose.xlu0.b32.cont [7/16] %v3915, 128
        %3939 = vxpose.xlu0.b32.cont [8/16] %v3918, 128
        %3940 = vxpose.xlu0.b32.cont [9/16] 0.0, 128
        %3941 = vxpose.xlu0.b32.cont [10/16] 0.0, 128
        %3942 = vxpose.xlu0.b32.cont [11/16] 0.0, 128
        %3943 = vxpose.xlu0.b32.cont [12/16] 0.0, 128
        %3944 = vxpose.xlu0.b32.cont [13/16] 0.0, 128
        %3945 = vxpose.xlu0.b32.cont [14/16] 0.0, 128
        %3946 = vxpose.xlu0.b32.cont [15/16] 0.0, 128
        %3947 = vxpose.xlu0.b32.end [16/16] 0.0, 128
        %v3948 = vpop.trf.xlu0
        %v3949 = vpop.trf.xlu0
        %v3950 = vpop.trf.xlu0
        %v3951 = vpop.trf.xlu0
        %v3952 = vpop.trf.xlu0
        %v3953 = vpop.trf.xlu0
        %v3954 = vpop.trf.xlu0
        %v3955 = vpop.trf.xlu0
        %v3956 = vpop.trf.xlu0
        %v3957 = vpop.trf.xlu0
        %v3958 = vpop.trf.xlu0
        %v3959 = vpop.trf.xlu0
        %v3960 = vpop.trf.xlu0
        %v3961 = vpop.trf.xlu0
        %v3962 = vpop.trf.xlu0
        %v3963 = vpop.trf.xlu0
        %vm3964 = vcmask 523264
        %v3966 = vsel %vm3964, %v3948, 0
        %3968 = vmatpush.msra.mxu0 0.0
        %3969 = vmatpush.msra.mxu0 0.0
        %3970 = vmatpush.msra.mxu0 0.0
        %3971 = vmatpush.msra.mxu0 0.0
        %3972 = vmatpush.msra.mxu0 0.0
        %3973 = vmatpush.msra.mxu0 0.0
        %3974 = vmatpush.msra.mxu0 0.0
        %3975 = vmatpush.msra.mxu0 0.0
        %3976 = vmatpush.msra.mxu0 %v3927
        %3977 = vmatpush.msra.mxu0 %v3926
        %3978 = vmatpush.msra.mxu0 %v3925
        %3979 = vmatpush.msra.mxu0 %v3924
        %3980 = vmatpush.msra.mxu0 %v3923
        %3981 = vmatpush.msra.mxu0 %v3922
        %3982 = vmatpush.msra.mxu0 %v3921
        %3983 = vmatpush.msra.mxu0 %v3920
        %3984 = vmatmul.f32.gmra.mxu0 %v3966
        %v3985 = vpop.f32.mrf.mxu0
        %v3986 = vadd.f32 %v3930, %v3985
        %3987 = vdwg.mxu0
        %v3988 = vld [vmem:[%s29] sm:$0x1]
        %v3990 = vrot.slane %v3986, 7
        %vm3992 = vcmask 1040384
        %v3993 = vsel %vm3992, %v3988, %v3990
        %v3994 = vld [vmem:[%s31] sm:$0x1f]
        %v3995 = vadd.f32 %v3993, %v3994
        %v3996 = vld [vmem:[%s33] sm:$0xff]
        %v3997 = vld [vmem:[%s33 + $0x8] sm:$0xff]
        %v3998 = vld [vmem:[%s33 + $0x10] sm:$0xff]
        %v3999 = vld [vmem:[%s33 + $0x18] sm:$0xff]
        %v4000 = vld [vmem:[%s33 + $0x20] sm:$0xff]
        %v4001 = vld [vmem:[%s33 + $0x28] sm:$0xff]
        %v4002 = vld [vmem:[%s33 + $0x30] sm:$0xff]
        %v4003 = vld [vmem:[%s33 + $0x38] sm:$0xff]
        %v4004 = vld [vmem:[%s33 + $0x40] sm:$0xff]
        %v4005 = vld [vmem:[%s33 + $0x48] sm:$0xff]
        %v4006 = vld [vmem:[%s33 + $0x50] sm:$0xff]
        %v4007 = vld [vmem:[%s33 + $0x58] sm:$0xff]
        %v4008 = vld [vmem:[%s33 + $0x60] sm:$0xff]
        %v4009 = vld [vmem:[%s33 + $0x68] sm:$0xff]
        %v4010 = vld [vmem:[%s33 + $0x70] sm:$0xff]
        %v4011 = vld [vmem:[%s33 + $0x78] sm:$0xff]
        %v4012 = vld [vmem:[%s33 + $0x80] sm:$0xff]
        %v4013 = vld [vmem:[%s33 + $0x88] sm:$0xff]
        %v4014 = vld [vmem:[%s33 + $0x90] sm:$0xff]
        %v4015 = vld [vmem:[%s33 + $0x98] sm:$0xff]
        %v4016 = vld [vmem:[%s33 + $0xa0] sm:$0xff]
        %v4017 = vld [vmem:[%s33 + $0xa8] sm:$0xff]
        %v4018 = vld [vmem:[%s33 + $0xb0] sm:$0xff]
        %v4019 = vld [vmem:[%s33 + $0xb8] sm:$0xff]
        %v4020 = vld [vmem:[%s33 + $0xc0] sm:$0xff]
        %v4021 = vld [vmem:[%s33 + $0xc8] sm:$0xff]
        %v4022 = vld [vmem:[%s33 + $0xd0] sm:$0xff]
        %v4023 = vld [vmem:[%s33 + $0xd8] sm:$0xff]
        %v4024 = vld [vmem:[%s33 + $0xe0] sm:$0xff]
        %v4025 = vld [vmem:[%s33 + $0xe8] sm:$0xff]
        %v4026 = vld [vmem:[%s33 + $0xf0] sm:$0xff]
        %v4027 = vld [vmem:[%s33 + $0xf8] sm:$0xff]
        %v4028 = vld [vmem:[%s33 + $0x100] sm:$0xff]
        %v4029 = vld [vmem:[%s33 + $0x108] sm:$0xff]
        %v4030 = vld [vmem:[%s33 + $0x110] sm:$0xff]
        %v4031 = vld [vmem:[%s33 + $0x118] sm:$0xff]
        %v4032 = vld [vmem:[%s33 + $0x120] sm:$0xff]
        %v4033 = vld [vmem:[%s33 + $0x128] sm:$0xff]
        %v4034 = vld [vmem:[%s33 + $0x130] sm:$0xff]
        %v4035 = vld [vmem:[%s33 + $0x138] sm:$0xff]
        %v4036 = vld [vmem:[%s33 + $0x140] sm:$0xff]
        %v4037 = vld [vmem:[%s33 + $0x148] sm:$0xff]
        %v4038 = vld [vmem:[%s33 + $0x150] sm:$0xff]
        %v4039 = vld [vmem:[%s33 + $0x158] sm:$0xff]
        %v4040 = vld [vmem:[%s33 + $0x160] sm:$0xff]
        %v4041 = vld [vmem:[%s33 + $0x168] sm:$0xff]
        %v4042 = vld [vmem:[%s33 + $0x170] sm:$0xff]
        %v4043 = vld [vmem:[%s33 + $0x178] sm:$0xff]
        %v4044 = vld [vmem:[%s35] sm:$0x7]
        %v4046 = vperm.slane %v4044, 0
        %v4047 = vperm.slane %v4044, 1
        %v4048 = vperm.slane %v4044, 2
        %4052 = vmatpush.msra.mxu0 %v4041
        %4053 = vmatpush.msra.mxu0 %v4038
        %4054 = vmatpush.msra.mxu0 %v4035
        %4055 = vmatpush.msra.mxu0 %v4032
        %4056 = vmatpush.msra.mxu0 %v4029
        %4057 = vmatpush.msra.mxu0 %v4026
        %4058 = vmatpush.msra.mxu0 %v4023
        %4059 = vmatpush.msra.mxu0 %v4020
        %4060 = vmatpush.msra.mxu0 %v4017
        %4061 = vmatpush.msra.mxu0 %v4014
        %4062 = vmatpush.msra.mxu0 %v4011
        %4063 = vmatpush.msra.mxu0 %v4008
        %4064 = vmatpush.msra.mxu0 %v4005
        %4065 = vmatpush.msra.mxu0 %v4002
        %4066 = vmatpush.msra.mxu0 %v3999
        %4067 = vmatpush.msra.mxu0 %v3996
        %4068 = vmatmul.f32.gmra.mxu0 %v3995
        %v4069 = vpop.f32.mrf.mxu0
        %v4070 = vadd.f32 %v4046, %v4069
        %4071 = vdwg.mxu0
        %4072 = vmatpush.msra.mxu0 %v4042
        %4073 = vmatpush.msra.mxu0 %v4039
        %4074 = vmatpush.msra.mxu0 %v4036
        %4075 = vmatpush.msra.mxu0 %v4033
        %4076 = vmatpush.msra.mxu0 %v4030
        %4077 = vmatpush.msra.mxu0 %v4027
        %4078 = vmatpush.msra.mxu0 %v4024
        %4079 = vmatpush.msra.mxu0 %v4021
        %4080 = vmatpush.msra.mxu0 %v4018
        %4081 = vmatpush.msra.mxu0 %v4015
        %4082 = vmatpush.msra.mxu0 %v4012
        %4083 = vmatpush.msra.mxu0 %v4009
        %4084 = vmatpush.msra.mxu0 %v4006
        %4085 = vmatpush.msra.mxu0 %v4003
        %4086 = vmatpush.msra.mxu0 %v4000
        %4087 = vmatpush.msra.mxu0 %v3997
        %4088 = vmatmul.f32.gmra.mxu0 %v3995
        %v4089 = vpop.f32.mrf.mxu0
        %v4090 = vadd.f32 %v4047, %v4089
        %4091 = vdwg.mxu0
        %4092 = vmatpush.msra.mxu0 %v4043
        %4093 = vmatpush.msra.mxu0 %v4040
        %4094 = vmatpush.msra.mxu0 %v4037
        %4095 = vmatpush.msra.mxu0 %v4034
        %4096 = vmatpush.msra.mxu0 %v4031
        %4097 = vmatpush.msra.mxu0 %v4028
        %4098 = vmatpush.msra.mxu0 %v4025
        %4099 = vmatpush.msra.mxu0 %v4022
        %4100 = vmatpush.msra.mxu0 %v4019
        %4101 = vmatpush.msra.mxu0 %v4016
        %4102 = vmatpush.msra.mxu0 %v4013
        %4103 = vmatpush.msra.mxu0 %v4010
        %4104 = vmatpush.msra.mxu0 %v4007
        %4105 = vmatpush.msra.mxu0 %v4004
        %4106 = vmatpush.msra.mxu0 %v4001
        %4107 = vmatpush.msra.mxu0 %v3998
        %4108 = vmatmul.f32.gmra.mxu0 %v3995
        %v4109 = vpop.f32.mrf.mxu0
        %v4110 = vadd.f32 %v4048, %v4109
        %4111 = vdwg.mxu0
        %vm4112 = vcmask 261120
        %v4114 = vsel %vm4112, %v4070, 0
        %v4117 = vsel %vm4112, %v4090, 0
        %4119 = vmatpush.xpose.msra.mxu0 0.0
        %4120 = vmatpush.xpose.msra.mxu0 0.0
        %4121 = vmatpush.xpose.msra.mxu0 0.0
        %4122 = vmatpush.xpose.msra.mxu0 0.0
        %4123 = vmatpush.xpose.msra.mxu0 0.0
        %4124 = vmatpush.xpose.msra.mxu0 0.0
        %4125 = vmatpush.xpose.msra.mxu0 0.0
        %4126 = vmatpush.xpose.msra.mxu0 0.0
        %4127 = vmatpush.xpose.msra.mxu0 0.0
        %4128 = vmatpush.xpose.msra.mxu0 0.0
        %4129 = vmatpush.xpose.msra.mxu0 0.0
        %4130 = vmatpush.xpose.msra.mxu0 0.0
        %4131 = vmatpush.xpose.msra.mxu0 0.0
        %4132 = vmatpush.xpose.msra.mxu0 0.0
        %4133 = vmatpush.xpose.msra.mxu0 0.0
        %4134 = vmatpush.xpose.msra.mxu0 %v4117
        %4135 = vmatmul.f32.gmra.mxu0 %v4114
        %v4136 = vpop.f32.mrf.mxu0
        %v4137 = vadd.f32 0.0, %v4136
        %4138 = vdwg.mxu0
        %vm4139 = vcmask 36864
        %v4140 = vsel %vm4139, %v4137, -inf
        %4141 = vmax.xlane.f32.xlu0 %v4140
        %v4142 = vpop.xlane.xlu0 %4141
        %v4143 = vsub.f32 %v4137, %v4142
        %v4144 = vmul.f32 %v4143, 1.442695
        %v4145 = vpow.pop %v4144
        %v4146 = vsel %vm4139, %v4145, 0.0
        %4147 = vadd.xlane.f32.xlu0 %v4146
        %v4148 = vpop.xlane.xlu0 %4147
        %v4149 = vrcp.pop %v4148
        %v4150 = vmul.f32 %v4148, %v4149
        %v4151 = vsub.f32 1.0, %v4150
        %v4152 = vmul.f32 %v4149, %v4151
        %v4153 = vadd.f32 %v4149, %v4152
        %vm4154 = vweird.f32 %v4148
        %vm4155 = vweird.f32 %v4149
        %vm4156 = vmor %vm4154, %vm4155
        %v4157 = vsel %vm4156, %v4149, %v4153
        %v4158 = vand.u32 2147483647, %v4148
        %vm4159 = vcmp.eq.f32.partialorder %v4158, 8.507059e+37
        %v4160 = vand.u32 %v4148, 2147483648
        %v4161 = vor.u32 1.1754944e-38, %v4160
        %v4162 = vsel %vm4159, %v4161, %v4157
        %v4163 = vmul.f32 %v4145, %v4162
        %vm4164 = vcmask 39936
        %v4166 = vsel %vm4164, %v4163, 0
        %vm4168 = vcmask 1044480
        %v4170 = vsel %vm4168, %v4110, 0
        %4172 = vmatpush.msra.mxu0 0.0
        %4173 = vmatpush.msra.mxu0 0.0
        %4174 = vmatpush.msra.mxu0 0.0
        %4175 = vmatpush.msra.mxu0 0.0
        %4176 = vmatpush.msra.mxu0 0.0
        %4177 = vmatpush.msra.mxu0 0.0
        %4178 = vmatpush.msra.mxu0 0.0
        %4179 = vmatpush.msra.mxu0 0.0
        %4180 = vmatpush.msra.mxu0 0.0
        %4181 = vmatpush.msra.mxu0 0.0
        %4182 = vmatpush.msra.mxu0 0.0
        %4183 = vmatpush.msra.mxu0 0.0
        %4184 = vmatpush.msra.mxu0 0.0
        %4185 = vmatpush.msra.mxu0 0.0
        %4186 = vmatpush.msra.mxu0 0.0
        %4187 = vmatpush.msra.mxu0 %v4170
        %4188 = vmatmul.f32.gmra.mxu0 %v4166
        %v4189 = vpop.f32.mrf.mxu0
        %v4190 = vadd.f32 0.0, %v4189
        %4191 = vdwg.mxu0
        %4192 = vrot.lane.b32.xlu0 %v4070, 96
        %v4193 = vpop.permute.xlu0 %4192
        %4194 = vrot.lane.b32.xlu0 %v4090, 96
        %v4195 = vpop.permute.xlu0 %4194
        %v4196 = vsel %vm4112, %v4193, 0
        %v4198 = vsel %vm4112, %v4195, 0
        %4200 = vmatpush.xpose.msra.mxu0 0.0
        %4201 = vmatpush.xpose.msra.mxu0 0.0
        %4202 = vmatpush.xpose.msra.mxu0 0.0
        %4203 = vmatpush.xpose.msra.mxu0 0.0
        %4204 = vmatpush.xpose.msra.mxu0 0.0
        %4205 = vmatpush.xpose.msra.mxu0 0.0
        %4206 = vmatpush.xpose.msra.mxu0 0.0
        %4207 = vmatpush.xpose.msra.mxu0 0.0
        %4208 = vmatpush.xpose.msra.mxu0 0.0
        %4209 = vmatpush.xpose.msra.mxu0 0.0
        %4210 = vmatpush.xpose.msra.mxu0 0.0
        %4211 = vmatpush.xpose.msra.mxu0 0.0
        %4212 = vmatpush.xpose.msra.mxu0 0.0
        %4213 = vmatpush.xpose.msra.mxu0 0.0
        %4214 = vmatpush.xpose.msra.mxu0 0.0
        %4215 = vmatpush.xpose.msra.mxu0 %v4198
        %4216 = vmatmul.f32.gmra.mxu0 %v4196
        %v4217 = vpop.f32.mrf.mxu0
        %v4218 = vadd.f32 0.0, %v4217
        %4219 = vdwg.mxu0
        %v4220 = vsel %vm4139, %v4218, -inf
        %4221 = vmax.xlane.f32.xlu0 %v4220
        %v4222 = vpop.xlane.xlu0 %4221
        %v4223 = vsub.f32 %v4218, %v4222
        %v4224 = vmul.f32 %v4223, 1.442695
        %v4225 = vpow.pop %v4224
        %v4226 = vsel %vm4139, %v4225, 0.0
        %4227 = vadd.xlane.f32.xlu0 %v4226
        %v4228 = vpop.xlane.xlu0 %4227
        %v4229 = vrcp.pop %v4228
        %v4230 = vmul.f32 %v4228, %v4229
        %v4231 = vsub.f32 1.0, %v4230
        %v4232 = vmul.f32 %v4229, %v4231
        %v4233 = vadd.f32 %v4229, %v4232
        %vm4234 = vweird.f32 %v4228
        %vm4235 = vweird.f32 %v4229
        %vm4236 = vmor %vm4234, %vm4235
        %v4237 = vsel %vm4236, %v4229, %v4233
        %v4238 = vand.u32 2147483647, %v4228
        %vm4239 = vcmp.eq.f32.partialorder %v4238, 8.507059e+37
        %v4240 = vand.u32 %v4228, 2147483648
        %v4241 = vor.u32 1.1754944e-38, %v4240
        %v4242 = vsel %vm4239, %v4241, %v4237
        %v4243 = vmul.f32 %v4225, %v4242
        %4244 = vrot.lane.b32.xlu0 %v4110, 96
        %v4245 = vpop.permute.xlu0 %4244
        %v4247 = vsel %vm4164, %v4243, 0
        %v4249 = vsel %vm4168, %v4245, 0
        %4251 = vmatpush.msra.mxu0 0.0
        %4252 = vmatpush.msra.mxu0 0.0
        %4253 = vmatpush.msra.mxu0 0.0
        %4254 = vmatpush.msra.mxu0 0.0
        %4255 = vmatpush.msra.mxu0 0.0
        %4256 = vmatpush.msra.mxu0 0.0
        %4257 = vmatpush.msra.mxu0 0.0
        %4258 = vmatpush.msra.mxu0 0.0
        %4259 = vmatpush.msra.mxu0 0.0
        %4260 = vmatpush.msra.mxu0 0.0
        %4261 = vmatpush.msra.mxu0 0.0
        %4262 = vmatpush.msra.mxu0 0.0
        %4263 = vmatpush.msra.mxu0 0.0
        %4264 = vmatpush.msra.mxu0 0.0
        %4265 = vmatpush.msra.mxu0 0.0
        %4266 = vmatpush.msra.mxu0 %v4249
        %4267 = vmatmul.f32.gmra.mxu0 %v4247
        %v4268 = vpop.f32.mrf.mxu0
        %v4269 = vadd.f32 0.0, %v4268
        %4270 = vdwg.mxu0
        %4271 = vrot.lane.b32.xlu0 %v4070, 64
        %v4272 = vpop.permute.xlu0 %4271
        %4273 = vrot.lane.b32.xlu0 %v4090, 64
        %v4274 = vpop.permute.xlu0 %4273
        %v4275 = vsel %vm4112, %v4272, 0
        %v4277 = vsel %vm4112, %v4274, 0
        %4279 = vmatpush.xpose.msra.mxu0 0.0
        %4280 = vmatpush.xpose.msra.mxu0 0.0
        %4281 = vmatpush.xpose.msra.mxu0 0.0
        %4282 = vmatpush.xpose.msra.mxu0 0.0
        %4283 = vmatpush.xpose.msra.mxu0 0.0
        %4284 = vmatpush.xpose.msra.mxu0 0.0
        %4285 = vmatpush.xpose.msra.mxu0 0.0
        %4286 = vmatpush.xpose.msra.mxu0 0.0
        %4287 = vmatpush.xpose.msra.mxu0 0.0
        %4288 = vmatpush.xpose.msra.mxu0 0.0
        %4289 = vmatpush.xpose.msra.mxu0 0.0
        %4290 = vmatpush.xpose.msra.mxu0 0.0
        %4291 = vmatpush.xpose.msra.mxu0 0.0
        %4292 = vmatpush.xpose.msra.mxu0 0.0
        %4293 = vmatpush.xpose.msra.mxu0 0.0
        %4294 = vmatpush.xpose.msra.mxu0 %v4277
        %4295 = vmatmul.f32.gmra.mxu0 %v4275
        %v4296 = vpop.f32.mrf.mxu0
        %v4297 = vadd.f32 0.0, %v4296
        %4298 = vdwg.mxu0
        %v4299 = vsel %vm4139, %v4297, -inf
        %4300 = vmax.xlane.f32.xlu0 %v4299
        %v4301 = vpop.xlane.xlu0 %4300
        %v4302 = vsub.f32 %v4297, %v4301
        %v4303 = vmul.f32 %v4302, 1.442695
        %v4304 = vpow.pop %v4303
        %v4305 = vsel %vm4139, %v4304, 0.0
        %4306 = vadd.xlane.f32.xlu0 %v4305
        %v4307 = vpop.xlane.xlu0 %4306
        %v4308 = vrcp.pop %v4307
        %v4309 = vmul.f32 %v4307, %v4308
        %v4310 = vsub.f32 1.0, %v4309
        %v4311 = vmul.f32 %v4308, %v4310
        %v4312 = vadd.f32 %v4308, %v4311
        %vm4313 = vweird.f32 %v4307
        %vm4314 = vweird.f32 %v4308
        %vm4315 = vmor %vm4313, %vm4314
        %v4316 = vsel %vm4315, %v4308, %v4312
        %v4317 = vand.u32 2147483647, %v4307
        %vm4318 = vcmp.eq.f32.partialorder %v4317, 8.507059e+37
        %v4319 = vand.u32 %v4307, 2147483648
        %v4320 = vor.u32 1.1754944e-38, %v4319
        %v4321 = vsel %vm4318, %v4320, %v4316
        %v4322 = vmul.f32 %v4304, %v4321
        %4323 = vrot.lane.b32.xlu0 %v4110, 64
        %v4324 = vpop.permute.xlu0 %4323
        %v4326 = vsel %vm4164, %v4322, 0
        %v4328 = vsel %vm4168, %v4324, 0
        %4330 = vmatpush.msra.mxu0 0.0
        %4331 = vmatpush.msra.mxu0 0.0
        %4332 = vmatpush.msra.mxu0 0.0
        %4333 = vmatpush.msra.mxu0 0.0
        %4334 = vmatpush.msra.mxu0 0.0
        %4335 = vmatpush.msra.mxu0 0.0
        %4336 = vmatpush.msra.mxu0 0.0
        %4337 = vmatpush.msra.mxu0 0.0
        %4338 = vmatpush.msra.mxu0 0.0
        %4339 = vmatpush.msra.mxu0 0.0
        %4340 = vmatpush.msra.mxu0 0.0
        %4341 = vmatpush.msra.mxu0 0.0
        %4342 = vmatpush.msra.mxu0 0.0
        %4343 = vmatpush.msra.mxu0 0.0
        %4344 = vmatpush.msra.mxu0 0.0
        %4345 = vmatpush.msra.mxu0 %v4328
        %4346 = vmatmul.f32.gmra.mxu0 %v4326
        %v4347 = vpop.f32.mrf.mxu0
        %v4348 = vadd.f32 0.0, %v4347
        %4349 = vdwg.mxu0
        %4350 = vrot.lane.b32.xlu0 %v4070, 32
        %v4351 = vpop.permute.xlu0 %4350
        %4352 = vrot.lane.b32.xlu0 %v4090, 32
        %v4353 = vpop.permute.xlu0 %4352
        %v4354 = vsel %vm4112, %v4351, 0
        %v4356 = vsel %vm4112, %v4353, 0
        %4358 = vmatpush.xpose.msra.mxu0 0.0
        %4359 = vmatpush.xpose.msra.mxu0 0.0
        %4360 = vmatpush.xpose.msra.mxu0 0.0
        %4361 = vmatpush.xpose.msra.mxu0 0.0
        %4362 = vmatpush.xpose.msra.mxu0 0.0
        %4363 = vmatpush.xpose.msra.mxu0 0.0
        %4364 = vmatpush.xpose.msra.mxu0 0.0
        %4365 = vmatpush.xpose.msra.mxu0 0.0
        %4366 = vmatpush.xpose.msra.mxu0 0.0
        %4367 = vmatpush.xpose.msra.mxu0 0.0
        %4368 = vmatpush.xpose.msra.mxu0 0.0
        %4369 = vmatpush.xpose.msra.mxu0 0.0
        %4370 = vmatpush.xpose.msra.mxu0 0.0
        %4371 = vmatpush.xpose.msra.mxu0 0.0
        %4372 = vmatpush.xpose.msra.mxu0 0.0
        %4373 = vmatpush.xpose.msra.mxu0 %v4356
        %4374 = vmatmul.f32.gmra.mxu0 %v4354
        %v4375 = vpop.f32.mrf.mxu0
        %v4376 = vadd.f32 0.0, %v4375
        %4377 = vdwg.mxu0
        %v4378 = vsel %vm4139, %v4376, -inf
        %4379 = vmax.xlane.f32.xlu0 %v4378
        %v4380 = vpop.xlane.xlu0 %4379
        %v4381 = vsub.f32 %v4376, %v4380
        %v4382 = vmul.f32 %v4381, 1.442695
        %v4383 = vpow.pop %v4382
        %v4384 = vsel %vm4139, %v4383, 0.0
        %4385 = vadd.xlane.f32.xlu0 %v4384
        %v4386 = vpop.xlane.xlu0 %4385
        %v4387 = vrcp.pop %v4386
        %v4388 = vmul.f32 %v4386, %v4387
        %v4389 = vsub.f32 1.0, %v4388
        %v4390 = vmul.f32 %v4387, %v4389
        %v4391 = vadd.f32 %v4387, %v4390
        %vm4392 = vweird.f32 %v4386
        %vm4393 = vweird.f32 %v4387
        %vm4394 = vmor %vm4392, %vm4393
        %v4395 = vsel %vm4394, %v4387, %v4391
        %v4396 = vand.u32 2147483647, %v4386
        %vm4397 = vcmp.eq.f32.partialorder %v4396, 8.507059e+37
        %v4398 = vand.u32 %v4386, 2147483648
        %v4399 = vor.u32 1.1754944e-38, %v4398
        %v4400 = vsel %vm4397, %v4399, %v4395
        %v4401 = vmul.f32 %v4383, %v4400
        %4402 = vrot.lane.b32.xlu0 %v4110, 32
        %v4403 = vpop.permute.xlu0 %4402
        %v4405 = vsel %vm4164, %v4401, 0
        %v4407 = vsel %vm4168, %v4403, 0
        %4409 = vmatpush.msra.mxu0 0.0
        %4410 = vmatpush.msra.mxu0 0.0
        %4411 = vmatpush.msra.mxu0 0.0
        %4412 = vmatpush.msra.mxu0 0.0
        %4413 = vmatpush.msra.mxu0 0.0
        %4414 = vmatpush.msra.mxu0 0.0
        %4415 = vmatpush.msra.mxu0 0.0
        %4416 = vmatpush.msra.mxu0 0.0
        %4417 = vmatpush.msra.mxu0 0.0
        %4418 = vmatpush.msra.mxu0 0.0
        %4419 = vmatpush.msra.mxu0 0.0
        %4420 = vmatpush.msra.mxu0 0.0
        %4421 = vmatpush.msra.mxu0 0.0
        %4422 = vmatpush.msra.mxu0 0.0
        %4423 = vmatpush.msra.mxu0 0.0
        %4424 = vmatpush.msra.mxu0 %v4407
        %4425 = vmatmul.f32.gmra.mxu0 %v4405
        %v4426 = vpop.f32.mrf.mxu0
        %v4427 = vadd.f32 0.0, %v4426
        %4428 = vdwg.mxu0
        %4430 = vrot.lane.b32.xlu0 %v4269, 32
        %v4431 = vpop.permute.xlu0 %4430
        %4434 = vrot.lane.b32.xlu0 %v4348, 64
        %v4435 = vpop.permute.xlu0 %4434
        %4438 = vrot.lane.b32.xlu0 %v4427, 96
        %v4439 = vpop.permute.xlu0 %4438
        %v4441 = vsel %vm4112, %v4190, %v4431
        %v4442 = vsel %vm3964, %v4441, %v4435
        %vm4443 = vcmask 785408
        %v4444 = vsel %vm4443, %v4442, %v4439
        %v4445 = vld [vmem:[%s37] sm:$0xff]
        %v4446 = vld [vmem:[%s37 + $0x8] sm:$0xff]
        %v4447 = vld [vmem:[%s37 + $0x10] sm:$0xff]
        %v4448 = vld [vmem:[%s37 + $0x18] sm:$0xff]
        %v4449 = vld [vmem:[%s37 + $0x20] sm:$0xff]
        %v4450 = vld [vmem:[%s37 + $0x28] sm:$0xff]
        %v4451 = vld [vmem:[%s37 + $0x30] sm:$0xff]
        %v4452 = vld [vmem:[%s37 + $0x38] sm:$0xff]
        %v4453 = vld [vmem:[%s37 + $0x40] sm:$0xff]
        %v4454 = vld [vmem:[%s37 + $0x48] sm:$0xff]
        %v4455 = vld [vmem:[%s37 + $0x50] sm:$0xff]
        %v4456 = vld [vmem:[%s37 + $0x58] sm:$0xff]
        %v4457 = vld [vmem:[%s37 + $0x60] sm:$0xff]
        %v4458 = vld [vmem:[%s37 + $0x68] sm:$0xff]
        %v4459 = vld [vmem:[%s37 + $0x70] sm:$0xff]
        %v4460 = vld [vmem:[%s37 + $0x78] sm:$0xff]
        %v4461 = vld [vmem:[%s39] sm:$0x1]
        %v4463 = vperm.slane %v4461, 0
        %4465 = vmatpush.msra.mxu0 %v4460
        %4466 = vmatpush.msra.mxu0 %v4459
        %4467 = vmatpush.msra.mxu0 %v4458
        %4468 = vmatpush.msra.mxu0 %v4457
        %4469 = vmatpush.msra.mxu0 %v4456
        %4470 = vmatpush.msra.mxu0 %v4455
        %4471 = vmatpush.msra.mxu0 %v4454
        %4472 = vmatpush.msra.mxu0 %v4453
        %4473 = vmatpush.msra.mxu0 %v4452
        %4474 = vmatpush.msra.mxu0 %v4451
        %4475 = vmatpush.msra.mxu0 %v4450
        %4476 = vmatpush.msra.mxu0 %v4449
        %4477 = vmatpush.msra.mxu0 %v4448
        %4478 = vmatpush.msra.mxu0 %v4447
        %4479 = vmatpush.msra.mxu0 %v4446
        %4480 = vmatpush.msra.mxu0 %v4445
        %4481 = vmatmul.f32.gmra.mxu0 %v4444
        %v4482 = vpop.f32.mrf.mxu0
        %v4483 = vadd.f32 %v4463, %v4482
        %4484 = vdwg.mxu0
        %v4485 = vadd.f32 %v3995, %v4483
        %v4486 = vld [vmem:[%s41] sm:$0x1]
        %v4487 = vld [vmem:[%s43] sm:$0x1]
        %v4488 = vsel %vm4168, %v4485, 0.0
        %4489 = vadd.xlane.f32.xlu0 %v4488
        %v4490 = vpop.xlane.xlu0 %4489
        %v4491 = vrcp.pop 128.0
        %v4492 = vmul.f32 128.0, %v4491
        %v4493 = vsub.f32 1.0, %v4492
        %v4494 = vmul.f32 %v4491, %v4493
        %v4495 = vadd.f32 %v4491, %v4494
        %vm4496 = vweird.f32 %v4491
        %v4497 = vsel %vm4496, %v4491, %v4495
        %v4498 = vmul.f32 %v4490, %v4497
        %v4499 = vsub.f32 %v4485, %v4498
        %v4500 = vmul.f32 %v4499, %v4499
        %v4501 = vsel %vm4168, %v4500, 0.0
        %4502 = vadd.xlane.f32.xlu0 %v4501
        %v4503 = vpop.xlane.xlu0 %4502
        %v4504 = vmul.f32 %v4503, %v4497
        %v4505 = vadd.f32 %v4504, 1e-05
        %v4506 = vrsqrt.pop %v4505
        %v4507 = vmul.f32 %v4506, %v4505
        %v4508 = vmul.f32 %v4507, %v4506
        %v4509 = vmul.f32 0.5, %v4508
        %v4510 = vsub.f32 1.5, %v4509
        %v4511 = vmul.f32 %v4506, %v4510
        %vm4512 = vweird.f32 %v4505
        %vm4513 = vweird.f32 %v4506
        %vm4514 = vmor %vm4512, %vm4513
        %v4515 = vsel %vm4514, %v4506, %v4511
        %v4516 = vmul.f32 %v4499, %v4515
        %v4518 = vperm.slane %v4486, 0
        %v4520 = vmul.f32 %v4516, %v4518
        %v4522 = vperm.slane %v4487, 0
        %v4524 = vadd.f32 %v4520, %v4522
        %v4525 = vld [vmem:[%s49] sm:$0xff]
        %v4526 = vld [vmem:[%s49 + $0x8] sm:$0xff]
        %v4527 = vld [vmem:[%s49 + $0x10] sm:$0xff]
        %v4528 = vld [vmem:[%s49 + $0x18] sm:$0xff]
        %v4529 = vld [vmem:[%s49 + $0x20] sm:$0xff]
        %v4530 = vld [vmem:[%s49 + $0x28] sm:$0xff]
        %v4531 = vld [vmem:[%s49 + $0x30] sm:$0xff]
        %v4532 = vld [vmem:[%s49 + $0x38] sm:$0xff]
        %v4533 = vld [vmem:[%s49 + $0x40] sm:$0xff]
        %v4534 = vld [vmem:[%s49 + $0x48] sm:$0xff]
        %v4535 = vld [vmem:[%s49 + $0x50] sm:$0xff]
        %v4536 = vld [vmem:[%s49 + $0x58] sm:$0xff]
        %v4537 = vld [vmem:[%s49 + $0x60] sm:$0xff]
        %v4538 = vld [vmem:[%s49 + $0x68] sm:$0xff]
        %v4539 = vld [vmem:[%s49 + $0x70] sm:$0xff]
        %v4540 = vld [vmem:[%s49 + $0x78] sm:$0xff]
        %v4541 = vld [vmem:[%s49 + $0x80] sm:$0xff]
        %v4542 = vld [vmem:[%s49 + $0x88] sm:$0xff]
        %v4543 = vld [vmem:[%s49 + $0x90] sm:$0xff]
        %v4544 = vld [vmem:[%s49 + $0x98] sm:$0xff]
        %v4545 = vld [vmem:[%s49 + $0xa0] sm:$0xff]
        %v4546 = vld [vmem:[%s49 + $0xa8] sm:$0xff]
        %v4547 = vld [vmem:[%s49 + $0xb0] sm:$0xff]
        %v4548 = vld [vmem:[%s49 + $0xb8] sm:$0xff]
        %v4549 = vld [vmem:[%s49 + $0xc0] sm:$0xff]
        %v4550 = vld [vmem:[%s49 + $0xc8] sm:$0xff]
        %v4551 = vld [vmem:[%s49 + $0xd0] sm:$0xff]
        %v4552 = vld [vmem:[%s49 + $0xd8] sm:$0xff]
        %v4553 = vld [vmem:[%s49 + $0xe0] sm:$0xff]
        %v4554 = vld [vmem:[%s49 + $0xe8] sm:$0xff]
        %v4555 = vld [vmem:[%s49 + $0xf0] sm:$0xff]
        %v4556 = vld [vmem:[%s49 + $0xf8] sm:$0xff]
        %v4557 = vld [vmem:[%s51] sm:$0x3]
        %v4559 = vperm.slane %v4557, 0
        %v4560 = vperm.slane %v4557, 1
        %4563 = vmatpush.msra.mxu0 %v4555
        %4564 = vmatpush.msra.mxu0 %v4553
        %4565 = vmatpush.msra.mxu0 %v4551
        %4566 = vmatpush.msra.mxu0 %v4549
        %4567 = vmatpush.msra.mxu0 %v4547
        %4568 = vmatpush.msra.mxu0 %v4545
        %4569 = vmatpush.msra.mxu0 %v4543
        %4570 = vmatpush.msra.mxu0 %v4541
        %4571 = vmatpush.msra.mxu0 %v4539
        %4572 = vmatpush.msra.mxu0 %v4537
        %4573 = vmatpush.msra.mxu0 %v4535
        %4574 = vmatpush.msra.mxu0 %v4533
        %4575 = vmatpush.msra.mxu0 %v4531
        %4576 = vmatpush.msra.mxu0 %v4529
        %4577 = vmatpush.msra.mxu0 %v4527
        %4578 = vmatpush.msra.mxu0 %v4525
        %4579 = vmatmul.f32.gmra.mxu0 %v4524
        %v4580 = vpop.f32.mrf.mxu0
        %v4581 = vadd.f32 %v4559, %v4580
        %4582 = vdwg.mxu0
        %4583 = vmatpush.msra.mxu0 %v4556
        %4584 = vmatpush.msra.mxu0 %v4554
        %4585 = vmatpush.msra.mxu0 %v4552
        %4586 = vmatpush.msra.mxu0 %v4550
        %4587 = vmatpush.msra.mxu0 %v4548
        %4588 = vmatpush.msra.mxu0 %v4546
        %4589 = vmatpush.msra.mxu0 %v4544
        %4590 = vmatpush.msra.mxu0 %v4542
        %4591 = vmatpush.msra.mxu0 %v4540
        %4592 = vmatpush.msra.mxu0 %v4538
        %4593 = vmatpush.msra.mxu0 %v4536
        %4594 = vmatpush.msra.mxu0 %v4534
        %4595 = vmatpush.msra.mxu0 %v4532
        %4596 = vmatpush.msra.mxu0 %v4530
        %4597 = vmatpush.msra.mxu0 %v4528
        %4598 = vmatpush.msra.mxu0 %v4526
        %4599 = vmatmul.f32.gmra.mxu0 %v4524
        %v4600 = vpop.f32.mrf.mxu0
        %v4601 = vadd.f32 %v4560, %v4600
        %4602 = vdwg.mxu0
        %v4603 = vmax.f32 %v4581, 0.0
        %v4604 = vmax.f32 %v4601, 0.0
        %v4605 = vld [vmem:[%s53] sm:$0xff]
        %v4606 = vld [vmem:[%s53 + $0x8] sm:$0xff]
        %v4607 = vld [vmem:[%s53 + $0x10] sm:$0xff]
        %v4608 = vld [vmem:[%s53 + $0x18] sm:$0xff]
        %v4609 = vld [vmem:[%s53 + $0x20] sm:$0xff]
        %v4610 = vld [vmem:[%s53 + $0x28] sm:$0xff]
        %v4611 = vld [vmem:[%s53 + $0x30] sm:$0xff]
        %v4612 = vld [vmem:[%s53 + $0x38] sm:$0xff]
        %v4613 = vld [vmem:[%s53 + $0x40] sm:$0xff]
        %v4614 = vld [vmem:[%s53 + $0x48] sm:$0xff]
        %v4615 = vld [vmem:[%s53 + $0x50] sm:$0xff]
        %v4616 = vld [vmem:[%s53 + $0x58] sm:$0xff]
        %v4617 = vld [vmem:[%s53 + $0x60] sm:$0xff]
        %v4618 = vld [vmem:[%s53 + $0x68] sm:$0xff]
        %v4619 = vld [vmem:[%s53 + $0x70] sm:$0xff]
        %v4620 = vld [vmem:[%s53 + $0x78] sm:$0xff]
        %v4621 = vld [vmem:[%s53 + $0x80] sm:$0xff]
        %v4622 = vld [vmem:[%s53 + $0x88] sm:$0xff]
        %v4623 = vld [vmem:[%s53 + $0x90] sm:$0xff]
        %v4624 = vld [vmem:[%s53 + $0x98] sm:$0xff]
        %v4625 = vld [vmem:[%s53 + $0xa0] sm:$0xff]
        %v4626 = vld [vmem:[%s53 + $0xa8] sm:$0xff]
        %v4627 = vld [vmem:[%s53 + $0xb0] sm:$0xff]
        %v4628 = vld [vmem:[%s53 + $0xb8] sm:$0xff]
        %v4629 = vld [vmem:[%s53 + $0xc0] sm:$0xff]
        %v4630 = vld [vmem:[%s53 + $0xc8] sm:$0xff]
        %v4631 = vld [vmem:[%s53 + $0xd0] sm:$0xff]
        %v4632 = vld [vmem:[%s53 + $0xd8] sm:$0xff]
        %v4633 = vld [vmem:[%s53 + $0xe0] sm:$0xff]
        %v4634 = vld [vmem:[%s53 + $0xe8] sm:$0xff]
        %v4635 = vld [vmem:[%s53 + $0xf0] sm:$0xff]
        %v4636 = vld [vmem:[%s53 + $0xf8] sm:$0xff]
        %v4637 = vld [vmem:[%s55] sm:$0x1]
        %v4639 = vperm.slane %v4637, 0
        %4641 = vmatpush.msra.mxu0 %v4620
        %4642 = vmatpush.msra.mxu0 %v4619
        %4643 = vmatpush.msra.mxu0 %v4618
        %4644 = vmatpush.msra.mxu0 %v4617
        %4645 = vmatpush.msra.mxu0 %v4616
        %4646 = vmatpush.msra.mxu0 %v4615
        %4647 = vmatpush.msra.mxu0 %v4614
        %4648 = vmatpush.msra.mxu0 %v4613
        %4649 = vmatpush.msra.mxu0 %v4612
        %4650 = vmatpush.msra.mxu0 %v4611
        %4651 = vmatpush.msra.mxu0 %v4610
        %4652 = vmatpush.msra.mxu0 %v4609
        %4653 = vmatpush.msra.mxu0 %v4608
        %4654 = vmatpush.msra.mxu0 %v4607
        %4655 = vmatpush.msra.mxu0 %v4606
        %4656 = vmatpush.msra.mxu0 %v4605
        %4657 = vmatmul.f32.gmra.mxu0 %v4603
        %v4658 = vpop.f32.mrf.mxu0
        %v4659 = vadd.f32 %v4639, %v4658
        %4660 = vdwg.mxu0
        %4661 = vmatpush.msra.mxu0 %v4636
        %4662 = vmatpush.msra.mxu0 %v4635
        %4663 = vmatpush.msra.mxu0 %v4634
        %4664 = vmatpush.msra.mxu0 %v4633
        %4665 = vmatpush.msra.mxu0 %v4632
        %4666 = vmatpush.msra.mxu0 %v4631
        %4667 = vmatpush.msra.mxu0 %v4630
        %4668 = vmatpush.msra.mxu0 %v4629
        %4669 = vmatpush.msra.mxu0 %v4628
        %4670 = vmatpush.msra.mxu0 %v4627
        %4671 = vmatpush.msra.mxu0 %v4626
        %4672 = vmatpush.msra.mxu0 %v4625
        %4673 = vmatpush.msra.mxu0 %v4624
        %4674 = vmatpush.msra.mxu0 %v4623
        %4675 = vmatpush.msra.mxu0 %v4622
        %4676 = vmatpush.msra.mxu0 %v4621
        %4677 = vmatmul.f32.gmra.mxu0 %v4604
        %v4678 = vpop.f32.mrf.mxu0
        %v4679 = vadd.f32 %v4659, %v4678
        %4680 = vdwg.mxu0
        %v4681 = vadd.f32 %v4524, %v4679
        %v4682 = vld [vmem:[%s45] sm:$0x1]
        %v4683 = vld [vmem:[%s47] sm:$0x1]
        %v4684 = vsel %vm4168, %v4681, 0.0
        %4685 = vadd.xlane.f32.xlu0 %v4684
        %v4686 = vpop.xlane.xlu0 %4685
        %v4687 = vmul.f32 %v4686, %v4497
        %v4688 = vsub.f32 %v4681, %v4687
        %v4689 = vmul.f32 %v4688, %v4688
        %v4690 = vsel %vm4168, %v4689, 0.0
        %4691 = vadd.xlane.f32.xlu0 %v4690
        %v4692 = vpop.xlane.xlu0 %4691
        %v4693 = vmul.f32 %v4692, %v4497
        %v4694 = vadd.f32 %v4693, 1e-05
        %v4695 = vrsqrt.pop %v4694
        %v4696 = vmul.f32 %v4695, %v4694
        %v4697 = vmul.f32 %v4696, %v4695
        %v4698 = vmul.f32 0.5, %v4697
        %v4699 = vsub.f32 1.5, %v4698
        %v4700 = vmul.f32 %v4695, %v4699
        %vm4701 = vweird.f32 %v4694
        %vm4702 = vweird.f32 %v4695
        %vm4703 = vmor %vm4701, %vm4702
        %v4704 = vsel %vm4703, %v4695, %v4700
        %v4705 = vmul.f32 %v4688, %v4704
        %v4707 = vperm.slane %v4682, 0
        %v4709 = vmul.f32 %v4705, %v4707
        %v4711 = vperm.slane %v4683, 0
        %v4713 = vadd.f32 %v4709, %v4711
        %s4714 = scalar_lea.vmem %s33, 384
        %v4715 = vld [vmem:[%s4714] sm:$0xff]
        %v4716 = vld [vmem:[%s4714 + $0x8] sm:$0xff]
        %v4717 = vld [vmem:[%s4714 + $0x10] sm:$0xff]
        %v4718 = vld [vmem:[%s4714 + $0x18] sm:$0xff]
        %v4719 = vld [vmem:[%s4714 + $0x20] sm:$0xff]
        %v4720 = vld [vmem:[%s4714 + $0x28] sm:$0xff]
        %v4721 = vld [vmem:[%s4714 + $0x30] sm:$0xff]
        %v4722 = vld [vmem:[%s4714 + $0x38] sm:$0xff]
        %v4723 = vld [vmem:[%s4714 + $0x40] sm:$0xff]
        %v4724 = vld [vmem:[%s4714 + $0x48] sm:$0xff]
        %v4725 = vld [vmem:[%s4714 + $0x50] sm:$0xff]
        %v4726 = vld [vmem:[%s4714 + $0x58] sm:$0xff]
        %v4727 = vld [vmem:[%s4714 + $0x60] sm:$0xff]
        %v4728 = vld [vmem:[%s4714 + $0x68] sm:$0xff]
        %v4729 = vld [vmem:[%s4714 + $0x70] sm:$0xff]
        %v4730 = vld [vmem:[%s4714 + $0x78] sm:$0xff]
        %v4731 = vld [vmem:[%s4714 + $0x80] sm:$0xff]
        %v4732 = vld [vmem:[%s4714 + $0x88] sm:$0xff]
        %v4733 = vld [vmem:[%s4714 + $0x90] sm:$0xff]
        %v4734 = vld [vmem:[%s4714 + $0x98] sm:$0xff]
        %v4735 = vld [vmem:[%s4714 + $0xa0] sm:$0xff]
        %v4736 = vld [vmem:[%s4714 + $0xa8] sm:$0xff]
        %v4737 = vld [vmem:[%s4714 + $0xb0] sm:$0xff]
        %v4738 = vld [vmem:[%s4714 + $0xb8] sm:$0xff]
        %v4739 = vld [vmem:[%s4714 + $0xc0] sm:$0xff]
        %v4740 = vld [vmem:[%s4714 + $0xc8] sm:$0xff]
        %v4741 = vld [vmem:[%s4714 + $0xd0] sm:$0xff]
        %v4742 = vld [vmem:[%s4714 + $0xd8] sm:$0xff]
        %v4743 = vld [vmem:[%s4714 + $0xe0] sm:$0xff]
        %v4744 = vld [vmem:[%s4714 + $0xe8] sm:$0xff]
        %v4745 = vld [vmem:[%s4714 + $0xf0] sm:$0xff]
        %v4746 = vld [vmem:[%s4714 + $0xf8] sm:$0xff]
        %v4747 = vld [vmem:[%s4714 + $0x100] sm:$0xff]
        %v4748 = vld [vmem:[%s4714 + $0x108] sm:$0xff]
        %v4749 = vld [vmem:[%s4714 + $0x110] sm:$0xff]
        %v4750 = vld [vmem:[%s4714 + $0x118] sm:$0xff]
        %v4751 = vld [vmem:[%s4714 + $0x120] sm:$0xff]
        %v4752 = vld [vmem:[%s4714 + $0x128] sm:$0xff]
        %v4753 = vld [vmem:[%s4714 + $0x130] sm:$0xff]
        %v4754 = vld [vmem:[%s4714 + $0x138] sm:$0xff]
        %v4755 = vld [vmem:[%s4714 + $0x140] sm:$0xff]
        %v4756 = vld [vmem:[%s4714 + $0x148] sm:$0xff]
        %v4757 = vld [vmem:[%s4714 + $0x150] sm:$0xff]
        %v4758 = vld [vmem:[%s4714 + $0x158] sm:$0xff]
        %v4759 = vld [vmem:[%s4714 + $0x160] sm:$0xff]
        %v4760 = vld [vmem:[%s4714 + $0x168] sm:$0xff]
        %v4761 = vld [vmem:[%s4714 + $0x170] sm:$0xff]
        %v4762 = vld [vmem:[%s4714 + $0x178] sm:$0xff]
        %s4763 = scalar_lea.vmem %s35, 3
        %v4764 = vld [vmem:[%s4763] sm:$0x7]
        %v4766 = vperm.slane %v4764, 0
        %v4767 = vperm.slane %v4764, 1
        %v4768 = vperm.slane %v4764, 2
        %4772 = vmatpush.msra.mxu0 %v4760
        %4773 = vmatpush.msra.mxu0 %v4757
        %4774 = vmatpush.msra.mxu0 %v4754
        %4775 = vmatpush.msra.mxu0 %v4751
        %4776 = vmatpush.msra.mxu0 %v4748
        %4777 = vmatpush.msra.mxu0 %v4745
        %4778 = vmatpush.msra.mxu0 %v4742
        %4779 = vmatpush.msra.mxu0 %v4739
        %4780 = vmatpush.msra.mxu0 %v4736
        %4781 = vmatpush.msra.mxu0 %v4733
        %4782 = vmatpush.msra.mxu0 %v4730
        %4783 = vmatpush.msra.mxu0 %v4727
        %4784 = vmatpush.msra.mxu0 %v4724
        %4785 = vmatpush.msra.mxu0 %v4721
        %4786 = vmatpush.msra.mxu0 %v4718
        %4787 = vmatpush.msra.mxu0 %v4715
        %4788 = vmatmul.f32.gmra.mxu0 %v4713
        %v4789 = vpop.f32.mrf.mxu0
        %v4790 = vadd.f32 %v4766, %v4789
        %4791 = vdwg.mxu0
        %4792 = vmatpush.msra.mxu0 %v4761
        %4793 = vmatpush.msra.mxu0 %v4758
        %4794 = vmatpush.msra.mxu0 %v4755
        %4795 = vmatpush.msra.mxu0 %v4752
        %4796 = vmatpush.msra.mxu0 %v4749
        %4797 = vmatpush.msra.mxu0 %v4746
        %4798 = vmatpush.msra.mxu0 %v4743
        %4799 = vmatpush.msra.mxu0 %v4740
        %4800 = vmatpush.msra.mxu0 %v4737
        %4801 = vmatpush.msra.mxu0 %v4734
        %4802 = vmatpush.msra.mxu0 %v4731
        %4803 = vmatpush.msra.mxu0 %v4728
        %4804 = vmatpush.msra.mxu0 %v4725
        %4805 = vmatpush.msra.mxu0 %v4722
        %4806 = vmatpush.msra.mxu0 %v4719
        %4807 = vmatpush.msra.mxu0 %v4716
        %4808 = vmatmul.f32.gmra.mxu0 %v4713
        %v4809 = vpop.f32.mrf.mxu0
        %v4810 = vadd.f32 %v4767, %v4809
        %4811 = vdwg.mxu0
        %4812 = vmatpush.msra.mxu0 %v4762
        %4813 = vmatpush.msra.mxu0 %v4759
        %4814 = vmatpush.msra.mxu0 %v4756
        %4815 = vmatpush.msra.mxu0 %v4753
        %4816 = vmatpush.msra.mxu0 %v4750
        %4817 = vmatpush.msra.mxu0 %v4747
        %4818 = vmatpush.msra.mxu0 %v4744
        %4819 = vmatpush.msra.mxu0 %v4741
        %4820 = vmatpush.msra.mxu0 %v4738
        %4821 = vmatpush.msra.mxu0 %v4735
        %4822 = vmatpush.msra.mxu0 %v4732
        %4823 = vmatpush.msra.mxu0 %v4729
        %4824 = vmatpush.msra.mxu0 %v4726
        %4825 = vmatpush.msra.mxu0 %v4723
        %4826 = vmatpush.msra.mxu0 %v4720
        %4827 = vmatpush.msra.mxu0 %v4717
        %4828 = vmatmul.f32.gmra.mxu0 %v4713
        %v4829 = vpop.f32.mrf.mxu0
        %v4830 = vadd.f32 %v4768, %v4829
        %4831 = vdwg.mxu0
        %v4833 = vsel %vm4112, %v4790, 0
        %v4836 = vsel %vm4112, %v4810, 0
        %4838 = vmatpush.xpose.msra.mxu0 0.0
        %4839 = vmatpush.xpose.msra.mxu0 0.0
        %4840 = vmatpush.xpose.msra.mxu0 0.0
        %4841 = vmatpush.xpose.msra.mxu0 0.0
        %4842 = vmatpush.xpose.msra.mxu0 0.0
        %4843 = vmatpush.xpose.msra.mxu0 0.0
        %4844 = vmatpush.xpose.msra.mxu0 0.0
        %4845 = vmatpush.xpose.msra.mxu0 0.0
        %4846 = vmatpush.xpose.msra.mxu0 0.0
        %4847 = vmatpush.xpose.msra.mxu0 0.0
        %4848 = vmatpush.xpose.msra.mxu0 0.0
        %4849 = vmatpush.xpose.msra.mxu0 0.0
        %4850 = vmatpush.xpose.msra.mxu0 0.0
        %4851 = vmatpush.xpose.msra.mxu0 0.0
        %4852 = vmatpush.xpose.msra.mxu0 0.0
        %4853 = vmatpush.xpose.msra.mxu0 %v4836
        %4854 = vmatmul.f32.gmra.mxu0 %v4833
        %v4855 = vpop.f32.mrf.mxu0
        %v4856 = vadd.f32 0.0, %v4855
        %4857 = vdwg.mxu0
        %v4858 = vsel %vm4139, %v4856, -inf
        %4859 = vmax.xlane.f32.xlu0 %v4858
        %v4860 = vpop.xlane.xlu0 %4859
        %v4861 = vsub.f32 %v4856, %v4860
        %v4862 = vmul.f32 %v4861, 1.442695
        %v4863 = vpow.pop %v4862
        %v4864 = vsel %vm4139, %v4863, 0.0
        %4865 = vadd.xlane.f32.xlu0 %v4864
        %v4866 = vpop.xlane.xlu0 %4865
        %v4867 = vrcp.pop %v4866
        %v4868 = vmul.f32 %v4866, %v4867
        %v4869 = vsub.f32 1.0, %v4868
        %v4870 = vmul.f32 %v4867, %v4869
        %v4871 = vadd.f32 %v4867, %v4870
        %vm4872 = vweird.f32 %v4866
        %vm4873 = vweird.f32 %v4867
        %vm4874 = vmor %vm4872, %vm4873
        %v4875 = vsel %vm4874, %v4867, %v4871
        %v4876 = vand.u32 2147483647, %v4866
        %vm4877 = vcmp.eq.f32.partialorder %v4876, 8.507059e+37
        %v4878 = vand.u32 %v4866, 2147483648
        %v4879 = vor.u32 1.1754944e-38, %v4878
        %v4880 = vsel %vm4877, %v4879, %v4875
        %v4881 = vmul.f32 %v4863, %v4880
        %v4883 = vsel %vm4164, %v4881, 0
        %v4886 = vsel %vm4168, %v4830, 0
        %4888 = vmatpush.msra.mxu0 0.0
        %4889 = vmatpush.msra.mxu0 0.0
        %4890 = vmatpush.msra.mxu0 0.0
        %4891 = vmatpush.msra.mxu0 0.0
        %4892 = vmatpush.msra.mxu0 0.0
        %4893 = vmatpush.msra.mxu0 0.0
        %4894 = vmatpush.msra.mxu0 0.0
        %4895 = vmatpush.msra.mxu0 0.0
        %4896 = vmatpush.msra.mxu0 0.0
        %4897 = vmatpush.msra.mxu0 0.0
        %4898 = vmatpush.msra.mxu0 0.0
        %4899 = vmatpush.msra.mxu0 0.0
        %4900 = vmatpush.msra.mxu0 0.0
        %4901 = vmatpush.msra.mxu0 0.0
        %4902 = vmatpush.msra.mxu0 0.0
        %4903 = vmatpush.msra.mxu0 %v4886
        %4904 = vmatmul.f32.gmra.mxu0 %v4883
        %v4905 = vpop.f32.mrf.mxu0
        %v4906 = vadd.f32 0.0, %v4905
        %4907 = vdwg.mxu0
        %4908 = vrot.lane.b32.xlu0 %v4790, 96
        %v4909 = vpop.permute.xlu0 %4908
        %4910 = vrot.lane.b32.xlu0 %v4810, 96
        %v4911 = vpop.permute.xlu0 %4910
        %v4912 = vsel %vm4112, %v4909, 0
        %v4914 = vsel %vm4112, %v4911, 0
        %4916 = vmatpush.xpose.msra.mxu0 0.0
        %4917 = vmatpush.xpose.msra.mxu0 0.0
        %4918 = vmatpush.xpose.msra.mxu0 0.0
        %4919 = vmatpush.xpose.msra.mxu0 0.0
        %4920 = vmatpush.xpose.msra.mxu0 0.0
        %4921 = vmatpush.xpose.msra.mxu0 0.0
        %4922 = vmatpush.xpose.msra.mxu0 0.0
        %4923 = vmatpush.xpose.msra.mxu0 0.0
        %4924 = vmatpush.xpose.msra.mxu0 0.0
        %4925 = vmatpush.xpose.msra.mxu0 0.0
        %4926 = vmatpush.xpose.msra.mxu0 0.0
        %4927 = vmatpush.xpose.msra.mxu0 0.0
        %4928 = vmatpush.xpose.msra.mxu0 0.0
        %4929 = vmatpush.xpose.msra.mxu0 0.0
        %4930 = vmatpush.xpose.msra.mxu0 0.0
        %4931 = vmatpush.xpose.msra.mxu0 %v4914
        %4932 = vmatmul.f32.gmra.mxu0 %v4912
        %v4933 = vpop.f32.mrf.mxu0
        %v4934 = vadd.f32 0.0, %v4933
        %4935 = vdwg.mxu0
        %v4936 = vsel %vm4139, %v4934, -inf
        %4937 = vmax.xlane.f32.xlu0 %v4936
        %v4938 = vpop.xlane.xlu0 %4937
        %v4939 = vsub.f32 %v4934, %v4938
        %v4940 = vmul.f32 %v4939, 1.442695
        %v4941 = vpow.pop %v4940
        %v4942 = vsel %vm4139, %v4941, 0.0
        %4943 = vadd.xlane.f32.xlu0 %v4942
        %v4944 = vpop.xlane.xlu0 %4943
        %v4945 = vrcp.pop %v4944
        %v4946 = vmul.f32 %v4944, %v4945
        %v4947 = vsub.f32 1.0, %v4946
        %v4948 = vmul.f32 %v4945, %v4947
        %v4949 = vadd.f32 %v4945, %v4948
        %vm4950 = vweird.f32 %v4944
        %vm4951 = vweird.f32 %v4945
        %vm4952 = vmor %vm4950, %vm4951
        %v4953 = vsel %vm4952, %v4945, %v4949
        %v4954 = vand.u32 2147483647, %v4944
        %vm4955 = vcmp.eq.f32.partialorder %v4954, 8.507059e+37
        %v4956 = vand.u32 %v4944, 2147483648
        %v4957 = vor.u32 1.1754944e-38, %v4956
        %v4958 = vsel %vm4955, %v4957, %v4953
        %v4959 = vmul.f32 %v4941, %v4958
        %4960 = vrot.lane.b32.xlu0 %v4830, 96
        %v4961 = vpop.permute.xlu0 %4960
        %v4963 = vsel %vm4164, %v4959, 0
        %v4965 = vsel %vm4168, %v4961, 0
        %4967 = vmatpush.msra.mxu0 0.0
        %4968 = vmatpush.msra.mxu0 0.0
        %4969 = vmatpush.msra.mxu0 0.0
        %4970 = vmatpush.msra.mxu0 0.0
        %4971 = vmatpush.msra.mxu0 0.0
        %4972 = vmatpush.msra.mxu0 0.0
        %4973 = vmatpush.msra.mxu0 0.0
        %4974 = vmatpush.msra.mxu0 0.0
        %4975 = vmatpush.msra.mxu0 0.0
        %4976 = vmatpush.msra.mxu0 0.0
        %4977 = vmatpush.msra.mxu0 0.0
        %4978 = vmatpush.msra.mxu0 0.0
        %4979 = vmatpush.msra.mxu0 0.0
        %4980 = vmatpush.msra.mxu0 0.0
        %4981 = vmatpush.msra.mxu0 0.0
        %4982 = vmatpush.msra.mxu0 %v4965
        %4983 = vmatmul.f32.gmra.mxu0 %v4963
        %v4984 = vpop.f32.mrf.mxu0
        %v4985 = vadd.f32 0.0, %v4984
        %4986 = vdwg.mxu0
        %4987 = vrot.lane.b32.xlu0 %v4790, 64
        %v4988 = vpop.permute.xlu0 %4987
        %4989 = vrot.lane.b32.xlu0 %v4810, 64
        %v4990 = vpop.permute.xlu0 %4989
        %v4991 = vsel %vm4112, %v4988, 0
        %v4993 = vsel %vm4112, %v4990, 0
        %4995 = vmatpush.xpose.msra.mxu0 0.0
        %4996 = vmatpush.xpose.msra.mxu0 0.0
        %4997 = vmatpush.xpose.msra.mxu0 0.0
        %4998 = vmatpush.xpose.msra.mxu0 0.0
        %4999 = vmatpush.xpose.msra.mxu0 0.0
        %5000 = vmatpush.xpose.msra.mxu0 0.0
        %5001 = vmatpush.xpose.msra.mxu0 0.0
        %5002 = vmatpush.xpose.msra.mxu0 0.0
        %5003 = vmatpush.xpose.msra.mxu0 0.0
        %5004 = vmatpush.xpose.msra.mxu0 0.0
        %5005 = vmatpush.xpose.msra.mxu0 0.0
        %5006 = vmatpush.xpose.msra.mxu0 0.0
        %5007 = vmatpush.xpose.msra.mxu0 0.0
        %5008 = vmatpush.xpose.msra.mxu0 0.0
        %5009 = vmatpush.xpose.msra.mxu0 0.0
        %5010 = vmatpush.xpose.msra.mxu0 %v4993
        %5011 = vmatmul.f32.gmra.mxu0 %v4991
        %v5012 = vpop.f32.mrf.mxu0
        %v5013 = vadd.f32 0.0, %v5012
        %5014 = vdwg.mxu0
        %v5015 = vsel %vm4139, %v5013, -inf
        %5016 = vmax.xlane.f32.xlu0 %v5015
        %v5017 = vpop.xlane.xlu0 %5016
        %v5018 = vsub.f32 %v5013, %v5017
        %v5019 = vmul.f32 %v5018, 1.442695
        %v5020 = vpow.pop %v5019
        %v5021 = vsel %vm4139, %v5020, 0.0
        %5022 = vadd.xlane.f32.xlu0 %v5021
        %v5023 = vpop.xlane.xlu0 %5022
        %v5024 = vrcp.pop %v5023
        %v5025 = vmul.f32 %v5023, %v5024
        %v5026 = vsub.f32 1.0, %v5025
        %v5027 = vmul.f32 %v5024, %v5026
        %v5028 = vadd.f32 %v5024, %v5027
        %vm5029 = vweird.f32 %v5023
        %vm5030 = vweird.f32 %v5024
        %vm5031 = vmor %vm5029, %vm5030
        %v5032 = vsel %vm5031, %v5024, %v5028
        %v5033 = vand.u32 2147483647, %v5023
        %vm5034 = vcmp.eq.f32.partialorder %v5033, 8.507059e+37
        %v5035 = vand.u32 %v5023, 2147483648
        %v5036 = vor.u32 1.1754944e-38, %v5035
        %v5037 = vsel %vm5034, %v5036, %v5032
        %v5038 = vmul.f32 %v5020, %v5037
        %5039 = vrot.lane.b32.xlu0 %v4830, 64
        %v5040 = vpop.permute.xlu0 %5039
        %v5042 = vsel %vm4164, %v5038, 0
        %v5044 = vsel %vm4168, %v5040, 0
        %5046 = vmatpush.msra.mxu0 0.0
        %5047 = vmatpush.msra.mxu0 0.0
        %5048 = vmatpush.msra.mxu0 0.0
        %5049 = vmatpush.msra.mxu0 0.0
        %5050 = vmatpush.msra.mxu0 0.0
        %5051 = vmatpush.msra.mxu0 0.0
        %5052 = vmatpush.msra.mxu0 0.0
        %5053 = vmatpush.msra.mxu0 0.0
        %5054 = vmatpush.msra.mxu0 0.0
        %5055 = vmatpush.msra.mxu0 0.0
        %5056 = vmatpush.msra.mxu0 0.0
        %5057 = vmatpush.msra.mxu0 0.0
        %5058 = vmatpush.msra.mxu0 0.0
        %5059 = vmatpush.msra.mxu0 0.0
        %5060 = vmatpush.msra.mxu0 0.0
        %5061 = vmatpush.msra.mxu0 %v5044
        %5062 = vmatmul.f32.gmra.mxu0 %v5042
        %v5063 = vpop.f32.mrf.mxu0
        %v5064 = vadd.f32 0.0, %v5063
        %5065 = vdwg.mxu0
        %5066 = vrot.lane.b32.xlu0 %v4790, 32
        %v5067 = vpop.permute.xlu0 %5066
        %5068 = vrot.lane.b32.xlu0 %v4810, 32
        %v5069 = vpop.permute.xlu0 %5068
        %v5070 = vsel %vm4112, %v5067, 0
        %v5072 = vsel %vm4112, %v5069, 0
        %5074 = vmatpush.xpose.msra.mxu0 0.0
        %5075 = vmatpush.xpose.msra.mxu0 0.0
        %5076 = vmatpush.xpose.msra.mxu0 0.0
        %5077 = vmatpush.xpose.msra.mxu0 0.0
        %5078 = vmatpush.xpose.msra.mxu0 0.0
        %5079 = vmatpush.xpose.msra.mxu0 0.0
        %5080 = vmatpush.xpose.msra.mxu0 0.0
        %5081 = vmatpush.xpose.msra.mxu0 0.0
        %5082 = vmatpush.xpose.msra.mxu0 0.0
        %5083 = vmatpush.xpose.msra.mxu0 0.0
        %5084 = vmatpush.xpose.msra.mxu0 0.0
        %5085 = vmatpush.xpose.msra.mxu0 0.0
        %5086 = vmatpush.xpose.msra.mxu0 0.0
        %5087 = vmatpush.xpose.msra.mxu0 0.0
        %5088 = vmatpush.xpose.msra.mxu0 0.0
        %5089 = vmatpush.xpose.msra.mxu0 %v5072
        %5090 = vmatmul.f32.gmra.mxu0 %v5070
        %v5091 = vpop.f32.mrf.mxu0
        %v5092 = vadd.f32 0.0, %v5091
        %5093 = vdwg.mxu0
        %v5094 = vsel %vm4139, %v5092, -inf
        %5095 = vmax.xlane.f32.xlu0 %v5094
        %v5096 = vpop.xlane.xlu0 %5095
        %v5097 = vsub.f32 %v5092, %v5096
        %v5098 = vmul.f32 %v5097, 1.442695
        %v5099 = vpow.pop %v5098
        %v5100 = vsel %vm4139, %v5099, 0.0
        %5101 = vadd.xlane.f32.xlu0 %v5100
        %v5102 = vpop.xlane.xlu0 %5101
        %v5103 = vrcp.pop %v5102
        %v5104 = vmul.f32 %v5102, %v5103
        %v5105 = vsub.f32 1.0, %v5104
        %v5106 = vmul.f32 %v5103, %v5105
        %v5107 = vadd.f32 %v5103, %v5106
        %vm5108 = vweird.f32 %v5102
        %vm5109 = vweird.f32 %v5103
        %vm5110 = vmor %vm5108, %vm5109
        %v5111 = vsel %vm5110, %v5103, %v5107
        %v5112 = vand.u32 2147483647, %v5102
        %vm5113 = vcmp.eq.f32.partialorder %v5112, 8.507059e+37
        %v5114 = vand.u32 %v5102, 2147483648
        %v5115 = vor.u32 1.1754944e-38, %v5114
        %v5116 = vsel %vm5113, %v5115, %v5111
        %v5117 = vmul.f32 %v5099, %v5116
        %5118 = vrot.lane.b32.xlu0 %v4830, 32
        %v5119 = vpop.permute.xlu0 %5118
        %v5121 = vsel %vm4164, %v5117, 0
        %v5123 = vsel %vm4168, %v5119, 0
        %5125 = vmatpush.msra.mxu0 0.0
        %5126 = vmatpush.msra.mxu0 0.0
        %5127 = vmatpush.msra.mxu0 0.0
        %5128 = vmatpush.msra.mxu0 0.0
        %5129 = vmatpush.msra.mxu0 0.0
        %5130 = vmatpush.msra.mxu0 0.0
        %5131 = vmatpush.msra.mxu0 0.0
        %5132 = vmatpush.msra.mxu0 0.0
        %5133 = vmatpush.msra.mxu0 0.0
        %5134 = vmatpush.msra.mxu0 0.0
        %5135 = vmatpush.msra.mxu0 0.0
        %5136 = vmatpush.msra.mxu0 0.0
        %5137 = vmatpush.msra.mxu0 0.0
        %5138 = vmatpush.msra.mxu0 0.0
        %5139 = vmatpush.msra.mxu0 0.0
        %5140 = vmatpush.msra.mxu0 %v5123
        %5141 = vmatmul.f32.gmra.mxu0 %v5121
        %v5142 = vpop.f32.mrf.mxu0
        %v5143 = vadd.f32 0.0, %v5142
        %5144 = vdwg.mxu0
        %5146 = vrot.lane.b32.xlu0 %v4985, 32
        %v5147 = vpop.permute.xlu0 %5146
        %5150 = vrot.lane.b32.xlu0 %v5064, 64
        %v5151 = vpop.permute.xlu0 %5150
        %5154 = vrot.lane.b32.xlu0 %v5143, 96
        %v5155 = vpop.permute.xlu0 %5154
        %v5157 = vsel %vm4112, %v4906, %v5147
        %v5158 = vsel %vm3964, %v5157, %v5151
        %v5159 = vsel %vm4443, %v5158, %v5155
        %s5160 = scalar_lea.vmem %s37, 128
        %v5161 = vld [vmem:[%s5160] sm:$0xff]
        %v5162 = vld [vmem:[%s5160 + $0x8] sm:$0xff]
        %v5163 = vld [vmem:[%s5160 + $0x10] sm:$0xff]
        %v5164 = vld [vmem:[%s5160 + $0x18] sm:$0xff]
        %v5165 = vld [vmem:[%s5160 + $0x20] sm:$0xff]
        %v5166 = vld [vmem:[%s5160 + $0x28] sm:$0xff]
        %v5167 = vld [vmem:[%s5160 + $0x30] sm:$0xff]
        %v5168 = vld [vmem:[%s5160 + $0x38] sm:$0xff]
        %v5169 = vld [vmem:[%s5160 + $0x40] sm:$0xff]
        %v5170 = vld [vmem:[%s5160 + $0x48] sm:$0xff]
        %v5171 = vld [vmem:[%s5160 + $0x50] sm:$0xff]
        %v5172 = vld [vmem:[%s5160 + $0x58] sm:$0xff]
        %v5173 = vld [vmem:[%s5160 + $0x60] sm:$0xff]
        %v5174 = vld [vmem:[%s5160 + $0x68] sm:$0xff]
        %v5175 = vld [vmem:[%s5160 + $0x70] sm:$0xff]
        %v5176 = vld [vmem:[%s5160 + $0x78] sm:$0xff]
        %s5177 = scalar_lea.vmem %s39, 1
        %v5178 = vld [vmem:[%s5177] sm:$0x1]
        %v5180 = vperm.slane %v5178, 0
        %5182 = vmatpush.msra.mxu0 %v5176
        %5183 = vmatpush.msra.mxu0 %v5175
        %5184 = vmatpush.msra.mxu0 %v5174
        %5185 = vmatpush.msra.mxu0 %v5173
        %5186 = vmatpush.msra.mxu0 %v5172
        %5187 = vmatpush.msra.mxu0 %v5171
        %5188 = vmatpush.msra.mxu0 %v5170
        %5189 = vmatpush.msra.mxu0 %v5169
        %5190 = vmatpush.msra.mxu0 %v5168
        %5191 = vmatpush.msra.mxu0 %v5167
        %5192 = vmatpush.msra.mxu0 %v5166
        %5193 = vmatpush.msra.mxu0 %v5165
        %5194 = vmatpush.msra.mxu0 %v5164
        %5195 = vmatpush.msra.mxu0 %v5163
        %5196 = vmatpush.msra.mxu0 %v5162
        %5197 = vmatpush.msra.mxu0 %v5161
        %5198 = vmatmul.f32.gmra.mxu0 %v5159
        %v5199 = vpop.f32.mrf.mxu0
        %v5200 = vadd.f32 %v5180, %v5199
        %5201 = vdwg.mxu0
        %v5202 = vadd.f32 %v4713, %v5200
        %s5203 = scalar_lea.vmem %s41, 1
        %v5204 = vld [vmem:[%s5203] sm:$0x1]
        %s5205 = scalar_lea.vmem %s43, 1
        %v5206 = vld [vmem:[%s5205] sm:$0x1]
        %v5207 = vsel %vm4168, %v5202, 0.0
        %5208 = vadd.xlane.f32.xlu0 %v5207
        %v5209 = vpop.xlane.xlu0 %5208
        %v5210 = vmul.f32 %v5209, %v4497
        %v5211 = vsub.f32 %v5202, %v5210
        %v5212 = vmul.f32 %v5211, %v5211
        %v5213 = vsel %vm4168, %v5212, 0.0
        %5214 = vadd.xlane.f32.xlu0 %v5213
        %v5215 = vpop.xlane.xlu0 %5214
        %v5216 = vmul.f32 %v5215, %v4497
        %v5217 = vadd.f32 %v5216, 1e-05
        %v5218 = vrsqrt.pop %v5217
        %v5219 = vmul.f32 %v5218, %v5217
        %v5220 = vmul.f32 %v5219, %v5218
        %v5221 = vmul.f32 0.5, %v5220
        %v5222 = vsub.f32 1.5, %v5221
        %v5223 = vmul.f32 %v5218, %v5222
        %vm5224 = vweird.f32 %v5217
        %vm5225 = vweird.f32 %v5218
        %vm5226 = vmor %vm5224, %vm5225
        %v5227 = vsel %vm5226, %v5218, %v5223
        %v5228 = vmul.f32 %v5211, %v5227
        %v5230 = vperm.slane %v5204, 0
        %v5232 = vmul.f32 %v5228, %v5230
        %v5234 = vperm.slane %v5206, 0
        %v5236 = vadd.f32 %v5232, %v5234
        %s5237 = scalar_lea.vmem %s49, 256
        %v5238 = vld [vmem:[%s5237] sm:$0xff]
        %v5239 = vld [vmem:[%s5237 + $0x8] sm:$0xff]
        %v5240 = vld [vmem:[%s5237 + $0x10] sm:$0xff]
        %v5241 = vld [vmem:[%s5237 + $0x18] sm:$0xff]
        %v5242 = vld [vmem:[%s5237 + $0x20] sm:$0xff]
        %v5243 = vld [vmem:[%s5237 + $0x28] sm:$0xff]
        %v5244 = vld [vmem:[%s5237 + $0x30] sm:$0xff]
        %v5245 = vld [vmem:[%s5237 + $0x38] sm:$0xff]
        %v5246 = vld [vmem:[%s5237 + $0x40] sm:$0xff]
        %v5247 = vld [vmem:[%s5237 + $0x48] sm:$0xff]
        %v5248 = vld [vmem:[%s5237 + $0x50] sm:$0xff]
        %v5249 = vld [vmem:[%s5237 + $0x58] sm:$0xff]
        %v5250 = vld [vmem:[%s5237 + $0x60] sm:$0xff]
        %v5251 = vld [vmem:[%s5237 + $0x68] sm:$0xff]
        %v5252 = vld [vmem:[%s5237 + $0x70] sm:$0xff]
        %v5253 = vld [vmem:[%s5237 + $0x78] sm:$0xff]
        %v5254 = vld [vmem:[%s5237 + $0x80] sm:$0xff]
        %v5255 = vld [vmem:[%s5237 + $0x88] sm:$0xff]
        %v5256 = vld [vmem:[%s5237 + $0x90] sm:$0xff]
        %v5257 = vld [vmem:[%s5237 + $0x98] sm:$0xff]
        %v5258 = vld [vmem:[%s5237 + $0xa0] sm:$0xff]
        %v5259 = vld [vmem:[%s5237 + $0xa8] sm:$0xff]
        %v5260 = vld [vmem:[%s5237 + $0xb0] sm:$0xff]
        %v5261 = vld [vmem:[%s5237 + $0xb8] sm:$0xff]
        %v5262 = vld [vmem:[%s5237 + $0xc0] sm:$0xff]
        %v5263 = vld [vmem:[%s5237 + $0xc8] sm:$0xff]
        %v5264 = vld [vmem:[%s5237 + $0xd0] sm:$0xff]
        %v5265 = vld [vmem:[%s5237 + $0xd8] sm:$0xff]
        %v5266 = vld [vmem:[%s5237 + $0xe0] sm:$0xff]
        %v5267 = vld [vmem:[%s5237 + $0xe8] sm:$0xff]
        %v5268 = vld [vmem:[%s5237 + $0xf0] sm:$0xff]
        %v5269 = vld [vmem:[%s5237 + $0xf8] sm:$0xff]
        %s5270 = scalar_lea.vmem %s51, 2
        %v5271 = vld [vmem:[%s5270] sm:$0x3]
        %v5273 = vperm.slane %v5271, 0
        %v5274 = vperm.slane %v5271, 1
        %5277 = vmatpush.msra.mxu0 %v5268
        %5278 = vmatpush.msra.mxu0 %v5266
        %5279 = vmatpush.msra.mxu0 %v5264
        %5280 = vmatpush.msra.mxu0 %v5262
        %5281 = vmatpush.msra.mxu0 %v5260
        %5282 = vmatpush.msra.mxu0 %v5258
        %5283 = vmatpush.msra.mxu0 %v5256
        %5284 = vmatpush.msra.mxu0 %v5254
        %5285 = vmatpush.msra.mxu0 %v5252
        %5286 = vmatpush.msra.mxu0 %v5250
        %5287 = vmatpush.msra.mxu0 %v5248
        %5288 = vmatpush.msra.mxu0 %v5246
        %5289 = vmatpush.msra.mxu0 %v5244
        %5290 = vmatpush.msra.mxu0 %v5242
        %5291 = vmatpush.msra.mxu0 %v5240
        %5292 = vmatpush.msra.mxu0 %v5238
        %5293 = vmatmul.f32.gmra.mxu0 %v5236
        %v5294 = vpop.f32.mrf.mxu0
        %v5295 = vadd.f32 %v5273, %v5294
        %5296 = vdwg.mxu0
        %5297 = vmatpush.msra.mxu0 %v5269
        %5298 = vmatpush.msra.mxu0 %v5267
        %5299 = vmatpush.msra.mxu0 %v5265
        %5300 = vmatpush.msra.mxu0 %v5263
        %5301 = vmatpush.msra.mxu0 %v5261
        %5302 = vmatpush.msra.mxu0 %v5259
        %5303 = vmatpush.msra.mxu0 %v5257
        %5304 = vmatpush.msra.mxu0 %v5255
        %5305 = vmatpush.msra.mxu0 %v5253
        %5306 = vmatpush.msra.mxu0 %v5251
        %5307 = vmatpush.msra.mxu0 %v5249
        %5308 = vmatpush.msra.mxu0 %v5247
        %5309 = vmatpush.msra.mxu0 %v5245
        %5310 = vmatpush.msra.mxu0 %v5243
        %5311 = vmatpush.msra.mxu0 %v5241
        %5312 = vmatpush.msra.mxu0 %v5239
        %5313 = vmatmul.f32.gmra.mxu0 %v5236
        %v5314 = vpop.f32.mrf.mxu0
        %v5315 = vadd.f32 %v5274, %v5314
        %5316 = vdwg.mxu0
        %v5317 = vmax.f32 %v5295, 0.0
        %v5318 = vmax.f32 %v5315, 0.0
        %s5319 = scalar_lea.vmem %s53, 256
        %v5320 = vld [vmem:[%s5319] sm:$0xff]
        %v5321 = vld [vmem:[%s5319 + $0x8] sm:$0xff]
        %v5322 = vld [vmem:[%s5319 + $0x10] sm:$0xff]
        %v5323 = vld [vmem:[%s5319 + $0x18] sm:$0xff]
        %v5324 = vld [vmem:[%s5319 + $0x20] sm:$0xff]
        %v5325 = vld [vmem:[%s5319 + $0x28] sm:$0xff]
        %v5326 = vld [vmem:[%s5319 + $0x30] sm:$0xff]
        %v5327 = vld [vmem:[%s5319 + $0x38] sm:$0xff]
        %v5328 = vld [vmem:[%s5319 + $0x40] sm:$0xff]
        %v5329 = vld [vmem:[%s5319 + $0x48] sm:$0xff]
        %v5330 = vld [vmem:[%s5319 + $0x50] sm:$0xff]
        %v5331 = vld [vmem:[%s5319 + $0x58] sm:$0xff]
        %v5332 = vld [vmem:[%s5319 + $0x60] sm:$0xff]
        %v5333 = vld [vmem:[%s5319 + $0x68] sm:$0xff]
        %v5334 = vld [vmem:[%s5319 + $0x70] sm:$0xff]
        %v5335 = vld [vmem:[%s5319 + $0x78] sm:$0xff]
        %v5336 = vld [vmem:[%s5319 + $0x80] sm:$0xff]
        %v5337 = vld [vmem:[%s5319 + $0x88] sm:$0xff]
        %v5338 = vld [vmem:[%s5319 + $0x90] sm:$0xff]
        %v5339 = vld [vmem:[%s5319 + $0x98] sm:$0xff]
        %v5340 = vld [vmem:[%s5319 + $0xa0] sm:$0xff]
        %v5341 = vld [vmem:[%s5319 + $0xa8] sm:$0xff]
        %v5342 = vld [vmem:[%s5319 + $0xb0] sm:$0xff]
        %v5343 = vld [vmem:[%s5319 + $0xb8] sm:$0xff]
        %v5344 = vld [vmem:[%s5319 + $0xc0] sm:$0xff]
        %v5345 = vld [vmem:[%s5319 + $0xc8] sm:$0xff]
        %v5346 = vld [vmem:[%s5319 + $0xd0] sm:$0xff]
        %v5347 = vld [vmem:[%s5319 + $0xd8] sm:$0xff]
        %v5348 = vld [vmem:[%s5319 + $0xe0] sm:$0xff]
        %v5349 = vld [vmem:[%s5319 + $0xe8] sm:$0xff]
        %v5350 = vld [vmem:[%s5319 + $0xf0] sm:$0xff]
        %v5351 = vld [vmem:[%s5319 + $0xf8] sm:$0xff]
        %s5352 = scalar_lea.vmem %s55, 1
        %v5353 = vld [vmem:[%s5352] sm:$0x1]
        %v5355 = vperm.slane %v5353, 0
        %5357 = vmatpush.msra.mxu0 %v5335
        %5358 = vmatpush.msra.mxu0 %v5334
        %5359 = vmatpush.msra.mxu0 %v5333
        %5360 = vmatpush.msra.mxu0 %v5332
        %5361 = vmatpush.msra.mxu0 %v5331
        %5362 = vmatpush.msra.mxu0 %v5330
        %5363 = vmatpush.msra.mxu0 %v5329
        %5364 = vmatpush.msra.mxu0 %v5328
        %5365 = vmatpush.msra.mxu0 %v5327
        %5366 = vmatpush.msra.mxu0 %v5326
        %5367 = vmatpush.msra.mxu0 %v5325
        %5368 = vmatpush.msra.mxu0 %v5324
        %5369 = vmatpush.msra.mxu0 %v5323
        %5370 = vmatpush.msra.mxu0 %v5322
        %5371 = vmatpush.msra.mxu0 %v5321
        %5372 = vmatpush.msra.mxu0 %v5320
        %5373 = vmatmul.f32.gmra.mxu0 %v5317
        %v5374 = vpop.f32.mrf.mxu0
        %v5375 = vadd.f32 %v5355, %v5374
        %5376 = vdwg.mxu0
        %5377 = vmatpush.msra.mxu0 %v5351
        %5378 = vmatpush.msra.mxu0 %v5350
        %5379 = vmatpush.msra.mxu0 %v5349
        %5380 = vmatpush.msra.mxu0 %v5348
        %5381 = vmatpush.msra.mxu0 %v5347
        %5382 = vmatpush.msra.mxu0 %v5346
        %5383 = vmatpush.msra.mxu0 %v5345
        %5384 = vmatpush.msra.mxu0 %v5344
        %5385 = vmatpush.msra.mxu0 %v5343
        %5386 = vmatpush.msra.mxu0 %v5342
        %5387 = vmatpush.msra.mxu0 %v5341
        %5388 = vmatpush.msra.mxu0 %v5340
        %5389 = vmatpush.msra.mxu0 %v5339
        %5390 = vmatpush.msra.mxu0 %v5338
        %5391 = vmatpush.msra.mxu0 %v5337
        %5392 = vmatpush.msra.mxu0 %v5336
        %5393 = vmatmul.f32.gmra.mxu0 %v5318
        %v5394 = vpop.f32.mrf.mxu0
        %v5395 = vadd.f32 %v5375, %v5394
        %5396 = vdwg.mxu0
        %v5397 = vadd.f32 %v5236, %v5395
        %s5398 = scalar_lea.vmem %s45, 1
        %v5399 = vld [vmem:[%s5398] sm:$0x1]
        %s5400 = scalar_lea.vmem %s47, 1
        %v5401 = vld [vmem:[%s5400] sm:$0x1]
        %v5402 = vsel %vm4168, %v5397, 0.0
        %5403 = vadd.xlane.f32.xlu0 %v5402
        %v5404 = vpop.xlane.xlu0 %5403
        %v5405 = vmul.f32 %v5404, %v4497
        %v5406 = vsub.f32 %v5397, %v5405
        %v5407 = vmul.f32 %v5406, %v5406
        %v5408 = vsel %vm4168, %v5407, 0.0
        %5409 = vadd.xlane.f32.xlu0 %v5408
        %v5410 = vpop.xlane.xlu0 %5409
        %v5411 = vmul.f32 %v5410, %v4497
        %v5412 = vadd.f32 %v5411, 1e-05
        %v5413 = vrsqrt.pop %v5412
        %v5414 = vmul.f32 %v5413, %v5412
        %v5415 = vmul.f32 %v5414, %v5413
        %v5416 = vmul.f32 0.5, %v5415
        %v5417 = vsub.f32 1.5, %v5416
        %v5418 = vmul.f32 %v5413, %v5417
        %vm5419 = vweird.f32 %v5412
        %vm5420 = vweird.f32 %v5413
        %vm5421 = vmor %vm5419, %vm5420
        %v5422 = vsel %vm5421, %v5413, %v5418
        %v5423 = vmul.f32 %v5406, %v5422
        %v5425 = vperm.slane %v5399, 0
        %v5427 = vmul.f32 %v5423, %v5425
        %v5429 = vperm.slane %v5401, 0
        %v5431 = vadd.f32 %v5427, %v5429
        %v5432 = vld [vmem:[%s57] sm:$0xff]
        %v5433 = vld [vmem:[%s57 + $0x8] sm:$0xff]
        %v5434 = vld [vmem:[%s57 + $0x10] sm:$0xff]
        %v5435 = vld [vmem:[%s57 + $0x18] sm:$0xff]
        %v5436 = vld [vmem:[%s57 + $0x20] sm:$0xff]
        %v5437 = vld [vmem:[%s57 + $0x28] sm:$0xff]
        %v5438 = vld [vmem:[%s57 + $0x30] sm:$0xff]
        %v5439 = vld [vmem:[%s57 + $0x38] sm:$0xff]
        %v5440 = vld [vmem:[%s57 + $0x40] sm:$0xff]
        %v5441 = vld [vmem:[%s57 + $0x48] sm:$0xff]
        %v5442 = vld [vmem:[%s57 + $0x50] sm:$0xff]
        %v5443 = vld [vmem:[%s57 + $0x58] sm:$0xff]
        %v5444 = vld [vmem:[%s57 + $0x60] sm:$0xff]
        %v5445 = vld [vmem:[%s57 + $0x68] sm:$0xff]
        %v5446 = vld [vmem:[%s57 + $0x70] sm:$0xff]
        %v5447 = vld [vmem:[%s57 + $0x78] sm:$0xff]
        %v5448 = vld [vmem:[%s59] sm:$0x1]
        %5449 = vmatpush.msra.mxu0 %v5447
        %5450 = vmatpush.msra.mxu0 %v5446
        %5451 = vmatpush.msra.mxu0 %v5445
        %5452 = vmatpush.msra.mxu0 %v5444
        %5453 = vmatpush.msra.mxu0 %v5443
        %5454 = vmatpush.msra.mxu0 %v5442
        %5455 = vmatpush.msra.mxu0 %v5441
        %5456 = vmatpush.msra.mxu0 %v5440
        %5457 = vmatpush.msra.mxu0 %v5439
        %5458 = vmatpush.msra.mxu0 %v5438
        %5459 = vmatpush.msra.mxu0 %v5437
        %5460 = vmatpush.msra.mxu0 %v5436
        %5461 = vmatpush.msra.mxu0 %v5435
        %5462 = vmatpush.msra.mxu0 %v5434
        %5463 = vmatpush.msra.mxu0 %v5433
        %5464 = vmatpush.msra.mxu0 %v5432
        %5465 = vmatmul.f32.gmra.mxu0 %v5431
        %v5466 = vpop.f32.mrf.mxu0
        %v5467 = vadd.f32 %v5448, %v5466
        %5468 = vdwg.mxu0
        %v5469 = vmax.f32 %v5467, 0.0
        %v5470 = vld [vmem:[%s61] sm:$0xff]
        %v5471 = vld [vmem:[%s61 + $0x8] sm:$0xff]
        %v5472 = vld [vmem:[%s61 + $0x10] sm:$0xff]
        %v5473 = vld [vmem:[%s61 + $0x18] sm:$0xff]
        %v5474 = vld [vmem:[%s61 + $0x20] sm:$0xff]
        %v5475 = vld [vmem:[%s61 + $0x28] sm:$0xff]
        %v5476 = vld [vmem:[%s61 + $0x30] sm:$0xff]
        %v5477 = vld [vmem:[%s61 + $0x38] sm:$0xff]
        %v5478 = vld [vmem:[%s63] sm:$0x1]
        %v5480 = vsel %vm3964, %v5469, 0
        %5482 = vmatpush.msra.mxu0 0.0
        %5483 = vmatpush.msra.mxu0 0.0
        %5484 = vmatpush.msra.mxu0 0.0
        %5485 = vmatpush.msra.mxu0 0.0
        %5486 = vmatpush.msra.mxu0 0.0
        %5487 = vmatpush.msra.mxu0 0.0
        %5488 = vmatpush.msra.mxu0 0.0
        %5489 = vmatpush.msra.mxu0 0.0
        %5490 = vmatpush.msra.mxu0 %v5477
        %5491 = vmatpush.msra.mxu0 %v5476
        %5492 = vmatpush.msra.mxu0 %v5475
        %5493 = vmatpush.msra.mxu0 %v5474
        %5494 = vmatpush.msra.mxu0 %v5473
        %5495 = vmatpush.msra.mxu0 %v5472
        %5496 = vmatpush.msra.mxu0 %v5471
        %5497 = vmatpush.msra.mxu0 %v5470
        %5498 = vmatmul.f32.gmra.mxu0 %v5480
        %v5499 = vpop.f32.mrf.mxu0
        %v5500 = vadd.f32 %v5478, %v5499
        %5501 = vdwg.mxu0
        %vm5502 = vcmask 57344
        %v5503 = vsel %vm5502, %v5500, -inf
        %5504 = vmax.xlane.f32.xlu0 %v5503
        %v5505 = vpop.xlane.xlu0 %5504
        %v5506 = vsub.f32 %v5500, %v5505
        %v5507 = vmul.f32 %v5506, 1.442695
        %v5508 = vpow.pop %v5507
        %v5509 = vsel %vm5502, %v5508, 0.0
        %5510 = vadd.xlane.f32.xlu0 %v5509
        %v5511 = vpop.xlane.xlu0 %5510
        %v5512 = vlog2.pop %v5511
        %v5513 = vmul.f32 %v5512, 0.6931472
        %v5514 = vadd.f32 %v5505, %v5513
        %v5515 = vsub.f32 %v5500, %v5514
        %5516 = vst.msk [vmem:[%s978] sm:$0x1] %vm5502, %v5515
        %s5517 = sand.u32 %s764, 1
        %s5518 = scalar_lea.sflag [#allocation3], %s5517
        %s5519 = sand.u32 %s764, 1
        %s5520 = scalar_lea.vmem [#allocation2], %s5519
        // Predicated region
        $region149: #{transformer_psmc_forward.1} parent=147 // pred_check
          %p5521 = pneg %p774
        $region150: #{transformer_psmc_forward.1} parent=147 // pred_check_branch
          %5523 = sbr.rel (%p5521) target = $region152
        $region151: #{transformer_psmc_forward.1} parent=147 // pred_region
          %5525 = vsyncadd %s5518, 0
          %s5526 = scalar_lea.hbm %s65, %s79
          %s5528 = sshll.u32 %s5520, 4
          %s5529 = int_to_ptr.vmem [resolvable:$true] %s5528
          %s5530 = sshll.u32 %s5526, 4
          %s5531 = int_to_ptr.hbm [resolvable:$true] %s5530
          %5533 = dma.vmem_to_hbm [thread:$0]  %s5529, 16, %s5531, %s5518
        $region152: #{transformer_psmc_forward.1} parent=147 // pred_fallthru
          _
      $region148: #{transformer_psmc_forward.1} parent=5 // pred_fallthru
        _
      %p5534 = scmp.le.s32.totalorder 2, %s74
      // Predicated region
      $region153: #{transformer_psmc_forward.1} parent=5 // pred_check
        %p5535 = pneg %p5534
      $region154: #{transformer_psmc_forward.1} parent=5 // pred_check_branch
        %5537 = sbr.rel (%p5535) target = $region156
      $region155: #{transformer_psmc_forward.1} parent=5 // pred_region
        %s5538 = ssub.s32 %s74, 2
        // Predicated region
        $region157: #{transformer_psmc_forward.1} parent=155 // pred_check
          %p5539 = pneg %p780
        $region158: #{transformer_psmc_forward.1} parent=155 // pred_check_branch
          %5541 = sbr.rel (%p5539) target = $region160
        $region159: #{transformer_psmc_forward.1} parent=155 // pred_region
          %s5542 = sand.u32 %s765, 1
          %s5543 = scalar_lea.sflag [#allocation3], %s5542
          %s5544 = sand.u32 %s765, 1
          %s5545 = scalar_lea.vmem [#allocation2], %s5544
          %5547 = dma.done %s5543, 16
        $region160: #{transformer_psmc_forward.1} parent=155 // pred_fallthru
          _
      $region156: #{transformer_psmc_forward.1} parent=5 // pred_fallthru
        _
    $region6: #{transformer_psmc_forward.1} parent=1 // loop_footer
      %s78 = sadd.s32 1, %s74
    $region7: #{transformer_psmc_forward.1} parent=1 // loop_footer_branch
      %73 = sbr.rel target = $region3
    $region8: #{transformer_psmc_forward.1} parent=1 // loop_exit
      _
    %5548 = vsyncpa [#allocation3], 1
    %s5549 = scalar_lea.sflag [#allocation3], 1
    %5550 = vsyncpa %s5549, 1

</llo_original>
